<compile_context>
chip_gen: v5e
topology: v5e:2x2
jax: 0.10.0
libtpu: 0.0.40
codegen_flags: <defaults>
</compile_context>

<pallas_src>
import jax
import jax.numpy as jnp
from jax.experimental import pallas as pl
from jax.experimental.pallas import tpu as pltpu

_CP = 128                     # lane-dense channel block for every conv kernel
_CONV_COUT = (32, 64, 128)    # true channel counts (fixed by the module)


# ----------------------------------------------------------------------------
# Fused Conv3x3 + MaxPool2 + BatchNorm(eval, folded) + SiLU kernel
# ----------------------------------------------------------------------------
def _make_conv_pool_kernel(MB):
    """MB = Bt*H*W im2col rows per grid step; the 4 pool partners of each
    output pixel occupy rows 4q..4q+3."""

    def kernel(x_ref, w_ref, scale_ref, shift_ref, o_ref, acc_ref, hm_ref):
        # One fat-K MXU matmul for all Bt images of this grid step
        # (bf16 operands, f32 accumulation), written to VMEM exactly once.
        acc_ref[...] = jnp.dot(x_ref[...], w_ref[...],
                               preferred_element_type=jnp.float32)
        # 2x2 max-pool = two stride-2 row reductions (partners are adjacent).
        hm_ref[...] = jnp.maximum(acc_ref[pl.ds(0, MB // 2, stride=2), :],
                                  acc_ref[pl.ds(1, MB // 2, stride=2), :])
        pooled = jnp.maximum(hm_ref[pl.ds(0, MB // 4, stride=2), :],
                             hm_ref[pl.ds(1, MB // 4, stride=2), :])
        # Folded BN(eval) affine (+conv bias, which commutes with max) and SiLU
        # computed ONLY on the compact pooled rows; sigmoid via EUP exp + EUP
        # approx reciprocal -> no VPU divide.
        z = pooled * scale_ref[...] + shift_ref[...]
        o_ref[...] = z * pl.reciprocal(1.0 + jnp.exp(-z), approx=True)

    return kernel


def _pick_bt(batch):
    """Images per grid step: as large as VMEM comfortably allows (amortizes
    grid overhead, fattens the MXU M dim) while keeping >=2 grid steps so both
    v7x TensorCores get work."""
    cap = min(8, batch)
    if batch >= 2:
        cap = min(cap, batch // 2)
    bt = max(1, cap)
    while batch % bt:
        bt -= 1
    return bt


def conv_pool_bn_silu(patches, w, scale, shift, *, batch, hw):
    """patches: (batch*hw, 9*Cin) bf16 im2col rows (pool partners consecutive).
    w: (9*Cin, 128) bf16 (Cout zero-padded to 128). scale/shift: (1, 128) f32.
    Returns (batch*hw//4, 128) f32 pooled/activated rows, row = b*P + ho*Wo+wo."""
    K = patches.shape[-1]
    bt = _pick_bt(batch)
    grid = batch // bt
    MB = bt * hw
    return pl.pallas_call(
        _make_conv_pool_kernel(MB),
        out_shape=jax.ShapeDtypeStruct((batch * (hw // 4), _CP), jnp.float32),
        grid_spec=pltpu.PrefetchScalarGridSpec(
            num_scalar_prefetch=0,
            grid=(grid,),
            in_specs=[
                pl.BlockSpec((MB, K), lambda i: (i, 0)),     # im2col patches
                pl.BlockSpec((K, _CP), lambda i: (0, 0)),    # conv weight (bf16)
                pl.BlockSpec((1, _CP), lambda i: (0, 0)),    # BN scale
                pl.BlockSpec((1, _CP), lambda i: (0, 0)),    # BN shift (+bias)
            ],
            out_specs=pl.BlockSpec((MB // 4, _CP), lambda i: (i, 0)),
            scratch_shapes=[
                pltpu.VMEM((MB, _CP), jnp.float32),          # conv accumulator
                pltpu.VMEM((MB // 2, _CP), jnp.float32),     # half-pooled rows
            ],
        ),
        compiler_params=pltpu.CompilerParams(dimension_semantics=("parallel",)),
    )(patches, w, scale, shift)


# ----------------------------------------------------------------------------
# Fused (collapsed) FC head: single matmul + bias, N padded 10 -> 128
# ----------------------------------------------------------------------------
def _fc_kernel(a_ref, w_ref, b_ref, o_ref):
    o_ref[...] = (jnp.dot(a_ref[...], w_ref[...],
                          preferred_element_type=jnp.float32) + b_ref[...])


def fc_fused(a, w_bf16, bias):
    """a: (B, 2048) bf16.  w: (2048, 128) bf16 (two Linears collapsed at init,
    N padded so the matmul/store is lane-dense).  Returns (B, 128) f32."""
    B, K = a.shape
    N = w_bf16.shape[1]
    mt = B if B <= 256 else 256          # M grid dimension for large batches
    pad = (-B) % mt
    if pad:
        a = jnp.pad(a, ((0, pad), (0, 0)))
    grid = a.shape[0] // mt
    out = pl.pallas_call(
        _fc_kernel,
        out_shape=jax.ShapeDtypeStruct((a.shape[0], N), jnp.float32),
        grid_spec=pltpu.PrefetchScalarGridSpec(
            num_scalar_prefetch=0,
            grid=(grid,),
            in_specs=[
                pl.BlockSpec((mt, K), lambda i: (i, 0)),
                pl.BlockSpec((K, N), lambda i: (0, 0)),
                pl.BlockSpec((1, N), lambda i: (0, 0)),
            ],
            out_specs=pl.BlockSpec((mt, N), lambda i: (i, 0)),
        ),
        compiler_params=pltpu.CompilerParams(dimension_semantics=("parallel",)),
    )(a, w_bf16, bias)
    return out[:B]


# ----------------------------------------------------------------------------
# Forward pass (JAX glue: layout plumbing only -- pad / im2col / reshapes)
# ----------------------------------------------------------------------------
def _im2col_pool_order(x):
    """(B,H,W,C) f32 -> (B*H*W, 9*C) bf16 3x3 'same' patches.  Rows ordered so
    the four 2x2 max-pool partners of each output pixel are consecutive:
    row = ((b*Ho + ho)*Wo + wo)*4 + i*2 + j  with h = 2*ho+i, w = 2*wo+j.
    Pure layout plumbing done once in XLA so the Pallas kernel runs a single
    aligned fat-K dot plus two stride-2 pool reductions (no in-kernel
    unaligned-sublane slice/relayout copies)."""
    B, H, W, C = x.shape
    Ho, Wo = H // 2, W // 2
    xp = jnp.pad(x, ((0, 0), (1, 1), (1, 1), (0, 0)))
    taps = [xp[:, kh:kh + H, kw:kw + W, :] for kh in range(3) for kw in range(3)]
    p = jnp.stack(taps, axis=3).reshape(B, H, W, 9 * C)
    p = p.reshape(B, Ho, 2, Wo, 2, 9 * C).transpose(0, 1, 3, 2, 4, 5)
    return p.reshape(B * H * W, 9 * C).astype(jnp.bfloat16)


def cnn_forward(x_nchw, params):
    x = jnp.transpose(x_nchw, (0, 2, 3, 1)).astype(jnp.float32)   # NCHW -> NHWC
    for blk, cout in zip(params["conv"], _CONV_COUT):
        B, H, W, _ = x.shape
        patches = _im2col_pool_order(x)
        y = conv_pool_bn_silu(patches, blk["w"], blk["scale"], blk["shift"],
                              batch=B, hw=H * W)
        x = y.reshape(B, H // 2, W // 2, _CP)[..., :cout]          # drop pad channels
    B = x.shape[0]
    # HWC flatten; the collapsed FC weight rows were pre-permuted to match.
    feat = x.reshape(B, -1).astype(jnp.bfloat16)
    logits = fc_fused(feat, params["fc_w"], params["fc_b"])
    return logits[:, :10]


# ----------------------------------------------------------------------------
# Deterministic synthetic parameters (shapes follow the PyTorch __init__)
# ----------------------------------------------------------------------------
def init_params(key):
    keys = jax.random.split(key, 16)
    it = iter(keys)

    def conv_block(cin, cout):
        # torch weight layout: (cout, cin, 3, 3)
        w = jax.random.normal(next(it), (cout, cin, 3, 3), jnp.float32)
        w = w / jnp.sqrt(9.0 * cin)
        b = 0.01 * jax.random.normal(next(it), (cout,), jnp.float32)
        # BatchNorm2d (eval mode) folded into per-channel scale/shift.
        gamma = 1.0 + 0.1 * jax.random.normal(next(it), (cout,), jnp.float32)
        beta = 0.1 * jax.random.normal(next(it), (cout,), jnp.float32)
        running_mean = jnp.zeros((cout,), jnp.float32)
        running_var = jnp.ones((cout,), jnp.float32)
        eps = 1e-5
        scale = gamma / jnp.sqrt(running_var + eps)
        # Module order is Conv -> MaxPool -> BN -> SiLU, so the per-channel conv
        # bias commutes with the max and folds exactly into the BN shift.
        shift = beta - running_mean * scale + scale * b
        # (cout,cin,3,3) -> (kh,kw,cin,cout) -> (9*cin, cout), Cout padded to 128
        # so every kernel load/store is lane-dense; bf16 for the MXU.
        w2d = jnp.transpose(w, (2, 3, 1, 0)).reshape(9 * cin, cout)
        w2d = jnp.pad(w2d, ((0, 0), (0, _CP - cout))).astype(jnp.bfloat16)
        scale_p = jnp.pad(scale, (0, _CP - cout)).reshape(1, _CP)
        shift_p = jnp.pad(shift, (0, _CP - cout)).reshape(1, _CP)
        return {"w": w2d, "scale": scale_p, "shift": shift_p}

    conv = [conv_block(3, 32), conv_block(32, 64), conv_block(64, 128)]

    # Linear(4*4*128 -> 64) and Linear(64 -> 10); torch weight is (out, in).
    w1 = jax.random.normal(next(it), (64, 2048), jnp.float32) / jnp.sqrt(2048.0)
    b1 = 0.01 * jax.random.normal(next(it), (64,), jnp.float32)
    w2 = jax.random.normal(next(it), (10, 64), jnp.float32) / jnp.sqrt(64.0)
    b2 = 0.01 * jax.random.normal(next(it), (10,), jnp.float32)

    # Fold nn.Flatten's (C,H,W) order into the weight so the forward can use a
    # plain HWC flatten: column j of the HWC layout corresponds to torch input
    # index c*16 + p with c = j % 128, p = j // 128.
    j = jnp.arange(4 * 4 * 128)
    c, p = j % 128, j // 128
    w1_hwc = w1[:, c * 16 + p]                             # (64, 2048)
    # Collapse the two Linear layers (no nonlinearity in between) and pad N to
    # 128 so the FC matmul / store is lane-dense (wrapper slices [:, :10]).
    fc_w = w1_hwc.T @ w2.T                                 # (2048, 10)
    fc_b = b1 @ w2.T + b2                                  # (10,)
    fc_w = jnp.pad(fc_w, ((0, 0), (0, _CP - 10))).astype(jnp.bfloat16)
    fc_b = jnp.pad(fc_b, (0, _CP - 10)).reshape(1, _CP).astype(jnp.float32)

    return {"conv": conv, "fc_w": fc_w, "fc_b": fc_b}


# ----------------------------------------------------------------------------
# Pure-JAX reference (same bf16 operand rounding, f32 accumulation)
# ----------------------------------------------------------------------------
def _reference_forward(x_nchw, params):
    x = jnp.transpose(x_nchw, (0, 2, 3, 1)).astype(jnp.float32)
    for blk, cout in zip(params["conv"], _CONV_COUT):
        B, H, W, C = x.shape
        xp = jnp.pad(x, ((0, 0), (1, 1), (1, 1), (0, 0)))
        cols = jnp.stack([xp[:, kh:kh + H, kw:kw + W, :]
                          for kh in range(3) for kw in range(3)], axis=3)
        a = cols.reshape(B, H, W, 9 * C).astype(jnp.bfloat16).astype(jnp.float32)
        w = blk["w"].astype(jnp.float32)[:, :cout]
        conv = jnp.einsum("bhwk,kc->bhwc", a, w)
        m = jnp.max(conv.reshape(B, H // 2, 2, W // 2, 2, cout), axis=(2, 4))
        z = m * blk["scale"][0, :cout] + blk["shift"][0, :cout]
        x = z * jax.nn.sigmoid(z)
    B = x.shape[0]
    feat = x.reshape(B, -1).astype(jnp.bfloat16).astype(jnp.float32)
    w = params["fc_w"].astype(jnp.float32)[:, :10]
    b = params["fc_b"][0, :10]
    return feat @ w + b


if __name__ == "__main__":
    key = jax.random.PRNGKey(0)
    kx, kp = jax.random.split(key)
    # CIFAR-10 geometry is required by Linear(4*4*128, 64): spatial must be 32.
    x = jax.random.normal(kx, (4, 3, 32, 32), jnp.float32)
    params = init_params(kp)

    out = jax.jit(cnn_forward)(x, params)
    out = jax.block_until_ready(out)
    assert out.shape == (4, 10), out.shape
    assert bool(jnp.all(jnp.isfinite(out)))

    ref = _reference_forward(x, params)
    assert bool(jnp.allclose(out, ref, rtol=2e-2, atol=2e-2)), \
        float(jnp.max(jnp.abs(out - ref)))

    print("KERNEL_OK")
</pallas_src>

<mosaic_0001>
module attributes {stable_mosaic.version = 11 : i64} {
  func.func @kernel(%arg0: i32, %arg1: memref<2048x27xbf16, #tpu.memory_space<vmem>>, %arg2: memref<27x128xbf16, #tpu.memory_space<vmem>>, %arg3: memref<1x128xf32, #tpu.memory_space<vmem>>, %arg4: memref<1x128xf32, #tpu.memory_space<vmem>>, %arg5: memref<512x128xf32, #tpu.memory_space<vmem>>, %arg6: memref<2048x128xf32, #tpu.memory_space<vmem>>, %arg7: memref<1024x128xf32, #tpu.memory_space<vmem>>) attributes {dimension_semantics = [#tpu.dimension_semantics<parallel>], iteration_bounds = array<i64: 2>, scalar_prefetch = 0 : i64, scratch_operands = 2 : i64, tpu.core_type = #tpu.core_type<tc>, window_params = [{transform_indices = @transform_0, window_bounds = array<i64: 2048, 27>}, {pipeline_mode = #tpu.pipeline_mode<synchronous>, transform_indices = @transform_1, window_bounds = array<i64: 27, 128>}, {pipeline_mode = #tpu.pipeline_mode<synchronous>, transform_indices = @transform_2, window_bounds = array<i64: 1, 128>}, {pipeline_mode = #tpu.pipeline_mode<synchronous>, transform_indices = @transform_3, window_bounds = array<i64: 1, 128>}, {transform_indices = @transform_4, window_bounds = array<i64: 512, 128>}]} {
    %c0 = arith.constant 0 : index
    %c0_0 = arith.constant 0 : index
    %0 = vector.load %arg1[%c0, %c0_0] : memref<2048x27xbf16, #tpu.memory_space<vmem>>, vector<2048x27xbf16>
    %c0_1 = arith.constant 0 : index
    %c0_2 = arith.constant 0 : index
    %1 = vector.load %arg2[%c0_1, %c0_2] : memref<27x128xbf16, #tpu.memory_space<vmem>>, vector<27x128xbf16>
    %cst = arith.constant dense<0.000000e+00> : vector<2048x128xf32>
    %2 = tpu.matmul %0, %1, %cst {dimension_numbers = #tpu.dot_dimension_numbers<[1], [0], [0], [1], [0, 0, 1, 1], [], []>} : vector<2048x27xbf16>, vector<27x128xbf16>, vector<2048x128xf32> -> vector<2048x128xf32>
    %c0_3 = arith.constant 0 : index
    %c0_4 = arith.constant 0 : index
    %3 = vector.load %arg6[%c0_3, %c0_4] : memref<2048x128xf32, #tpu.memory_space<vmem>>, vector<2048x128xf32>
    tpu.vector_store %arg6[%c0_3, %c0_4], %2 {strides = array<i32>} : memref<2048x128xf32, #tpu.memory_space<vmem>>, vector<2048x128xf32>,
    %c0_5 = arith.constant 0 : index
    %c0_6 = arith.constant 0 : index
    %4 = tpu.strided_load %arg6[%c0_5, %c0_6] {strides = array<i32: 2, 1>} : memref<2048x128xf32, #tpu.memory_space<vmem>>, vector<1024x128xf32>
    %c1 = arith.constant 1 : index
    %c0_7 = arith.constant 0 : index
    %5 = tpu.strided_load %arg6[%c1, %c0_7] {strides = array<i32: 2, 1>} : memref<2048x128xf32, #tpu.memory_space<vmem>>, vector<1024x128xf32>
    %6 = arith.maximumf %4, %5 : vector<1024x128xf32>
    %c0_8 = arith.constant 0 : index
    %c0_9 = arith.constant 0 : index
    %7 = vector.load %arg7[%c0_8, %c0_9] : memref<1024x128xf32, #tpu.memory_space<vmem>>, vector<1024x128xf32>
    tpu.vector_store %arg7[%c0_8, %c0_9], %6 {strides = array<i32>} : memref<1024x128xf32, #tpu.memory_space<vmem>>, vector<1024x128xf32>,
    %c0_10 = arith.constant 0 : index
    %c0_11 = arith.constant 0 : index
    %8 = tpu.strided_load %arg7[%c0_10, %c0_11] {strides = array<i32: 2, 1>} : memref<1024x128xf32, #tpu.memory_space<vmem>>, vector<512x128xf32>
    %c1_12 = arith.constant 1 : index
    %c0_13 = arith.constant 0 : index
    %9 = tpu.strided_load %arg7[%c1_12, %c0_13] {strides = array<i32: 2, 1>} : memref<1024x128xf32, #tpu.memory_space<vmem>>, vector<512x128xf32>
    %10 = arith.maximumf %8, %9 : vector<512x128xf32>
    %c0_14 = arith.constant 0 : index
    %c0_15 = arith.constant 0 : index
    %11 = vector.load %arg3[%c0_14, %c0_15] : memref<1x128xf32, #tpu.memory_space<vmem>>, vector<1x128xf32>
    %12 = vector.broadcast %11 : vector<1x128xf32> to vector<512x128xf32>
    %13 = arith.mulf %10, %12 : vector<512x128xf32>
    %c0_16 = arith.constant 0 : index
    %c0_17 = arith.constant 0 : index
    %14 = vector.load %arg4[%c0_16, %c0_17] : memref<1x128xf32, #tpu.memory_space<vmem>>, vector<1x128xf32>
    %15 = vector.broadcast %14 : vector<1x128xf32> to vector<512x128xf32>
    %16 = arith.addf %13, %15 : vector<512x128xf32>
    %cst_18 = arith.constant 0.000000e+00 : f32
    %17 = vector.broadcast %cst_18 : f32 to vector<512x128xf32>
    %18 = arith.subf %17, %16 : vector<512x128xf32>
    %19 = math.exp %18 : vector<512x128xf32>
    %cst_19 = arith.constant 1.000000e+00 : f32
    %20 = vector.broadcast %cst_19 : f32 to vector<512x128xf32>
    %21 = arith.addf %20, %19 : vector<512x128xf32>
    %22 = tpu.reciprocal %21 {approx = true} : vector<512x128xf32> -> vector<512x128xf32>
    %23 = arith.mulf %16, %22 : vector<512x128xf32>
    %c0_20 = arith.constant 0 : index
    %c0_21 = arith.constant 0 : index
    %24 = vector.load %arg5[%c0_20, %c0_21] : memref<512x128xf32, #tpu.memory_space<vmem>>, vector<512x128xf32>
    tpu.vector_store %arg5[%c0_20, %c0_21], %23 {strides = array<i32>} : memref<512x128xf32, #tpu.memory_space<vmem>>, vector<512x128xf32>,
    return
  }
  func.func @transform_0(%arg0: i32) -> (i32, i32) {
    %c0_i32 = arith.constant 0 : i32
    %c0_i32_0 = arith.constant 0 : i32
    return %arg0, %c0_i32 : i32, i32
  }
  func.func @transform_1(%arg0: i32) -> (i32, i32) {
    %c0_i32 = arith.constant 0 : i32
    %c0_i32_0 = arith.constant 0 : i32
    %c0_i32_1 = arith.constant 0 : i32
    return %c0_i32, %c0_i32_0 : i32, i32
  }
  func.func @transform_2(%arg0: i32) -> (i32, i32) {
    %c0_i32 = arith.constant 0 : i32
    %c0_i32_0 = arith.constant 0 : i32
    %c0_i32_1 = arith.constant 0 : i32
    return %c0_i32, %c0_i32_0 : i32, i32
  }
  func.func @transform_3(%arg0: i32) -> (i32, i32) {
    %c0_i32 = arith.constant 0 : i32
    %c0_i32_0 = arith.constant 0 : i32
    %c0_i32_1 = arith.constant 0 : i32
    return %c0_i32, %c0_i32_0 : i32, i32
  }
  func.func @transform_4(%arg0: i32) -> (i32, i32) {
    %c0_i32 = arith.constant 0 : i32
    %c0_i32_0 = arith.constant 0 : i32
    return %arg0, %c0_i32 : i32, i32
  }
}

module attributes {stable_mosaic.version = 11 : i64} {
  func.func @kernel(%arg0: i32, %arg1: memref<512x288xbf16, #tpu.memory_space<vmem>>, %arg2: memref<288x128xbf16, #tpu.memory_space<vmem>>, %arg3: memref<1x128xf32, #tpu.memory_space<vmem>>, %arg4: memref<1x128xf32, #tpu.memory_space<vmem>>, %arg5: memref<128x128xf32, #tpu.memory_space<vmem>>, %arg6: memref<512x128xf32, #tpu.memory_space<vmem>>, %arg7: memref<256x128xf32, #tpu.memory_space<vmem>>) attributes {dimension_semantics = [#tpu.dimension_semantics<parallel>], iteration_bounds = array<i64: 2>, scalar_prefetch = 0 : i64, scratch_operands = 2 : i64, tpu.core_type = #tpu.core_type<tc>, window_params = [{transform_indices = @transform_0, window_bounds = array<i64: 512, 288>}, {pipeline_mode = #tpu.pipeline_mode<synchronous>, transform_indices = @transform_1, window_bounds = array<i64: 288, 128>}, {pipeline_mode = #tpu.pipeline_mode<synchronous>, transform_indices = @transform_2, window_bounds = array<i64: 1, 128>}, {pipeline_mode = #tpu.pipeline_mode<synchronous>, transform_indices = @transform_3, window_bounds = array<i64: 1, 128>}, {transform_indices = @transform_4, window_bounds = array<i64: 128, 128>}]} {
    %c0 = arith.constant 0 : index
    %c0_0 = arith.constant 0 : index
    %0 = vector.load %arg1[%c0, %c0_0] : memref<512x288xbf16, #tpu.memory_space<vmem>>, vector<512x288xbf16>
    %c0_1 = arith.constant 0 : index
    %c0_2 = arith.constant 0 : index
    %1 = vector.load %arg2[%c0_1, %c0_2] : memref<288x128xbf16, #tpu.memory_space<vmem>>, vector<288x128xbf16>
    %cst = arith.constant dense<0.000000e+00> : vector<512x128xf32>
    %2 = tpu.matmul %0, %1, %cst {dimension_numbers = #tpu.dot_dimension_numbers<[1], [0], [0], [1], [0, 0, 1, 1], [], []>} : vector<512x288xbf16>, vector<288x128xbf16>, vector<512x128xf32> -> vector<512x128xf32>
    %c0_3 = arith.constant 0 : index
    %c0_4 = arith.constant 0 : index
    %3 = vector.load %arg6[%c0_3, %c0_4] : memref<512x128xf32, #tpu.memory_space<vmem>>, vector<512x128xf32>
    tpu.vector_store %arg6[%c0_3, %c0_4], %2 {strides = array<i32>} : memref<512x128xf32, #tpu.memory_space<vmem>>, vector<512x128xf32>,
    %c0_5 = arith.constant 0 : index
    %c0_6 = arith.constant 0 : index
    %4 = tpu.strided_load %arg6[%c0_5, %c0_6] {strides = array<i32: 2, 1>} : memref<512x128xf32, #tpu.memory_space<vmem>>, vector<256x128xf32>
    %c1 = arith.constant 1 : index
    %c0_7 = arith.constant 0 : index
    %5 = tpu.strided_load %arg6[%c1, %c0_7] {strides = array<i32: 2, 1>} : memref<512x128xf32, #tpu.memory_space<vmem>>, vector<256x128xf32>
    %6 = arith.maximumf %4, %5 : vector<256x128xf32>
    %c0_8 = arith.constant 0 : index
    %c0_9 = arith.constant 0 : index
    %7 = vector.load %arg7[%c0_8, %c0_9] : memref<256x128xf32, #tpu.memory_space<vmem>>, vector<256x128xf32>
    tpu.vector_store %arg7[%c0_8, %c0_9], %6 {strides = array<i32>} : memref<256x128xf32, #tpu.memory_space<vmem>>, vector<256x128xf32>,
    %c0_10 = arith.constant 0 : index
    %c0_11 = arith.constant 0 : index
    %8 = tpu.strided_load %arg7[%c0_10, %c0_11] {strides = array<i32: 2, 1>} : memref<256x128xf32, #tpu.memory_space<vmem>>, vector<128x128xf32>
    %c1_12 = arith.constant 1 : index
    %c0_13 = arith.constant 0 : index
    %9 = tpu.strided_load %arg7[%c1_12, %c0_13] {strides = array<i32: 2, 1>} : memref<256x128xf32, #tpu.memory_space<vmem>>, vector<128x128xf32>
    %10 = arith.maximumf %8, %9 : vector<128x128xf32>
    %c0_14 = arith.constant 0 : index
    %c0_15 = arith.constant 0 : index
    %11 = vector.load %arg3[%c0_14, %c0_15] : memref<1x128xf32, #tpu.memory_space<vmem>>, vector<1x128xf32>
    %12 = vector.broadcast %11 : vector<1x128xf32> to vector<128x128xf32>
    %13 = arith.mulf %10, %12 : vector<128x128xf32>
    %c0_16 = arith.constant 0 : index
    %c0_17 = arith.constant 0 : index
    %14 = vector.load %arg4[%c0_16, %c0_17] : memref<1x128xf32, #tpu.memory_space<vmem>>, vector<1x128xf32>
    %15 = vector.broadcast %14 : vector<1x128xf32> to vector<128x128xf32>
    %16 = arith.addf %13, %15 : vector<128x128xf32>
    %cst_18 = arith.constant 0.000000e+00 : f32
    %17 = vector.broadcast %cst_18 : f32 to vector<128x128xf32>
    %18 = arith.subf %17, %16 : vector<128x128xf32>
    %19 = math.exp %18 : vector<128x128xf32>
    %cst_19 = arith.constant 1.000000e+00 : f32
    %20 = vector.broadcast %cst_19 : f32 to vector<128x128xf32>
    %21 = arith.addf %20, %19 : vector<128x128xf32>
    %22 = tpu.reciprocal %21 {approx = true} : vector<128x128xf32> -> vector<128x128xf32>
    %23 = arith.mulf %16, %22 : vector<128x128xf32>
    %c0_20 = arith.constant 0 : index
    %c0_21 = arith.constant 0 : index
    %24 = vector.load %arg5[%c0_20, %c0_21] : memref<128x128xf32, #tpu.memory_space<vmem>>, vector<128x128xf32>
    tpu.vector_store %arg5[%c0_20, %c0_21], %23 {strides = array<i32>} : memref<128x128xf32, #tpu.memory_space<vmem>>, vector<128x128xf32>,
    return
  }
  func.func @transform_0(%arg0: i32) -> (i32, i32) {
    %c0_i32 = arith.constant 0 : i32
    %c0_i32_0 = arith.constant 0 : i32
    return %arg0, %c0_i32 : i32, i32
  }
  func.func @transform_1(%arg0: i32) -> (i32, i32) {
    %c0_i32 = arith.constant 0 : i32
    %c0_i32_0 = arith.constant 0 : i32
    %c0_i32_1 = arith.constant 0 : i32
    return %c0_i32, %c0_i32_0 : i32, i32
  }
  func.func @transform_2(%arg0: i32) -> (i32, i32) {
    %c0_i32 = arith.constant 0 : i32
    %c0_i32_0 = arith.constant 0 : i32
    %c0_i32_1 = arith.constant 0 : i32
    return %c0_i32, %c0_i32_0 : i32, i32
  }
  func.func @transform_3(%arg0: i32) -> (i32, i32) {
    %c0_i32 = arith.constant 0 : i32
    %c0_i32_0 = arith.constant 0 : i32
    %c0_i32_1 = arith.constant 0 : i32
    return %c0_i32, %c0_i32_0 : i32, i32
  }
  func.func @transform_4(%arg0: i32) -> (i32, i32) {
    %c0_i32 = arith.constant 0 : i32
    %c0_i32_0 = arith.constant 0 : i32
    return %arg0, %c0_i32 : i32, i32
  }
}

module attributes {stable_mosaic.version = 11 : i64} {
  func.func @kernel(%arg0: i32, %arg1: memref<128x576xbf16, #tpu.memory_space<vmem>>, %arg2: memref<576x128xbf16, #tpu.memory_space<vmem>>, %arg3: memref<1x128xf32, #tpu.memory_space<vmem>>, %arg4: memref<1x128xf32, #tpu.memory_space<vmem>>, %arg5: memref<32x128xf32, #tpu.memory_space<vmem>>, %arg6: memref<128x128xf32, #tpu.memory_space<vmem>>, %arg7: memref<64x128xf32, #tpu.memory_space<vmem>>) attributes {dimension_semantics = [#tpu.dimension_semantics<parallel>], iteration_bounds = array<i64: 2>, scalar_prefetch = 0 : i64, scratch_operands = 2 : i64, tpu.core_type = #tpu.core_type<tc>, window_params = [{transform_indices = @transform_0, window_bounds = array<i64: 128, 576>}, {pipeline_mode = #tpu.pipeline_mode<synchronous>, transform_indices = @transform_1, window_bounds = array<i64: 576, 128>}, {pipeline_mode = #tpu.pipeline_mode<synchronous>, transform_indices = @transform_2, window_bounds = array<i64: 1, 128>}, {pipeline_mode = #tpu.pipeline_mode<synchronous>, transform_indices = @transform_3, window_bounds = array<i64: 1, 128>}, {transform_indices = @transform_4, window_bounds = array<i64: 32, 128>}]} {
    %c0 = arith.constant 0 : index
    %c0_0 = arith.constant 0 : index
    %0 = vector.load %arg1[%c0, %c0_0] : memref<128x576xbf16, #tpu.memory_space<vmem>>, vector<128x576xbf16>
    %c0_1 = arith.constant 0 : index
    %c0_2 = arith.constant 0 : index
    %1 = vector.load %arg2[%c0_1, %c0_2] : memref<576x128xbf16, #tpu.memory_space<vmem>>, vector<576x128xbf16>
    %cst = arith.constant dense<0.000000e+00> : vector<128x128xf32>
    %2 = tpu.matmul %0, %1, %cst {dimension_numbers = #tpu.dot_dimension_numbers<[1], [0], [0], [1], [0, 0, 1, 1], [], []>} : vector<128x576xbf16>, vector<576x128xbf16>, vector<128x128xf32> -> vector<128x128xf32>
    %c0_3 = arith.constant 0 : index
    %c0_4 = arith.constant 0 : index
    %3 = vector.load %arg6[%c0_3, %c0_4] : memref<128x128xf32, #tpu.memory_space<vmem>>, vector<128x128xf32>
    tpu.vector_store %arg6[%c0_3, %c0_4], %2 {strides = array<i32>} : memref<128x128xf32, #tpu.memory_space<vmem>>, vector<128x128xf32>,
    %c0_5 = arith.constant 0 : index
    %c0_6 = arith.constant 0 : index
    %4 = tpu.strided_load %arg6[%c0_5, %c0_6] {strides = array<i32: 2, 1>} : memref<128x128xf32, #tpu.memory_space<vmem>>, vector<64x128xf32>
    %c1 = arith.constant 1 : index
    %c0_7 = arith.constant 0 : index
    %5 = tpu.strided_load %arg6[%c1, %c0_7] {strides = array<i32: 2, 1>} : memref<128x128xf32, #tpu.memory_space<vmem>>, vector<64x128xf32>
    %6 = arith.maximumf %4, %5 : vector<64x128xf32>
    %c0_8 = arith.constant 0 : index
    %c0_9 = arith.constant 0 : index
    %7 = vector.load %arg7[%c0_8, %c0_9] : memref<64x128xf32, #tpu.memory_space<vmem>>, vector<64x128xf32>
    tpu.vector_store %arg7[%c0_8, %c0_9], %6 {strides = array<i32>} : memref<64x128xf32, #tpu.memory_space<vmem>>, vector<64x128xf32>,
    %c0_10 = arith.constant 0 : index
    %c0_11 = arith.constant 0 : index
    %8 = tpu.strided_load %arg7[%c0_10, %c0_11] {strides = array<i32: 2, 1>} : memref<64x128xf32, #tpu.memory_space<vmem>>, vector<32x128xf32>
    %c1_12 = arith.constant 1 : index
    %c0_13 = arith.constant 0 : index
    %9 = tpu.strided_load %arg7[%c1_12, %c0_13] {strides = array<i32: 2, 1>} : memref<64x128xf32, #tpu.memory_space<vmem>>, vector<32x128xf32>
    %10 = arith.maximumf %8, %9 : vector<32x128xf32>
    %c0_14 = arith.constant 0 : index
    %c0_15 = arith.constant 0 : index
    %11 = vector.load %arg3[%c0_14, %c0_15] : memref<1x128xf32, #tpu.memory_space<vmem>>, vector<1x128xf32>
    %12 = vector.broadcast %11 : vector<1x128xf32> to vector<32x128xf32>
    %13 = arith.mulf %10, %12 : vector<32x128xf32>
    %c0_16 = arith.constant 0 : index
    %c0_17 = arith.constant 0 : index
    %14 = vector.load %arg4[%c0_16, %c0_17] : memref<1x128xf32, #tpu.memory_space<vmem>>, vector<1x128xf32>
    %15 = vector.broadcast %14 : vector<1x128xf32> to vector<32x128xf32>
    %16 = arith.addf %13, %15 : vector<32x128xf32>
    %cst_18 = arith.constant 0.000000e+00 : f32
    %17 = vector.broadcast %cst_18 : f32 to vector<32x128xf32>
    %18 = arith.subf %17, %16 : vector<32x128xf32>
    %19 = math.exp %18 : vector<32x128xf32>
    %cst_19 = arith.constant 1.000000e+00 : f32
    %20 = vector.broadcast %cst_19 : f32 to vector<32x128xf32>
    %21 = arith.addf %20, %19 : vector<32x128xf32>
    %22 = tpu.reciprocal %21 {approx = true} : vector<32x128xf32> -> vector<32x128xf32>
    %23 = arith.mulf %16, %22 : vector<32x128xf32>
    %c0_20 = arith.constant 0 : index
    %c0_21 = arith.constant 0 : index
    %24 = vector.load %arg5[%c0_20, %c0_21] : memref<32x128xf32, #tpu.memory_space<vmem>>, vector<32x128xf32>
    tpu.vector_store %arg5[%c0_20, %c0_21], %23 {strides = array<i32>} : memref<32x128xf32, #tpu.memory_space<vmem>>, vector<32x128xf32>,
    return
  }
  func.func @transform_0(%arg0: i32) -> (i32, i32) {
    %c0_i32 = arith.constant 0 : i32
    %c0_i32_0 = arith.constant 0 : i32
    return %arg0, %c0_i32 : i32, i32
  }
  func.func @transform_1(%arg0: i32) -> (i32, i32) {
    %c0_i32 = arith.constant 0 : i32
    %c0_i32_0 = arith.constant 0 : i32
    %c0_i32_1 = arith.constant 0 : i32
    return %c0_i32, %c0_i32_0 : i32, i32
  }
  func.func @transform_2(%arg0: i32) -> (i32, i32) {
    %c0_i32 = arith.constant 0 : i32
    %c0_i32_0 = arith.constant 0 : i32
    %c0_i32_1 = arith.constant 0 : i32
    return %c0_i32, %c0_i32_0 : i32, i32
  }
  func.func @transform_3(%arg0: i32) -> (i32, i32) {
    %c0_i32 = arith.constant 0 : i32
    %c0_i32_0 = arith.constant 0 : i32
    %c0_i32_1 = arith.constant 0 : i32
    return %c0_i32, %c0_i32_0 : i32, i32
  }
  func.func @transform_4(%arg0: i32) -> (i32, i32) {
    %c0_i32 = arith.constant 0 : i32
    %c0_i32_0 = arith.constant 0 : i32
    return %arg0, %c0_i32 : i32, i32
  }
}

module attributes {stable_mosaic.version = 11 : i64} {
  func.func @_fc_kernel(%arg0: i32, %arg1: memref<4x2048xbf16, #tpu.memory_space<vmem>>, %arg2: memref<2048x128xbf16, #tpu.memory_space<vmem>>, %arg3: memref<1x128xf32, #tpu.memory_space<vmem>>, %arg4: memref<4x128xf32, #tpu.memory_space<vmem>>) attributes {dimension_semantics = [#tpu.dimension_semantics<parallel>], iteration_bounds = array<i64: 1>, scalar_prefetch = 0 : i64, scratch_operands = 0 : i64, tpu.core_type = #tpu.core_type<tc>, window_params = [{transform_indices = @transform_0, window_bounds = array<i64: 4, 2048>}, {pipeline_mode = #tpu.pipeline_mode<synchronous>, transform_indices = @transform_1, window_bounds = array<i64: 2048, 128>}, {pipeline_mode = #tpu.pipeline_mode<synchronous>, transform_indices = @transform_2, window_bounds = array<i64: 1, 128>}, {transform_indices = @transform_3, window_bounds = array<i64: 4, 128>}]} {
    %c0 = arith.constant 0 : index
    %c0_0 = arith.constant 0 : index
    %0 = vector.load %arg1[%c0, %c0_0] : memref<4x2048xbf16, #tpu.memory_space<vmem>>, vector<4x2048xbf16>
    %c0_1 = arith.constant 0 : index
    %c0_2 = arith.constant 0 : index
    %1 = vector.load %arg2[%c0_1, %c0_2] : memref<2048x128xbf16, #tpu.memory_space<vmem>>, vector<2048x128xbf16>
    %cst = arith.constant dense<0.000000e+00> : vector<4x128xf32>
    %2 = tpu.matmul %0, %1, %cst {dimension_numbers = #tpu.dot_dimension_numbers<[1], [0], [0], [1], [0, 0, 1, 1], [], []>} : vector<4x2048xbf16>, vector<2048x128xbf16>, vector<4x128xf32> -> vector<4x128xf32>
    %c0_3 = arith.constant 0 : index
    %c0_4 = arith.constant 0 : index
    %3 = vector.load %arg3[%c0_3, %c0_4] : memref<1x128xf32, #tpu.memory_space<vmem>>, vector<1x128xf32>
    %4 = vector.broadcast %3 : vector<1x128xf32> to vector<4x128xf32>
    %5 = arith.addf %2, %4 : vector<4x128xf32>
    %c0_5 = arith.constant 0 : index
    %c0_6 = arith.constant 0 : index
    %6 = vector.load %arg4[%c0_5, %c0_6] : memref<4x128xf32, #tpu.memory_space<vmem>>, vector<4x128xf32>
    tpu.vector_store %arg4[%c0_5, %c0_6], %5 {strides = array<i32>} : memref<4x128xf32, #tpu.memory_space<vmem>>, vector<4x128xf32>,
    return
  }
  func.func @transform_0(%arg0: i32) -> (i32, i32) {
    %c0_i32 = arith.constant 0 : i32
    %c0_i32_0 = arith.constant 0 : i32
    return %arg0, %c0_i32 : i32, i32
  }
  func.func @transform_1(%arg0: i32) -> (i32, i32) {
    %c0_i32 = arith.constant 0 : i32
    %c0_i32_0 = arith.constant 0 : i32
    %c0_i32_1 = arith.constant 0 : i32
    return %c0_i32, %c0_i32_0 : i32, i32
  }
  func.func @transform_2(%arg0: i32) -> (i32, i32) {
    %c0_i32 = arith.constant 0 : i32
    %c0_i32_0 = arith.constant 0 : i32
    %c0_i32_1 = arith.constant 0 : i32
    return %c0_i32, %c0_i32_0 : i32, i32
  }
  func.func @transform_3(%arg0: i32) -> (i32, i32) {
    %c0_i32 = arith.constant 0 : i32
    %c0_i32_0 = arith.constant 0 : i32
    return %arg0, %c0_i32 : i32, i32
  }
}

</mosaic_0001>

<llo_original>
// kernel: cnn_forward.4
$region0: #{cnn_forward.4}
  #allocation0 [shape = 'u32[]', space=smem, size = 0x4, offset = 0x4, fixed_abs, tag = 'smem constant byte address 0x4 - core index']
  #allocation1 [shape = 'u32[72,128]{1,0:T(1,128)}', space=vmem, size = 0x9000, scoped, tag = 'internal scratch']
  #allocation2 [shape = 'f32[2048,128]{1,0:T(8,128)}', space=vmem, size = 0x100000, scoped, tag = 'scratch operand']
  #allocation3 [shape = 'f32[1024,128]{1,0:T(8,128)}', space=vmem, size = 0x80000, scoped, tag = 'scratch operand']
  %s0 = inlined_call_operand.vmem [shape: bf16[4096,27], index: 0, kind: input, shape index: {}]
  %s1 = inlined_call_operand.vmem [shape: bf16[27,128], index: 1, kind: input, shape index: {}]
  %s2 = inlined_call_operand.vmem [shape: f32[1,128], index: 2, kind: input, shape index: {}]
  %s3 = inlined_call_operand.vmem [shape: f32[1,128], index: 3, kind: input, shape index: {}]
  %s4 = inlined_call_operand.vmem [shape: f32[1024,128], index: 4, kind: output, shape index: {}]
  %s5 = sld [smem:[#allocation0]]
  $region49: #{cnn_forward.4} parent=0
    _
  %s7 = ssub.s32 1, %s5
  %s8 = scalar_select 0, %s7, %s5
  loop: start=0, step=1, limit=4
  $region2: #{cnn_forward.4} parent=0 // loop_pre_header
    _
  $region3: #{cnn_forward.4} parent=0 // loop_header
    %s10 = sphi 0, %s14
    %p11 = scmp.ge.s32.totalorder %s10, 4
    %s20 = sphi 0, %s22
    %s23 = sphi 0, %s20
    %s24 = sphi 0, %s23
    %s40 = sphi 0, %s24
    %s44 = sphi 0, %s44
    %s46 = sphi 0, %s44
    %s47 = sphi 0, %s46
    %s61 = sphi 0, %s47
    %s65 = sphi 0, %s65
    %s67 = sphi 0, %s65
    %s68 = sphi 0, %s67
    %s82 = sphi 0, %s68
    %s86 = sphi 0, %s86
    %s88 = sphi 0, %s86
    %s89 = sphi 0, %s88
    %s103 = sphi 0, %s89
    %s109 = sphi 0, %s111
    %s112 = sphi 0, %s109
    %s113 = sphi 0, %s112
    %s129 = sphi 0, %s113
  $region4: #{cnn_forward.4} parent=0 // loop_header_branch
    %13 = sbr.rel (%p11) target = $region8
  $region5: #{cnn_forward.4} parent=0 // loop_body
    %s15 = ssub.s32 %s10, 1
    %s16 = ssub.s32 %s10, 2
    %s17 = sadd.s32 %s10, 1
    %s18 = ssub.s32 %s10, %s17
    %p19 = scmp.eq.s32.totalorder %s18, 0
    %s21 = sadd.s32 %s20, 1
    %s22 = scalar_select %p19, %s20, %s21
    %p25 = pneg %p19
    %p26 = scmp.eq.s32.totalorder %s10, 1
    %p27 = por %p25, %p26
    %p28 = scmp.ne.s32.totalorder %s20, %s23
    %p29 = scmp.eq.s32.totalorder %s10, 0
    %p30 = por %p28, %p29
    %p31 = scmp.ne.s32.totalorder %s20, %s23
    %p32 = scmp.eq.s32.totalorder %s15, 1
    %p33 = por %p31, %p32
    %p34 = scmp.ne.s32.totalorder %s23, %s24
    %p35 = scmp.eq.s32.totalorder %s15, 0
    %p36 = por %p34, %p35
    %p37 = scmp.ne.s32.totalorder %s23, %s24
    %p38 = scmp.eq.s32.totalorder %s16, 1
    %p39 = por %p37, %p38
    %p41 = scmp.ne.s32.totalorder %s24, %s40
    %p42 = scmp.eq.s32.totalorder %s16, 0
    %p43 = por %p41, %p42
    %s45 = sadd.s32 %s44, 1
    %p48 = scmp.eq.s32.totalorder %s10, 1
    %p49 = scmp.ne.s32.totalorder %s44, %s46
    %p50 = scmp.eq.s32.totalorder %s10, 0
    %p51 = por %p49, %p50
    %p52 = scmp.ne.s32.totalorder %s44, %s46
    %p53 = scmp.eq.s32.totalorder %s15, 1
    %p54 = por %p52, %p53
    %p55 = scmp.ne.s32.totalorder %s46, %s47
    %p56 = scmp.eq.s32.totalorder %s15, 0
    %p57 = por %p55, %p56
    %p58 = scmp.ne.s32.totalorder %s46, %s47
    %p59 = scmp.eq.s32.totalorder %s16, 1
    %p60 = por %p58, %p59
    %p62 = scmp.ne.s32.totalorder %s47, %s61
    %p63 = scmp.eq.s32.totalorder %s16, 0
    %p64 = por %p62, %p63
    %s66 = sadd.s32 %s65, 1
    %p69 = scmp.eq.s32.totalorder %s10, 1
    %p70 = scmp.ne.s32.totalorder %s65, %s67
    %p71 = scmp.eq.s32.totalorder %s10, 0
    %p72 = por %p70, %p71
    %p73 = scmp.ne.s32.totalorder %s65, %s67
    %p74 = scmp.eq.s32.totalorder %s15, 1
    %p75 = por %p73, %p74
    %p76 = scmp.ne.s32.totalorder %s67, %s68
    %p77 = scmp.eq.s32.totalorder %s15, 0
    %p78 = por %p76, %p77
    %p79 = scmp.ne.s32.totalorder %s67, %s68
    %p80 = scmp.eq.s32.totalorder %s16, 1
    %p81 = por %p79, %p80
    %p83 = scmp.ne.s32.totalorder %s68, %s82
    %p84 = scmp.eq.s32.totalorder %s16, 0
    %p85 = por %p83, %p84
    %s87 = sadd.s32 %s86, 1
    %p90 = scmp.eq.s32.totalorder %s10, 1
    %p91 = scmp.ne.s32.totalorder %s86, %s88
    %p92 = scmp.eq.s32.totalorder %s10, 0
    %p93 = por %p91, %p92
    %p94 = scmp.ne.s32.totalorder %s86, %s88
    %p95 = scmp.eq.s32.totalorder %s15, 1
    %p96 = por %p94, %p95
    %p97 = scmp.ne.s32.totalorder %s88, %s89
    %p98 = scmp.eq.s32.totalorder %s15, 0
    %p99 = por %p97, %p98
    %p100 = scmp.ne.s32.totalorder %s88, %s89
    %p101 = scmp.eq.s32.totalorder %s16, 1
    %p102 = por %p100, %p101
    %p104 = scmp.ne.s32.totalorder %s89, %s103
    %p105 = scmp.eq.s32.totalorder %s16, 0
    %p106 = por %p104, %p105
    %s107 = ssub.s32 %s10, %s17
    %p108 = scmp.eq.s32.totalorder %s107, 0
    %s110 = sadd.s32 %s109, 1
    %s111 = scalar_select %p108, %s109, %s110
    %p114 = pneg %p108
    %p115 = scmp.eq.s32.totalorder %s10, 1
    %p116 = por %p114, %p115
    %p117 = scmp.ne.s32.totalorder %s109, %s112
    %p118 = scmp.eq.s32.totalorder %s10, 0
    %p119 = por %p117, %p118
    %p120 = scmp.ne.s32.totalorder %s109, %s112
    %p121 = scmp.eq.s32.totalorder %s15, 1
    %p122 = por %p120, %p121
    %p123 = scmp.ne.s32.totalorder %s112, %s113
    %p124 = scmp.eq.s32.totalorder %s15, 0
    %p125 = por %p123, %p124
    %p126 = scmp.ne.s32.totalorder %s112, %s113
    %p127 = scmp.eq.s32.totalorder %s16, 1
    %p128 = por %p126, %p127
    %p130 = scmp.ne.s32.totalorder %s113, %s129
    %p131 = scmp.eq.s32.totalorder %s16, 0
    %p132 = por %p130, %p131
    %p133 = scmp.le.s32.totalorder 1, %s10
    %p134 = scmp.lt.s32.totalorder %s10, 3
    %p135 = pnand %p133, %p134
    %p136 = pneg %p135
    // Predicated region
    $region9: #{cnn_forward.4} parent=5 // pred_check
      _
    $region10: #{cnn_forward.4} parent=5 // pred_check_branch
      %138 = sbr.rel (%p135) target = $region12
    $region11: #{cnn_forward.4} parent=5 // pred_region
      %s139 = ssub.s32 %s10, 1
      // Predicated region
      $region13: #{cnn_forward.4} parent=11 // pred_check
        %p140 = pneg %p57
      $region14: #{cnn_forward.4} parent=11 // pred_check_branch
        %142 = sbr.rel (%p140) target = $region16
      $region15: #{cnn_forward.4} parent=11 // pred_region
        _
      $region16: #{cnn_forward.4} parent=11 // pred_fallthru
        _
      // Predicated region
      $region17: #{cnn_forward.4} parent=11 // pred_check
        %p143 = pneg %p78
      $region18: #{cnn_forward.4} parent=11 // pred_check_branch
        %145 = sbr.rel (%p143) target = $region20
      $region19: #{cnn_forward.4} parent=11 // pred_region
        _
      $region20: #{cnn_forward.4} parent=11 // pred_fallthru
        _
      // Predicated region
      $region21: #{cnn_forward.4} parent=11 // pred_check
        %p146 = pneg %p99
      $region22: #{cnn_forward.4} parent=11 // pred_check_branch
        %148 = sbr.rel (%p146) target = $region24
      $region23: #{cnn_forward.4} parent=11 // pred_region
        _
      $region24: #{cnn_forward.4} parent=11 // pred_fallthru
        _
    $region12: #{cnn_forward.4} parent=5 // pred_fallthru
      _
    %p149 = scmp.lt.s32.totalorder %s10, 2
    // Predicated region
    $region25: #{cnn_forward.4} parent=5 // pred_check
      %p150 = pneg %p149
    $region26: #{cnn_forward.4} parent=5 // pred_check_branch
      %152 = sbr.rel (%p150) target = $region28
    $region27: #{cnn_forward.4} parent=5 // pred_region
      // Predicated region
      $region29: #{cnn_forward.4} parent=27 // pred_check
        %p153 = pneg %p30
      $region30: #{cnn_forward.4} parent=27 // pred_check_branch
        %155 = sbr.rel (%p153) target = $region32
      $region31: #{cnn_forward.4} parent=27 // pred_region
        %s156 = smul.u32 256, %s10
        %p157 = scmp.lt.s32.totalorder %s156, 511
        %s158 = scalar_select %p157, %s156, 511
        %s159 = smul.addr %s158, 4
        %s160 = scalar_lea.vmem %s0, %s159
        %s161 = smul.u32 256, %s10
      $region32: #{cnn_forward.4} parent=27 // pred_fallthru
        _
    $region28: #{cnn_forward.4} parent=5 // pred_fallthru
      _
    %p162 = scmp.le.s32.totalorder 1, %s10
    %p163 = scmp.lt.s32.totalorder %s10, 3
    %p164 = pnand %p162, %p163
    %p165 = pneg %p164
    // Predicated region
    $region33: #{cnn_forward.4} parent=5 // pred_check
      _
    $region34: #{cnn_forward.4} parent=5 // pred_check_branch
      %167 = sbr.rel (%p164) target = $region36
    $region35: #{cnn_forward.4} parent=5 // pred_region
      %s168 = ssub.s32 %s10, 1
      %s169 = smul.u32 256, %s15
      %p170 = scmp.lt.s32.totalorder %s169, 511
      %s171 = scalar_select %p170, %s169, 511
      %s172 = smul.addr %s171, 4
      %s173 = scalar_lea.vmem %s0, %s172
      %p174 = pneg %p36
      %p175 = pneg %p33
      %p176 = pneg %p57
      %p177 = pneg %p54
      %p178 = pneg %p78
      %p179 = pneg %p75
      %p180 = pneg %p99
      %p181 = pneg %p96
      %p182 = pneg %p125
      %p183 = pneg %p122
      %s184 = smul.u32 64, %s15
      %p185 = scmp.lt.s32.totalorder %s184, 127
      %s186 = scalar_select %p185, %s184, 127
      %s187 = smul.addr %s186, 8
      %s188 = scalar_lea.vmem %s4, %s187
      %s189 = smul.u32 256, %s15
      %p190 = scmp.lt.s32.totalorder %s189, 511
      %s191 = scalar_select %p190, %s189, 511
      %s192 = smul.addr %s191, 4
      %s193 = scalar_lea.vmem %s0, %s192
      %s194 = smul.u32 256, %s15
      %s195 = smul.u32 64, %s15
      %p196 = scmp.lt.s32.totalorder %s195, 127
      %s197 = scalar_select %p196, %s195, 127
      %s198 = smul.addr %s197, 8
      %s199 = scalar_lea.vmem %s4, %s198
      %s200 = smul.u32 64, %s15
      %v202 = vld [vmem:[%s193] sm:$0xf]
      %v203 = vld [vmem:[%s193 + $0x4] sm:$0xf]
      %v204 = vld [vmem:[%s193 + $0x8] sm:$0xf]
      %v205 = vld [vmem:[%s193 + $0xc] sm:$0xf]
      %v206 = vld [vmem:[%s193 + $0x10] sm:$0xf]
      %v207 = vld [vmem:[%s193 + $0x14] sm:$0xf]
      %v208 = vld [vmem:[%s193 + $0x18] sm:$0xf]
      %v209 = vld [vmem:[%s193 + $0x1c] sm:$0xf]
      %v210 = vld [vmem:[%s193 + $0x20] sm:$0xf]
      %v211 = vld [vmem:[%s193 + $0x24] sm:$0xf]
      %v212 = vld [vmem:[%s193 + $0x28] sm:$0xf]
      %v213 = vld [vmem:[%s193 + $0x2c] sm:$0xf]
      %v214 = vld [vmem:[%s193 + $0x30] sm:$0xf]
      %v215 = vld [vmem:[%s193 + $0x34] sm:$0xf]
      %v216 = vld [vmem:[%s193 + $0x38] sm:$0xf]
      %v217 = vld [vmem:[%s193 + $0x3c] sm:$0xf]
      %v218 = vld [vmem:[%s193 + $0x40] sm:$0xf]
      %v219 = vld [vmem:[%s193 + $0x44] sm:$0xf]
      %v220 = vld [vmem:[%s193 + $0x48] sm:$0xf]
      %v221 = vld [vmem:[%s193 + $0x4c] sm:$0xf]
      %v222 = vld [vmem:[%s193 + $0x50] sm:$0xf]
      %v223 = vld [vmem:[%s193 + $0x54] sm:$0xf]
      %v224 = vld [vmem:[%s193 + $0x58] sm:$0xf]
      %v225 = vld [vmem:[%s193 + $0x5c] sm:$0xf]
      %v226 = vld [vmem:[%s193 + $0x60] sm:$0xf]
      %v227 = vld [vmem:[%s193 + $0x64] sm:$0xf]
      %v228 = vld [vmem:[%s193 + $0x68] sm:$0xf]
      %v229 = vld [vmem:[%s193 + $0x6c] sm:$0xf]
      %v230 = vld [vmem:[%s193 + $0x70] sm:$0xf]
      %v231 = vld [vmem:[%s193 + $0x74] sm:$0xf]
      %v232 = vld [vmem:[%s193 + $0x78] sm:$0xf]
      %v233 = vld [vmem:[%s193 + $0x7c] sm:$0xf]
      %v234 = vld [vmem:[%s193 + $0x80] sm:$0xf]
      %v235 = vld [vmem:[%s193 + $0x84] sm:$0xf]
      %v236 = vld [vmem:[%s193 + $0x88] sm:$0xf]
      %v237 = vld [vmem:[%s193 + $0x8c] sm:$0xf]
      %v238 = vld [vmem:[%s193 + $0x90] sm:$0xf]
      %v239 = vld [vmem:[%s193 + $0x94] sm:$0xf]
      %v240 = vld [vmem:[%s193 + $0x98] sm:$0xf]
      %v241 = vld [vmem:[%s193 + $0x9c] sm:$0xf]
      %v242 = vld [vmem:[%s193 + $0xa0] sm:$0xf]
      %v243 = vld [vmem:[%s193 + $0xa4] sm:$0xf]
      %v244 = vld [vmem:[%s193 + $0xa8] sm:$0xf]
      %v245 = vld [vmem:[%s193 + $0xac] sm:$0xf]
      %v246 = vld [vmem:[%s193 + $0xb0] sm:$0xf]
      %v247 = vld [vmem:[%s193 + $0xb4] sm:$0xf]
      %v248 = vld [vmem:[%s193 + $0xb8] sm:$0xf]
      %v249 = vld [vmem:[%s193 + $0xbc] sm:$0xf]
      %v250 = vld [vmem:[%s193 + $0xc0] sm:$0xf]
      %v251 = vld [vmem:[%s193 + $0xc4] sm:$0xf]
      %v252 = vld [vmem:[%s193 + $0xc8] sm:$0xf]
      %v253 = vld [vmem:[%s193 + $0xcc] sm:$0xf]
      %v254 = vld [vmem:[%s193 + $0xd0] sm:$0xf]
      %v255 = vld [vmem:[%s193 + $0xd4] sm:$0xf]
      %v256 = vld [vmem:[%s193 + $0xd8] sm:$0xf]
      %v257 = vld [vmem:[%s193 + $0xdc] sm:$0xf]
      %v258 = vld [vmem:[%s193 + $0xe0] sm:$0xf]
      %v259 = vld [vmem:[%s193 + $0xe4] sm:$0xf]
      %v260 = vld [vmem:[%s193 + $0xe8] sm:$0xf]
      %v261 = vld [vmem:[%s193 + $0xec] sm:$0xf]
      %v262 = vld [vmem:[%s193 + $0xf0] sm:$0xf]
      %v263 = vld [vmem:[%s193 + $0xf4] sm:$0xf]
      %v264 = vld [vmem:[%s193 + $0xf8] sm:$0xf]
      %v265 = vld [vmem:[%s193 + $0xfc] sm:$0xf]
      %v266 = vld [vmem:[%s193 + $0x100] sm:$0xf]
      %v267 = vld [vmem:[%s193 + $0x104] sm:$0xf]
      %v268 = vld [vmem:[%s193 + $0x108] sm:$0xf]
      %v269 = vld [vmem:[%s193 + $0x10c] sm:$0xf]
      %v270 = vld [vmem:[%s193 + $0x110] sm:$0xf]
      %v271 = vld [vmem:[%s193 + $0x114] sm:$0xf]
      %v272 = vld [vmem:[%s193 + $0x118] sm:$0xf]
      %v273 = vld [vmem:[%s193 + $0x11c] sm:$0xf]
      %v274 = vld [vmem:[%s193 + $0x120] sm:$0xf]
      %v275 = vld [vmem:[%s193 + $0x124] sm:$0xf]
      %v276 = vld [vmem:[%s193 + $0x128] sm:$0xf]
      %v277 = vld [vmem:[%s193 + $0x12c] sm:$0xf]
      %v278 = vld [vmem:[%s193 + $0x130] sm:$0xf]
      %v279 = vld [vmem:[%s193 + $0x134] sm:$0xf]
      %v280 = vld [vmem:[%s193 + $0x138] sm:$0xf]
      %v281 = vld [vmem:[%s193 + $0x13c] sm:$0xf]
      %v282 = vld [vmem:[%s193 + $0x140] sm:$0xf]
      %v283 = vld [vmem:[%s193 + $0x144] sm:$0xf]
      %v284 = vld [vmem:[%s193 + $0x148] sm:$0xf]
      %v285 = vld [vmem:[%s193 + $0x14c] sm:$0xf]
      %v286 = vld [vmem:[%s193 + $0x150] sm:$0xf]
      %v287 = vld [vmem:[%s193 + $0x154] sm:$0xf]
      %v288 = vld [vmem:[%s193 + $0x158] sm:$0xf]
      %v289 = vld [vmem:[%s193 + $0x15c] sm:$0xf]
      %v290 = vld [vmem:[%s193 + $0x160] sm:$0xf]
      %v291 = vld [vmem:[%s193 + $0x164] sm:$0xf]
      %v292 = vld [vmem:[%s193 + $0x168] sm:$0xf]
      %v293 = vld [vmem:[%s193 + $0x16c] sm:$0xf]
      %v294 = vld [vmem:[%s193 + $0x170] sm:$0xf]
      %v295 = vld [vmem:[%s193 + $0x174] sm:$0xf]
      %v296 = vld [vmem:[%s193 + $0x178] sm:$0xf]
      %v297 = vld [vmem:[%s193 + $0x17c] sm:$0xf]
      %v298 = vld [vmem:[%s193 + $0x180] sm:$0xf]
      %v299 = vld [vmem:[%s193 + $0x184] sm:$0xf]
      %v300 = vld [vmem:[%s193 + $0x188] sm:$0xf]
      %v301 = vld [vmem:[%s193 + $0x18c] sm:$0xf]
      %v302 = vld [vmem:[%s193 + $0x190] sm:$0xf]
      %v303 = vld [vmem:[%s193 + $0x194] sm:$0xf]
      %v304 = vld [vmem:[%s193 + $0x198] sm:$0xf]
      %v305 = vld [vmem:[%s193 + $0x19c] sm:$0xf]
      %v306 = vld [vmem:[%s193 + $0x1a0] sm:$0xf]
      %v307 = vld [vmem:[%s193 + $0x1a4] sm:$0xf]
      %v308 = vld [vmem:[%s193 + $0x1a8] sm:$0xf]
      %v309 = vld [vmem:[%s193 + $0x1ac] sm:$0xf]
      %v310 = vld [vmem:[%s193 + $0x1b0] sm:$0xf]
      %v311 = vld [vmem:[%s193 + $0x1b4] sm:$0xf]
      %v312 = vld [vmem:[%s193 + $0x1b8] sm:$0xf]
      %v313 = vld [vmem:[%s193 + $0x1bc] sm:$0xf]
      %v314 = vld [vmem:[%s193 + $0x1c0] sm:$0xf]
      %v315 = vld [vmem:[%s193 + $0x1c4] sm:$0xf]
      %v316 = vld [vmem:[%s193 + $0x1c8] sm:$0xf]
      %v317 = vld [vmem:[%s193 + $0x1cc] sm:$0xf]
      %v318 = vld [vmem:[%s193 + $0x1d0] sm:$0xf]
      %v319 = vld [vmem:[%s193 + $0x1d4] sm:$0xf]
      %v320 = vld [vmem:[%s193 + $0x1d8] sm:$0xf]
      %v321 = vld [vmem:[%s193 + $0x1dc] sm:$0xf]
      %v322 = vld [vmem:[%s193 + $0x1e0] sm:$0xf]
      %v323 = vld [vmem:[%s193 + $0x1e4] sm:$0xf]
      %v324 = vld [vmem:[%s193 + $0x1e8] sm:$0xf]
      %v325 = vld [vmem:[%s193 + $0x1ec] sm:$0xf]
      %v326 = vld [vmem:[%s193 + $0x1f0] sm:$0xf]
      %v327 = vld [vmem:[%s193 + $0x1f4] sm:$0xf]
      %v328 = vld [vmem:[%s193 + $0x1f8] sm:$0xf]
      %v329 = vld [vmem:[%s193 + $0x1fc] sm:$0xf]
      %v330 = vld [vmem:[%s193 + $0x200] sm:$0xf]
      %v331 = vld [vmem:[%s193 + $0x204] sm:$0xf]
      %v332 = vld [vmem:[%s193 + $0x208] sm:$0xf]
      %v333 = vld [vmem:[%s193 + $0x20c] sm:$0xf]
      %v334 = vld [vmem:[%s193 + $0x210] sm:$0xf]
      %v335 = vld [vmem:[%s193 + $0x214] sm:$0xf]
      %v336 = vld [vmem:[%s193 + $0x218] sm:$0xf]
      %v337 = vld [vmem:[%s193 + $0x21c] sm:$0xf]
      %v338 = vld [vmem:[%s193 + $0x220] sm:$0xf]
      %v339 = vld [vmem:[%s193 + $0x224] sm:$0xf]
      %v340 = vld [vmem:[%s193 + $0x228] sm:$0xf]
      %v341 = vld [vmem:[%s193 + $0x22c] sm:$0xf]
      %v342 = vld [vmem:[%s193 + $0x230] sm:$0xf]
      %v343 = vld [vmem:[%s193 + $0x234] sm:$0xf]
      %v344 = vld [vmem:[%s193 + $0x238] sm:$0xf]
      %v345 = vld [vmem:[%s193 + $0x23c] sm:$0xf]
      %v346 = vld [vmem:[%s193 + $0x240] sm:$0xf]
      %v347 = vld [vmem:[%s193 + $0x244] sm:$0xf]
      %v348 = vld [vmem:[%s193 + $0x248] sm:$0xf]
      %v349 = vld [vmem:[%s193 + $0x24c] sm:$0xf]
      %v350 = vld [vmem:[%s193 + $0x250] sm:$0xf]
      %v351 = vld [vmem:[%s193 + $0x254] sm:$0xf]
      %v352 = vld [vmem:[%s193 + $0x258] sm:$0xf]
      %v353 = vld [vmem:[%s193 + $0x25c] sm:$0xf]
      %v354 = vld [vmem:[%s193 + $0x260] sm:$0xf]
      %v355 = vld [vmem:[%s193 + $0x264] sm:$0xf]
      %v356 = vld [vmem:[%s193 + $0x268] sm:$0xf]
      %v357 = vld [vmem:[%s193 + $0x26c] sm:$0xf]
      %v358 = vld [vmem:[%s193 + $0x270] sm:$0xf]
      %v359 = vld [vmem:[%s193 + $0x274] sm:$0xf]
      %v360 = vld [vmem:[%s193 + $0x278] sm:$0xf]
      %v361 = vld [vmem:[%s193 + $0x27c] sm:$0xf]
      %v362 = vld [vmem:[%s193 + $0x280] sm:$0xf]
      %v363 = vld [vmem:[%s193 + $0x284] sm:$0xf]
      %v364 = vld [vmem:[%s193 + $0x288] sm:$0xf]
      %v365 = vld [vmem:[%s193 + $0x28c] sm:$0xf]
      %v366 = vld [vmem:[%s193 + $0x290] sm:$0xf]
      %v367 = vld [vmem:[%s193 + $0x294] sm:$0xf]
      %v368 = vld [vmem:[%s193 + $0x298] sm:$0xf]
      %v369 = vld [vmem:[%s193 + $0x29c] sm:$0xf]
      %v370 = vld [vmem:[%s193 + $0x2a0] sm:$0xf]
      %v371 = vld [vmem:[%s193 + $0x2a4] sm:$0xf]
      %v372 = vld [vmem:[%s193 + $0x2a8] sm:$0xf]
      %v373 = vld [vmem:[%s193 + $0x2ac] sm:$0xf]
      %v374 = vld [vmem:[%s193 + $0x2b0] sm:$0xf]
      %v375 = vld [vmem:[%s193 + $0x2b4] sm:$0xf]
      %v376 = vld [vmem:[%s193 + $0x2b8] sm:$0xf]
      %v377 = vld [vmem:[%s193 + $0x2bc] sm:$0xf]
      %v378 = vld [vmem:[%s193 + $0x2c0] sm:$0xf]
      %v379 = vld [vmem:[%s193 + $0x2c4] sm:$0xf]
      %v380 = vld [vmem:[%s193 + $0x2c8] sm:$0xf]
      %v381 = vld [vmem:[%s193 + $0x2cc] sm:$0xf]
      %v382 = vld [vmem:[%s193 + $0x2d0] sm:$0xf]
      %v383 = vld [vmem:[%s193 + $0x2d4] sm:$0xf]
      %v384 = vld [vmem:[%s193 + $0x2d8] sm:$0xf]
      %v385 = vld [vmem:[%s193 + $0x2dc] sm:$0xf]
      %v386 = vld [vmem:[%s193 + $0x2e0] sm:$0xf]
      %v387 = vld [vmem:[%s193 + $0x2e4] sm:$0xf]
      %v388 = vld [vmem:[%s193 + $0x2e8] sm:$0xf]
      %v389 = vld [vmem:[%s193 + $0x2ec] sm:$0xf]
      %v390 = vld [vmem:[%s193 + $0x2f0] sm:$0xf]
      %v391 = vld [vmem:[%s193 + $0x2f4] sm:$0xf]
      %v392 = vld [vmem:[%s193 + $0x2f8] sm:$0xf]
      %v393 = vld [vmem:[%s193 + $0x2fc] sm:$0xf]
      %v394 = vld [vmem:[%s193 + $0x300] sm:$0xf]
      %v395 = vld [vmem:[%s193 + $0x304] sm:$0xf]
      %v396 = vld [vmem:[%s193 + $0x308] sm:$0xf]
      %v397 = vld [vmem:[%s193 + $0x30c] sm:$0xf]
      %v398 = vld [vmem:[%s193 + $0x310] sm:$0xf]
      %v399 = vld [vmem:[%s193 + $0x314] sm:$0xf]
      %v400 = vld [vmem:[%s193 + $0x318] sm:$0xf]
      %v401 = vld [vmem:[%s193 + $0x31c] sm:$0xf]
      %v402 = vld [vmem:[%s193 + $0x320] sm:$0xf]
      %v403 = vld [vmem:[%s193 + $0x324] sm:$0xf]
      %v404 = vld [vmem:[%s193 + $0x328] sm:$0xf]
      %v405 = vld [vmem:[%s193 + $0x32c] sm:$0xf]
      %v406 = vld [vmem:[%s193 + $0x330] sm:$0xf]
      %v407 = vld [vmem:[%s193 + $0x334] sm:$0xf]
      %v408 = vld [vmem:[%s193 + $0x338] sm:$0xf]
      %v409 = vld [vmem:[%s193 + $0x33c] sm:$0xf]
      %v410 = vld [vmem:[%s193 + $0x340] sm:$0xf]
      %v411 = vld [vmem:[%s193 + $0x344] sm:$0xf]
      %v412 = vld [vmem:[%s193 + $0x348] sm:$0xf]
      %v413 = vld [vmem:[%s193 + $0x34c] sm:$0xf]
      %v414 = vld [vmem:[%s193 + $0x350] sm:$0xf]
      %v415 = vld [vmem:[%s193 + $0x354] sm:$0xf]
      %v416 = vld [vmem:[%s193 + $0x358] sm:$0xf]
      %v417 = vld [vmem:[%s193 + $0x35c] sm:$0xf]
      %v418 = vld [vmem:[%s193 + $0x360] sm:$0xf]
      %v419 = vld [vmem:[%s193 + $0x364] sm:$0xf]
      %v420 = vld [vmem:[%s193 + $0x368] sm:$0xf]
      %v421 = vld [vmem:[%s193 + $0x36c] sm:$0xf]
      %v422 = vld [vmem:[%s193 + $0x370] sm:$0xf]
      %v423 = vld [vmem:[%s193 + $0x374] sm:$0xf]
      %v424 = vld [vmem:[%s193 + $0x378] sm:$0xf]
      %v425 = vld [vmem:[%s193 + $0x37c] sm:$0xf]
      %v426 = vld [vmem:[%s193 + $0x380] sm:$0xf]
      %v427 = vld [vmem:[%s193 + $0x384] sm:$0xf]
      %v428 = vld [vmem:[%s193 + $0x388] sm:$0xf]
      %v429 = vld [vmem:[%s193 + $0x38c] sm:$0xf]
      %v430 = vld [vmem:[%s193 + $0x390] sm:$0xf]
      %v431 = vld [vmem:[%s193 + $0x394] sm:$0xf]
      %v432 = vld [vmem:[%s193 + $0x398] sm:$0xf]
      %v433 = vld [vmem:[%s193 + $0x39c] sm:$0xf]
      %v434 = vld [vmem:[%s193 + $0x3a0] sm:$0xf]
      %v435 = vld [vmem:[%s193 + $0x3a4] sm:$0xf]
      %v436 = vld [vmem:[%s193 + $0x3a8] sm:$0xf]
      %v437 = vld [vmem:[%s193 + $0x3ac] sm:$0xf]
      %v438 = vld [vmem:[%s193 + $0x3b0] sm:$0xf]
      %v439 = vld [vmem:[%s193 + $0x3b4] sm:$0xf]
      %v440 = vld [vmem:[%s193 + $0x3b8] sm:$0xf]
      %v441 = vld [vmem:[%s193 + $0x3bc] sm:$0xf]
      %v442 = vld [vmem:[%s193 + $0x3c0] sm:$0xf]
      %v443 = vld [vmem:[%s193 + $0x3c4] sm:$0xf]
      %v444 = vld [vmem:[%s193 + $0x3c8] sm:$0xf]
      %v445 = vld [vmem:[%s193 + $0x3cc] sm:$0xf]
      %v446 = vld [vmem:[%s193 + $0x3d0] sm:$0xf]
      %v447 = vld [vmem:[%s193 + $0x3d4] sm:$0xf]
      %v448 = vld [vmem:[%s193 + $0x3d8] sm:$0xf]
      %v449 = vld [vmem:[%s193 + $0x3dc] sm:$0xf]
      %v450 = vld [vmem:[%s193 + $0x3e0] sm:$0xf]
      %v451 = vld [vmem:[%s193 + $0x3e4] sm:$0xf]
      %v452 = vld [vmem:[%s193 + $0x3e8] sm:$0xf]
      %v453 = vld [vmem:[%s193 + $0x3ec] sm:$0xf]
      %v454 = vld [vmem:[%s193 + $0x3f0] sm:$0xf]
      %v455 = vld [vmem:[%s193 + $0x3f4] sm:$0xf]
      %v456 = vld [vmem:[%s193 + $0x3f8] sm:$0xf]
      %v457 = vld [vmem:[%s193 + $0x3fc] sm:$0xf]
      %v458 = vld [vmem:[%s1] sm:$0xf]
      %v459 = vld [vmem:[%s1 + $0x4] sm:$0xf]
      %v460 = vld [vmem:[%s1 + $0x8] sm:$0xf]
      %v461 = vld [vmem:[%s1 + $0xc] sm:$0x3]
      %v718 = vunpack.c.l.b16 %v202
      %v719 = vunpack.c.l.b16 %v203
      %v720 = vunpack.c.l.b16 %v204
      %v721 = vunpack.c.l.b16 %v205
      %v722 = vunpack.c.l.b16 %v206
      %v723 = vunpack.c.l.b16 %v207
      %v724 = vunpack.c.l.b16 %v208
      %v725 = vunpack.c.l.b16 %v209
      %v726 = vunpack.c.l.b16 %v210
      %v727 = vunpack.c.l.b16 %v211
      %v728 = vunpack.c.l.b16 %v212
      %v729 = vunpack.c.l.b16 %v213
      %v730 = vunpack.c.l.b16 %v214
      %v731 = vunpack.c.l.b16 %v215
      %v732 = vunpack.c.l.b16 %v216
      %v733 = vunpack.c.l.b16 %v217
      %v734 = vunpack.c.l.b16 %v218
      %v735 = vunpack.c.l.b16 %v219
      %v736 = vunpack.c.l.b16 %v220
      %v737 = vunpack.c.l.b16 %v221
      %v738 = vunpack.c.l.b16 %v222
      %v739 = vunpack.c.l.b16 %v223
      %v740 = vunpack.c.l.b16 %v224
      %v741 = vunpack.c.l.b16 %v225
      %v742 = vunpack.c.l.b16 %v226
      %v743 = vunpack.c.l.b16 %v227
      %v744 = vunpack.c.l.b16 %v228
      %v745 = vunpack.c.l.b16 %v229
      %v746 = vunpack.c.l.b16 %v230
      %v747 = vunpack.c.l.b16 %v231
      %v748 = vunpack.c.l.b16 %v232
      %v749 = vunpack.c.l.b16 %v233
      %v750 = vunpack.c.l.b16 %v234
      %v751 = vunpack.c.l.b16 %v235
      %v752 = vunpack.c.l.b16 %v236
      %v753 = vunpack.c.l.b16 %v237
      %v754 = vunpack.c.l.b16 %v238
      %v755 = vunpack.c.l.b16 %v239
      %v756 = vunpack.c.l.b16 %v240
      %v757 = vunpack.c.l.b16 %v241
      %v758 = vunpack.c.l.b16 %v242
      %v759 = vunpack.c.l.b16 %v243
      %v760 = vunpack.c.l.b16 %v244
      %v761 = vunpack.c.l.b16 %v245
      %v762 = vunpack.c.l.b16 %v246
      %v763 = vunpack.c.l.b16 %v247
      %v764 = vunpack.c.l.b16 %v248
      %v765 = vunpack.c.l.b16 %v249
      %v766 = vunpack.c.l.b16 %v250
      %v767 = vunpack.c.l.b16 %v251
      %v768 = vunpack.c.l.b16 %v252
      %v769 = vunpack.c.l.b16 %v253
      %v770 = vunpack.c.l.b16 %v254
      %v771 = vunpack.c.l.b16 %v255
      %v772 = vunpack.c.l.b16 %v256
      %v773 = vunpack.c.l.b16 %v257
      %v774 = vunpack.c.l.b16 %v258
      %v775 = vunpack.c.l.b16 %v259
      %v776 = vunpack.c.l.b16 %v260
      %v777 = vunpack.c.l.b16 %v261
      %v778 = vunpack.c.l.b16 %v262
      %v779 = vunpack.c.l.b16 %v263
      %v780 = vunpack.c.l.b16 %v264
      %v781 = vunpack.c.l.b16 %v265
      %v782 = vunpack.c.l.b16 %v266
      %v783 = vunpack.c.l.b16 %v267
      %v784 = vunpack.c.l.b16 %v268
      %v785 = vunpack.c.l.b16 %v269
      %v786 = vunpack.c.l.b16 %v270
      %v787 = vunpack.c.l.b16 %v271
      %v788 = vunpack.c.l.b16 %v272
      %v789 = vunpack.c.l.b16 %v273
      %v790 = vunpack.c.l.b16 %v274
      %v791 = vunpack.c.l.b16 %v275
      %v792 = vunpack.c.l.b16 %v276
      %v793 = vunpack.c.l.b16 %v277
      %v794 = vunpack.c.l.b16 %v278
      %v795 = vunpack.c.l.b16 %v279
      %v796 = vunpack.c.l.b16 %v280
      %v797 = vunpack.c.l.b16 %v281
      %v798 = vunpack.c.l.b16 %v282
      %v799 = vunpack.c.l.b16 %v283
      %v800 = vunpack.c.l.b16 %v284
      %v801 = vunpack.c.l.b16 %v285
      %v802 = vunpack.c.l.b16 %v286
      %v803 = vunpack.c.l.b16 %v287
      %v804 = vunpack.c.l.b16 %v288
      %v805 = vunpack.c.l.b16 %v289
      %v806 = vunpack.c.l.b16 %v290
      %v807 = vunpack.c.l.b16 %v291
      %v808 = vunpack.c.l.b16 %v292
      %v809 = vunpack.c.l.b16 %v293
      %v810 = vunpack.c.l.b16 %v294
      %v811 = vunpack.c.l.b16 %v295
      %v812 = vunpack.c.l.b16 %v296
      %v813 = vunpack.c.l.b16 %v297
      %v814 = vunpack.c.l.b16 %v298
      %v815 = vunpack.c.l.b16 %v299
      %v816 = vunpack.c.l.b16 %v300
      %v817 = vunpack.c.l.b16 %v301
      %v818 = vunpack.c.l.b16 %v302
      %v819 = vunpack.c.l.b16 %v303
      %v820 = vunpack.c.l.b16 %v304
      %v821 = vunpack.c.l.b16 %v305
      %v822 = vunpack.c.l.b16 %v306
      %v823 = vunpack.c.l.b16 %v307
      %v824 = vunpack.c.l.b16 %v308
      %v825 = vunpack.c.l.b16 %v309
      %v826 = vunpack.c.l.b16 %v310
      %v827 = vunpack.c.l.b16 %v311
      %v828 = vunpack.c.l.b16 %v312
      %v829 = vunpack.c.l.b16 %v313
      %v830 = vunpack.c.l.b16 %v314
      %v831 = vunpack.c.l.b16 %v315
      %v832 = vunpack.c.l.b16 %v316
      %v833 = vunpack.c.l.b16 %v317
      %v834 = vunpack.c.l.b16 %v318
      %v835 = vunpack.c.l.b16 %v319
      %v836 = vunpack.c.l.b16 %v320
      %v837 = vunpack.c.l.b16 %v321
      %v838 = vunpack.c.l.b16 %v322
      %v839 = vunpack.c.l.b16 %v323
      %v840 = vunpack.c.l.b16 %v324
      %v841 = vunpack.c.l.b16 %v325
      %v842 = vunpack.c.l.b16 %v326
      %v843 = vunpack.c.l.b16 %v327
      %v844 = vunpack.c.l.b16 %v328
      %v845 = vunpack.c.l.b16 %v329
      %v846 = vunpack.c.l.b16 %v330
      %v847 = vunpack.c.l.b16 %v331
      %v848 = vunpack.c.l.b16 %v332
      %v849 = vunpack.c.l.b16 %v333
      %v850 = vunpack.c.l.b16 %v334
      %v851 = vunpack.c.l.b16 %v335
      %v852 = vunpack.c.l.b16 %v336
      %v853 = vunpack.c.l.b16 %v337
      %v854 = vunpack.c.l.b16 %v338
      %v855 = vunpack.c.l.b16 %v339
      %v856 = vunpack.c.l.b16 %v340
      %v857 = vunpack.c.l.b16 %v341
      %v858 = vunpack.c.l.b16 %v342
      %v859 = vunpack.c.l.b16 %v343
      %v860 = vunpack.c.l.b16 %v344
      %v861 = vunpack.c.l.b16 %v345
      %v862 = vunpack.c.l.b16 %v346
      %v863 = vunpack.c.l.b16 %v347
      %v864 = vunpack.c.l.b16 %v348
      %v865 = vunpack.c.l.b16 %v349
      %v866 = vunpack.c.l.b16 %v350
      %v867 = vunpack.c.l.b16 %v351
      %v868 = vunpack.c.l.b16 %v352
      %v869 = vunpack.c.l.b16 %v353
      %v870 = vunpack.c.l.b16 %v354
      %v871 = vunpack.c.l.b16 %v355
      %v872 = vunpack.c.l.b16 %v356
      %v873 = vunpack.c.l.b16 %v357
      %v874 = vunpack.c.l.b16 %v358
      %v875 = vunpack.c.l.b16 %v359
      %v876 = vunpack.c.l.b16 %v360
      %v877 = vunpack.c.l.b16 %v361
      %v878 = vunpack.c.l.b16 %v362
      %v879 = vunpack.c.l.b16 %v363
      %v880 = vunpack.c.l.b16 %v364
      %v881 = vunpack.c.l.b16 %v365
      %v882 = vunpack.c.l.b16 %v366
      %v883 = vunpack.c.l.b16 %v367
      %v884 = vunpack.c.l.b16 %v368
      %v885 = vunpack.c.l.b16 %v369
      %v886 = vunpack.c.l.b16 %v370
      %v887 = vunpack.c.l.b16 %v371
      %v888 = vunpack.c.l.b16 %v372
      %v889 = vunpack.c.l.b16 %v373
      %v890 = vunpack.c.l.b16 %v374
      %v891 = vunpack.c.l.b16 %v375
      %v892 = vunpack.c.l.b16 %v376
      %v893 = vunpack.c.l.b16 %v377
      %v894 = vunpack.c.l.b16 %v378
      %v895 = vunpack.c.l.b16 %v379
      %v896 = vunpack.c.l.b16 %v380
      %v897 = vunpack.c.l.b16 %v381
      %v898 = vunpack.c.l.b16 %v382
      %v899 = vunpack.c.l.b16 %v383
      %v900 = vunpack.c.l.b16 %v384
      %v901 = vunpack.c.l.b16 %v385
      %v902 = vunpack.c.l.b16 %v386
      %v903 = vunpack.c.l.b16 %v387
      %v904 = vunpack.c.l.b16 %v388
      %v905 = vunpack.c.l.b16 %v389
      %v906 = vunpack.c.l.b16 %v390
      %v907 = vunpack.c.l.b16 %v391
      %v908 = vunpack.c.l.b16 %v392
      %v909 = vunpack.c.l.b16 %v393
      %v910 = vunpack.c.l.b16 %v394
      %v911 = vunpack.c.l.b16 %v395
      %v912 = vunpack.c.l.b16 %v396
      %v913 = vunpack.c.l.b16 %v397
      %v914 = vunpack.c.l.b16 %v398
      %v915 = vunpack.c.l.b16 %v399
      %v916 = vunpack.c.l.b16 %v400
      %v917 = vunpack.c.l.b16 %v401
      %v918 = vunpack.c.l.b16 %v402
      %v919 = vunpack.c.l.b16 %v403
      %v920 = vunpack.c.l.b16 %v404
      %v921 = vunpack.c.l.b16 %v405
      %v922 = vunpack.c.l.b16 %v406
      %v923 = vunpack.c.l.b16 %v407
      %v924 = vunpack.c.l.b16 %v408
      %v925 = vunpack.c.l.b16 %v409
      %v926 = vunpack.c.l.b16 %v410
      %v927 = vunpack.c.l.b16 %v411
      %v928 = vunpack.c.l.b16 %v412
      %v929 = vunpack.c.l.b16 %v413
      %v930 = vunpack.c.l.b16 %v414
      %v931 = vunpack.c.l.b16 %v415
      %v932 = vunpack.c.l.b16 %v416
      %v933 = vunpack.c.l.b16 %v417
      %v934 = vunpack.c.l.b16 %v418
      %v935 = vunpack.c.l.b16 %v419
      %v936 = vunpack.c.l.b16 %v420
      %v937 = vunpack.c.l.b16 %v421
      %v938 = vunpack.c.l.b16 %v422
      %v939 = vunpack.c.l.b16 %v423
      %v940 = vunpack.c.l.b16 %v424
      %v941 = vunpack.c.l.b16 %v425
      %v942 = vunpack.c.l.b16 %v426
      %v943 = vunpack.c.l.b16 %v427
      %v944 = vunpack.c.l.b16 %v428
      %v945 = vunpack.c.l.b16 %v429
      %v946 = vunpack.c.l.b16 %v430
      %v947 = vunpack.c.l.b16 %v431
      %v948 = vunpack.c.l.b16 %v432
      %v949 = vunpack.c.l.b16 %v433
      %v950 = vunpack.c.l.b16 %v434
      %v951 = vunpack.c.l.b16 %v435
      %v952 = vunpack.c.l.b16 %v436
      %v953 = vunpack.c.l.b16 %v437
      %v954 = vunpack.c.l.b16 %v438
      %v955 = vunpack.c.l.b16 %v439
      %v956 = vunpack.c.l.b16 %v440
      %v957 = vunpack.c.l.b16 %v441
      %v958 = vunpack.c.l.b16 %v442
      %v959 = vunpack.c.l.b16 %v443
      %v960 = vunpack.c.l.b16 %v444
      %v961 = vunpack.c.l.b16 %v445
      %v962 = vunpack.c.l.b16 %v446
      %v963 = vunpack.c.l.b16 %v447
      %v964 = vunpack.c.l.b16 %v448
      %v965 = vunpack.c.l.b16 %v449
      %v966 = vunpack.c.l.b16 %v450
      %v967 = vunpack.c.l.b16 %v451
      %v968 = vunpack.c.l.b16 %v452
      %v969 = vunpack.c.l.b16 %v453
      %v970 = vunpack.c.l.b16 %v454
      %v971 = vunpack.c.l.b16 %v455
      %v972 = vunpack.c.l.b16 %v456
      %v973 = vunpack.c.l.b16 %v457
      %v974 = vpack.c.b16 %v719, %v718
      %v975 = vpack.c.b16 %v721, %v720
      %v976 = vpack.c.b16 %v723, %v722
      %v977 = vpack.c.b16 %v725, %v724
      %v978 = vpack.c.b16 %v727, %v726
      %v979 = vpack.c.b16 %v729, %v728
      %v980 = vpack.c.b16 %v731, %v730
      %v981 = vpack.c.b16 %v733, %v732
      %v982 = vpack.c.b16 %v735, %v734
      %v983 = vpack.c.b16 %v737, %v736
      %v984 = vpack.c.b16 %v739, %v738
      %v985 = vpack.c.b16 %v741, %v740
      %v986 = vpack.c.b16 %v743, %v742
      %v987 = vpack.c.b16 %v745, %v744
      %v988 = vpack.c.b16 %v747, %v746
      %v989 = vpack.c.b16 %v749, %v748
      %v990 = vpack.c.b16 %v751, %v750
      %v991 = vpack.c.b16 %v753, %v752
      %v992 = vpack.c.b16 %v755, %v754
      %v993 = vpack.c.b16 %v757, %v756
      %v994 = vpack.c.b16 %v759, %v758
      %v995 = vpack.c.b16 %v761, %v760
      %v996 = vpack.c.b16 %v763, %v762
      %v997 = vpack.c.b16 %v765, %v764
      %v998 = vpack.c.b16 %v767, %v766
      %v999 = vpack.c.b16 %v769, %v768
      %v1000 = vpack.c.b16 %v771, %v770
      %v1001 = vpack.c.b16 %v773, %v772
      %v1002 = vpack.c.b16 %v775, %v774
      %v1003 = vpack.c.b16 %v777, %v776
      %v1004 = vpack.c.b16 %v779, %v778
      %v1005 = vpack.c.b16 %v781, %v780
      %v1006 = vpack.c.b16 %v783, %v782
      %v1007 = vpack.c.b16 %v785, %v784
      %v1008 = vpack.c.b16 %v787, %v786
      %v1009 = vpack.c.b16 %v789, %v788
      %v1010 = vpack.c.b16 %v791, %v790
      %v1011 = vpack.c.b16 %v793, %v792
      %v1012 = vpack.c.b16 %v795, %v794
      %v1013 = vpack.c.b16 %v797, %v796
      %v1014 = vpack.c.b16 %v799, %v798
      %v1015 = vpack.c.b16 %v801, %v800
      %v1016 = vpack.c.b16 %v803, %v802
      %v1017 = vpack.c.b16 %v805, %v804
      %v1018 = vpack.c.b16 %v807, %v806
      %v1019 = vpack.c.b16 %v809, %v808
      %v1020 = vpack.c.b16 %v811, %v810
      %v1021 = vpack.c.b16 %v813, %v812
      %v1022 = vpack.c.b16 %v815, %v814
      %v1023 = vpack.c.b16 %v817, %v816
      %v1024 = vpack.c.b16 %v819, %v818
      %v1025 = vpack.c.b16 %v821, %v820
      %v1026 = vpack.c.b16 %v823, %v822
      %v1027 = vpack.c.b16 %v825, %v824
      %v1028 = vpack.c.b16 %v827, %v826
      %v1029 = vpack.c.b16 %v829, %v828
      %v1030 = vpack.c.b16 %v831, %v830
      %v1031 = vpack.c.b16 %v833, %v832
      %v1032 = vpack.c.b16 %v835, %v834
      %v1033 = vpack.c.b16 %v837, %v836
      %v1034 = vpack.c.b16 %v839, %v838
      %v1035 = vpack.c.b16 %v841, %v840
      %v1036 = vpack.c.b16 %v843, %v842
      %v1037 = vpack.c.b16 %v845, %v844
      %v1038 = vpack.c.b16 %v847, %v846
      %v1039 = vpack.c.b16 %v849, %v848
      %v1040 = vpack.c.b16 %v851, %v850
      %v1041 = vpack.c.b16 %v853, %v852
      %v1042 = vpack.c.b16 %v855, %v854
      %v1043 = vpack.c.b16 %v857, %v856
      %v1044 = vpack.c.b16 %v859, %v858
      %v1045 = vpack.c.b16 %v861, %v860
      %v1046 = vpack.c.b16 %v863, %v862
      %v1047 = vpack.c.b16 %v865, %v864
      %v1048 = vpack.c.b16 %v867, %v866
      %v1049 = vpack.c.b16 %v869, %v868
      %v1050 = vpack.c.b16 %v871, %v870
      %v1051 = vpack.c.b16 %v873, %v872
      %v1052 = vpack.c.b16 %v875, %v874
      %v1053 = vpack.c.b16 %v877, %v876
      %v1054 = vpack.c.b16 %v879, %v878
      %v1055 = vpack.c.b16 %v881, %v880
      %v1056 = vpack.c.b16 %v883, %v882
      %v1057 = vpack.c.b16 %v885, %v884
      %v1058 = vpack.c.b16 %v887, %v886
      %v1059 = vpack.c.b16 %v889, %v888
      %v1060 = vpack.c.b16 %v891, %v890
      %v1061 = vpack.c.b16 %v893, %v892
      %v1062 = vpack.c.b16 %v895, %v894
      %v1063 = vpack.c.b16 %v897, %v896
      %v1064 = vpack.c.b16 %v899, %v898
      %v1065 = vpack.c.b16 %v901, %v900
      %v1066 = vpack.c.b16 %v903, %v902
      %v1067 = vpack.c.b16 %v905, %v904
      %v1068 = vpack.c.b16 %v907, %v906
      %v1069 = vpack.c.b16 %v909, %v908
      %v1070 = vpack.c.b16 %v911, %v910
      %v1071 = vpack.c.b16 %v913, %v912
      %v1072 = vpack.c.b16 %v915, %v914
      %v1073 = vpack.c.b16 %v917, %v916
      %v1074 = vpack.c.b16 %v919, %v918
      %v1075 = vpack.c.b16 %v921, %v920
      %v1076 = vpack.c.b16 %v923, %v922
      %v1077 = vpack.c.b16 %v925, %v924
      %v1078 = vpack.c.b16 %v927, %v926
      %v1079 = vpack.c.b16 %v929, %v928
      %v1080 = vpack.c.b16 %v931, %v930
      %v1081 = vpack.c.b16 %v933, %v932
      %v1082 = vpack.c.b16 %v935, %v934
      %v1083 = vpack.c.b16 %v937, %v936
      %v1084 = vpack.c.b16 %v939, %v938
      %v1085 = vpack.c.b16 %v941, %v940
      %v1086 = vpack.c.b16 %v943, %v942
      %v1087 = vpack.c.b16 %v945, %v944
      %v1088 = vpack.c.b16 %v947, %v946
      %v1089 = vpack.c.b16 %v949, %v948
      %v1090 = vpack.c.b16 %v951, %v950
      %v1091 = vpack.c.b16 %v953, %v952
      %v1092 = vpack.c.b16 %v955, %v954
      %v1093 = vpack.c.b16 %v957, %v956
      %v1094 = vpack.c.b16 %v959, %v958
      %v1095 = vpack.c.b16 %v961, %v960
      %v1096 = vpack.c.b16 %v963, %v962
      %v1097 = vpack.c.b16 %v965, %v964
      %v1098 = vpack.c.b16 %v967, %v966
      %v1099 = vpack.c.b16 %v969, %v968
      %v1100 = vpack.c.b16 %v971, %v970
      %v1101 = vpack.c.b16 %v973, %v972
      %v1106 = vunpack.c.l.b16 %v458
      %v1107 = vunpack.c.l.b16 %v459
      %v1108 = vunpack.c.l.b16 %v460
      %v1109 = vunpack.c.l.b16 %v461
      %v1110 = vpack.c.b16 %v1107, %v1106
      %v1111 = vpack.c.b16 %v1109, %v1108
      %vm1113 = vcmask 220160
      %v1115 = vsel %vm1113, %v974, 0
      %v1118 = vsel %vm1113, %v975, 0
      %v1121 = vsel %vm1113, %v976, 0
      %v1124 = vsel %vm1113, %v977, 0
      %v1127 = vsel %vm1113, %v978, 0
      %v1130 = vsel %vm1113, %v979, 0
      %v1133 = vsel %vm1113, %v980, 0
      %v1136 = vsel %vm1113, %v981, 0
      %v1139 = vsel %vm1113, %v982, 0
      %v1142 = vsel %vm1113, %v983, 0
      %v1145 = vsel %vm1113, %v984, 0
      %v1148 = vsel %vm1113, %v985, 0
      %v1151 = vsel %vm1113, %v986, 0
      %v1154 = vsel %vm1113, %v987, 0
      %v1157 = vsel %vm1113, %v988, 0
      %v1160 = vsel %vm1113, %v989, 0
      %v1163 = vsel %vm1113, %v990, 0
      %v1166 = vsel %vm1113, %v991, 0
      %v1169 = vsel %vm1113, %v992, 0
      %v1172 = vsel %vm1113, %v993, 0
      %v1175 = vsel %vm1113, %v994, 0
      %v1178 = vsel %vm1113, %v995, 0
      %v1181 = vsel %vm1113, %v996, 0
      %v1184 = vsel %vm1113, %v997, 0
      %v1187 = vsel %vm1113, %v998, 0
      %v1190 = vsel %vm1113, %v999, 0
      %v1193 = vsel %vm1113, %v1000, 0
      %v1196 = vsel %vm1113, %v1001, 0
      %v1199 = vsel %vm1113, %v1002, 0
      %v1202 = vsel %vm1113, %v1003, 0
      %v1205 = vsel %vm1113, %v1004, 0
      %v1208 = vsel %vm1113, %v1005, 0
      %v1211 = vsel %vm1113, %v1006, 0
      %v1214 = vsel %vm1113, %v1007, 0
      %v1217 = vsel %vm1113, %v1008, 0
      %v1220 = vsel %vm1113, %v1009, 0
      %v1223 = vsel %vm1113, %v1010, 0
      %v1226 = vsel %vm1113, %v1011, 0
      %v1229 = vsel %vm1113, %v1012, 0
      %v1232 = vsel %vm1113, %v1013, 0
      %v1235 = vsel %vm1113, %v1014, 0
      %v1238 = vsel %vm1113, %v1015, 0
      %v1241 = vsel %vm1113, %v1016, 0
      %v1244 = vsel %vm1113, %v1017, 0
      %v1247 = vsel %vm1113, %v1018, 0
      %v1250 = vsel %vm1113, %v1019, 0
      %v1253 = vsel %vm1113, %v1020, 0
      %v1256 = vsel %vm1113, %v1021, 0
      %v1259 = vsel %vm1113, %v1022, 0
      %v1262 = vsel %vm1113, %v1023, 0
      %v1265 = vsel %vm1113, %v1024, 0
      %v1268 = vsel %vm1113, %v1025, 0
      %v1271 = vsel %vm1113, %v1026, 0
      %v1274 = vsel %vm1113, %v1027, 0
      %v1277 = vsel %vm1113, %v1028, 0
      %v1280 = vsel %vm1113, %v1029, 0
      %v1283 = vsel %vm1113, %v1030, 0
      %v1286 = vsel %vm1113, %v1031, 0
      %v1289 = vsel %vm1113, %v1032, 0
      %v1292 = vsel %vm1113, %v1033, 0
      %v1295 = vsel %vm1113, %v1034, 0
      %v1298 = vsel %vm1113, %v1035, 0
      %v1301 = vsel %vm1113, %v1036, 0
      %v1304 = vsel %vm1113, %v1037, 0
      %v1307 = vsel %vm1113, %v1038, 0
      %v1310 = vsel %vm1113, %v1039, 0
      %v1313 = vsel %vm1113, %v1040, 0
      %v1316 = vsel %vm1113, %v1041, 0
      %v1319 = vsel %vm1113, %v1042, 0
      %v1322 = vsel %vm1113, %v1043, 0
      %v1325 = vsel %vm1113, %v1044, 0
      %v1328 = vsel %vm1113, %v1045, 0
      %v1331 = vsel %vm1113, %v1046, 0
      %v1334 = vsel %vm1113, %v1047, 0
      %v1337 = vsel %vm1113, %v1048, 0
      %v1340 = vsel %vm1113, %v1049, 0
      %v1343 = vsel %vm1113, %v1050, 0
      %v1346 = vsel %vm1113, %v1051, 0
      %v1349 = vsel %vm1113, %v1052, 0
      %v1352 = vsel %vm1113, %v1053, 0
      %v1355 = vsel %vm1113, %v1054, 0
      %v1358 = vsel %vm1113, %v1055, 0
      %v1361 = vsel %vm1113, %v1056, 0
      %v1364 = vsel %vm1113, %v1057, 0
      %v1367 = vsel %vm1113, %v1058, 0
      %v1370 = vsel %vm1113, %v1059, 0
      %v1373 = vsel %vm1113, %v1060, 0
      %v1376 = vsel %vm1113, %v1061, 0
      %v1379 = vsel %vm1113, %v1062, 0
      %v1382 = vsel %vm1113, %v1063, 0
      %v1385 = vsel %vm1113, %v1064, 0
      %v1388 = vsel %vm1113, %v1065, 0
      %v1391 = vsel %vm1113, %v1066, 0
      %v1394 = vsel %vm1113, %v1067, 0
      %v1397 = vsel %vm1113, %v1068, 0
      %v1400 = vsel %vm1113, %v1069, 0
      %v1403 = vsel %vm1113, %v1070, 0
      %v1406 = vsel %vm1113, %v1071, 0
      %v1409 = vsel %vm1113, %v1072, 0
      %v1412 = vsel %vm1113, %v1073, 0
      %v1415 = vsel %vm1113, %v1074, 0
      %v1418 = vsel %vm1113, %v1075, 0
      %v1421 = vsel %vm1113, %v1076, 0
      %v1424 = vsel %vm1113, %v1077, 0
      %v1427 = vsel %vm1113, %v1078, 0
      %v1430 = vsel %vm1113, %v1079, 0
      %v1433 = vsel %vm1113, %v1080, 0
      %v1436 = vsel %vm1113, %v1081, 0
      %v1439 = vsel %vm1113, %v1082, 0
      %v1442 = vsel %vm1113, %v1083, 0
      %v1445 = vsel %vm1113, %v1084, 0
      %v1448 = vsel %vm1113, %v1085, 0
      %v1451 = vsel %vm1113, %v1086, 0
      %v1454 = vsel %vm1113, %v1087, 0
      %v1457 = vsel %vm1113, %v1088, 0
      %v1460 = vsel %vm1113, %v1089, 0
      %v1463 = vsel %vm1113, %v1090, 0
      %v1466 = vsel %vm1113, %v1091, 0
      %v1469 = vsel %vm1113, %v1092, 0
      %v1472 = vsel %vm1113, %v1093, 0
      %v1475 = vsel %vm1113, %v1094, 0
      %v1478 = vsel %vm1113, %v1095, 0
      %v1481 = vsel %vm1113, %v1096, 0
      %v1484 = vsel %vm1113, %v1097, 0
      %v1487 = vsel %vm1113, %v1098, 0
      %v1490 = vsel %vm1113, %v1099, 0
      %v1493 = vsel %vm1113, %v1100, 0
      %v1496 = vsel %vm1113, %v1101, 0
      %vm1498 = vcmask 1044480
      %vm1499 = vcmask 1045504
      %v1500 = vsel %vm1498, 4294967295, 65535
      %v1501 = vsel %vm1499, %v1500, 0
      %v1503 = vand.u32 %v1111, %v1501
      %1505 = vmatpush.bf16.msra.mxu0 0
      %1506 = vmatpush.bf16.msra.mxu0 0
      %1507 = vmatpush.bf16.msra.mxu0 0
      %1508 = vmatpush.bf16.msra.mxu0 0
      %1509 = vmatpush.bf16.msra.mxu0 0
      %1510 = vmatpush.bf16.msra.mxu0 0
      %1511 = vmatpush.bf16.msra.mxu0 %v1503
      %1512 = vmatpush.bf16.msra.mxu0 %v1110
      %1513 = vmatmul.bf16.gmra.mxu0 %v1115
      %v1514 = vpop.f32.mrf.mxu0
      %v1515 = vadd.f32 0.0, %v1514
      %v1516 = vpop.f32.mrf.mxu0
      %v1517 = vadd.f32 0.0, %v1516
      %1518 = vmatmul.bf16.gmra.mxu0 %v1118
      %v1519 = vpop.f32.mrf.mxu0
      %v1520 = vadd.f32 0.0, %v1519
      %v1521 = vpop.f32.mrf.mxu0
      %v1522 = vadd.f32 0.0, %v1521
      %1523 = vmatmul.bf16.gmra.mxu0 %v1121
      %v1524 = vpop.f32.mrf.mxu0
      %v1525 = vadd.f32 0.0, %v1524
      %v1526 = vpop.f32.mrf.mxu0
      %v1527 = vadd.f32 0.0, %v1526
      %1528 = vmatmul.bf16.gmra.mxu0 %v1124
      %v1529 = vpop.f32.mrf.mxu0
      %v1530 = vadd.f32 0.0, %v1529
      %v1531 = vpop.f32.mrf.mxu0
      %v1532 = vadd.f32 0.0, %v1531
      %1533 = vmatmul.bf16.gmra.mxu0 %v1127
      %v1534 = vpop.f32.mrf.mxu0
      %v1535 = vadd.f32 0.0, %v1534
      %v1536 = vpop.f32.mrf.mxu0
      %v1537 = vadd.f32 0.0, %v1536
      %1538 = vmatmul.bf16.gmra.mxu0 %v1130
      %v1539 = vpop.f32.mrf.mxu0
      %v1540 = vadd.f32 0.0, %v1539
      %v1541 = vpop.f32.mrf.mxu0
      %v1542 = vadd.f32 0.0, %v1541
      %1543 = vmatmul.bf16.gmra.mxu0 %v1133
      %v1544 = vpop.f32.mrf.mxu0
      %v1545 = vadd.f32 0.0, %v1544
      %v1546 = vpop.f32.mrf.mxu0
      %v1547 = vadd.f32 0.0, %v1546
      %1548 = vmatmul.bf16.gmra.mxu0 %v1136
      %v1549 = vpop.f32.mrf.mxu0
      %v1550 = vadd.f32 0.0, %v1549
      %v1551 = vpop.f32.mrf.mxu0
      %v1552 = vadd.f32 0.0, %v1551
      %1553 = vmatmul.bf16.gmra.mxu0 %v1139
      %v1554 = vpop.f32.mrf.mxu0
      %v1555 = vadd.f32 0.0, %v1554
      %v1556 = vpop.f32.mrf.mxu0
      %v1557 = vadd.f32 0.0, %v1556
      %1558 = vmatmul.bf16.gmra.mxu0 %v1142
      %v1559 = vpop.f32.mrf.mxu0
      %v1560 = vadd.f32 0.0, %v1559
      %v1561 = vpop.f32.mrf.mxu0
      %v1562 = vadd.f32 0.0, %v1561
      %1563 = vmatmul.bf16.gmra.mxu0 %v1145
      %v1564 = vpop.f32.mrf.mxu0
      %v1565 = vadd.f32 0.0, %v1564
      %v1566 = vpop.f32.mrf.mxu0
      %v1567 = vadd.f32 0.0, %v1566
      %1568 = vmatmul.bf16.gmra.mxu0 %v1148
      %v1569 = vpop.f32.mrf.mxu0
      %v1570 = vadd.f32 0.0, %v1569
      %v1571 = vpop.f32.mrf.mxu0
      %v1572 = vadd.f32 0.0, %v1571
      %1573 = vmatmul.bf16.gmra.mxu0 %v1151
      %v1574 = vpop.f32.mrf.mxu0
      %v1575 = vadd.f32 0.0, %v1574
      %v1576 = vpop.f32.mrf.mxu0
      %v1577 = vadd.f32 0.0, %v1576
      %1578 = vmatmul.bf16.gmra.mxu0 %v1154
      %v1579 = vpop.f32.mrf.mxu0
      %v1580 = vadd.f32 0.0, %v1579
      %v1581 = vpop.f32.mrf.mxu0
      %v1582 = vadd.f32 0.0, %v1581
      %1583 = vmatmul.bf16.gmra.mxu0 %v1157
      %v1584 = vpop.f32.mrf.mxu0
      %v1585 = vadd.f32 0.0, %v1584
      %v1586 = vpop.f32.mrf.mxu0
      %v1587 = vadd.f32 0.0, %v1586
      %1588 = vmatmul.bf16.gmra.mxu0 %v1160
      %v1589 = vpop.f32.mrf.mxu0
      %v1590 = vadd.f32 0.0, %v1589
      %v1591 = vpop.f32.mrf.mxu0
      %v1592 = vadd.f32 0.0, %v1591
      %1593 = vmatmul.bf16.gmra.mxu0 %v1163
      %v1594 = vpop.f32.mrf.mxu0
      %v1595 = vadd.f32 0.0, %v1594
      %v1596 = vpop.f32.mrf.mxu0
      %v1597 = vadd.f32 0.0, %v1596
      %1598 = vmatmul.bf16.gmra.mxu0 %v1166
      %v1599 = vpop.f32.mrf.mxu0
      %v1600 = vadd.f32 0.0, %v1599
      %v1601 = vpop.f32.mrf.mxu0
      %v1602 = vadd.f32 0.0, %v1601
      %1603 = vmatmul.bf16.gmra.mxu0 %v1169
      %v1604 = vpop.f32.mrf.mxu0
      %v1605 = vadd.f32 0.0, %v1604
      %v1606 = vpop.f32.mrf.mxu0
      %v1607 = vadd.f32 0.0, %v1606
      %1608 = vmatmul.bf16.gmra.mxu0 %v1172
      %v1609 = vpop.f32.mrf.mxu0
      %v1610 = vadd.f32 0.0, %v1609
      %v1611 = vpop.f32.mrf.mxu0
      %v1612 = vadd.f32 0.0, %v1611
      %1613 = vmatmul.bf16.gmra.mxu0 %v1175
      %v1614 = vpop.f32.mrf.mxu0
      %v1615 = vadd.f32 0.0, %v1614
      %v1616 = vpop.f32.mrf.mxu0
      %v1617 = vadd.f32 0.0, %v1616
      %1618 = vmatmul.bf16.gmra.mxu0 %v1178
      %v1619 = vpop.f32.mrf.mxu0
      %v1620 = vadd.f32 0.0, %v1619
      %v1621 = vpop.f32.mrf.mxu0
      %v1622 = vadd.f32 0.0, %v1621
      %1623 = vmatmul.bf16.gmra.mxu0 %v1181
      %v1624 = vpop.f32.mrf.mxu0
      %v1625 = vadd.f32 0.0, %v1624
      %v1626 = vpop.f32.mrf.mxu0
      %v1627 = vadd.f32 0.0, %v1626
      %1628 = vmatmul.bf16.gmra.mxu0 %v1184
      %v1629 = vpop.f32.mrf.mxu0
      %v1630 = vadd.f32 0.0, %v1629
      %v1631 = vpop.f32.mrf.mxu0
      %v1632 = vadd.f32 0.0, %v1631
      %1633 = vmatmul.bf16.gmra.mxu0 %v1187
      %v1634 = vpop.f32.mrf.mxu0
      %v1635 = vadd.f32 0.0, %v1634
      %v1636 = vpop.f32.mrf.mxu0
      %v1637 = vadd.f32 0.0, %v1636
      %1638 = vmatmul.bf16.gmra.mxu0 %v1190
      %v1639 = vpop.f32.mrf.mxu0
      %v1640 = vadd.f32 0.0, %v1639
      %v1641 = vpop.f32.mrf.mxu0
      %v1642 = vadd.f32 0.0, %v1641
      %1643 = vmatmul.bf16.gmra.mxu0 %v1193
      %v1644 = vpop.f32.mrf.mxu0
      %v1645 = vadd.f32 0.0, %v1644
      %v1646 = vpop.f32.mrf.mxu0
      %v1647 = vadd.f32 0.0, %v1646
      %1648 = vmatmul.bf16.gmra.mxu0 %v1196
      %v1649 = vpop.f32.mrf.mxu0
      %v1650 = vadd.f32 0.0, %v1649
      %v1651 = vpop.f32.mrf.mxu0
      %v1652 = vadd.f32 0.0, %v1651
      %1653 = vmatmul.bf16.gmra.mxu0 %v1199
      %v1654 = vpop.f32.mrf.mxu0
      %v1655 = vadd.f32 0.0, %v1654
      %v1656 = vpop.f32.mrf.mxu0
      %v1657 = vadd.f32 0.0, %v1656
      %1658 = vmatmul.bf16.gmra.mxu0 %v1202
      %v1659 = vpop.f32.mrf.mxu0
      %v1660 = vadd.f32 0.0, %v1659
      %v1661 = vpop.f32.mrf.mxu0
      %v1662 = vadd.f32 0.0, %v1661
      %1663 = vmatmul.bf16.gmra.mxu0 %v1205
      %v1664 = vpop.f32.mrf.mxu0
      %v1665 = vadd.f32 0.0, %v1664
      %v1666 = vpop.f32.mrf.mxu0
      %v1667 = vadd.f32 0.0, %v1666
      %1668 = vmatmul.bf16.gmra.mxu0 %v1208
      %v1669 = vpop.f32.mrf.mxu0
      %v1670 = vadd.f32 0.0, %v1669
      %v1671 = vpop.f32.mrf.mxu0
      %v1672 = vadd.f32 0.0, %v1671
      %1673 = vmatmul.bf16.gmra.mxu0 %v1211
      %v1674 = vpop.f32.mrf.mxu0
      %v1675 = vadd.f32 0.0, %v1674
      %v1676 = vpop.f32.mrf.mxu0
      %v1677 = vadd.f32 0.0, %v1676
      %1678 = vmatmul.bf16.gmra.mxu0 %v1214
      %v1679 = vpop.f32.mrf.mxu0
      %v1680 = vadd.f32 0.0, %v1679
      %v1681 = vpop.f32.mrf.mxu0
      %v1682 = vadd.f32 0.0, %v1681
      %1683 = vmatmul.bf16.gmra.mxu0 %v1217
      %v1684 = vpop.f32.mrf.mxu0
      %v1685 = vadd.f32 0.0, %v1684
      %v1686 = vpop.f32.mrf.mxu0
      %v1687 = vadd.f32 0.0, %v1686
      %1688 = vmatmul.bf16.gmra.mxu0 %v1220
      %v1689 = vpop.f32.mrf.mxu0
      %v1690 = vadd.f32 0.0, %v1689
      %v1691 = vpop.f32.mrf.mxu0
      %v1692 = vadd.f32 0.0, %v1691
      %1693 = vmatmul.bf16.gmra.mxu0 %v1223
      %v1694 = vpop.f32.mrf.mxu0
      %v1695 = vadd.f32 0.0, %v1694
      %v1696 = vpop.f32.mrf.mxu0
      %v1697 = vadd.f32 0.0, %v1696
      %1698 = vmatmul.bf16.gmra.mxu0 %v1226
      %v1699 = vpop.f32.mrf.mxu0
      %v1700 = vadd.f32 0.0, %v1699
      %v1701 = vpop.f32.mrf.mxu0
      %v1702 = vadd.f32 0.0, %v1701
      %1703 = vmatmul.bf16.gmra.mxu0 %v1229
      %v1704 = vpop.f32.mrf.mxu0
      %v1705 = vadd.f32 0.0, %v1704
      %v1706 = vpop.f32.mrf.mxu0
      %v1707 = vadd.f32 0.0, %v1706
      %1708 = vmatmul.bf16.gmra.mxu0 %v1232
      %v1709 = vpop.f32.mrf.mxu0
      %v1710 = vadd.f32 0.0, %v1709
      %v1711 = vpop.f32.mrf.mxu0
      %v1712 = vadd.f32 0.0, %v1711
      %1713 = vmatmul.bf16.gmra.mxu0 %v1235
      %v1714 = vpop.f32.mrf.mxu0
      %v1715 = vadd.f32 0.0, %v1714
      %v1716 = vpop.f32.mrf.mxu0
      %v1717 = vadd.f32 0.0, %v1716
      %1718 = vmatmul.bf16.gmra.mxu0 %v1238
      %v1719 = vpop.f32.mrf.mxu0
      %v1720 = vadd.f32 0.0, %v1719
      %v1721 = vpop.f32.mrf.mxu0
      %v1722 = vadd.f32 0.0, %v1721
      %1723 = vmatmul.bf16.gmra.mxu0 %v1241
      %v1724 = vpop.f32.mrf.mxu0
      %v1725 = vadd.f32 0.0, %v1724
      %v1726 = vpop.f32.mrf.mxu0
      %v1727 = vadd.f32 0.0, %v1726
      %1728 = vmatmul.bf16.gmra.mxu0 %v1244
      %v1729 = vpop.f32.mrf.mxu0
      %v1730 = vadd.f32 0.0, %v1729
      %v1731 = vpop.f32.mrf.mxu0
      %v1732 = vadd.f32 0.0, %v1731
      %1733 = vmatmul.bf16.gmra.mxu0 %v1247
      %v1734 = vpop.f32.mrf.mxu0
      %v1735 = vadd.f32 0.0, %v1734
      %v1736 = vpop.f32.mrf.mxu0
      %v1737 = vadd.f32 0.0, %v1736
      %1738 = vmatmul.bf16.gmra.mxu0 %v1250
      %v1739 = vpop.f32.mrf.mxu0
      %v1740 = vadd.f32 0.0, %v1739
      %v1741 = vpop.f32.mrf.mxu0
      %v1742 = vadd.f32 0.0, %v1741
      %1743 = vmatmul.bf16.gmra.mxu0 %v1253
      %v1744 = vpop.f32.mrf.mxu0
      %v1745 = vadd.f32 0.0, %v1744
      %v1746 = vpop.f32.mrf.mxu0
      %v1747 = vadd.f32 0.0, %v1746
      %1748 = vmatmul.bf16.gmra.mxu0 %v1256
      %v1749 = vpop.f32.mrf.mxu0
      %v1750 = vadd.f32 0.0, %v1749
      %v1751 = vpop.f32.mrf.mxu0
      %v1752 = vadd.f32 0.0, %v1751
      %1753 = vmatmul.bf16.gmra.mxu0 %v1259
      %v1754 = vpop.f32.mrf.mxu0
      %v1755 = vadd.f32 0.0, %v1754
      %v1756 = vpop.f32.mrf.mxu0
      %v1757 = vadd.f32 0.0, %v1756
      %1758 = vmatmul.bf16.gmra.mxu0 %v1262
      %v1759 = vpop.f32.mrf.mxu0
      %v1760 = vadd.f32 0.0, %v1759
      %v1761 = vpop.f32.mrf.mxu0
      %v1762 = vadd.f32 0.0, %v1761
      %1763 = vmatmul.bf16.gmra.mxu0 %v1265
      %v1764 = vpop.f32.mrf.mxu0
      %v1765 = vadd.f32 0.0, %v1764
      %v1766 = vpop.f32.mrf.mxu0
      %v1767 = vadd.f32 0.0, %v1766
      %1768 = vmatmul.bf16.gmra.mxu0 %v1268
      %v1769 = vpop.f32.mrf.mxu0
      %v1770 = vadd.f32 0.0, %v1769
      %v1771 = vpop.f32.mrf.mxu0
      %v1772 = vadd.f32 0.0, %v1771
      %1773 = vmatmul.bf16.gmra.mxu0 %v1271
      %v1774 = vpop.f32.mrf.mxu0
      %v1775 = vadd.f32 0.0, %v1774
      %v1776 = vpop.f32.mrf.mxu0
      %v1777 = vadd.f32 0.0, %v1776
      %1778 = vmatmul.bf16.gmra.mxu0 %v1274
      %v1779 = vpop.f32.mrf.mxu0
      %v1780 = vadd.f32 0.0, %v1779
      %v1781 = vpop.f32.mrf.mxu0
      %v1782 = vadd.f32 0.0, %v1781
      %1783 = vmatmul.bf16.gmra.mxu0 %v1277
      %v1784 = vpop.f32.mrf.mxu0
      %v1785 = vadd.f32 0.0, %v1784
      %v1786 = vpop.f32.mrf.mxu0
      %v1787 = vadd.f32 0.0, %v1786
      %1788 = vmatmul.bf16.gmra.mxu0 %v1280
      %v1789 = vpop.f32.mrf.mxu0
      %v1790 = vadd.f32 0.0, %v1789
      %v1791 = vpop.f32.mrf.mxu0
      %v1792 = vadd.f32 0.0, %v1791
      %1793 = vmatmul.bf16.gmra.mxu0 %v1283
      %v1794 = vpop.f32.mrf.mxu0
      %v1795 = vadd.f32 0.0, %v1794
      %v1796 = vpop.f32.mrf.mxu0
      %v1797 = vadd.f32 0.0, %v1796
      %1798 = vmatmul.bf16.gmra.mxu0 %v1286
      %v1799 = vpop.f32.mrf.mxu0
      %v1800 = vadd.f32 0.0, %v1799
      %v1801 = vpop.f32.mrf.mxu0
      %v1802 = vadd.f32 0.0, %v1801
      %1803 = vmatmul.bf16.gmra.mxu0 %v1289
      %v1804 = vpop.f32.mrf.mxu0
      %v1805 = vadd.f32 0.0, %v1804
      %v1806 = vpop.f32.mrf.mxu0
      %v1807 = vadd.f32 0.0, %v1806
      %1808 = vmatmul.bf16.gmra.mxu0 %v1292
      %v1809 = vpop.f32.mrf.mxu0
      %v1810 = vadd.f32 0.0, %v1809
      %v1811 = vpop.f32.mrf.mxu0
      %v1812 = vadd.f32 0.0, %v1811
      %1813 = vmatmul.bf16.gmra.mxu0 %v1295
      %v1814 = vpop.f32.mrf.mxu0
      %v1815 = vadd.f32 0.0, %v1814
      %v1816 = vpop.f32.mrf.mxu0
      %v1817 = vadd.f32 0.0, %v1816
      %1818 = vmatmul.bf16.gmra.mxu0 %v1298
      %v1819 = vpop.f32.mrf.mxu0
      %v1820 = vadd.f32 0.0, %v1819
      %v1821 = vpop.f32.mrf.mxu0
      %v1822 = vadd.f32 0.0, %v1821
      %1823 = vmatmul.bf16.gmra.mxu0 %v1301
      %v1824 = vpop.f32.mrf.mxu0
      %v1825 = vadd.f32 0.0, %v1824
      %v1826 = vpop.f32.mrf.mxu0
      %v1827 = vadd.f32 0.0, %v1826
      %1828 = vmatmul.bf16.gmra.mxu0 %v1304
      %v1829 = vpop.f32.mrf.mxu0
      %v1830 = vadd.f32 0.0, %v1829
      %v1831 = vpop.f32.mrf.mxu0
      %v1832 = vadd.f32 0.0, %v1831
      %1833 = vmatmul.bf16.gmra.mxu0 %v1307
      %v1834 = vpop.f32.mrf.mxu0
      %v1835 = vadd.f32 0.0, %v1834
      %v1836 = vpop.f32.mrf.mxu0
      %v1837 = vadd.f32 0.0, %v1836
      %1838 = vmatmul.bf16.gmra.mxu0 %v1310
      %v1839 = vpop.f32.mrf.mxu0
      %v1840 = vadd.f32 0.0, %v1839
      %v1841 = vpop.f32.mrf.mxu0
      %v1842 = vadd.f32 0.0, %v1841
      %1843 = vmatmul.bf16.gmra.mxu0 %v1313
      %v1844 = vpop.f32.mrf.mxu0
      %v1845 = vadd.f32 0.0, %v1844
      %v1846 = vpop.f32.mrf.mxu0
      %v1847 = vadd.f32 0.0, %v1846
      %1848 = vmatmul.bf16.gmra.mxu0 %v1316
      %v1849 = vpop.f32.mrf.mxu0
      %v1850 = vadd.f32 0.0, %v1849
      %v1851 = vpop.f32.mrf.mxu0
      %v1852 = vadd.f32 0.0, %v1851
      %1853 = vmatmul.bf16.gmra.mxu0 %v1319
      %v1854 = vpop.f32.mrf.mxu0
      %v1855 = vadd.f32 0.0, %v1854
      %v1856 = vpop.f32.mrf.mxu0
      %v1857 = vadd.f32 0.0, %v1856
      %1858 = vmatmul.bf16.gmra.mxu0 %v1322
      %v1859 = vpop.f32.mrf.mxu0
      %v1860 = vadd.f32 0.0, %v1859
      %v1861 = vpop.f32.mrf.mxu0
      %v1862 = vadd.f32 0.0, %v1861
      %1863 = vmatmul.bf16.gmra.mxu0 %v1325
      %v1864 = vpop.f32.mrf.mxu0
      %v1865 = vadd.f32 0.0, %v1864
      %v1866 = vpop.f32.mrf.mxu0
      %v1867 = vadd.f32 0.0, %v1866
      %1868 = vmatmul.bf16.gmra.mxu0 %v1328
      %v1869 = vpop.f32.mrf.mxu0
      %v1870 = vadd.f32 0.0, %v1869
      %v1871 = vpop.f32.mrf.mxu0
      %v1872 = vadd.f32 0.0, %v1871
      %1873 = vmatmul.bf16.gmra.mxu0 %v1331
      %v1874 = vpop.f32.mrf.mxu0
      %v1875 = vadd.f32 0.0, %v1874
      %v1876 = vpop.f32.mrf.mxu0
      %v1877 = vadd.f32 0.0, %v1876
      %1878 = vmatmul.bf16.gmra.mxu0 %v1334
      %v1879 = vpop.f32.mrf.mxu0
      %v1880 = vadd.f32 0.0, %v1879
      %v1881 = vpop.f32.mrf.mxu0
      %v1882 = vadd.f32 0.0, %v1881
      %1883 = vmatmul.bf16.gmra.mxu0 %v1337
      %v1884 = vpop.f32.mrf.mxu0
      %v1885 = vadd.f32 0.0, %v1884
      %v1886 = vpop.f32.mrf.mxu0
      %v1887 = vadd.f32 0.0, %v1886
      %1888 = vmatmul.bf16.gmra.mxu0 %v1340
      %v1889 = vpop.f32.mrf.mxu0
      %v1890 = vadd.f32 0.0, %v1889
      %v1891 = vpop.f32.mrf.mxu0
      %v1892 = vadd.f32 0.0, %v1891
      %1893 = vmatmul.bf16.gmra.mxu0 %v1343
      %v1894 = vpop.f32.mrf.mxu0
      %v1895 = vadd.f32 0.0, %v1894
      %v1896 = vpop.f32.mrf.mxu0
      %v1897 = vadd.f32 0.0, %v1896
      %1898 = vmatmul.bf16.gmra.mxu0 %v1346
      %v1899 = vpop.f32.mrf.mxu0
      %v1900 = vadd.f32 0.0, %v1899
      %v1901 = vpop.f32.mrf.mxu0
      %v1902 = vadd.f32 0.0, %v1901
      %1903 = vmatmul.bf16.gmra.mxu0 %v1349
      %v1904 = vpop.f32.mrf.mxu0
      %v1905 = vadd.f32 0.0, %v1904
      %v1906 = vpop.f32.mrf.mxu0
      %v1907 = vadd.f32 0.0, %v1906
      %1908 = vmatmul.bf16.gmra.mxu0 %v1352
      %v1909 = vpop.f32.mrf.mxu0
      %v1910 = vadd.f32 0.0, %v1909
      %v1911 = vpop.f32.mrf.mxu0
      %v1912 = vadd.f32 0.0, %v1911
      %1913 = vmatmul.bf16.gmra.mxu0 %v1355
      %v1914 = vpop.f32.mrf.mxu0
      %v1915 = vadd.f32 0.0, %v1914
      %v1916 = vpop.f32.mrf.mxu0
      %v1917 = vadd.f32 0.0, %v1916
      %1918 = vmatmul.bf16.gmra.mxu0 %v1358
      %v1919 = vpop.f32.mrf.mxu0
      %v1920 = vadd.f32 0.0, %v1919
      %v1921 = vpop.f32.mrf.mxu0
      %v1922 = vadd.f32 0.0, %v1921
      %1923 = vmatmul.bf16.gmra.mxu0 %v1361
      %v1924 = vpop.f32.mrf.mxu0
      %v1925 = vadd.f32 0.0, %v1924
      %v1926 = vpop.f32.mrf.mxu0
      %v1927 = vadd.f32 0.0, %v1926
      %1928 = vmatmul.bf16.gmra.mxu0 %v1364
      %v1929 = vpop.f32.mrf.mxu0
      %v1930 = vadd.f32 0.0, %v1929
      %v1931 = vpop.f32.mrf.mxu0
      %v1932 = vadd.f32 0.0, %v1931
      %1933 = vmatmul.bf16.gmra.mxu0 %v1367
      %v1934 = vpop.f32.mrf.mxu0
      %v1935 = vadd.f32 0.0, %v1934
      %v1936 = vpop.f32.mrf.mxu0
      %v1937 = vadd.f32 0.0, %v1936
      %1938 = vmatmul.bf16.gmra.mxu0 %v1370
      %v1939 = vpop.f32.mrf.mxu0
      %v1940 = vadd.f32 0.0, %v1939
      %v1941 = vpop.f32.mrf.mxu0
      %v1942 = vadd.f32 0.0, %v1941
      %1943 = vmatmul.bf16.gmra.mxu0 %v1373
      %v1944 = vpop.f32.mrf.mxu0
      %v1945 = vadd.f32 0.0, %v1944
      %v1946 = vpop.f32.mrf.mxu0
      %v1947 = vadd.f32 0.0, %v1946
      %1948 = vmatmul.bf16.gmra.mxu0 %v1376
      %v1949 = vpop.f32.mrf.mxu0
      %v1950 = vadd.f32 0.0, %v1949
      %v1951 = vpop.f32.mrf.mxu0
      %v1952 = vadd.f32 0.0, %v1951
      %1953 = vmatmul.bf16.gmra.mxu0 %v1379
      %v1954 = vpop.f32.mrf.mxu0
      %v1955 = vadd.f32 0.0, %v1954
      %v1956 = vpop.f32.mrf.mxu0
      %v1957 = vadd.f32 0.0, %v1956
      %1958 = vmatmul.bf16.gmra.mxu0 %v1382
      %v1959 = vpop.f32.mrf.mxu0
      %v1960 = vadd.f32 0.0, %v1959
      %v1961 = vpop.f32.mrf.mxu0
      %v1962 = vadd.f32 0.0, %v1961
      %1963 = vmatmul.bf16.gmra.mxu0 %v1385
      %v1964 = vpop.f32.mrf.mxu0
      %v1965 = vadd.f32 0.0, %v1964
      %v1966 = vpop.f32.mrf.mxu0
      %v1967 = vadd.f32 0.0, %v1966
      %1968 = vmatmul.bf16.gmra.mxu0 %v1388
      %v1969 = vpop.f32.mrf.mxu0
      %v1970 = vadd.f32 0.0, %v1969
      %v1971 = vpop.f32.mrf.mxu0
      %v1972 = vadd.f32 0.0, %v1971
      %1973 = vmatmul.bf16.gmra.mxu0 %v1391
      %v1974 = vpop.f32.mrf.mxu0
      %v1975 = vadd.f32 0.0, %v1974
      %v1976 = vpop.f32.mrf.mxu0
      %v1977 = vadd.f32 0.0, %v1976
      %1978 = vmatmul.bf16.gmra.mxu0 %v1394
      %v1979 = vpop.f32.mrf.mxu0
      %v1980 = vadd.f32 0.0, %v1979
      %v1981 = vpop.f32.mrf.mxu0
      %v1982 = vadd.f32 0.0, %v1981
      %1983 = vmatmul.bf16.gmra.mxu0 %v1397
      %v1984 = vpop.f32.mrf.mxu0
      %v1985 = vadd.f32 0.0, %v1984
      %v1986 = vpop.f32.mrf.mxu0
      %v1987 = vadd.f32 0.0, %v1986
      %1988 = vmatmul.bf16.gmra.mxu0 %v1400
      %v1989 = vpop.f32.mrf.mxu0
      %v1990 = vadd.f32 0.0, %v1989
      %v1991 = vpop.f32.mrf.mxu0
      %v1992 = vadd.f32 0.0, %v1991
      %1993 = vmatmul.bf16.gmra.mxu0 %v1403
      %v1994 = vpop.f32.mrf.mxu0
      %v1995 = vadd.f32 0.0, %v1994
      %v1996 = vpop.f32.mrf.mxu0
      %v1997 = vadd.f32 0.0, %v1996
      %1998 = vmatmul.bf16.gmra.mxu0 %v1406
      %v1999 = vpop.f32.mrf.mxu0
      %v2000 = vadd.f32 0.0, %v1999
      %v2001 = vpop.f32.mrf.mxu0
      %v2002 = vadd.f32 0.0, %v2001
      %2003 = vmatmul.bf16.gmra.mxu0 %v1409
      %v2004 = vpop.f32.mrf.mxu0
      %v2005 = vadd.f32 0.0, %v2004
      %v2006 = vpop.f32.mrf.mxu0
      %v2007 = vadd.f32 0.0, %v2006
      %2008 = vmatmul.bf16.gmra.mxu0 %v1412
      %v2009 = vpop.f32.mrf.mxu0
      %v2010 = vadd.f32 0.0, %v2009
      %v2011 = vpop.f32.mrf.mxu0
      %v2012 = vadd.f32 0.0, %v2011
      %2013 = vmatmul.bf16.gmra.mxu0 %v1415
      %v2014 = vpop.f32.mrf.mxu0
      %v2015 = vadd.f32 0.0, %v2014
      %v2016 = vpop.f32.mrf.mxu0
      %v2017 = vadd.f32 0.0, %v2016
      %2018 = vmatmul.bf16.gmra.mxu0 %v1418
      %v2019 = vpop.f32.mrf.mxu0
      %v2020 = vadd.f32 0.0, %v2019
      %v2021 = vpop.f32.mrf.mxu0
      %v2022 = vadd.f32 0.0, %v2021
      %2023 = vmatmul.bf16.gmra.mxu0 %v1421
      %v2024 = vpop.f32.mrf.mxu0
      %v2025 = vadd.f32 0.0, %v2024
      %v2026 = vpop.f32.mrf.mxu0
      %v2027 = vadd.f32 0.0, %v2026
      %2028 = vmatmul.bf16.gmra.mxu0 %v1424
      %v2029 = vpop.f32.mrf.mxu0
      %v2030 = vadd.f32 0.0, %v2029
      %v2031 = vpop.f32.mrf.mxu0
      %v2032 = vadd.f32 0.0, %v2031
      %2033 = vmatmul.bf16.gmra.mxu0 %v1427
      %v2034 = vpop.f32.mrf.mxu0
      %v2035 = vadd.f32 0.0, %v2034
      %v2036 = vpop.f32.mrf.mxu0
      %v2037 = vadd.f32 0.0, %v2036
      %2038 = vmatmul.bf16.gmra.mxu0 %v1430
      %v2039 = vpop.f32.mrf.mxu0
      %v2040 = vadd.f32 0.0, %v2039
      %v2041 = vpop.f32.mrf.mxu0
      %v2042 = vadd.f32 0.0, %v2041
      %2043 = vmatmul.bf16.gmra.mxu0 %v1433
      %v2044 = vpop.f32.mrf.mxu0
      %v2045 = vadd.f32 0.0, %v2044
      %v2046 = vpop.f32.mrf.mxu0
      %v2047 = vadd.f32 0.0, %v2046
      %2048 = vmatmul.bf16.gmra.mxu0 %v1436
      %v2049 = vpop.f32.mrf.mxu0
      %v2050 = vadd.f32 0.0, %v2049
      %v2051 = vpop.f32.mrf.mxu0
      %v2052 = vadd.f32 0.0, %v2051
      %2053 = vmatmul.bf16.gmra.mxu0 %v1439
      %v2054 = vpop.f32.mrf.mxu0
      %v2055 = vadd.f32 0.0, %v2054
      %v2056 = vpop.f32.mrf.mxu0
      %v2057 = vadd.f32 0.0, %v2056
      %2058 = vmatmul.bf16.gmra.mxu0 %v1442
      %v2059 = vpop.f32.mrf.mxu0
      %v2060 = vadd.f32 0.0, %v2059
      %v2061 = vpop.f32.mrf.mxu0
      %v2062 = vadd.f32 0.0, %v2061
      %2063 = vmatmul.bf16.gmra.mxu0 %v1445
      %v2064 = vpop.f32.mrf.mxu0
      %v2065 = vadd.f32 0.0, %v2064
      %v2066 = vpop.f32.mrf.mxu0
      %v2067 = vadd.f32 0.0, %v2066
      %2068 = vmatmul.bf16.gmra.mxu0 %v1448
      %v2069 = vpop.f32.mrf.mxu0
      %v2070 = vadd.f32 0.0, %v2069
      %v2071 = vpop.f32.mrf.mxu0
      %v2072 = vadd.f32 0.0, %v2071
      %2073 = vmatmul.bf16.gmra.mxu0 %v1451
      %v2074 = vpop.f32.mrf.mxu0
      %v2075 = vadd.f32 0.0, %v2074
      %v2076 = vpop.f32.mrf.mxu0
      %v2077 = vadd.f32 0.0, %v2076
      %2078 = vmatmul.bf16.gmra.mxu0 %v1454
      %v2079 = vpop.f32.mrf.mxu0
      %v2080 = vadd.f32 0.0, %v2079
      %v2081 = vpop.f32.mrf.mxu0
      %v2082 = vadd.f32 0.0, %v2081
      %2083 = vmatmul.bf16.gmra.mxu0 %v1457
      %v2084 = vpop.f32.mrf.mxu0
      %v2085 = vadd.f32 0.0, %v2084
      %v2086 = vpop.f32.mrf.mxu0
      %v2087 = vadd.f32 0.0, %v2086
      %2088 = vmatmul.bf16.gmra.mxu0 %v1460
      %v2089 = vpop.f32.mrf.mxu0
      %v2090 = vadd.f32 0.0, %v2089
      %v2091 = vpop.f32.mrf.mxu0
      %v2092 = vadd.f32 0.0, %v2091
      %2093 = vmatmul.bf16.gmra.mxu0 %v1463
      %v2094 = vpop.f32.mrf.mxu0
      %v2095 = vadd.f32 0.0, %v2094
      %v2096 = vpop.f32.mrf.mxu0
      %v2097 = vadd.f32 0.0, %v2096
      %2098 = vmatmul.bf16.gmra.mxu0 %v1466
      %v2099 = vpop.f32.mrf.mxu0
      %v2100 = vadd.f32 0.0, %v2099
      %v2101 = vpop.f32.mrf.mxu0
      %v2102 = vadd.f32 0.0, %v2101
      %2103 = vmatmul.bf16.gmra.mxu0 %v1469
      %v2104 = vpop.f32.mrf.mxu0
      %v2105 = vadd.f32 0.0, %v2104
      %v2106 = vpop.f32.mrf.mxu0
      %v2107 = vadd.f32 0.0, %v2106
      %2108 = vmatmul.bf16.gmra.mxu0 %v1472
      %v2109 = vpop.f32.mrf.mxu0
      %v2110 = vadd.f32 0.0, %v2109
      %v2111 = vpop.f32.mrf.mxu0
      %v2112 = vadd.f32 0.0, %v2111
      %2113 = vmatmul.bf16.gmra.mxu0 %v1475
      %v2114 = vpop.f32.mrf.mxu0
      %v2115 = vadd.f32 0.0, %v2114
      %v2116 = vpop.f32.mrf.mxu0
      %v2117 = vadd.f32 0.0, %v2116
      %2118 = vmatmul.bf16.gmra.mxu0 %v1478
      %v2119 = vpop.f32.mrf.mxu0
      %v2120 = vadd.f32 0.0, %v2119
      %v2121 = vpop.f32.mrf.mxu0
      %v2122 = vadd.f32 0.0, %v2121
      %2123 = vmatmul.bf16.gmra.mxu0 %v1481
      %v2124 = vpop.f32.mrf.mxu0
      %v2125 = vadd.f32 0.0, %v2124
      %v2126 = vpop.f32.mrf.mxu0
      %v2127 = vadd.f32 0.0, %v2126
      %2128 = vmatmul.bf16.gmra.mxu0 %v1484
      %v2129 = vpop.f32.mrf.mxu0
      %v2130 = vadd.f32 0.0, %v2129
      %v2131 = vpop.f32.mrf.mxu0
      %v2132 = vadd.f32 0.0, %v2131
      %2133 = vmatmul.bf16.gmra.mxu0 %v1487
      %v2134 = vpop.f32.mrf.mxu0
      %v2135 = vadd.f32 0.0, %v2134
      %v2136 = vpop.f32.mrf.mxu0
      %v2137 = vadd.f32 0.0, %v2136
      %2138 = vmatmul.bf16.gmra.mxu0 %v1490
      %v2139 = vpop.f32.mrf.mxu0
      %v2140 = vadd.f32 0.0, %v2139
      %v2141 = vpop.f32.mrf.mxu0
      %v2142 = vadd.f32 0.0, %v2141
      %2143 = vmatmul.bf16.gmra.mxu0 %v1493
      %v2144 = vpop.f32.mrf.mxu0
      %v2145 = vadd.f32 0.0, %v2144
      %v2146 = vpop.f32.mrf.mxu0
      %v2147 = vadd.f32 0.0, %v2146
      %2148 = vmatmul.bf16.gmra.mxu0 %v1496
      %v2149 = vpop.f32.mrf.mxu0
      %v2150 = vadd.f32 0.0, %v2149
      %v2151 = vpop.f32.mrf.mxu0
      %v2152 = vadd.f32 0.0, %v2151
      %2153 = vdwg.mxu0
      %2154 = vst [vmem:[#allocation2] sm:$0xff] %v1515
      %2155 = vst [vmem:[#allocation2 + $0x8] sm:$0xff] %v1517
      %2156 = vst [vmem:[#allocation2 + $0x10] sm:$0xff] %v1520
      %2157 = vst [vmem:[#allocation2 + $0x18] sm:$0xff] %v1522
      %2158 = vst [vmem:[#allocation2 + $0x20] sm:$0xff] %v1525
      %2159 = vst [vmem:[#allocation2 + $0x28] sm:$0xff] %v1527
      %2160 = vst [vmem:[#allocation2 + $0x30] sm:$0xff] %v1530
      %2161 = vst [vmem:[#allocation2 + $0x38] sm:$0xff] %v1532
      %2162 = vst [vmem:[#allocation2 + $0x40] sm:$0xff] %v1535
      %2163 = vst [vmem:[#allocation2 + $0x48] sm:$0xff] %v1537
      %2164 = vst [vmem:[#allocation2 + $0x50] sm:$0xff] %v1540
      %2165 = vst [vmem:[#allocation2 + $0x58] sm:$0xff] %v1542
      %2166 = vst [vmem:[#allocation2 + $0x60] sm:$0xff] %v1545
      %2167 = vst [vmem:[#allocation2 + $0x68] sm:$0xff] %v1547
      %2168 = vst [vmem:[#allocation2 + $0x70] sm:$0xff] %v1550
      %2169 = vst [vmem:[#allocation2 + $0x78] sm:$0xff] %v1552
      %2170 = vst [vmem:[#allocation2 + $0x80] sm:$0xff] %v1555
      %2171 = vst [vmem:[#allocation2 + $0x88] sm:$0xff] %v1557
      %2172 = vst [vmem:[#allocation2 + $0x90] sm:$0xff] %v1560
      %2173 = vst [vmem:[#allocation2 + $0x98] sm:$0xff] %v1562
      %2174 = vst [vmem:[#allocation2 + $0xa0] sm:$0xff] %v1565
      %2175 = vst [vmem:[#allocation2 + $0xa8] sm:$0xff] %v1567
      %2176 = vst [vmem:[#allocation2 + $0xb0] sm:$0xff] %v1570
      %2177 = vst [vmem:[#allocation2 + $0xb8] sm:$0xff] %v1572
      %2178 = vst [vmem:[#allocation2 + $0xc0] sm:$0xff] %v1575
      %2179 = vst [vmem:[#allocation2 + $0xc8] sm:$0xff] %v1577
      %2180 = vst [vmem:[#allocation2 + $0xd0] sm:$0xff] %v1580
      %2181 = vst [vmem:[#allocation2 + $0xd8] sm:$0xff] %v1582
      %2182 = vst [vmem:[#allocation2 + $0xe0] sm:$0xff] %v1585
      %2183 = vst [vmem:[#allocation2 + $0xe8] sm:$0xff] %v1587
      %2184 = vst [vmem:[#allocation2 + $0xf0] sm:$0xff] %v1590
      %2185 = vst [vmem:[#allocation2 + $0xf8] sm:$0xff] %v1592
      %2186 = vst [vmem:[#allocation2 + $0x100] sm:$0xff] %v1595
      %2187 = vst [vmem:[#allocation2 + $0x108] sm:$0xff] %v1597
      %2188 = vst [vmem:[#allocation2 + $0x110] sm:$0xff] %v1600
      %2189 = vst [vmem:[#allocation2 + $0x118] sm:$0xff] %v1602
      %2190 = vst [vmem:[#allocation2 + $0x120] sm:$0xff] %v1605
      %2191 = vst [vmem:[#allocation2 + $0x128] sm:$0xff] %v1607
      %2192 = vst [vmem:[#allocation2 + $0x130] sm:$0xff] %v1610
      %2193 = vst [vmem:[#allocation2 + $0x138] sm:$0xff] %v1612
      %2194 = vst [vmem:[#allocation2 + $0x140] sm:$0xff] %v1615
      %2195 = vst [vmem:[#allocation2 + $0x148] sm:$0xff] %v1617
      %2196 = vst [vmem:[#allocation2 + $0x150] sm:$0xff] %v1620
      %2197 = vst [vmem:[#allocation2 + $0x158] sm:$0xff] %v1622
      %2198 = vst [vmem:[#allocation2 + $0x160] sm:$0xff] %v1625
      %2199 = vst [vmem:[#allocation2 + $0x168] sm:$0xff] %v1627
      %2200 = vst [vmem:[#allocation2 + $0x170] sm:$0xff] %v1630
      %2201 = vst [vmem:[#allocation2 + $0x178] sm:$0xff] %v1632
      %2202 = vst [vmem:[#allocation2 + $0x180] sm:$0xff] %v1635
      %2203 = vst [vmem:[#allocation2 + $0x188] sm:$0xff] %v1637
      %2204 = vst [vmem:[#allocation2 + $0x190] sm:$0xff] %v1640
      %2205 = vst [vmem:[#allocation2 + $0x198] sm:$0xff] %v1642
      %2206 = vst [vmem:[#allocation2 + $0x1a0] sm:$0xff] %v1645
      %2207 = vst [vmem:[#allocation2 + $0x1a8] sm:$0xff] %v1647
      %2208 = vst [vmem:[#allocation2 + $0x1b0] sm:$0xff] %v1650
      %2209 = vst [vmem:[#allocation2 + $0x1b8] sm:$0xff] %v1652
      %2210 = vst [vmem:[#allocation2 + $0x1c0] sm:$0xff] %v1655
      %2211 = vst [vmem:[#allocation2 + $0x1c8] sm:$0xff] %v1657
      %2212 = vst [vmem:[#allocation2 + $0x1d0] sm:$0xff] %v1660
      %2213 = vst [vmem:[#allocation2 + $0x1d8] sm:$0xff] %v1662
      %2214 = vst [vmem:[#allocation2 + $0x1e0] sm:$0xff] %v1665
      %2215 = vst [vmem:[#allocation2 + $0x1e8] sm:$0xff] %v1667
      %2216 = vst [vmem:[#allocation2 + $0x1f0] sm:$0xff] %v1670
      %2217 = vst [vmem:[#allocation2 + $0x1f8] sm:$0xff] %v1672
      %2218 = vst [vmem:[#allocation2 + $0x200] sm:$0xff] %v1675
      %2219 = vst [vmem:[#allocation2 + $0x208] sm:$0xff] %v1677
      %2220 = vst [vmem:[#allocation2 + $0x210] sm:$0xff] %v1680
      %2221 = vst [vmem:[#allocation2 + $0x218] sm:$0xff] %v1682
      %2222 = vst [vmem:[#allocation2 + $0x220] sm:$0xff] %v1685
      %2223 = vst [vmem:[#allocation2 + $0x228] sm:$0xff] %v1687
      %2224 = vst [vmem:[#allocation2 + $0x230] sm:$0xff] %v1690
      %2225 = vst [vmem:[#allocation2 + $0x238] sm:$0xff] %v1692
      %2226 = vst [vmem:[#allocation2 + $0x240] sm:$0xff] %v1695
      %2227 = vst [vmem:[#allocation2 + $0x248] sm:$0xff] %v1697
      %2228 = vst [vmem:[#allocation2 + $0x250] sm:$0xff] %v1700
      %2229 = vst [vmem:[#allocation2 + $0x258] sm:$0xff] %v1702
      %2230 = vst [vmem:[#allocation2 + $0x260] sm:$0xff] %v1705
      %2231 = vst [vmem:[#allocation2 + $0x268] sm:$0xff] %v1707
      %2232 = vst [vmem:[#allocation2 + $0x270] sm:$0xff] %v1710
      %2233 = vst [vmem:[#allocation2 + $0x278] sm:$0xff] %v1712
      %2234 = vst [vmem:[#allocation2 + $0x280] sm:$0xff] %v1715
      %2235 = vst [vmem:[#allocation2 + $0x288] sm:$0xff] %v1717
      %2236 = vst [vmem:[#allocation2 + $0x290] sm:$0xff] %v1720
      %2237 = vst [vmem:[#allocation2 + $0x298] sm:$0xff] %v1722
      %2238 = vst [vmem:[#allocation2 + $0x2a0] sm:$0xff] %v1725
      %2239 = vst [vmem:[#allocation2 + $0x2a8] sm:$0xff] %v1727
      %2240 = vst [vmem:[#allocation2 + $0x2b0] sm:$0xff] %v1730
      %2241 = vst [vmem:[#allocation2 + $0x2b8] sm:$0xff] %v1732
      %2242 = vst [vmem:[#allocation2 + $0x2c0] sm:$0xff] %v1735
      %2243 = vst [vmem:[#allocation2 + $0x2c8] sm:$0xff] %v1737
      %2244 = vst [vmem:[#allocation2 + $0x2d0] sm:$0xff] %v1740
      %2245 = vst [vmem:[#allocation2 + $0x2d8] sm:$0xff] %v1742
      %2246 = vst [vmem:[#allocation2 + $0x2e0] sm:$0xff] %v1745
      %2247 = vst [vmem:[#allocation2 + $0x2e8] sm:$0xff] %v1747
      %2248 = vst [vmem:[#allocation2 + $0x2f0] sm:$0xff] %v1750
      %2249 = vst [vmem:[#allocation2 + $0x2f8] sm:$0xff] %v1752
      %2250 = vst [vmem:[#allocation2 + $0x300] sm:$0xff] %v1755
      %2251 = vst [vmem:[#allocation2 + $0x308] sm:$0xff] %v1757
      %2252 = vst [vmem:[#allocation2 + $0x310] sm:$0xff] %v1760
      %2253 = vst [vmem:[#allocation2 + $0x318] sm:$0xff] %v1762
      %2254 = vst [vmem:[#allocation2 + $0x320] sm:$0xff] %v1765
      %2255 = vst [vmem:[#allocation2 + $0x328] sm:$0xff] %v1767
      %2256 = vst [vmem:[#allocation2 + $0x330] sm:$0xff] %v1770
      %2257 = vst [vmem:[#allocation2 + $0x338] sm:$0xff] %v1772
      %2258 = vst [vmem:[#allocation2 + $0x340] sm:$0xff] %v1775
      %2259 = vst [vmem:[#allocation2 + $0x348] sm:$0xff] %v1777
      %2260 = vst [vmem:[#allocation2 + $0x350] sm:$0xff] %v1780
      %2261 = vst [vmem:[#allocation2 + $0x358] sm:$0xff] %v1782
      %2262 = vst [vmem:[#allocation2 + $0x360] sm:$0xff] %v1785
      %2263 = vst [vmem:[#allocation2 + $0x368] sm:$0xff] %v1787
      %2264 = vst [vmem:[#allocation2 + $0x370] sm:$0xff] %v1790
      %2265 = vst [vmem:[#allocation2 + $0x378] sm:$0xff] %v1792
      %2266 = vst [vmem:[#allocation2 + $0x380] sm:$0xff] %v1795
      %2267 = vst [vmem:[#allocation2 + $0x388] sm:$0xff] %v1797
      %2268 = vst [vmem:[#allocation2 + $0x390] sm:$0xff] %v1800
      %2269 = vst [vmem:[#allocation2 + $0x398] sm:$0xff] %v1802
      %2270 = vst [vmem:[#allocation2 + $0x3a0] sm:$0xff] %v1805
      %2271 = vst [vmem:[#allocation2 + $0x3a8] sm:$0xff] %v1807
      %2272 = vst [vmem:[#allocation2 + $0x3b0] sm:$0xff] %v1810
      %2273 = vst [vmem:[#allocation2 + $0x3b8] sm:$0xff] %v1812
      %2274 = vst [vmem:[#allocation2 + $0x3c0] sm:$0xff] %v1815
      %2275 = vst [vmem:[#allocation2 + $0x3c8] sm:$0xff] %v1817
      %2276 = vst [vmem:[#allocation2 + $0x3d0] sm:$0xff] %v1820
      %2277 = vst [vmem:[#allocation2 + $0x3d8] sm:$0xff] %v1822
      %2278 = vst [vmem:[#allocation2 + $0x3e0] sm:$0xff] %v1825
      %2279 = vst [vmem:[#allocation2 + $0x3e8] sm:$0xff] %v1827
      %2280 = vst [vmem:[#allocation2 + $0x3f0] sm:$0xff] %v1830
      %2281 = vst [vmem:[#allocation2 + $0x3f8] sm:$0xff] %v1832
      %2282 = vst [vmem:[#allocation2 + $0x400] sm:$0xff] %v1835
      %2283 = vst [vmem:[#allocation2 + $0x408] sm:$0xff] %v1837
      %2284 = vst [vmem:[#allocation2 + $0x410] sm:$0xff] %v1840
      %2285 = vst [vmem:[#allocation2 + $0x418] sm:$0xff] %v1842
      %2286 = vst [vmem:[#allocation2 + $0x420] sm:$0xff] %v1845
      %2287 = vst [vmem:[#allocation2 + $0x428] sm:$0xff] %v1847
      %2288 = vst [vmem:[#allocation2 + $0x430] sm:$0xff] %v1850
      %2289 = vst [vmem:[#allocation2 + $0x438] sm:$0xff] %v1852
      %2290 = vst [vmem:[#allocation2 + $0x440] sm:$0xff] %v1855
      %2291 = vst [vmem:[#allocation2 + $0x448] sm:$0xff] %v1857
      %2292 = vst [vmem:[#allocation2 + $0x450] sm:$0xff] %v1860
      %2293 = vst [vmem:[#allocation2 + $0x458] sm:$0xff] %v1862
      %2294 = vst [vmem:[#allocation2 + $0x460] sm:$0xff] %v1865
      %2295 = vst [vmem:[#allocation2 + $0x468] sm:$0xff] %v1867
      %2296 = vst [vmem:[#allocation2 + $0x470] sm:$0xff] %v1870
      %2297 = vst [vmem:[#allocation2 + $0x478] sm:$0xff] %v1872
      %2298 = vst [vmem:[#allocation2 + $0x480] sm:$0xff] %v1875
      %2299 = vst [vmem:[#allocation2 + $0x488] sm:$0xff] %v1877
      %2300 = vst [vmem:[#allocation2 + $0x490] sm:$0xff] %v1880
      %2301 = vst [vmem:[#allocation2 + $0x498] sm:$0xff] %v1882
      %2302 = vst [vmem:[#allocation2 + $0x4a0] sm:$0xff] %v1885
      %2303 = vst [vmem:[#allocation2 + $0x4a8] sm:$0xff] %v1887
      %2304 = vst [vmem:[#allocation2 + $0x4b0] sm:$0xff] %v1890
      %2305 = vst [vmem:[#allocation2 + $0x4b8] sm:$0xff] %v1892
      %2306 = vst [vmem:[#allocation2 + $0x4c0] sm:$0xff] %v1895
      %2307 = vst [vmem:[#allocation2 + $0x4c8] sm:$0xff] %v1897
      %2308 = vst [vmem:[#allocation2 + $0x4d0] sm:$0xff] %v1900
      %2309 = vst [vmem:[#allocation2 + $0x4d8] sm:$0xff] %v1902
      %2310 = vst [vmem:[#allocation2 + $0x4e0] sm:$0xff] %v1905
      %2311 = vst [vmem:[#allocation2 + $0x4e8] sm:$0xff] %v1907
      %2312 = vst [vmem:[#allocation2 + $0x4f0] sm:$0xff] %v1910
      %2313 = vst [vmem:[#allocation2 + $0x4f8] sm:$0xff] %v1912
      %2314 = vst [vmem:[#allocation2 + $0x500] sm:$0xff] %v1915
      %2315 = vst [vmem:[#allocation2 + $0x508] sm:$0xff] %v1917
      %2316 = vst [vmem:[#allocation2 + $0x510] sm:$0xff] %v1920
      %2317 = vst [vmem:[#allocation2 + $0x518] sm:$0xff] %v1922
      %2318 = vst [vmem:[#allocation2 + $0x520] sm:$0xff] %v1925
      %2319 = vst [vmem:[#allocation2 + $0x528] sm:$0xff] %v1927
      %2320 = vst [vmem:[#allocation2 + $0x530] sm:$0xff] %v1930
      %2321 = vst [vmem:[#allocation2 + $0x538] sm:$0xff] %v1932
      %2322 = vst [vmem:[#allocation2 + $0x540] sm:$0xff] %v1935
      %2323 = vst [vmem:[#allocation2 + $0x548] sm:$0xff] %v1937
      %2324 = vst [vmem:[#allocation2 + $0x550] sm:$0xff] %v1940
      %2325 = vst [vmem:[#allocation2 + $0x558] sm:$0xff] %v1942
      %2326 = vst [vmem:[#allocation2 + $0x560] sm:$0xff] %v1945
      %2327 = vst [vmem:[#allocation2 + $0x568] sm:$0xff] %v1947
      %2328 = vst [vmem:[#allocation2 + $0x570] sm:$0xff] %v1950
      %2329 = vst [vmem:[#allocation2 + $0x578] sm:$0xff] %v1952
      %2330 = vst [vmem:[#allocation2 + $0x580] sm:$0xff] %v1955
      %2331 = vst [vmem:[#allocation2 + $0x588] sm:$0xff] %v1957
      %2332 = vst [vmem:[#allocation2 + $0x590] sm:$0xff] %v1960
      %2333 = vst [vmem:[#allocation2 + $0x598] sm:$0xff] %v1962
      %2334 = vst [vmem:[#allocation2 + $0x5a0] sm:$0xff] %v1965
      %2335 = vst [vmem:[#allocation2 + $0x5a8] sm:$0xff] %v1967
      %2336 = vst [vmem:[#allocation2 + $0x5b0] sm:$0xff] %v1970
      %2337 = vst [vmem:[#allocation2 + $0x5b8] sm:$0xff] %v1972
      %2338 = vst [vmem:[#allocation2 + $0x5c0] sm:$0xff] %v1975
      %2339 = vst [vmem:[#allocation2 + $0x5c8] sm:$0xff] %v1977
      %2340 = vst [vmem:[#allocation2 + $0x5d0] sm:$0xff] %v1980
      %2341 = vst [vmem:[#allocation2 + $0x5d8] sm:$0xff] %v1982
      %2342 = vst [vmem:[#allocation2 + $0x5e0] sm:$0xff] %v1985
      %2343 = vst [vmem:[#allocation2 + $0x5e8] sm:$0xff] %v1987
      %2344 = vst [vmem:[#allocation2 + $0x5f0] sm:$0xff] %v1990
      %2345 = vst [vmem:[#allocation2 + $0x5f8] sm:$0xff] %v1992
      %2346 = vst [vmem:[#allocation2 + $0x600] sm:$0xff] %v1995
      %2347 = vst [vmem:[#allocation2 + $0x608] sm:$0xff] %v1997
      %2348 = vst [vmem:[#allocation2 + $0x610] sm:$0xff] %v2000
      %2349 = vst [vmem:[#allocation2 + $0x618] sm:$0xff] %v2002
      %2350 = vst [vmem:[#allocation2 + $0x620] sm:$0xff] %v2005
      %2351 = vst [vmem:[#allocation2 + $0x628] sm:$0xff] %v2007
      %2352 = vst [vmem:[#allocation2 + $0x630] sm:$0xff] %v2010
      %2353 = vst [vmem:[#allocation2 + $0x638] sm:$0xff] %v2012
      %2354 = vst [vmem:[#allocation2 + $0x640] sm:$0xff] %v2015
      %2355 = vst [vmem:[#allocation2 + $0x648] sm:$0xff] %v2017
      %2356 = vst [vmem:[#allocation2 + $0x650] sm:$0xff] %v2020
      %2357 = vst [vmem:[#allocation2 + $0x658] sm:$0xff] %v2022
      %2358 = vst [vmem:[#allocation2 + $0x660] sm:$0xff] %v2025
      %2359 = vst [vmem:[#allocation2 + $0x668] sm:$0xff] %v2027
      %2360 = vst [vmem:[#allocation2 + $0x670] sm:$0xff] %v2030
      %2361 = vst [vmem:[#allocation2 + $0x678] sm:$0xff] %v2032
      %2362 = vst [vmem:[#allocation2 + $0x680] sm:$0xff] %v2035
      %2363 = vst [vmem:[#allocation2 + $0x688] sm:$0xff] %v2037
      %2364 = vst [vmem:[#allocation2 + $0x690] sm:$0xff] %v2040
      %2365 = vst [vmem:[#allocation2 + $0x698] sm:$0xff] %v2042
      %2366 = vst [vmem:[#allocation2 + $0x6a0] sm:$0xff] %v2045
      %2367 = vst [vmem:[#allocation2 + $0x6a8] sm:$0xff] %v2047
      %2368 = vst [vmem:[#allocation2 + $0x6b0] sm:$0xff] %v2050
      %2369 = vst [vmem:[#allocation2 + $0x6b8] sm:$0xff] %v2052
      %2370 = vst [vmem:[#allocation2 + $0x6c0] sm:$0xff] %v2055
      %2371 = vst [vmem:[#allocation2 + $0x6c8] sm:$0xff] %v2057
      %2372 = vst [vmem:[#allocation2 + $0x6d0] sm:$0xff] %v2060
      %2373 = vst [vmem:[#allocation2 + $0x6d8] sm:$0xff] %v2062
      %2374 = vst [vmem:[#allocation2 + $0x6e0] sm:$0xff] %v2065
      %2375 = vst [vmem:[#allocation2 + $0x6e8] sm:$0xff] %v2067
      %2376 = vst [vmem:[#allocation2 + $0x6f0] sm:$0xff] %v2070
      %2377 = vst [vmem:[#allocation2 + $0x6f8] sm:$0xff] %v2072
      %2378 = vst [vmem:[#allocation2 + $0x700] sm:$0xff] %v2075
      %2379 = vst [vmem:[#allocation2 + $0x708] sm:$0xff] %v2077
      %2380 = vst [vmem:[#allocation2 + $0x710] sm:$0xff] %v2080
      %2381 = vst [vmem:[#allocation2 + $0x718] sm:$0xff] %v2082
      %2382 = vst [vmem:[#allocation2 + $0x720] sm:$0xff] %v2085
      %2383 = vst [vmem:[#allocation2 + $0x728] sm:$0xff] %v2087
      %2384 = vst [vmem:[#allocation2 + $0x730] sm:$0xff] %v2090
      %2385 = vst [vmem:[#allocation2 + $0x738] sm:$0xff] %v2092
      %2386 = vst [vmem:[#allocation2 + $0x740] sm:$0xff] %v2095
      %2387 = vst [vmem:[#allocation2 + $0x748] sm:$0xff] %v2097
      %2388 = vst [vmem:[#allocation2 + $0x750] sm:$0xff] %v2100
      %2389 = vst [vmem:[#allocation2 + $0x758] sm:$0xff] %v2102
      %2390 = vst [vmem:[#allocation2 + $0x760] sm:$0xff] %v2105
      %2391 = vst [vmem:[#allocation2 + $0x768] sm:$0xff] %v2107
      %2392 = vst [vmem:[#allocation2 + $0x770] sm:$0xff] %v2110
      %2393 = vst [vmem:[#allocation2 + $0x778] sm:$0xff] %v2112
      %2394 = vst [vmem:[#allocation2 + $0x780] sm:$0xff] %v2115
      %2395 = vst [vmem:[#allocation2 + $0x788] sm:$0xff] %v2117
      %2396 = vst [vmem:[#allocation2 + $0x790] sm:$0xff] %v2120
      %2397 = vst [vmem:[#allocation2 + $0x798] sm:$0xff] %v2122
      %2398 = vst [vmem:[#allocation2 + $0x7a0] sm:$0xff] %v2125
      %2399 = vst [vmem:[#allocation2 + $0x7a8] sm:$0xff] %v2127
      %2400 = vst [vmem:[#allocation2 + $0x7b0] sm:$0xff] %v2130
      %2401 = vst [vmem:[#allocation2 + $0x7b8] sm:$0xff] %v2132
      %2402 = vst [vmem:[#allocation2 + $0x7c0] sm:$0xff] %v2135
      %2403 = vst [vmem:[#allocation2 + $0x7c8] sm:$0xff] %v2137
      %2404 = vst [vmem:[#allocation2 + $0x7d0] sm:$0xff] %v2140
      %2405 = vst [vmem:[#allocation2 + $0x7d8] sm:$0xff] %v2142
      %2406 = vst [vmem:[#allocation2 + $0x7e0] sm:$0xff] %v2145
      %2407 = vst [vmem:[#allocation2 + $0x7e8] sm:$0xff] %v2147
      %2408 = vst [vmem:[#allocation2 + $0x7f0] sm:$0xff] %v2150
      %2409 = vst [vmem:[#allocation2 + $0x7f8] sm:$0xff] %v2152
      %v2410 = vld [vmem:[#allocation2] ss:$2 sm:$0xff]
      %s2411 = scalar_lea.vmem [#allocation2], 16
      %v2412 = vld [vmem:[%s2411] ss:$2 sm:$0xff]
      %s2413 = scalar_lea.vmem [#allocation2], 32
      %v2414 = vld [vmem:[%s2413] ss:$2 sm:$0xff]
      %s2415 = scalar_lea.vmem [#allocation2], 48
      %v2416 = vld [vmem:[%s2415] ss:$2 sm:$0xff]
      %s2417 = scalar_lea.vmem [#allocation2], 64
      %v2418 = vld [vmem:[%s2417] ss:$2 sm:$0xff]
      %s2419 = scalar_lea.vmem [#allocation2], 80
      %v2420 = vld [vmem:[%s2419] ss:$2 sm:$0xff]
      %s2421 = scalar_lea.vmem [#allocation2], 96
      %v2422 = vld [vmem:[%s2421] ss:$2 sm:$0xff]
      %s2423 = scalar_lea.vmem [#allocation2], 112
      %v2424 = vld [vmem:[%s2423] ss:$2 sm:$0xff]
      %s2425 = scalar_lea.vmem [#allocation2], 128
      %v2426 = vld [vmem:[%s2425] ss:$2 sm:$0xff]
      %s2427 = scalar_lea.vmem [#allocation2], 144
      %v2428 = vld [vmem:[%s2427] ss:$2 sm:$0xff]
      %s2429 = scalar_lea.vmem [#allocation2], 160
      %v2430 = vld [vmem:[%s2429] ss:$2 sm:$0xff]
      %s2431 = scalar_lea.vmem [#allocation2], 176
      %v2432 = vld [vmem:[%s2431] ss:$2 sm:$0xff]
      %s2433 = scalar_lea.vmem [#allocation2], 192
      %v2434 = vld [vmem:[%s2433] ss:$2 sm:$0xff]
      %s2435 = scalar_lea.vmem [#allocation2], 208
      %v2436 = vld [vmem:[%s2435] ss:$2 sm:$0xff]
      %s2437 = scalar_lea.vmem [#allocation2], 224
      %v2438 = vld [vmem:[%s2437] ss:$2 sm:$0xff]
      %s2439 = scalar_lea.vmem [#allocation2], 240
      %v2440 = vld [vmem:[%s2439] ss:$2 sm:$0xff]
      %s2441 = scalar_lea.vmem [#allocation2], 256
      %v2442 = vld [vmem:[%s2441] ss:$2 sm:$0xff]
      %s2443 = scalar_lea.vmem [#allocation2], 272
      %v2444 = vld [vmem:[%s2443] ss:$2 sm:$0xff]
      %s2445 = scalar_lea.vmem [#allocation2], 288
      %v2446 = vld [vmem:[%s2445] ss:$2 sm:$0xff]
      %s2447 = scalar_lea.vmem [#allocation2], 304
      %v2448 = vld [vmem:[%s2447] ss:$2 sm:$0xff]
      %s2449 = scalar_lea.vmem [#allocation2], 320
      %v2450 = vld [vmem:[%s2449] ss:$2 sm:$0xff]
      %s2451 = scalar_lea.vmem [#allocation2], 336
      %v2452 = vld [vmem:[%s2451] ss:$2 sm:$0xff]
      %s2453 = scalar_lea.vmem [#allocation2], 352
      %v2454 = vld [vmem:[%s2453] ss:$2 sm:$0xff]
      %s2455 = scalar_lea.vmem [#allocation2], 368
      %v2456 = vld [vmem:[%s2455] ss:$2 sm:$0xff]
      %s2457 = scalar_lea.vmem [#allocation2], 384
      %v2458 = vld [vmem:[%s2457] ss:$2 sm:$0xff]
      %s2459 = scalar_lea.vmem [#allocation2], 400
      %v2460 = vld [vmem:[%s2459] ss:$2 sm:$0xff]
      %s2461 = scalar_lea.vmem [#allocation2], 416
      %v2462 = vld [vmem:[%s2461] ss:$2 sm:$0xff]
      %s2463 = scalar_lea.vmem [#allocation2], 432
      %v2464 = vld [vmem:[%s2463] ss:$2 sm:$0xff]
      %s2465 = scalar_lea.vmem [#allocation2], 448
      %v2466 = vld [vmem:[%s2465] ss:$2 sm:$0xff]
      %s2467 = scalar_lea.vmem [#allocation2], 464
      %v2468 = vld [vmem:[%s2467] ss:$2 sm:$0xff]
      %s2469 = scalar_lea.vmem [#allocation2], 480
      %v2470 = vld [vmem:[%s2469] ss:$2 sm:$0xff]
      %s2471 = scalar_lea.vmem [#allocation2], 496
      %v2472 = vld [vmem:[%s2471] ss:$2 sm:$0xff]
      %s2473 = scalar_lea.vmem [#allocation2], 512
      %v2474 = vld [vmem:[%s2473] ss:$2 sm:$0xff]
      %s2475 = scalar_lea.vmem [#allocation2], 528
      %v2476 = vld [vmem:[%s2475] ss:$2 sm:$0xff]
      %s2477 = scalar_lea.vmem [#allocation2], 544
      %v2478 = vld [vmem:[%s2477] ss:$2 sm:$0xff]
      %s2479 = scalar_lea.vmem [#allocation2], 560
      %v2480 = vld [vmem:[%s2479] ss:$2 sm:$0xff]
      %s2481 = scalar_lea.vmem [#allocation2], 576
      %v2482 = vld [vmem:[%s2481] ss:$2 sm:$0xff]
      %s2483 = scalar_lea.vmem [#allocation2], 592
      %v2484 = vld [vmem:[%s2483] ss:$2 sm:$0xff]
      %s2485 = scalar_lea.vmem [#allocation2], 608
      %v2486 = vld [vmem:[%s2485] ss:$2 sm:$0xff]
      %s2487 = scalar_lea.vmem [#allocation2], 624
      %v2488 = vld [vmem:[%s2487] ss:$2 sm:$0xff]
      %s2489 = scalar_lea.vmem [#allocation2], 640
      %v2490 = vld [vmem:[%s2489] ss:$2 sm:$0xff]
      %s2491 = scalar_lea.vmem [#allocation2], 656
      %v2492 = vld [vmem:[%s2491] ss:$2 sm:$0xff]
      %s2493 = scalar_lea.vmem [#allocation2], 672
      %v2494 = vld [vmem:[%s2493] ss:$2 sm:$0xff]
      %s2495 = scalar_lea.vmem [#allocation2], 688
      %v2496 = vld [vmem:[%s2495] ss:$2 sm:$0xff]
      %s2497 = scalar_lea.vmem [#allocation2], 704
      %v2498 = vld [vmem:[%s2497] ss:$2 sm:$0xff]
      %s2499 = scalar_lea.vmem [#allocation2], 720
      %v2500 = vld [vmem:[%s2499] ss:$2 sm:$0xff]
      %s2501 = scalar_lea.vmem [#allocation2], 736
      %v2502 = vld [vmem:[%s2501] ss:$2 sm:$0xff]
      %s2503 = scalar_lea.vmem [#allocation2], 752
      %v2504 = vld [vmem:[%s2503] ss:$2 sm:$0xff]
      %s2505 = scalar_lea.vmem [#allocation2], 768
      %v2506 = vld [vmem:[%s2505] ss:$2 sm:$0xff]
      %s2507 = scalar_lea.vmem [#allocation2], 784
      %v2508 = vld [vmem:[%s2507] ss:$2 sm:$0xff]
      %s2509 = scalar_lea.vmem [#allocation2], 800
      %v2510 = vld [vmem:[%s2509] ss:$2 sm:$0xff]
      %s2511 = scalar_lea.vmem [#allocation2], 816
      %v2512 = vld [vmem:[%s2511] ss:$2 sm:$0xff]
      %s2513 = scalar_lea.vmem [#allocation2], 832
      %v2514 = vld [vmem:[%s2513] ss:$2 sm:$0xff]
      %s2515 = scalar_lea.vmem [#allocation2], 848
      %v2516 = vld [vmem:[%s2515] ss:$2 sm:$0xff]
      %s2517 = scalar_lea.vmem [#allocation2], 864
      %v2518 = vld [vmem:[%s2517] ss:$2 sm:$0xff]
      %s2519 = scalar_lea.vmem [#allocation2], 880
      %v2520 = vld [vmem:[%s2519] ss:$2 sm:$0xff]
      %s2521 = scalar_lea.vmem [#allocation2], 896
      %v2522 = vld [vmem:[%s2521] ss:$2 sm:$0xff]
      %s2523 = scalar_lea.vmem [#allocation2], 912
      %v2524 = vld [vmem:[%s2523] ss:$2 sm:$0xff]
      %s2525 = scalar_lea.vmem [#allocation2], 928
      %v2526 = vld [vmem:[%s2525] ss:$2 sm:$0xff]
      %s2527 = scalar_lea.vmem [#allocation2], 944
      %v2528 = vld [vmem:[%s2527] ss:$2 sm:$0xff]
      %s2529 = scalar_lea.vmem [#allocation2], 960
      %v2530 = vld [vmem:[%s2529] ss:$2 sm:$0xff]
      %s2531 = scalar_lea.vmem [#allocation2], 976
      %v2532 = vld [vmem:[%s2531] ss:$2 sm:$0xff]
      %s2533 = scalar_lea.vmem [#allocation2], 992
      %v2534 = vld [vmem:[%s2533] ss:$2 sm:$0xff]
      %s2535 = scalar_lea.vmem [#allocation2], 1008
      %v2536 = vld [vmem:[%s2535] ss:$2 sm:$0xff]
      %s2537 = scalar_lea.vmem [#allocation2], 1024
      %v2538 = vld [vmem:[%s2537] ss:$2 sm:$0xff]
      %s2539 = scalar_lea.vmem [#allocation2], 1040
      %v2540 = vld [vmem:[%s2539] ss:$2 sm:$0xff]
      %s2541 = scalar_lea.vmem [#allocation2], 1056
      %v2542 = vld [vmem:[%s2541] ss:$2 sm:$0xff]
      %s2543 = scalar_lea.vmem [#allocation2], 1072
      %v2544 = vld [vmem:[%s2543] ss:$2 sm:$0xff]
      %s2545 = scalar_lea.vmem [#allocation2], 1088
      %v2546 = vld [vmem:[%s2545] ss:$2 sm:$0xff]
      %s2547 = scalar_lea.vmem [#allocation2], 1104
      %v2548 = vld [vmem:[%s2547] ss:$2 sm:$0xff]
      %s2549 = scalar_lea.vmem [#allocation2], 1120
      %v2550 = vld [vmem:[%s2549] ss:$2 sm:$0xff]
      %s2551 = scalar_lea.vmem [#allocation2], 1136
      %v2552 = vld [vmem:[%s2551] ss:$2 sm:$0xff]
      %s2553 = scalar_lea.vmem [#allocation2], 1152
      %v2554 = vld [vmem:[%s2553] ss:$2 sm:$0xff]
      %s2555 = scalar_lea.vmem [#allocation2], 1168
      %v2556 = vld [vmem:[%s2555] ss:$2 sm:$0xff]
      %s2557 = scalar_lea.vmem [#allocation2], 1184
      %v2558 = vld [vmem:[%s2557] ss:$2 sm:$0xff]
      %s2559 = scalar_lea.vmem [#allocation2], 1200
      %v2560 = vld [vmem:[%s2559] ss:$2 sm:$0xff]
      %s2561 = scalar_lea.vmem [#allocation2], 1216
      %v2562 = vld [vmem:[%s2561] ss:$2 sm:$0xff]
      %s2563 = scalar_lea.vmem [#allocation2], 1232
      %v2564 = vld [vmem:[%s2563] ss:$2 sm:$0xff]
      %s2565 = scalar_lea.vmem [#allocation2], 1248
      %v2566 = vld [vmem:[%s2565] ss:$2 sm:$0xff]
      %s2567 = scalar_lea.vmem [#allocation2], 1264
      %v2568 = vld [vmem:[%s2567] ss:$2 sm:$0xff]
      %s2569 = scalar_lea.vmem [#allocation2], 1280
      %v2570 = vld [vmem:[%s2569] ss:$2 sm:$0xff]
      %s2571 = scalar_lea.vmem [#allocation2], 1296
      %v2572 = vld [vmem:[%s2571] ss:$2 sm:$0xff]
      %s2573 = scalar_lea.vmem [#allocation2], 1312
      %v2574 = vld [vmem:[%s2573] ss:$2 sm:$0xff]
      %s2575 = scalar_lea.vmem [#allocation2], 1328
      %v2576 = vld [vmem:[%s2575] ss:$2 sm:$0xff]
      %s2577 = scalar_lea.vmem [#allocation2], 1344
      %v2578 = vld [vmem:[%s2577] ss:$2 sm:$0xff]
      %s2579 = scalar_lea.vmem [#allocation2], 1360
      %v2580 = vld [vmem:[%s2579] ss:$2 sm:$0xff]
      %s2581 = scalar_lea.vmem [#allocation2], 1376
      %v2582 = vld [vmem:[%s2581] ss:$2 sm:$0xff]
      %s2583 = scalar_lea.vmem [#allocation2], 1392
      %v2584 = vld [vmem:[%s2583] ss:$2 sm:$0xff]
      %s2585 = scalar_lea.vmem [#allocation2], 1408
      %v2586 = vld [vmem:[%s2585] ss:$2 sm:$0xff]
      %s2587 = scalar_lea.vmem [#allocation2], 1424
      %v2588 = vld [vmem:[%s2587] ss:$2 sm:$0xff]
      %s2589 = scalar_lea.vmem [#allocation2], 1440
      %v2590 = vld [vmem:[%s2589] ss:$2 sm:$0xff]
      %s2591 = scalar_lea.vmem [#allocation2], 1456
      %v2592 = vld [vmem:[%s2591] ss:$2 sm:$0xff]
      %s2593 = scalar_lea.vmem [#allocation2], 1472
      %v2594 = vld [vmem:[%s2593] ss:$2 sm:$0xff]
      %s2595 = scalar_lea.vmem [#allocation2], 1488
      %v2596 = vld [vmem:[%s2595] ss:$2 sm:$0xff]
      %s2597 = scalar_lea.vmem [#allocation2], 1504
      %v2598 = vld [vmem:[%s2597] ss:$2 sm:$0xff]
      %s2599 = scalar_lea.vmem [#allocation2], 1520
      %v2600 = vld [vmem:[%s2599] ss:$2 sm:$0xff]
      %s2601 = scalar_lea.vmem [#allocation2], 1536
      %v2602 = vld [vmem:[%s2601] ss:$2 sm:$0xff]
      %s2603 = scalar_lea.vmem [#allocation2], 1552
      %v2604 = vld [vmem:[%s2603] ss:$2 sm:$0xff]
      %s2605 = scalar_lea.vmem [#allocation2], 1568
      %v2606 = vld [vmem:[%s2605] ss:$2 sm:$0xff]
      %s2607 = scalar_lea.vmem [#allocation2], 1584
      %v2608 = vld [vmem:[%s2607] ss:$2 sm:$0xff]
      %s2609 = scalar_lea.vmem [#allocation2], 1600
      %v2610 = vld [vmem:[%s2609] ss:$2 sm:$0xff]
      %s2611 = scalar_lea.vmem [#allocation2], 1616
      %v2612 = vld [vmem:[%s2611] ss:$2 sm:$0xff]
      %s2613 = scalar_lea.vmem [#allocation2], 1632
      %v2614 = vld [vmem:[%s2613] ss:$2 sm:$0xff]
      %s2615 = scalar_lea.vmem [#allocation2], 1648
      %v2616 = vld [vmem:[%s2615] ss:$2 sm:$0xff]
      %s2617 = scalar_lea.vmem [#allocation2], 1664
      %v2618 = vld [vmem:[%s2617] ss:$2 sm:$0xff]
      %s2619 = scalar_lea.vmem [#allocation2], 1680
      %v2620 = vld [vmem:[%s2619] ss:$2 sm:$0xff]
      %s2621 = scalar_lea.vmem [#allocation2], 1696
      %v2622 = vld [vmem:[%s2621] ss:$2 sm:$0xff]
      %s2623 = scalar_lea.vmem [#allocation2], 1712
      %v2624 = vld [vmem:[%s2623] ss:$2 sm:$0xff]
      %s2625 = scalar_lea.vmem [#allocation2], 1728
      %v2626 = vld [vmem:[%s2625] ss:$2 sm:$0xff]
      %s2627 = scalar_lea.vmem [#allocation2], 1744
      %v2628 = vld [vmem:[%s2627] ss:$2 sm:$0xff]
      %s2629 = scalar_lea.vmem [#allocation2], 1760
      %v2630 = vld [vmem:[%s2629] ss:$2 sm:$0xff]
      %s2631 = scalar_lea.vmem [#allocation2], 1776
      %v2632 = vld [vmem:[%s2631] ss:$2 sm:$0xff]
      %s2633 = scalar_lea.vmem [#allocation2], 1792
      %v2634 = vld [vmem:[%s2633] ss:$2 sm:$0xff]
      %s2635 = scalar_lea.vmem [#allocation2], 1808
      %v2636 = vld [vmem:[%s2635] ss:$2 sm:$0xff]
      %s2637 = scalar_lea.vmem [#allocation2], 1824
      %v2638 = vld [vmem:[%s2637] ss:$2 sm:$0xff]
      %s2639 = scalar_lea.vmem [#allocation2], 1840
      %v2640 = vld [vmem:[%s2639] ss:$2 sm:$0xff]
      %s2641 = scalar_lea.vmem [#allocation2], 1856
      %v2642 = vld [vmem:[%s2641] ss:$2 sm:$0xff]
      %s2643 = scalar_lea.vmem [#allocation2], 1872
      %v2644 = vld [vmem:[%s2643] ss:$2 sm:$0xff]
      %s2645 = scalar_lea.vmem [#allocation2], 1888
      %v2646 = vld [vmem:[%s2645] ss:$2 sm:$0xff]
      %s2647 = scalar_lea.vmem [#allocation2], 1904
      %v2648 = vld [vmem:[%s2647] ss:$2 sm:$0xff]
      %s2649 = scalar_lea.vmem [#allocation2], 1920
      %v2650 = vld [vmem:[%s2649] ss:$2 sm:$0xff]
      %s2651 = scalar_lea.vmem [#allocation2], 1936
      %v2652 = vld [vmem:[%s2651] ss:$2 sm:$0xff]
      %s2653 = scalar_lea.vmem [#allocation2], 1952
      %v2654 = vld [vmem:[%s2653] ss:$2 sm:$0xff]
      %s2655 = scalar_lea.vmem [#allocation2], 1968
      %v2656 = vld [vmem:[%s2655] ss:$2 sm:$0xff]
      %s2657 = scalar_lea.vmem [#allocation2], 1984
      %v2658 = vld [vmem:[%s2657] ss:$2 sm:$0xff]
      %s2659 = scalar_lea.vmem [#allocation2], 2000
      %v2660 = vld [vmem:[%s2659] ss:$2 sm:$0xff]
      %s2661 = scalar_lea.vmem [#allocation2], 2016
      %v2662 = vld [vmem:[%s2661] ss:$2 sm:$0xff]
      %s2663 = scalar_lea.vmem [#allocation2], 2032
      %v2664 = vld [vmem:[%s2663] ss:$2 sm:$0xff]
      %s2665 = scalar_lea.vmem [#allocation2], 1
      %v2666 = vld [vmem:[%s2665] ss:$2 sm:$0xff]
      %s2667 = scalar_lea.vmem [#allocation2], 17
      %v2668 = vld [vmem:[%s2667] ss:$2 sm:$0xff]
      %s2669 = scalar_lea.vmem [#allocation2], 33
      %v2670 = vld [vmem:[%s2669] ss:$2 sm:$0xff]
      %s2671 = scalar_lea.vmem [#allocation2], 49
      %v2672 = vld [vmem:[%s2671] ss:$2 sm:$0xff]
      %s2673 = scalar_lea.vmem [#allocation2], 65
      %v2674 = vld [vmem:[%s2673] ss:$2 sm:$0xff]
      %s2675 = scalar_lea.vmem [#allocation2], 81
      %v2676 = vld [vmem:[%s2675] ss:$2 sm:$0xff]
      %s2677 = scalar_lea.vmem [#allocation2], 97
      %v2678 = vld [vmem:[%s2677] ss:$2 sm:$0xff]
      %s2679 = scalar_lea.vmem [#allocation2], 113
      %v2680 = vld [vmem:[%s2679] ss:$2 sm:$0xff]
      %s2681 = scalar_lea.vmem [#allocation2], 129
      %v2682 = vld [vmem:[%s2681] ss:$2 sm:$0xff]
      %s2683 = scalar_lea.vmem [#allocation2], 145
      %v2684 = vld [vmem:[%s2683] ss:$2 sm:$0xff]
      %s2685 = scalar_lea.vmem [#allocation2], 161
      %v2686 = vld [vmem:[%s2685] ss:$2 sm:$0xff]
      %s2687 = scalar_lea.vmem [#allocation2], 177
      %v2688 = vld [vmem:[%s2687] ss:$2 sm:$0xff]
      %s2689 = scalar_lea.vmem [#allocation2], 193
      %v2690 = vld [vmem:[%s2689] ss:$2 sm:$0xff]
      %s2691 = scalar_lea.vmem [#allocation2], 209
      %v2692 = vld [vmem:[%s2691] ss:$2 sm:$0xff]
      %s2693 = scalar_lea.vmem [#allocation2], 225
      %v2694 = vld [vmem:[%s2693] ss:$2 sm:$0xff]
      %s2695 = scalar_lea.vmem [#allocation2], 241
      %v2696 = vld [vmem:[%s2695] ss:$2 sm:$0xff]
      %s2697 = scalar_lea.vmem [#allocation2], 257
      %v2698 = vld [vmem:[%s2697] ss:$2 sm:$0xff]
      %s2699 = scalar_lea.vmem [#allocation2], 273
      %v2700 = vld [vmem:[%s2699] ss:$2 sm:$0xff]
      %s2701 = scalar_lea.vmem [#allocation2], 289
      %v2702 = vld [vmem:[%s2701] ss:$2 sm:$0xff]
      %s2703 = scalar_lea.vmem [#allocation2], 305
      %v2704 = vld [vmem:[%s2703] ss:$2 sm:$0xff]
      %s2705 = scalar_lea.vmem [#allocation2], 321
      %v2706 = vld [vmem:[%s2705] ss:$2 sm:$0xff]
      %s2707 = scalar_lea.vmem [#allocation2], 337
      %v2708 = vld [vmem:[%s2707] ss:$2 sm:$0xff]
      %s2709 = scalar_lea.vmem [#allocation2], 353
      %v2710 = vld [vmem:[%s2709] ss:$2 sm:$0xff]
      %s2711 = scalar_lea.vmem [#allocation2], 369
      %v2712 = vld [vmem:[%s2711] ss:$2 sm:$0xff]
      %s2713 = scalar_lea.vmem [#allocation2], 385
      %v2714 = vld [vmem:[%s2713] ss:$2 sm:$0xff]
      %s2715 = scalar_lea.vmem [#allocation2], 401
      %v2716 = vld [vmem:[%s2715] ss:$2 sm:$0xff]
      %s2717 = scalar_lea.vmem [#allocation2], 417
      %v2718 = vld [vmem:[%s2717] ss:$2 sm:$0xff]
      %s2719 = scalar_lea.vmem [#allocation2], 433
      %v2720 = vld [vmem:[%s2719] ss:$2 sm:$0xff]
      %s2721 = scalar_lea.vmem [#allocation2], 449
      %v2722 = vld [vmem:[%s2721] ss:$2 sm:$0xff]
      %s2723 = scalar_lea.vmem [#allocation2], 465
      %v2724 = vld [vmem:[%s2723] ss:$2 sm:$0xff]
      %s2725 = scalar_lea.vmem [#allocation2], 481
      %v2726 = vld [vmem:[%s2725] ss:$2 sm:$0xff]
      %s2727 = scalar_lea.vmem [#allocation2], 497
      %v2728 = vld [vmem:[%s2727] ss:$2 sm:$0xff]
      %s2729 = scalar_lea.vmem [#allocation2], 513
      %v2730 = vld [vmem:[%s2729] ss:$2 sm:$0xff]
      %s2731 = scalar_lea.vmem [#allocation2], 529
      %v2732 = vld [vmem:[%s2731] ss:$2 sm:$0xff]
      %s2733 = scalar_lea.vmem [#allocation2], 545
      %v2734 = vld [vmem:[%s2733] ss:$2 sm:$0xff]
      %s2735 = scalar_lea.vmem [#allocation2], 561
      %v2736 = vld [vmem:[%s2735] ss:$2 sm:$0xff]
      %s2737 = scalar_lea.vmem [#allocation2], 577
      %v2738 = vld [vmem:[%s2737] ss:$2 sm:$0xff]
      %s2739 = scalar_lea.vmem [#allocation2], 593
      %v2740 = vld [vmem:[%s2739] ss:$2 sm:$0xff]
      %s2741 = scalar_lea.vmem [#allocation2], 609
      %v2742 = vld [vmem:[%s2741] ss:$2 sm:$0xff]
      %s2743 = scalar_lea.vmem [#allocation2], 625
      %v2744 = vld [vmem:[%s2743] ss:$2 sm:$0xff]
      %s2745 = scalar_lea.vmem [#allocation2], 641
      %v2746 = vld [vmem:[%s2745] ss:$2 sm:$0xff]
      %s2747 = scalar_lea.vmem [#allocation2], 657
      %v2748 = vld [vmem:[%s2747] ss:$2 sm:$0xff]
      %s2749 = scalar_lea.vmem [#allocation2], 673
      %v2750 = vld [vmem:[%s2749] ss:$2 sm:$0xff]
      %s2751 = scalar_lea.vmem [#allocation2], 689
      %v2752 = vld [vmem:[%s2751] ss:$2 sm:$0xff]
      %s2753 = scalar_lea.vmem [#allocation2], 705
      %v2754 = vld [vmem:[%s2753] ss:$2 sm:$0xff]
      %s2755 = scalar_lea.vmem [#allocation2], 721
      %v2756 = vld [vmem:[%s2755] ss:$2 sm:$0xff]
      %s2757 = scalar_lea.vmem [#allocation2], 737
      %v2758 = vld [vmem:[%s2757] ss:$2 sm:$0xff]
      %s2759 = scalar_lea.vmem [#allocation2], 753
      %v2760 = vld [vmem:[%s2759] ss:$2 sm:$0xff]
      %s2761 = scalar_lea.vmem [#allocation2], 769
      %v2762 = vld [vmem:[%s2761] ss:$2 sm:$0xff]
      %s2763 = scalar_lea.vmem [#allocation2], 785
      %v2764 = vld [vmem:[%s2763] ss:$2 sm:$0xff]
      %s2765 = scalar_lea.vmem [#allocation2], 801
      %v2766 = vld [vmem:[%s2765] ss:$2 sm:$0xff]
      %s2767 = scalar_lea.vmem [#allocation2], 817
      %v2768 = vld [vmem:[%s2767] ss:$2 sm:$0xff]
      %s2769 = scalar_lea.vmem [#allocation2], 833
      %v2770 = vld [vmem:[%s2769] ss:$2 sm:$0xff]
      %s2771 = scalar_lea.vmem [#allocation2], 849
      %v2772 = vld [vmem:[%s2771] ss:$2 sm:$0xff]
      %s2773 = scalar_lea.vmem [#allocation2], 865
      %v2774 = vld [vmem:[%s2773] ss:$2 sm:$0xff]
      %s2775 = scalar_lea.vmem [#allocation2], 881
      %v2776 = vld [vmem:[%s2775] ss:$2 sm:$0xff]
      %s2777 = scalar_lea.vmem [#allocation2], 897
      %v2778 = vld [vmem:[%s2777] ss:$2 sm:$0xff]
      %s2779 = scalar_lea.vmem [#allocation2], 913
      %v2780 = vld [vmem:[%s2779] ss:$2 sm:$0xff]
      %s2781 = scalar_lea.vmem [#allocation2], 929
      %v2782 = vld [vmem:[%s2781] ss:$2 sm:$0xff]
      %s2783 = scalar_lea.vmem [#allocation2], 945
      %v2784 = vld [vmem:[%s2783] ss:$2 sm:$0xff]
      %s2785 = scalar_lea.vmem [#allocation2], 961
      %v2786 = vld [vmem:[%s2785] ss:$2 sm:$0xff]
      %s2787 = scalar_lea.vmem [#allocation2], 977
      %v2788 = vld [vmem:[%s2787] ss:$2 sm:$0xff]
      %s2789 = scalar_lea.vmem [#allocation2], 993
      %v2790 = vld [vmem:[%s2789] ss:$2 sm:$0xff]
      %s2791 = scalar_lea.vmem [#allocation2], 1009
      %v2792 = vld [vmem:[%s2791] ss:$2 sm:$0xff]
      %s2793 = scalar_lea.vmem [#allocation2], 1025
      %v2794 = vld [vmem:[%s2793] ss:$2 sm:$0xff]
      %s2795 = scalar_lea.vmem [#allocation2], 1041
      %v2796 = vld [vmem:[%s2795] ss:$2 sm:$0xff]
      %s2797 = scalar_lea.vmem [#allocation2], 1057
      %v2798 = vld [vmem:[%s2797] ss:$2 sm:$0xff]
      %s2799 = scalar_lea.vmem [#allocation2], 1073
      %v2800 = vld [vmem:[%s2799] ss:$2 sm:$0xff]
      %s2801 = scalar_lea.vmem [#allocation2], 1089
      %v2802 = vld [vmem:[%s2801] ss:$2 sm:$0xff]
      %s2803 = scalar_lea.vmem [#allocation2], 1105
      %v2804 = vld [vmem:[%s2803] ss:$2 sm:$0xff]
      %s2805 = scalar_lea.vmem [#allocation2], 1121
      %v2806 = vld [vmem:[%s2805] ss:$2 sm:$0xff]
      %s2807 = scalar_lea.vmem [#allocation2], 1137
      %v2808 = vld [vmem:[%s2807] ss:$2 sm:$0xff]
      %s2809 = scalar_lea.vmem [#allocation2], 1153
      %v2810 = vld [vmem:[%s2809] ss:$2 sm:$0xff]
      %s2811 = scalar_lea.vmem [#allocation2], 1169
      %v2812 = vld [vmem:[%s2811] ss:$2 sm:$0xff]
      %s2813 = scalar_lea.vmem [#allocation2], 1185
      %v2814 = vld [vmem:[%s2813] ss:$2 sm:$0xff]
      %s2815 = scalar_lea.vmem [#allocation2], 1201
      %v2816 = vld [vmem:[%s2815] ss:$2 sm:$0xff]
      %s2817 = scalar_lea.vmem [#allocation2], 1217
      %v2818 = vld [vmem:[%s2817] ss:$2 sm:$0xff]
      %s2819 = scalar_lea.vmem [#allocation2], 1233
      %v2820 = vld [vmem:[%s2819] ss:$2 sm:$0xff]
      %s2821 = scalar_lea.vmem [#allocation2], 1249
      %v2822 = vld [vmem:[%s2821] ss:$2 sm:$0xff]
      %s2823 = scalar_lea.vmem [#allocation2], 1265
      %v2824 = vld [vmem:[%s2823] ss:$2 sm:$0xff]
      %s2825 = scalar_lea.vmem [#allocation2], 1281
      %v2826 = vld [vmem:[%s2825] ss:$2 sm:$0xff]
      %s2827 = scalar_lea.vmem [#allocation2], 1297
      %v2828 = vld [vmem:[%s2827] ss:$2 sm:$0xff]
      %s2829 = scalar_lea.vmem [#allocation2], 1313
      %v2830 = vld [vmem:[%s2829] ss:$2 sm:$0xff]
      %s2831 = scalar_lea.vmem [#allocation2], 1329
      %v2832 = vld [vmem:[%s2831] ss:$2 sm:$0xff]
      %s2833 = scalar_lea.vmem [#allocation2], 1345
      %v2834 = vld [vmem:[%s2833] ss:$2 sm:$0xff]
      %s2835 = scalar_lea.vmem [#allocation2], 1361
      %v2836 = vld [vmem:[%s2835] ss:$2 sm:$0xff]
      %s2837 = scalar_lea.vmem [#allocation2], 1377
      %v2838 = vld [vmem:[%s2837] ss:$2 sm:$0xff]
      %s2839 = scalar_lea.vmem [#allocation2], 1393
      %v2840 = vld [vmem:[%s2839] ss:$2 sm:$0xff]
      %s2841 = scalar_lea.vmem [#allocation2], 1409
      %v2842 = vld [vmem:[%s2841] ss:$2 sm:$0xff]
      %s2843 = scalar_lea.vmem [#allocation2], 1425
      %v2844 = vld [vmem:[%s2843] ss:$2 sm:$0xff]
      %s2845 = scalar_lea.vmem [#allocation2], 1441
      %v2846 = vld [vmem:[%s2845] ss:$2 sm:$0xff]
      %s2847 = scalar_lea.vmem [#allocation2], 1457
      %v2848 = vld [vmem:[%s2847] ss:$2 sm:$0xff]
      %s2849 = scalar_lea.vmem [#allocation2], 1473
      %v2850 = vld [vmem:[%s2849] ss:$2 sm:$0xff]
      %s2851 = scalar_lea.vmem [#allocation2], 1489
      %v2852 = vld [vmem:[%s2851] ss:$2 sm:$0xff]
      %s2853 = scalar_lea.vmem [#allocation2], 1505
      %v2854 = vld [vmem:[%s2853] ss:$2 sm:$0xff]
      %s2855 = scalar_lea.vmem [#allocation2], 1521
      %v2856 = vld [vmem:[%s2855] ss:$2 sm:$0xff]
      %s2857 = scalar_lea.vmem [#allocation2], 1537
      %v2858 = vld [vmem:[%s2857] ss:$2 sm:$0xff]
      %s2859 = scalar_lea.vmem [#allocation2], 1553
      %v2860 = vld [vmem:[%s2859] ss:$2 sm:$0xff]
      %s2861 = scalar_lea.vmem [#allocation2], 1569
      %v2862 = vld [vmem:[%s2861] ss:$2 sm:$0xff]
      %s2863 = scalar_lea.vmem [#allocation2], 1585
      %v2864 = vld [vmem:[%s2863] ss:$2 sm:$0xff]
      %s2865 = scalar_lea.vmem [#allocation2], 1601
      %v2866 = vld [vmem:[%s2865] ss:$2 sm:$0xff]
      %s2867 = scalar_lea.vmem [#allocation2], 1617
      %v2868 = vld [vmem:[%s2867] ss:$2 sm:$0xff]
      %s2869 = scalar_lea.vmem [#allocation2], 1633
      %v2870 = vld [vmem:[%s2869] ss:$2 sm:$0xff]
      %s2871 = scalar_lea.vmem [#allocation2], 1649
      %v2872 = vld [vmem:[%s2871] ss:$2 sm:$0xff]
      %s2873 = scalar_lea.vmem [#allocation2], 1665
      %v2874 = vld [vmem:[%s2873] ss:$2 sm:$0xff]
      %s2875 = scalar_lea.vmem [#allocation2], 1681
      %v2876 = vld [vmem:[%s2875] ss:$2 sm:$0xff]
      %s2877 = scalar_lea.vmem [#allocation2], 1697
      %v2878 = vld [vmem:[%s2877] ss:$2 sm:$0xff]
      %s2879 = scalar_lea.vmem [#allocation2], 1713
      %v2880 = vld [vmem:[%s2879] ss:$2 sm:$0xff]
      %s2881 = scalar_lea.vmem [#allocation2], 1729
      %v2882 = vld [vmem:[%s2881] ss:$2 sm:$0xff]
      %s2883 = scalar_lea.vmem [#allocation2], 1745
      %v2884 = vld [vmem:[%s2883] ss:$2 sm:$0xff]
      %s2885 = scalar_lea.vmem [#allocation2], 1761
      %v2886 = vld [vmem:[%s2885] ss:$2 sm:$0xff]
      %s2887 = scalar_lea.vmem [#allocation2], 1777
      %v2888 = vld [vmem:[%s2887] ss:$2 sm:$0xff]
      %s2889 = scalar_lea.vmem [#allocation2], 1793
      %v2890 = vld [vmem:[%s2889] ss:$2 sm:$0xff]
      %s2891 = scalar_lea.vmem [#allocation2], 1809
      %v2892 = vld [vmem:[%s2891] ss:$2 sm:$0xff]
      %s2893 = scalar_lea.vmem [#allocation2], 1825
      %v2894 = vld [vmem:[%s2893] ss:$2 sm:$0xff]
      %s2895 = scalar_lea.vmem [#allocation2], 1841
      %v2896 = vld [vmem:[%s2895] ss:$2 sm:$0xff]
      %s2897 = scalar_lea.vmem [#allocation2], 1857
      %v2898 = vld [vmem:[%s2897] ss:$2 sm:$0xff]
      %s2899 = scalar_lea.vmem [#allocation2], 1873
      %v2900 = vld [vmem:[%s2899] ss:$2 sm:$0xff]
      %s2901 = scalar_lea.vmem [#allocation2], 1889
      %v2902 = vld [vmem:[%s2901] ss:$2 sm:$0xff]
      %s2903 = scalar_lea.vmem [#allocation2], 1905
      %v2904 = vld [vmem:[%s2903] ss:$2 sm:$0xff]
      %s2905 = scalar_lea.vmem [#allocation2], 1921
      %v2906 = vld [vmem:[%s2905] ss:$2 sm:$0xff]
      %s2907 = scalar_lea.vmem [#allocation2], 1937
      %v2908 = vld [vmem:[%s2907] ss:$2 sm:$0xff]
      %s2909 = scalar_lea.vmem [#allocation2], 1953
      %v2910 = vld [vmem:[%s2909] ss:$2 sm:$0xff]
      %s2911 = scalar_lea.vmem [#allocation2], 1969
      %v2912 = vld [vmem:[%s2911] ss:$2 sm:$0xff]
      %s2913 = scalar_lea.vmem [#allocation2], 1985
      %v2914 = vld [vmem:[%s2913] ss:$2 sm:$0xff]
      %s2915 = scalar_lea.vmem [#allocation2], 2001
      %v2916 = vld [vmem:[%s2915] ss:$2 sm:$0xff]
      %s2917 = scalar_lea.vmem [#allocation2], 2017
      %v2918 = vld [vmem:[%s2917] ss:$2 sm:$0xff]
      %s2919 = scalar_lea.vmem [#allocation2], 2033
      %v2920 = vld [vmem:[%s2919] ss:$2 sm:$0xff]
      %v2921 = vmax.f32 %v2410, %v2666
      %v2922 = vmax.f32 %v2412, %v2668
      %v2923 = vmax.f32 %v2414, %v2670
      %v2924 = vmax.f32 %v2416, %v2672
      %v2925 = vmax.f32 %v2418, %v2674
      %v2926 = vmax.f32 %v2420, %v2676
      %v2927 = vmax.f32 %v2422, %v2678
      %v2928 = vmax.f32 %v2424, %v2680
      %v2929 = vmax.f32 %v2426, %v2682
      %v2930 = vmax.f32 %v2428, %v2684
      %v2931 = vmax.f32 %v2430, %v2686
      %v2932 = vmax.f32 %v2432, %v2688
      %v2933 = vmax.f32 %v2434, %v2690
      %v2934 = vmax.f32 %v2436, %v2692
      %v2935 = vmax.f32 %v2438, %v2694
      %v2936 = vmax.f32 %v2440, %v2696
      %v2937 = vmax.f32 %v2442, %v2698
      %v2938 = vmax.f32 %v2444, %v2700
      %v2939 = vmax.f32 %v2446, %v2702
      %v2940 = vmax.f32 %v2448, %v2704
      %v2941 = vmax.f32 %v2450, %v2706
      %v2942 = vmax.f32 %v2452, %v2708
      %v2943 = vmax.f32 %v2454, %v2710
      %v2944 = vmax.f32 %v2456, %v2712
      %v2945 = vmax.f32 %v2458, %v2714
      %v2946 = vmax.f32 %v2460, %v2716
      %v2947 = vmax.f32 %v2462, %v2718
      %v2948 = vmax.f32 %v2464, %v2720
      %v2949 = vmax.f32 %v2466, %v2722
      %v2950 = vmax.f32 %v2468, %v2724
      %v2951 = vmax.f32 %v2470, %v2726
      %v2952 = vmax.f32 %v2472, %v2728
      %v2953 = vmax.f32 %v2474, %v2730
      %v2954 = vmax.f32 %v2476, %v2732
      %v2955 = vmax.f32 %v2478, %v2734
      %v2956 = vmax.f32 %v2480, %v2736
      %v2957 = vmax.f32 %v2482, %v2738
      %v2958 = vmax.f32 %v2484, %v2740
      %v2959 = vmax.f32 %v2486, %v2742
      %v2960 = vmax.f32 %v2488, %v2744
      %v2961 = vmax.f32 %v2490, %v2746
      %v2962 = vmax.f32 %v2492, %v2748
      %v2963 = vmax.f32 %v2494, %v2750
      %v2964 = vmax.f32 %v2496, %v2752
      %v2965 = vmax.f32 %v2498, %v2754
      %v2966 = vmax.f32 %v2500, %v2756
      %v2967 = vmax.f32 %v2502, %v2758
      %v2968 = vmax.f32 %v2504, %v2760
      %v2969 = vmax.f32 %v2506, %v2762
      %v2970 = vmax.f32 %v2508, %v2764
      %v2971 = vmax.f32 %v2510, %v2766
      %v2972 = vmax.f32 %v2512, %v2768
      %v2973 = vmax.f32 %v2514, %v2770
      %v2974 = vmax.f32 %v2516, %v2772
      %v2975 = vmax.f32 %v2518, %v2774
      %v2976 = vmax.f32 %v2520, %v2776
      %v2977 = vmax.f32 %v2522, %v2778
      %v2978 = vmax.f32 %v2524, %v2780
      %v2979 = vmax.f32 %v2526, %v2782
      %v2980 = vmax.f32 %v2528, %v2784
      %v2981 = vmax.f32 %v2530, %v2786
      %v2982 = vmax.f32 %v2532, %v2788
      %v2983 = vmax.f32 %v2534, %v2790
      %v2984 = vmax.f32 %v2536, %v2792
      %v2985 = vmax.f32 %v2538, %v2794
      %v2986 = vmax.f32 %v2540, %v2796
      %v2987 = vmax.f32 %v2542, %v2798
      %v2988 = vmax.f32 %v2544, %v2800
      %v2989 = vmax.f32 %v2546, %v2802
      %v2990 = vmax.f32 %v2548, %v2804
      %v2991 = vmax.f32 %v2550, %v2806
      %v2992 = vmax.f32 %v2552, %v2808
      %v2993 = vmax.f32 %v2554, %v2810
      %v2994 = vmax.f32 %v2556, %v2812
      %v2995 = vmax.f32 %v2558, %v2814
      %v2996 = vmax.f32 %v2560, %v2816
      %v2997 = vmax.f32 %v2562, %v2818
      %v2998 = vmax.f32 %v2564, %v2820
      %v2999 = vmax.f32 %v2566, %v2822
      %v3000 = vmax.f32 %v2568, %v2824
      %v3001 = vmax.f32 %v2570, %v2826
      %v3002 = vmax.f32 %v2572, %v2828
      %v3003 = vmax.f32 %v2574, %v2830
      %v3004 = vmax.f32 %v2576, %v2832
      %v3005 = vmax.f32 %v2578, %v2834
      %v3006 = vmax.f32 %v2580, %v2836
      %v3007 = vmax.f32 %v2582, %v2838
      %v3008 = vmax.f32 %v2584, %v2840
      %v3009 = vmax.f32 %v2586, %v2842
      %v3010 = vmax.f32 %v2588, %v2844
      %v3011 = vmax.f32 %v2590, %v2846
      %v3012 = vmax.f32 %v2592, %v2848
      %v3013 = vmax.f32 %v2594, %v2850
      %v3014 = vmax.f32 %v2596, %v2852
      %v3015 = vmax.f32 %v2598, %v2854
      %v3016 = vmax.f32 %v2600, %v2856
      %v3017 = vmax.f32 %v2602, %v2858
      %v3018 = vmax.f32 %v2604, %v2860
      %v3019 = vmax.f32 %v2606, %v2862
      %v3020 = vmax.f32 %v2608, %v2864
      %v3021 = vmax.f32 %v2610, %v2866
      %v3022 = vmax.f32 %v2612, %v2868
      %v3023 = vmax.f32 %v2614, %v2870
      %v3024 = vmax.f32 %v2616, %v2872
      %v3025 = vmax.f32 %v2618, %v2874
      %v3026 = vmax.f32 %v2620, %v2876
      %v3027 = vmax.f32 %v2622, %v2878
      %v3028 = vmax.f32 %v2624, %v2880
      %v3029 = vmax.f32 %v2626, %v2882
      %v3030 = vmax.f32 %v2628, %v2884
      %v3031 = vmax.f32 %v2630, %v2886
      %v3032 = vmax.f32 %v2632, %v2888
      %v3033 = vmax.f32 %v2634, %v2890
      %v3034 = vmax.f32 %v2636, %v2892
      %v3035 = vmax.f32 %v2638, %v2894
      %v3036 = vmax.f32 %v2640, %v2896
      %v3037 = vmax.f32 %v2642, %v2898
      %v3038 = vmax.f32 %v2644, %v2900
      %v3039 = vmax.f32 %v2646, %v2902
      %v3040 = vmax.f32 %v2648, %v2904
      %v3041 = vmax.f32 %v2650, %v2906
      %v3042 = vmax.f32 %v2652, %v2908
      %v3043 = vmax.f32 %v2654, %v2910
      %v3044 = vmax.f32 %v2656, %v2912
      %v3045 = vmax.f32 %v2658, %v2914
      %v3046 = vmax.f32 %v2660, %v2916
      %v3047 = vmax.f32 %v2662, %v2918
      %v3048 = vmax.f32 %v2664, %v2920
      %3049 = vst [vmem:[#allocation3] sm:$0xff] %v2921
      %3050 = vst [vmem:[#allocation3 + $0x8] sm:$0xff] %v2922
      %3051 = vst [vmem:[#allocation3 + $0x10] sm:$0xff] %v2923
      %3052 = vst [vmem:[#allocation3 + $0x18] sm:$0xff] %v2924
      %3053 = vst [vmem:[#allocation3 + $0x20] sm:$0xff] %v2925
      %3054 = vst [vmem:[#allocation3 + $0x28] sm:$0xff] %v2926
      %3055 = vst [vmem:[#allocation3 + $0x30] sm:$0xff] %v2927
      %3056 = vst [vmem:[#allocation3 + $0x38] sm:$0xff] %v2928
      %3057 = vst [vmem:[#allocation3 + $0x40] sm:$0xff] %v2929
      %3058 = vst [vmem:[#allocation3 + $0x48] sm:$0xff] %v2930
      %3059 = vst [vmem:[#allocation3 + $0x50] sm:$0xff] %v2931
      %3060 = vst [vmem:[#allocation3 + $0x58] sm:$0xff] %v2932
      %3061 = vst [vmem:[#allocation3 + $0x60] sm:$0xff] %v2933
      %3062 = vst [vmem:[#allocation3 + $0x68] sm:$0xff] %v2934
      %3063 = vst [vmem:[#allocation3 + $0x70] sm:$0xff] %v2935
      %3064 = vst [vmem:[#allocation3 + $0x78] sm:$0xff] %v2936
      %3065 = vst [vmem:[#allocation3 + $0x80] sm:$0xff] %v2937
      %3066 = vst [vmem:[#allocation3 + $0x88] sm:$0xff] %v2938
      %3067 = vst [vmem:[#allocation3 + $0x90] sm:$0xff] %v2939
      %3068 = vst [vmem:[#allocation3 + $0x98] sm:$0xff] %v2940
      %3069 = vst [vmem:[#allocation3 + $0xa0] sm:$0xff] %v2941
      %3070 = vst [vmem:[#allocation3 + $0xa8] sm:$0xff] %v2942
      %3071 = vst [vmem:[#allocation3 + $0xb0] sm:$0xff] %v2943
      %3072 = vst [vmem:[#allocation3 + $0xb8] sm:$0xff] %v2944
      %3073 = vst [vmem:[#allocation3 + $0xc0] sm:$0xff] %v2945
      %3074 = vst [vmem:[#allocation3 + $0xc8] sm:$0xff] %v2946
      %3075 = vst [vmem:[#allocation3 + $0xd0] sm:$0xff] %v2947
      %3076 = vst [vmem:[#allocation3 + $0xd8] sm:$0xff] %v2948
      %3077 = vst [vmem:[#allocation3 + $0xe0] sm:$0xff] %v2949
      %3078 = vst [vmem:[#allocation3 + $0xe8] sm:$0xff] %v2950
      %3079 = vst [vmem:[#allocation3 + $0xf0] sm:$0xff] %v2951
      %3080 = vst [vmem:[#allocation3 + $0xf8] sm:$0xff] %v2952
      %3081 = vst [vmem:[#allocation3 + $0x100] sm:$0xff] %v2953
      %3082 = vst [vmem:[#allocation3 + $0x108] sm:$0xff] %v2954
      %3083 = vst [vmem:[#allocation3 + $0x110] sm:$0xff] %v2955
      %3084 = vst [vmem:[#allocation3 + $0x118] sm:$0xff] %v2956
      %3085 = vst [vmem:[#allocation3 + $0x120] sm:$0xff] %v2957
      %3086 = vst [vmem:[#allocation3 + $0x128] sm:$0xff] %v2958
      %3087 = vst [vmem:[#allocation3 + $0x130] sm:$0xff] %v2959
      %3088 = vst [vmem:[#allocation3 + $0x138] sm:$0xff] %v2960
      %3089 = vst [vmem:[#allocation3 + $0x140] sm:$0xff] %v2961
      %3090 = vst [vmem:[#allocation3 + $0x148] sm:$0xff] %v2962
      %3091 = vst [vmem:[#allocation3 + $0x150] sm:$0xff] %v2963
      %3092 = vst [vmem:[#allocation3 + $0x158] sm:$0xff] %v2964
      %3093 = vst [vmem:[#allocation3 + $0x160] sm:$0xff] %v2965
      %3094 = vst [vmem:[#allocation3 + $0x168] sm:$0xff] %v2966
      %3095 = vst [vmem:[#allocation3 + $0x170] sm:$0xff] %v2967
      %3096 = vst [vmem:[#allocation3 + $0x178] sm:$0xff] %v2968
      %3097 = vst [vmem:[#allocation3 + $0x180] sm:$0xff] %v2969
      %3098 = vst [vmem:[#allocation3 + $0x188] sm:$0xff] %v2970
      %3099 = vst [vmem:[#allocation3 + $0x190] sm:$0xff] %v2971
      %3100 = vst [vmem:[#allocation3 + $0x198] sm:$0xff] %v2972
      %3101 = vst [vmem:[#allocation3 + $0x1a0] sm:$0xff] %v2973
      %3102 = vst [vmem:[#allocation3 + $0x1a8] sm:$0xff] %v2974
      %3103 = vst [vmem:[#allocation3 + $0x1b0] sm:$0xff] %v2975
      %3104 = vst [vmem:[#allocation3 + $0x1b8] sm:$0xff] %v2976
      %3105 = vst [vmem:[#allocation3 + $0x1c0] sm:$0xff] %v2977
      %3106 = vst [vmem:[#allocation3 + $0x1c8] sm:$0xff] %v2978
      %3107 = vst [vmem:[#allocation3 + $0x1d0] sm:$0xff] %v2979
      %3108 = vst [vmem:[#allocation3 + $0x1d8] sm:$0xff] %v2980
      %3109 = vst [vmem:[#allocation3 + $0x1e0] sm:$0xff] %v2981
      %3110 = vst [vmem:[#allocation3 + $0x1e8] sm:$0xff] %v2982
      %3111 = vst [vmem:[#allocation3 + $0x1f0] sm:$0xff] %v2983
      %3112 = vst [vmem:[#allocation3 + $0x1f8] sm:$0xff] %v2984
      %3113 = vst [vmem:[#allocation3 + $0x200] sm:$0xff] %v2985
      %3114 = vst [vmem:[#allocation3 + $0x208] sm:$0xff] %v2986
      %3115 = vst [vmem:[#allocation3 + $0x210] sm:$0xff] %v2987
      %3116 = vst [vmem:[#allocation3 + $0x218] sm:$0xff] %v2988
      %3117 = vst [vmem:[#allocation3 + $0x220] sm:$0xff] %v2989
      %3118 = vst [vmem:[#allocation3 + $0x228] sm:$0xff] %v2990
      %3119 = vst [vmem:[#allocation3 + $0x230] sm:$0xff] %v2991
      %3120 = vst [vmem:[#allocation3 + $0x238] sm:$0xff] %v2992
      %3121 = vst [vmem:[#allocation3 + $0x240] sm:$0xff] %v2993
      %3122 = vst [vmem:[#allocation3 + $0x248] sm:$0xff] %v2994
      %3123 = vst [vmem:[#allocation3 + $0x250] sm:$0xff] %v2995
      %3124 = vst [vmem:[#allocation3 + $0x258] sm:$0xff] %v2996
      %3125 = vst [vmem:[#allocation3 + $0x260] sm:$0xff] %v2997
      %3126 = vst [vmem:[#allocation3 + $0x268] sm:$0xff] %v2998
      %3127 = vst [vmem:[#allocation3 + $0x270] sm:$0xff] %v2999
      %3128 = vst [vmem:[#allocation3 + $0x278] sm:$0xff] %v3000
      %3129 = vst [vmem:[#allocation3 + $0x280] sm:$0xff] %v3001
      %3130 = vst [vmem:[#allocation3 + $0x288] sm:$0xff] %v3002
      %3131 = vst [vmem:[#allocation3 + $0x290] sm:$0xff] %v3003
      %3132 = vst [vmem:[#allocation3 + $0x298] sm:$0xff] %v3004
      %3133 = vst [vmem:[#allocation3 + $0x2a0] sm:$0xff] %v3005
      %3134 = vst [vmem:[#allocation3 + $0x2a8] sm:$0xff] %v3006
      %3135 = vst [vmem:[#allocation3 + $0x2b0] sm:$0xff] %v3007
      %3136 = vst [vmem:[#allocation3 + $0x2b8] sm:$0xff] %v3008
      %3137 = vst [vmem:[#allocation3 + $0x2c0] sm:$0xff] %v3009
      %3138 = vst [vmem:[#allocation3 + $0x2c8] sm:$0xff] %v3010
      %3139 = vst [vmem:[#allocation3 + $0x2d0] sm:$0xff] %v3011
      %3140 = vst [vmem:[#allocation3 + $0x2d8] sm:$0xff] %v3012
      %3141 = vst [vmem:[#allocation3 + $0x2e0] sm:$0xff] %v3013
      %3142 = vst [vmem:[#allocation3 + $0x2e8] sm:$0xff] %v3014
      %3143 = vst [vmem:[#allocation3 + $0x2f0] sm:$0xff] %v3015
      %3144 = vst [vmem:[#allocation3 + $0x2f8] sm:$0xff] %v3016
      %3145 = vst [vmem:[#allocation3 + $0x300] sm:$0xff] %v3017
      %3146 = vst [vmem:[#allocation3 + $0x308] sm:$0xff] %v3018
      %3147 = vst [vmem:[#allocation3 + $0x310] sm:$0xff] %v3019
      %3148 = vst [vmem:[#allocation3 + $0x318] sm:$0xff] %v3020
      %3149 = vst [vmem:[#allocation3 + $0x320] sm:$0xff] %v3021
      %3150 = vst [vmem:[#allocation3 + $0x328] sm:$0xff] %v3022
      %3151 = vst [vmem:[#allocation3 + $0x330] sm:$0xff] %v3023
      %3152 = vst [vmem:[#allocation3 + $0x338] sm:$0xff] %v3024
      %3153 = vst [vmem:[#allocation3 + $0x340] sm:$0xff] %v3025
      %3154 = vst [vmem:[#allocation3 + $0x348] sm:$0xff] %v3026
      %3155 = vst [vmem:[#allocation3 + $0x350] sm:$0xff] %v3027
      %3156 = vst [vmem:[#allocation3 + $0x358] sm:$0xff] %v3028
      %3157 = vst [vmem:[#allocation3 + $0x360] sm:$0xff] %v3029
      %3158 = vst [vmem:[#allocation3 + $0x368] sm:$0xff] %v3030
      %3159 = vst [vmem:[#allocation3 + $0x370] sm:$0xff] %v3031
      %3160 = vst [vmem:[#allocation3 + $0x378] sm:$0xff] %v3032
      %3161 = vst [vmem:[#allocation3 + $0x380] sm:$0xff] %v3033
      %3162 = vst [vmem:[#allocation3 + $0x388] sm:$0xff] %v3034
      %3163 = vst [vmem:[#allocation3 + $0x390] sm:$0xff] %v3035
      %3164 = vst [vmem:[#allocation3 + $0x398] sm:$0xff] %v3036
      %3165 = vst [vmem:[#allocation3 + $0x3a0] sm:$0xff] %v3037
      %3166 = vst [vmem:[#allocation3 + $0x3a8] sm:$0xff] %v3038
      %3167 = vst [vmem:[#allocation3 + $0x3b0] sm:$0xff] %v3039
      %3168 = vst [vmem:[#allocation3 + $0x3b8] sm:$0xff] %v3040
      %3169 = vst [vmem:[#allocation3 + $0x3c0] sm:$0xff] %v3041
      %3170 = vst [vmem:[#allocation3 + $0x3c8] sm:$0xff] %v3042
      %3171 = vst [vmem:[#allocation3 + $0x3d0] sm:$0xff] %v3043
      %3172 = vst [vmem:[#allocation3 + $0x3d8] sm:$0xff] %v3044
      %3173 = vst [vmem:[#allocation3 + $0x3e0] sm:$0xff] %v3045
      %3174 = vst [vmem:[#allocation3 + $0x3e8] sm:$0xff] %v3046
      %3175 = vst [vmem:[#allocation3 + $0x3f0] sm:$0xff] %v3047
      %3176 = vst [vmem:[#allocation3 + $0x3f8] sm:$0xff] %v3048
      %v3177 = vld [vmem:[#allocation3] ss:$2 sm:$0xff]
      %s3178 = scalar_lea.vmem [#allocation3], 16
      %v3179 = vld [vmem:[%s3178] ss:$2 sm:$0xff]
      %s3180 = scalar_lea.vmem [#allocation3], 32
      %v3181 = vld [vmem:[%s3180] ss:$2 sm:$0xff]
      %s3182 = scalar_lea.vmem [#allocation3], 48
      %v3183 = vld [vmem:[%s3182] ss:$2 sm:$0xff]
      %s3184 = scalar_lea.vmem [#allocation3], 64
      %v3185 = vld [vmem:[%s3184] ss:$2 sm:$0xff]
      %s3186 = scalar_lea.vmem [#allocation3], 80
      %v3187 = vld [vmem:[%s3186] ss:$2 sm:$0xff]
      %s3188 = scalar_lea.vmem [#allocation3], 96
      %v3189 = vld [vmem:[%s3188] ss:$2 sm:$0xff]
      %s3190 = scalar_lea.vmem [#allocation3], 112
      %v3191 = vld [vmem:[%s3190] ss:$2 sm:$0xff]
      %s3192 = scalar_lea.vmem [#allocation3], 128
      %v3193 = vld [vmem:[%s3192] ss:$2 sm:$0xff]
      %s3194 = scalar_lea.vmem [#allocation3], 144
      %v3195 = vld [vmem:[%s3194] ss:$2 sm:$0xff]
      %s3196 = scalar_lea.vmem [#allocation3], 160
      %v3197 = vld [vmem:[%s3196] ss:$2 sm:$0xff]
      %s3198 = scalar_lea.vmem [#allocation3], 176
      %v3199 = vld [vmem:[%s3198] ss:$2 sm:$0xff]
      %s3200 = scalar_lea.vmem [#allocation3], 192
      %v3201 = vld [vmem:[%s3200] ss:$2 sm:$0xff]
      %s3202 = scalar_lea.vmem [#allocation3], 208
      %v3203 = vld [vmem:[%s3202] ss:$2 sm:$0xff]
      %s3204 = scalar_lea.vmem [#allocation3], 224
      %v3205 = vld [vmem:[%s3204] ss:$2 sm:$0xff]
      %s3206 = scalar_lea.vmem [#allocation3], 240
      %v3207 = vld [vmem:[%s3206] ss:$2 sm:$0xff]
      %s3208 = scalar_lea.vmem [#allocation3], 256
      %v3209 = vld [vmem:[%s3208] ss:$2 sm:$0xff]
      %s3210 = scalar_lea.vmem [#allocation3], 272
      %v3211 = vld [vmem:[%s3210] ss:$2 sm:$0xff]
      %s3212 = scalar_lea.vmem [#allocation3], 288
      %v3213 = vld [vmem:[%s3212] ss:$2 sm:$0xff]
      %s3214 = scalar_lea.vmem [#allocation3], 304
      %v3215 = vld [vmem:[%s3214] ss:$2 sm:$0xff]
      %s3216 = scalar_lea.vmem [#allocation3], 320
      %v3217 = vld [vmem:[%s3216] ss:$2 sm:$0xff]
      %s3218 = scalar_lea.vmem [#allocation3], 336
      %v3219 = vld [vmem:[%s3218] ss:$2 sm:$0xff]
      %s3220 = scalar_lea.vmem [#allocation3], 352
      %v3221 = vld [vmem:[%s3220] ss:$2 sm:$0xff]
      %s3222 = scalar_lea.vmem [#allocation3], 368
      %v3223 = vld [vmem:[%s3222] ss:$2 sm:$0xff]
      %s3224 = scalar_lea.vmem [#allocation3], 384
      %v3225 = vld [vmem:[%s3224] ss:$2 sm:$0xff]
      %s3226 = scalar_lea.vmem [#allocation3], 400
      %v3227 = vld [vmem:[%s3226] ss:$2 sm:$0xff]
      %s3228 = scalar_lea.vmem [#allocation3], 416
      %v3229 = vld [vmem:[%s3228] ss:$2 sm:$0xff]
      %s3230 = scalar_lea.vmem [#allocation3], 432
      %v3231 = vld [vmem:[%s3230] ss:$2 sm:$0xff]
      %s3232 = scalar_lea.vmem [#allocation3], 448
      %v3233 = vld [vmem:[%s3232] ss:$2 sm:$0xff]
      %s3234 = scalar_lea.vmem [#allocation3], 464
      %v3235 = vld [vmem:[%s3234] ss:$2 sm:$0xff]
      %s3236 = scalar_lea.vmem [#allocation3], 480
      %v3237 = vld [vmem:[%s3236] ss:$2 sm:$0xff]
      %s3238 = scalar_lea.vmem [#allocation3], 496
      %v3239 = vld [vmem:[%s3238] ss:$2 sm:$0xff]
      %s3240 = scalar_lea.vmem [#allocation3], 512
      %v3241 = vld [vmem:[%s3240] ss:$2 sm:$0xff]
      %s3242 = scalar_lea.vmem [#allocation3], 528
      %v3243 = vld [vmem:[%s3242] ss:$2 sm:$0xff]
      %s3244 = scalar_lea.vmem [#allocation3], 544
      %v3245 = vld [vmem:[%s3244] ss:$2 sm:$0xff]
      %s3246 = scalar_lea.vmem [#allocation3], 560
      %v3247 = vld [vmem:[%s3246] ss:$2 sm:$0xff]
      %s3248 = scalar_lea.vmem [#allocation3], 576
      %v3249 = vld [vmem:[%s3248] ss:$2 sm:$0xff]
      %s3250 = scalar_lea.vmem [#allocation3], 592
      %v3251 = vld [vmem:[%s3250] ss:$2 sm:$0xff]
      %s3252 = scalar_lea.vmem [#allocation3], 608
      %v3253 = vld [vmem:[%s3252] ss:$2 sm:$0xff]
      %s3254 = scalar_lea.vmem [#allocation3], 624
      %v3255 = vld [vmem:[%s3254] ss:$2 sm:$0xff]
      %s3256 = scalar_lea.vmem [#allocation3], 640
      %v3257 = vld [vmem:[%s3256] ss:$2 sm:$0xff]
      %s3258 = scalar_lea.vmem [#allocation3], 656
      %v3259 = vld [vmem:[%s3258] ss:$2 sm:$0xff]
      %s3260 = scalar_lea.vmem [#allocation3], 672
      %v3261 = vld [vmem:[%s3260] ss:$2 sm:$0xff]
      %s3262 = scalar_lea.vmem [#allocation3], 688
      %v3263 = vld [vmem:[%s3262] ss:$2 sm:$0xff]
      %s3264 = scalar_lea.vmem [#allocation3], 704
      %v3265 = vld [vmem:[%s3264] ss:$2 sm:$0xff]
      %s3266 = scalar_lea.vmem [#allocation3], 720
      %v3267 = vld [vmem:[%s3266] ss:$2 sm:$0xff]
      %s3268 = scalar_lea.vmem [#allocation3], 736
      %v3269 = vld [vmem:[%s3268] ss:$2 sm:$0xff]
      %s3270 = scalar_lea.vmem [#allocation3], 752
      %v3271 = vld [vmem:[%s3270] ss:$2 sm:$0xff]
      %s3272 = scalar_lea.vmem [#allocation3], 768
      %v3273 = vld [vmem:[%s3272] ss:$2 sm:$0xff]
      %s3274 = scalar_lea.vmem [#allocation3], 784
      %v3275 = vld [vmem:[%s3274] ss:$2 sm:$0xff]
      %s3276 = scalar_lea.vmem [#allocation3], 800
      %v3277 = vld [vmem:[%s3276] ss:$2 sm:$0xff]
      %s3278 = scalar_lea.vmem [#allocation3], 816
      %v3279 = vld [vmem:[%s3278] ss:$2 sm:$0xff]
      %s3280 = scalar_lea.vmem [#allocation3], 832
      %v3281 = vld [vmem:[%s3280] ss:$2 sm:$0xff]
      %s3282 = scalar_lea.vmem [#allocation3], 848
      %v3283 = vld [vmem:[%s3282] ss:$2 sm:$0xff]
      %s3284 = scalar_lea.vmem [#allocation3], 864
      %v3285 = vld [vmem:[%s3284] ss:$2 sm:$0xff]
      %s3286 = scalar_lea.vmem [#allocation3], 880
      %v3287 = vld [vmem:[%s3286] ss:$2 sm:$0xff]
      %s3288 = scalar_lea.vmem [#allocation3], 896
      %v3289 = vld [vmem:[%s3288] ss:$2 sm:$0xff]
      %s3290 = scalar_lea.vmem [#allocation3], 912
      %v3291 = vld [vmem:[%s3290] ss:$2 sm:$0xff]
      %s3292 = scalar_lea.vmem [#allocation3], 928
      %v3293 = vld [vmem:[%s3292] ss:$2 sm:$0xff]
      %s3294 = scalar_lea.vmem [#allocation3], 944
      %v3295 = vld [vmem:[%s3294] ss:$2 sm:$0xff]
      %s3296 = scalar_lea.vmem [#allocation3], 960
      %v3297 = vld [vmem:[%s3296] ss:$2 sm:$0xff]
      %s3298 = scalar_lea.vmem [#allocation3], 976
      %v3299 = vld [vmem:[%s3298] ss:$2 sm:$0xff]
      %s3300 = scalar_lea.vmem [#allocation3], 992
      %v3301 = vld [vmem:[%s3300] ss:$2 sm:$0xff]
      %s3302 = scalar_lea.vmem [#allocation3], 1008
      %v3303 = vld [vmem:[%s3302] ss:$2 sm:$0xff]
      %s3304 = scalar_lea.vmem [#allocation3], 1
      %v3305 = vld [vmem:[%s3304] ss:$2 sm:$0xff]
      %s3306 = scalar_lea.vmem [#allocation3], 17
      %v3307 = vld [vmem:[%s3306] ss:$2 sm:$0xff]
      %s3308 = scalar_lea.vmem [#allocation3], 33
      %v3309 = vld [vmem:[%s3308] ss:$2 sm:$0xff]
      %s3310 = scalar_lea.vmem [#allocation3], 49
      %v3311 = vld [vmem:[%s3310] ss:$2 sm:$0xff]
      %s3312 = scalar_lea.vmem [#allocation3], 65
      %v3313 = vld [vmem:[%s3312] ss:$2 sm:$0xff]
      %s3314 = scalar_lea.vmem [#allocation3], 81
      %v3315 = vld [vmem:[%s3314] ss:$2 sm:$0xff]
      %s3316 = scalar_lea.vmem [#allocation3], 97
      %v3317 = vld [vmem:[%s3316] ss:$2 sm:$0xff]
      %s3318 = scalar_lea.vmem [#allocation3], 113
      %v3319 = vld [vmem:[%s3318] ss:$2 sm:$0xff]
      %s3320 = scalar_lea.vmem [#allocation3], 129
      %v3321 = vld [vmem:[%s3320] ss:$2 sm:$0xff]
      %s3322 = scalar_lea.vmem [#allocation3], 145
      %v3323 = vld [vmem:[%s3322] ss:$2 sm:$0xff]
      %s3324 = scalar_lea.vmem [#allocation3], 161
      %v3325 = vld [vmem:[%s3324] ss:$2 sm:$0xff]
      %s3326 = scalar_lea.vmem [#allocation3], 177
      %v3327 = vld [vmem:[%s3326] ss:$2 sm:$0xff]
      %s3328 = scalar_lea.vmem [#allocation3], 193
      %v3329 = vld [vmem:[%s3328] ss:$2 sm:$0xff]
      %s3330 = scalar_lea.vmem [#allocation3], 209
      %v3331 = vld [vmem:[%s3330] ss:$2 sm:$0xff]
      %s3332 = scalar_lea.vmem [#allocation3], 225
      %v3333 = vld [vmem:[%s3332] ss:$2 sm:$0xff]
      %s3334 = scalar_lea.vmem [#allocation3], 241
      %v3335 = vld [vmem:[%s3334] ss:$2 sm:$0xff]
      %s3336 = scalar_lea.vmem [#allocation3], 257
      %v3337 = vld [vmem:[%s3336] ss:$2 sm:$0xff]
      %s3338 = scalar_lea.vmem [#allocation3], 273
      %v3339 = vld [vmem:[%s3338] ss:$2 sm:$0xff]
      %s3340 = scalar_lea.vmem [#allocation3], 289
      %v3341 = vld [vmem:[%s3340] ss:$2 sm:$0xff]
      %s3342 = scalar_lea.vmem [#allocation3], 305
      %v3343 = vld [vmem:[%s3342] ss:$2 sm:$0xff]
      %s3344 = scalar_lea.vmem [#allocation3], 321
      %v3345 = vld [vmem:[%s3344] ss:$2 sm:$0xff]
      %s3346 = scalar_lea.vmem [#allocation3], 337
      %v3347 = vld [vmem:[%s3346] ss:$2 sm:$0xff]
      %s3348 = scalar_lea.vmem [#allocation3], 353
      %v3349 = vld [vmem:[%s3348] ss:$2 sm:$0xff]
      %s3350 = scalar_lea.vmem [#allocation3], 369
      %v3351 = vld [vmem:[%s3350] ss:$2 sm:$0xff]
      %s3352 = scalar_lea.vmem [#allocation3], 385
      %v3353 = vld [vmem:[%s3352] ss:$2 sm:$0xff]
      %s3354 = scalar_lea.vmem [#allocation3], 401
      %v3355 = vld [vmem:[%s3354] ss:$2 sm:$0xff]
      %s3356 = scalar_lea.vmem [#allocation3], 417
      %v3357 = vld [vmem:[%s3356] ss:$2 sm:$0xff]
      %s3358 = scalar_lea.vmem [#allocation3], 433
      %v3359 = vld [vmem:[%s3358] ss:$2 sm:$0xff]
      %s3360 = scalar_lea.vmem [#allocation3], 449
      %v3361 = vld [vmem:[%s3360] ss:$2 sm:$0xff]
      %s3362 = scalar_lea.vmem [#allocation3], 465
      %v3363 = vld [vmem:[%s3362] ss:$2 sm:$0xff]
      %s3364 = scalar_lea.vmem [#allocation3], 481
      %v3365 = vld [vmem:[%s3364] ss:$2 sm:$0xff]
      %s3366 = scalar_lea.vmem [#allocation3], 497
      %v3367 = vld [vmem:[%s3366] ss:$2 sm:$0xff]
      %s3368 = scalar_lea.vmem [#allocation3], 513
      %v3369 = vld [vmem:[%s3368] ss:$2 sm:$0xff]
      %s3370 = scalar_lea.vmem [#allocation3], 529
      %v3371 = vld [vmem:[%s3370] ss:$2 sm:$0xff]
      %s3372 = scalar_lea.vmem [#allocation3], 545
      %v3373 = vld [vmem:[%s3372] ss:$2 sm:$0xff]
      %s3374 = scalar_lea.vmem [#allocation3], 561
      %v3375 = vld [vmem:[%s3374] ss:$2 sm:$0xff]
      %s3376 = scalar_lea.vmem [#allocation3], 577
      %v3377 = vld [vmem:[%s3376] ss:$2 sm:$0xff]
      %s3378 = scalar_lea.vmem [#allocation3], 593
      %v3379 = vld [vmem:[%s3378] ss:$2 sm:$0xff]
      %s3380 = scalar_lea.vmem [#allocation3], 609
      %v3381 = vld [vmem:[%s3380] ss:$2 sm:$0xff]
      %s3382 = scalar_lea.vmem [#allocation3], 625
      %v3383 = vld [vmem:[%s3382] ss:$2 sm:$0xff]
      %s3384 = scalar_lea.vmem [#allocation3], 641
      %v3385 = vld [vmem:[%s3384] ss:$2 sm:$0xff]
      %s3386 = scalar_lea.vmem [#allocation3], 657
      %v3387 = vld [vmem:[%s3386] ss:$2 sm:$0xff]
      %s3388 = scalar_lea.vmem [#allocation3], 673
      %v3389 = vld [vmem:[%s3388] ss:$2 sm:$0xff]
      %s3390 = scalar_lea.vmem [#allocation3], 689
      %v3391 = vld [vmem:[%s3390] ss:$2 sm:$0xff]
      %s3392 = scalar_lea.vmem [#allocation3], 705
      %v3393 = vld [vmem:[%s3392] ss:$2 sm:$0xff]
      %s3394 = scalar_lea.vmem [#allocation3], 721
      %v3395 = vld [vmem:[%s3394] ss:$2 sm:$0xff]
      %s3396 = scalar_lea.vmem [#allocation3], 737
      %v3397 = vld [vmem:[%s3396] ss:$2 sm:$0xff]
      %s3398 = scalar_lea.vmem [#allocation3], 753
      %v3399 = vld [vmem:[%s3398] ss:$2 sm:$0xff]
      %s3400 = scalar_lea.vmem [#allocation3], 769
      %v3401 = vld [vmem:[%s3400] ss:$2 sm:$0xff]
      %s3402 = scalar_lea.vmem [#allocation3], 785
      %v3403 = vld [vmem:[%s3402] ss:$2 sm:$0xff]
      %s3404 = scalar_lea.vmem [#allocation3], 801
      %v3405 = vld [vmem:[%s3404] ss:$2 sm:$0xff]
      %s3406 = scalar_lea.vmem [#allocation3], 817
      %v3407 = vld [vmem:[%s3406] ss:$2 sm:$0xff]
      %s3408 = scalar_lea.vmem [#allocation3], 833
      %v3409 = vld [vmem:[%s3408] ss:$2 sm:$0xff]
      %s3410 = scalar_lea.vmem [#allocation3], 849
      %v3411 = vld [vmem:[%s3410] ss:$2 sm:$0xff]
      %s3412 = scalar_lea.vmem [#allocation3], 865
      %v3413 = vld [vmem:[%s3412] ss:$2 sm:$0xff]
      %s3414 = scalar_lea.vmem [#allocation3], 881
      %v3415 = vld [vmem:[%s3414] ss:$2 sm:$0xff]
      %s3416 = scalar_lea.vmem [#allocation3], 897
      %v3417 = vld [vmem:[%s3416] ss:$2 sm:$0xff]
      %s3418 = scalar_lea.vmem [#allocation3], 913
      %v3419 = vld [vmem:[%s3418] ss:$2 sm:$0xff]
      %s3420 = scalar_lea.vmem [#allocation3], 929
      %v3421 = vld [vmem:[%s3420] ss:$2 sm:$0xff]
      %s3422 = scalar_lea.vmem [#allocation3], 945
      %v3423 = vld [vmem:[%s3422] ss:$2 sm:$0xff]
      %s3424 = scalar_lea.vmem [#allocation3], 961
      %v3425 = vld [vmem:[%s3424] ss:$2 sm:$0xff]
      %s3426 = scalar_lea.vmem [#allocation3], 977
      %v3427 = vld [vmem:[%s3426] ss:$2 sm:$0xff]
      %s3428 = scalar_lea.vmem [#allocation3], 993
      %v3429 = vld [vmem:[%s3428] ss:$2 sm:$0xff]
      %s3430 = scalar_lea.vmem [#allocation3], 1009
      %v3431 = vld [vmem:[%s3430] ss:$2 sm:$0xff]
      %v3432 = vmax.f32 %v3177, %v3305
      %v3433 = vmax.f32 %v3179, %v3307
      %v3434 = vmax.f32 %v3181, %v3309
      %v3435 = vmax.f32 %v3183, %v3311
      %v3436 = vmax.f32 %v3185, %v3313
      %v3437 = vmax.f32 %v3187, %v3315
      %v3438 = vmax.f32 %v3189, %v3317
      %v3439 = vmax.f32 %v3191, %v3319
      %v3440 = vmax.f32 %v3193, %v3321
      %v3441 = vmax.f32 %v3195, %v3323
      %v3442 = vmax.f32 %v3197, %v3325
      %v3443 = vmax.f32 %v3199, %v3327
      %v3444 = vmax.f32 %v3201, %v3329
      %v3445 = vmax.f32 %v3203, %v3331
      %v3446 = vmax.f32 %v3205, %v3333
      %v3447 = vmax.f32 %v3207, %v3335
      %v3448 = vmax.f32 %v3209, %v3337
      %v3449 = vmax.f32 %v3211, %v3339
      %v3450 = vmax.f32 %v3213, %v3341
      %v3451 = vmax.f32 %v3215, %v3343
      %v3452 = vmax.f32 %v3217, %v3345
      %v3453 = vmax.f32 %v3219, %v3347
      %v3454 = vmax.f32 %v3221, %v3349
      %v3455 = vmax.f32 %v3223, %v3351
      %v3456 = vmax.f32 %v3225, %v3353
      %v3457 = vmax.f32 %v3227, %v3355
      %v3458 = vmax.f32 %v3229, %v3357
      %v3459 = vmax.f32 %v3231, %v3359
      %v3460 = vmax.f32 %v3233, %v3361
      %v3461 = vmax.f32 %v3235, %v3363
      %v3462 = vmax.f32 %v3237, %v3365
      %v3463 = vmax.f32 %v3239, %v3367
      %v3464 = vmax.f32 %v3241, %v3369
      %v3465 = vmax.f32 %v3243, %v3371
      %v3466 = vmax.f32 %v3245, %v3373
      %v3467 = vmax.f32 %v3247, %v3375
      %v3468 = vmax.f32 %v3249, %v3377
      %v3469 = vmax.f32 %v3251, %v3379
      %v3470 = vmax.f32 %v3253, %v3381
      %v3471 = vmax.f32 %v3255, %v3383
      %v3472 = vmax.f32 %v3257, %v3385
      %v3473 = vmax.f32 %v3259, %v3387
      %v3474 = vmax.f32 %v3261, %v3389
      %v3475 = vmax.f32 %v3263, %v3391
      %v3476 = vmax.f32 %v3265, %v3393
      %v3477 = vmax.f32 %v3267, %v3395
      %v3478 = vmax.f32 %v3269, %v3397
      %v3479 = vmax.f32 %v3271, %v3399
      %v3480 = vmax.f32 %v3273, %v3401
      %v3481 = vmax.f32 %v3275, %v3403
      %v3482 = vmax.f32 %v3277, %v3405
      %v3483 = vmax.f32 %v3279, %v3407
      %v3484 = vmax.f32 %v3281, %v3409
      %v3485 = vmax.f32 %v3283, %v3411
      %v3486 = vmax.f32 %v3285, %v3413
      %v3487 = vmax.f32 %v3287, %v3415
      %v3488 = vmax.f32 %v3289, %v3417
      %v3489 = vmax.f32 %v3291, %v3419
      %v3490 = vmax.f32 %v3293, %v3421
      %v3491 = vmax.f32 %v3295, %v3423
      %v3492 = vmax.f32 %v3297, %v3425
      %v3493 = vmax.f32 %v3299, %v3427
      %v3494 = vmax.f32 %v3301, %v3429
      %v3495 = vmax.f32 %v3303, %v3431
      %v3496 = vld [vmem:[%s2] sm:$0x1]
      %v3498 = vperm.slane %v3496, 0
      %v3500 = vmul.f32 %v3432, %v3498
      %v3501 = vmul.f32 %v3433, %v3498
      %v3502 = vmul.f32 %v3434, %v3498
      %v3503 = vmul.f32 %v3435, %v3498
      %v3504 = vmul.f32 %v3436, %v3498
      %v3505 = vmul.f32 %v3437, %v3498
      %v3506 = vmul.f32 %v3438, %v3498
      %v3507 = vmul.f32 %v3439, %v3498
      %v3508 = vmul.f32 %v3440, %v3498
      %v3509 = vmul.f32 %v3441, %v3498
      %v3510 = vmul.f32 %v3442, %v3498
      %v3511 = vmul.f32 %v3443, %v3498
      %v3512 = vmul.f32 %v3444, %v3498
      %v3513 = vmul.f32 %v3445, %v3498
      %v3514 = vmul.f32 %v3446, %v3498
      %v3515 = vmul.f32 %v3447, %v3498
      %v3516 = vmul.f32 %v3448, %v3498
      %v3517 = vmul.f32 %v3449, %v3498
      %v3518 = vmul.f32 %v3450, %v3498
      %v3519 = vmul.f32 %v3451, %v3498
      %v3520 = vmul.f32 %v3452, %v3498
      %v3521 = vmul.f32 %v3453, %v3498
      %v3522 = vmul.f32 %v3454, %v3498
      %v3523 = vmul.f32 %v3455, %v3498
      %v3524 = vmul.f32 %v3456, %v3498
      %v3525 = vmul.f32 %v3457, %v3498
      %v3526 = vmul.f32 %v3458, %v3498
      %v3527 = vmul.f32 %v3459, %v3498
      %v3528 = vmul.f32 %v3460, %v3498
      %v3529 = vmul.f32 %v3461, %v3498
      %v3530 = vmul.f32 %v3462, %v3498
      %v3531 = vmul.f32 %v3463, %v3498
      %v3532 = vmul.f32 %v3464, %v3498
      %v3533 = vmul.f32 %v3465, %v3498
      %v3534 = vmul.f32 %v3466, %v3498
      %v3535 = vmul.f32 %v3467, %v3498
      %v3536 = vmul.f32 %v3468, %v3498
      %v3537 = vmul.f32 %v3469, %v3498
      %v3538 = vmul.f32 %v3470, %v3498
      %v3539 = vmul.f32 %v3471, %v3498
      %v3540 = vmul.f32 %v3472, %v3498
      %v3541 = vmul.f32 %v3473, %v3498
      %v3542 = vmul.f32 %v3474, %v3498
      %v3543 = vmul.f32 %v3475, %v3498
      %v3544 = vmul.f32 %v3476, %v3498
      %v3545 = vmul.f32 %v3477, %v3498
      %v3546 = vmul.f32 %v3478, %v3498
      %v3547 = vmul.f32 %v3479, %v3498
      %v3548 = vmul.f32 %v3480, %v3498
      %v3549 = vmul.f32 %v3481, %v3498
      %v3550 = vmul.f32 %v3482, %v3498
      %v3551 = vmul.f32 %v3483, %v3498
      %v3552 = vmul.f32 %v3484, %v3498
      %v3553 = vmul.f32 %v3485, %v3498
      %v3554 = vmul.f32 %v3486, %v3498
      %v3555 = vmul.f32 %v3487, %v3498
      %v3556 = vmul.f32 %v3488, %v3498
      %v3557 = vmul.f32 %v3489, %v3498
      %v3558 = vmul.f32 %v3490, %v3498
      %v3559 = vmul.f32 %v3491, %v3498
      %v3560 = vmul.f32 %v3492, %v3498
      %v3561 = vmul.f32 %v3493, %v3498
      %v3562 = vmul.f32 %v3494, %v3498
      %v3563 = vmul.f32 %v3495, %v3498
      %v3564 = vld [vmem:[%s3] sm:$0x1]
      %v3566 = vperm.slane %v3564, 0
      %v3568 = vadd.f32 %v3500, %v3566
      %v3569 = vadd.f32 %v3501, %v3566
      %v3570 = vadd.f32 %v3502, %v3566
      %v3571 = vadd.f32 %v3503, %v3566
      %v3572 = vadd.f32 %v3504, %v3566
      %v3573 = vadd.f32 %v3505, %v3566
      %v3574 = vadd.f32 %v3506, %v3566
      %v3575 = vadd.f32 %v3507, %v3566
      %v3576 = vadd.f32 %v3508, %v3566
      %v3577 = vadd.f32 %v3509, %v3566
      %v3578 = vadd.f32 %v3510, %v3566
      %v3579 = vadd.f32 %v3511, %v3566
      %v3580 = vadd.f32 %v3512, %v3566
      %v3581 = vadd.f32 %v3513, %v3566
      %v3582 = vadd.f32 %v3514, %v3566
      %v3583 = vadd.f32 %v3515, %v3566
      %v3584 = vadd.f32 %v3516, %v3566
      %v3585 = vadd.f32 %v3517, %v3566
      %v3586 = vadd.f32 %v3518, %v3566
      %v3587 = vadd.f32 %v3519, %v3566
      %v3588 = vadd.f32 %v3520, %v3566
      %v3589 = vadd.f32 %v3521, %v3566
      %v3590 = vadd.f32 %v3522, %v3566
      %v3591 = vadd.f32 %v3523, %v3566
      %v3592 = vadd.f32 %v3524, %v3566
      %v3593 = vadd.f32 %v3525, %v3566
      %v3594 = vadd.f32 %v3526, %v3566
      %v3595 = vadd.f32 %v3527, %v3566
      %v3596 = vadd.f32 %v3528, %v3566
      %v3597 = vadd.f32 %v3529, %v3566
      %v3598 = vadd.f32 %v3530, %v3566
      %v3599 = vadd.f32 %v3531, %v3566
      %v3600 = vadd.f32 %v3532, %v3566
      %v3601 = vadd.f32 %v3533, %v3566
      %v3602 = vadd.f32 %v3534, %v3566
      %v3603 = vadd.f32 %v3535, %v3566
      %v3604 = vadd.f32 %v3536, %v3566
      %v3605 = vadd.f32 %v3537, %v3566
      %v3606 = vadd.f32 %v3538, %v3566
      %v3607 = vadd.f32 %v3539, %v3566
      %v3608 = vadd.f32 %v3540, %v3566
      %v3609 = vadd.f32 %v3541, %v3566
      %v3610 = vadd.f32 %v3542, %v3566
      %v3611 = vadd.f32 %v3543, %v3566
      %v3612 = vadd.f32 %v3544, %v3566
      %v3613 = vadd.f32 %v3545, %v3566
      %v3614 = vadd.f32 %v3546, %v3566
      %v3615 = vadd.f32 %v3547, %v3566
      %v3616 = vadd.f32 %v3548, %v3566
      %v3617 = vadd.f32 %v3549, %v3566
      %v3618 = vadd.f32 %v3550, %v3566
      %v3619 = vadd.f32 %v3551, %v3566
      %v3620 = vadd.f32 %v3552, %v3566
      %v3621 = vadd.f32 %v3553, %v3566
      %v3622 = vadd.f32 %v3554, %v3566
      %v3623 = vadd.f32 %v3555, %v3566
      %v3624 = vadd.f32 %v3556, %v3566
      %v3625 = vadd.f32 %v3557, %v3566
      %v3626 = vadd.f32 %v3558, %v3566
      %v3627 = vadd.f32 %v3559, %v3566
      %v3628 = vadd.f32 %v3560, %v3566
      %v3629 = vadd.f32 %v3561, %v3566
      %v3630 = vadd.f32 %v3562, %v3566
      %v3631 = vadd.f32 %v3563, %v3566
      %v3632 = vsub.f32 0.0, %v3568
      %v3633 = vsub.f32 0.0, %v3569
      %v3634 = vsub.f32 0.0, %v3570
      %v3635 = vsub.f32 0.0, %v3571
      %v3636 = vsub.f32 0.0, %v3572
      %v3637 = vsub.f32 0.0, %v3573
      %v3638 = vsub.f32 0.0, %v3574
      %v3639 = vsub.f32 0.0, %v3575
      %v3640 = vsub.f32 0.0, %v3576
      %v3641 = vsub.f32 0.0, %v3577
      %v3642 = vsub.f32 0.0, %v3578
      %v3643 = vsub.f32 0.0, %v3579
      %v3644 = vsub.f32 0.0, %v3580
      %v3645 = vsub.f32 0.0, %v3581
      %v3646 = vsub.f32 0.0, %v3582
      %v3647 = vsub.f32 0.0, %v3583
      %v3648 = vsub.f32 0.0, %v3584
      %v3649 = vsub.f32 0.0, %v3585
      %v3650 = vsub.f32 0.0, %v3586
      %v3651 = vsub.f32 0.0, %v3587
      %v3652 = vsub.f32 0.0, %v3588
      %v3653 = vsub.f32 0.0, %v3589
      %v3654 = vsub.f32 0.0, %v3590
      %v3655 = vsub.f32 0.0, %v3591
      %v3656 = vsub.f32 0.0, %v3592
      %v3657 = vsub.f32 0.0, %v3593
      %v3658 = vsub.f32 0.0, %v3594
      %v3659 = vsub.f32 0.0, %v3595
      %v3660 = vsub.f32 0.0, %v3596
      %v3661 = vsub.f32 0.0, %v3597
      %v3662 = vsub.f32 0.0, %v3598
      %v3663 = vsub.f32 0.0, %v3599
      %v3664 = vsub.f32 0.0, %v3600
      %v3665 = vsub.f32 0.0, %v3601
      %v3666 = vsub.f32 0.0, %v3602
      %v3667 = vsub.f32 0.0, %v3603
      %v3668 = vsub.f32 0.0, %v3604
      %v3669 = vsub.f32 0.0, %v3605
      %v3670 = vsub.f32 0.0, %v3606
      %v3671 = vsub.f32 0.0, %v3607
      %v3672 = vsub.f32 0.0, %v3608
      %v3673 = vsub.f32 0.0, %v3609
      %v3674 = vsub.f32 0.0, %v3610
      %v3675 = vsub.f32 0.0, %v3611
      %v3676 = vsub.f32 0.0, %v3612
      %v3677 = vsub.f32 0.0, %v3613
      %v3678 = vsub.f32 0.0, %v3614
      %v3679 = vsub.f32 0.0, %v3615
      %v3680 = vsub.f32 0.0, %v3616
      %v3681 = vsub.f32 0.0, %v3617
      %v3682 = vsub.f32 0.0, %v3618
      %v3683 = vsub.f32 0.0, %v3619
      %v3684 = vsub.f32 0.0, %v3620
      %v3685 = vsub.f32 0.0, %v3621
      %v3686 = vsub.f32 0.0, %v3622
      %v3687 = vsub.f32 0.0, %v3623
      %v3688 = vsub.f32 0.0, %v3624
      %v3689 = vsub.f32 0.0, %v3625
      %v3690 = vsub.f32 0.0, %v3626
      %v3691 = vsub.f32 0.0, %v3627
      %v3692 = vsub.f32 0.0, %v3628
      %v3693 = vsub.f32 0.0, %v3629
      %v3694 = vsub.f32 0.0, %v3630
      %v3695 = vsub.f32 0.0, %v3631
      %v3696 = vmul.f32 %v3632, 1.442695
      %v3697 = vpow.pop %v3696
      %v3698 = vmul.f32 %v3633, 1.442695
      %v3699 = vpow.pop %v3698
      %v3700 = vmul.f32 %v3634, 1.442695
      %v3701 = vpow.pop %v3700
      %v3702 = vmul.f32 %v3635, 1.442695
      %v3703 = vpow.pop %v3702
      %v3704 = vmul.f32 %v3636, 1.442695
      %v3705 = vpow.pop %v3704
      %v3706 = vmul.f32 %v3637, 1.442695
      %v3707 = vpow.pop %v3706
      %v3708 = vmul.f32 %v3638, 1.442695
      %v3709 = vpow.pop %v3708
      %v3710 = vmul.f32 %v3639, 1.442695
      %v3711 = vpow.pop %v3710
      %v3712 = vmul.f32 %v3640, 1.442695
      %v3713 = vpow.pop %v3712
      %v3714 = vmul.f32 %v3641, 1.442695
      %v3715 = vpow.pop %v3714
      %v3716 = vmul.f32 %v3642, 1.442695
      %v3717 = vpow.pop %v3716
      %v3718 = vmul.f32 %v3643, 1.442695
      %v3719 = vpow.pop %v3718
      %v3720 = vmul.f32 %v3644, 1.442695
      %v3721 = vpow.pop %v3720
      %v3722 = vmul.f32 %v3645, 1.442695
      %v3723 = vpow.pop %v3722
      %v3724 = vmul.f32 %v3646, 1.442695
      %v3725 = vpow.pop %v3724
      %v3726 = vmul.f32 %v3647, 1.442695
      %v3727 = vpow.pop %v3726
      %v3728 = vmul.f32 %v3648, 1.442695
      %v3729 = vpow.pop %v3728
      %v3730 = vmul.f32 %v3649, 1.442695
      %v3731 = vpow.pop %v3730
      %v3732 = vmul.f32 %v3650, 1.442695
      %v3733 = vpow.pop %v3732
      %v3734 = vmul.f32 %v3651, 1.442695
      %v3735 = vpow.pop %v3734
      %v3736 = vmul.f32 %v3652, 1.442695
      %v3737 = vpow.pop %v3736
      %v3738 = vmul.f32 %v3653, 1.442695
      %v3739 = vpow.pop %v3738
      %v3740 = vmul.f32 %v3654, 1.442695
      %v3741 = vpow.pop %v3740
      %v3742 = vmul.f32 %v3655, 1.442695
      %v3743 = vpow.pop %v3742
      %v3744 = vmul.f32 %v3656, 1.442695
      %v3745 = vpow.pop %v3744
      %v3746 = vmul.f32 %v3657, 1.442695
      %v3747 = vpow.pop %v3746
      %v3748 = vmul.f32 %v3658, 1.442695
      %v3749 = vpow.pop %v3748
      %v3750 = vmul.f32 %v3659, 1.442695
      %v3751 = vpow.pop %v3750
      %v3752 = vmul.f32 %v3660, 1.442695
      %v3753 = vpow.pop %v3752
      %v3754 = vmul.f32 %v3661, 1.442695
      %v3755 = vpow.pop %v3754
      %v3756 = vmul.f32 %v3662, 1.442695
      %v3757 = vpow.pop %v3756
      %v3758 = vmul.f32 %v3663, 1.442695
      %v3759 = vpow.pop %v3758
      %v3760 = vmul.f32 %v3664, 1.442695
      %v3761 = vpow.pop %v3760
      %v3762 = vmul.f32 %v3665, 1.442695
      %v3763 = vpow.pop %v3762
      %v3764 = vmul.f32 %v3666, 1.442695
      %v3765 = vpow.pop %v3764
      %v3766 = vmul.f32 %v3667, 1.442695
      %v3767 = vpow.pop %v3766
      %v3768 = vmul.f32 %v3668, 1.442695
      %v3769 = vpow.pop %v3768
      %v3770 = vmul.f32 %v3669, 1.442695
      %v3771 = vpow.pop %v3770
      %v3772 = vmul.f32 %v3670, 1.442695
      %v3773 = vpow.pop %v3772
      %v3774 = vmul.f32 %v3671, 1.442695
      %v3775 = vpow.pop %v3774
      %v3776 = vmul.f32 %v3672, 1.442695
      %v3777 = vpow.pop %v3776
      %v3778 = vmul.f32 %v3673, 1.442695
      %v3779 = vpow.pop %v3778
      %v3780 = vmul.f32 %v3674, 1.442695
      %v3781 = vpow.pop %v3780
      %v3782 = vmul.f32 %v3675, 1.442695
      %v3783 = vpow.pop %v3782
      %v3784 = vmul.f32 %v3676, 1.442695
      %v3785 = vpow.pop %v3784
      %v3786 = vmul.f32 %v3677, 1.442695
      %v3787 = vpow.pop %v3786
      %v3788 = vmul.f32 %v3678, 1.442695
      %v3789 = vpow.pop %v3788
      %v3790 = vmul.f32 %v3679, 1.442695
      %v3791 = vpow.pop %v3790
      %v3792 = vmul.f32 %v3680, 1.442695
      %v3793 = vpow.pop %v3792
      %v3794 = vmul.f32 %v3681, 1.442695
      %v3795 = vpow.pop %v3794
      %v3796 = vmul.f32 %v3682, 1.442695
      %v3797 = vpow.pop %v3796
      %v3798 = vmul.f32 %v3683, 1.442695
      %v3799 = vpow.pop %v3798
      %v3800 = vmul.f32 %v3684, 1.442695
      %v3801 = vpow.pop %v3800
      %v3802 = vmul.f32 %v3685, 1.442695
      %v3803 = vpow.pop %v3802
      %v3804 = vmul.f32 %v3686, 1.442695
      %v3805 = vpow.pop %v3804
      %v3806 = vmul.f32 %v3687, 1.442695
      %v3807 = vpow.pop %v3806
      %v3808 = vmul.f32 %v3688, 1.442695
      %v3809 = vpow.pop %v3808
      %v3810 = vmul.f32 %v3689, 1.442695
      %v3811 = vpow.pop %v3810
      %v3812 = vmul.f32 %v3690, 1.442695
      %v3813 = vpow.pop %v3812
      %v3814 = vmul.f32 %v3691, 1.442695
      %v3815 = vpow.pop %v3814
      %v3816 = vmul.f32 %v3692, 1.442695
      %v3817 = vpow.pop %v3816
      %v3818 = vmul.f32 %v3693, 1.442695
      %v3819 = vpow.pop %v3818
      %v3820 = vmul.f32 %v3694, 1.442695
      %v3821 = vpow.pop %v3820
      %v3822 = vmul.f32 %v3695, 1.442695
      %v3823 = vpow.pop %v3822
      %v3824 = vadd.f32 %v3697, 1.0
      %v3825 = vadd.f32 %v3699, 1.0
      %v3826 = vadd.f32 %v3701, 1.0
      %v3827 = vadd.f32 %v3703, 1.0
      %v3828 = vadd.f32 %v3705, 1.0
      %v3829 = vadd.f32 %v3707, 1.0
      %v3830 = vadd.f32 %v3709, 1.0
      %v3831 = vadd.f32 %v3711, 1.0
      %v3832 = vadd.f32 %v3713, 1.0
      %v3833 = vadd.f32 %v3715, 1.0
      %v3834 = vadd.f32 %v3717, 1.0
      %v3835 = vadd.f32 %v3719, 1.0
      %v3836 = vadd.f32 %v3721, 1.0
      %v3837 = vadd.f32 %v3723, 1.0
      %v3838 = vadd.f32 %v3725, 1.0
      %v3839 = vadd.f32 %v3727, 1.0
      %v3840 = vadd.f32 %v3729, 1.0
      %v3841 = vadd.f32 %v3731, 1.0
      %v3842 = vadd.f32 %v3733, 1.0
      %v3843 = vadd.f32 %v3735, 1.0
      %v3844 = vadd.f32 %v3737, 1.0
      %v3845 = vadd.f32 %v3739, 1.0
      %v3846 = vadd.f32 %v3741, 1.0
      %v3847 = vadd.f32 %v3743, 1.0
      %v3848 = vadd.f32 %v3745, 1.0
      %v3849 = vadd.f32 %v3747, 1.0
      %v3850 = vadd.f32 %v3749, 1.0
      %v3851 = vadd.f32 %v3751, 1.0
      %v3852 = vadd.f32 %v3753, 1.0
      %v3853 = vadd.f32 %v3755, 1.0
      %v3854 = vadd.f32 %v3757, 1.0
      %v3855 = vadd.f32 %v3759, 1.0
      %v3856 = vadd.f32 %v3761, 1.0
      %v3857 = vadd.f32 %v3763, 1.0
      %v3858 = vadd.f32 %v3765, 1.0
      %v3859 = vadd.f32 %v3767, 1.0
      %v3860 = vadd.f32 %v3769, 1.0
      %v3861 = vadd.f32 %v3771, 1.0
      %v3862 = vadd.f32 %v3773, 1.0
      %v3863 = vadd.f32 %v3775, 1.0
      %v3864 = vadd.f32 %v3777, 1.0
      %v3865 = vadd.f32 %v3779, 1.0
      %v3866 = vadd.f32 %v3781, 1.0
      %v3867 = vadd.f32 %v3783, 1.0
      %v3868 = vadd.f32 %v3785, 1.0
      %v3869 = vadd.f32 %v3787, 1.0
      %v3870 = vadd.f32 %v3789, 1.0
      %v3871 = vadd.f32 %v3791, 1.0
      %v3872 = vadd.f32 %v3793, 1.0
      %v3873 = vadd.f32 %v3795, 1.0
      %v3874 = vadd.f32 %v3797, 1.0
      %v3875 = vadd.f32 %v3799, 1.0
      %v3876 = vadd.f32 %v3801, 1.0
      %v3877 = vadd.f32 %v3803, 1.0
      %v3878 = vadd.f32 %v3805, 1.0
      %v3879 = vadd.f32 %v3807, 1.0
      %v3880 = vadd.f32 %v3809, 1.0
      %v3881 = vadd.f32 %v3811, 1.0
      %v3882 = vadd.f32 %v3813, 1.0
      %v3883 = vadd.f32 %v3815, 1.0
      %v3884 = vadd.f32 %v3817, 1.0
      %v3885 = vadd.f32 %v3819, 1.0
      %v3886 = vadd.f32 %v3821, 1.0
      %v3887 = vadd.f32 %v3823, 1.0
      %v3888 = vrcp.pop %v3824
      %v3889 = vrcp.pop %v3825
      %v3890 = vrcp.pop %v3826
      %v3891 = vrcp.pop %v3827
      %v3892 = vrcp.pop %v3828
      %v3893 = vrcp.pop %v3829
      %v3894 = vrcp.pop %v3830
      %v3895 = vrcp.pop %v3831
      %v3896 = vrcp.pop %v3832
      %v3897 = vrcp.pop %v3833
      %v3898 = vrcp.pop %v3834
      %v3899 = vrcp.pop %v3835
      %v3900 = vrcp.pop %v3836
      %v3901 = vrcp.pop %v3837
      %v3902 = vrcp.pop %v3838
      %v3903 = vrcp.pop %v3839
      %v3904 = vrcp.pop %v3840
      %v3905 = vrcp.pop %v3841
      %v3906 = vrcp.pop %v3842
      %v3907 = vrcp.pop %v3843
      %v3908 = vrcp.pop %v3844
      %v3909 = vrcp.pop %v3845
      %v3910 = vrcp.pop %v3846
      %v3911 = vrcp.pop %v3847
      %v3912 = vrcp.pop %v3848
      %v3913 = vrcp.pop %v3849
      %v3914 = vrcp.pop %v3850
      %v3915 = vrcp.pop %v3851
      %v3916 = vrcp.pop %v3852
      %v3917 = vrcp.pop %v3853
      %v3918 = vrcp.pop %v3854
      %v3919 = vrcp.pop %v3855
      %v3920 = vrcp.pop %v3856
      %v3921 = vrcp.pop %v3857
      %v3922 = vrcp.pop %v3858
      %v3923 = vrcp.pop %v3859
      %v3924 = vrcp.pop %v3860
      %v3925 = vrcp.pop %v3861
      %v3926 = vrcp.pop %v3862
      %v3927 = vrcp.pop %v3863
      %v3928 = vrcp.pop %v3864
      %v3929 = vrcp.pop %v3865
      %v3930 = vrcp.pop %v3866
      %v3931 = vrcp.pop %v3867
      %v3932 = vrcp.pop %v3868
      %v3933 = vrcp.pop %v3869
      %v3934 = vrcp.pop %v3870
      %v3935 = vrcp.pop %v3871
      %v3936 = vrcp.pop %v3872
      %v3937 = vrcp.pop %v3873
      %v3938 = vrcp.pop %v3874
      %v3939 = vrcp.pop %v3875
      %v3940 = vrcp.pop %v3876
      %v3941 = vrcp.pop %v3877
      %v3942 = vrcp.pop %v3878
      %v3943 = vrcp.pop %v3879
      %v3944 = vrcp.pop %v3880
      %v3945 = vrcp.pop %v3881
      %v3946 = vrcp.pop %v3882
      %v3947 = vrcp.pop %v3883
      %v3948 = vrcp.pop %v3884
      %v3949 = vrcp.pop %v3885
      %v3950 = vrcp.pop %v3886
      %v3951 = vrcp.pop %v3887
      %v3952 = vmul.f32 %v3568, %v3888
      %v3953 = vmul.f32 %v3569, %v3889
      %v3954 = vmul.f32 %v3570, %v3890
      %v3955 = vmul.f32 %v3571, %v3891
      %v3956 = vmul.f32 %v3572, %v3892
      %v3957 = vmul.f32 %v3573, %v3893
      %v3958 = vmul.f32 %v3574, %v3894
      %v3959 = vmul.f32 %v3575, %v3895
      %v3960 = vmul.f32 %v3576, %v3896
      %v3961 = vmul.f32 %v3577, %v3897
      %v3962 = vmul.f32 %v3578, %v3898
      %v3963 = vmul.f32 %v3579, %v3899
      %v3964 = vmul.f32 %v3580, %v3900
      %v3965 = vmul.f32 %v3581, %v3901
      %v3966 = vmul.f32 %v3582, %v3902
      %v3967 = vmul.f32 %v3583, %v3903
      %v3968 = vmul.f32 %v3584, %v3904
      %v3969 = vmul.f32 %v3585, %v3905
      %v3970 = vmul.f32 %v3586, %v3906
      %v3971 = vmul.f32 %v3587, %v3907
      %v3972 = vmul.f32 %v3588, %v3908
      %v3973 = vmul.f32 %v3589, %v3909
      %v3974 = vmul.f32 %v3590, %v3910
      %v3975 = vmul.f32 %v3591, %v3911
      %v3976 = vmul.f32 %v3592, %v3912
      %v3977 = vmul.f32 %v3593, %v3913
      %v3978 = vmul.f32 %v3594, %v3914
      %v3979 = vmul.f32 %v3595, %v3915
      %v3980 = vmul.f32 %v3596, %v3916
      %v3981 = vmul.f32 %v3597, %v3917
      %v3982 = vmul.f32 %v3598, %v3918
      %v3983 = vmul.f32 %v3599, %v3919
      %v3984 = vmul.f32 %v3600, %v3920
      %v3985 = vmul.f32 %v3601, %v3921
      %v3986 = vmul.f32 %v3602, %v3922
      %v3987 = vmul.f32 %v3603, %v3923
      %v3988 = vmul.f32 %v3604, %v3924
      %v3989 = vmul.f32 %v3605, %v3925
      %v3990 = vmul.f32 %v3606, %v3926
      %v3991 = vmul.f32 %v3607, %v3927
      %v3992 = vmul.f32 %v3608, %v3928
      %v3993 = vmul.f32 %v3609, %v3929
      %v3994 = vmul.f32 %v3610, %v3930
      %v3995 = vmul.f32 %v3611, %v3931
      %v3996 = vmul.f32 %v3612, %v3932
      %v3997 = vmul.f32 %v3613, %v3933
      %v3998 = vmul.f32 %v3614, %v3934
      %v3999 = vmul.f32 %v3615, %v3935
      %v4000 = vmul.f32 %v3616, %v3936
      %v4001 = vmul.f32 %v3617, %v3937
      %v4002 = vmul.f32 %v3618, %v3938
      %v4003 = vmul.f32 %v3619, %v3939
      %v4004 = vmul.f32 %v3620, %v3940
      %v4005 = vmul.f32 %v3621, %v3941
      %v4006 = vmul.f32 %v3622, %v3942
      %v4007 = vmul.f32 %v3623, %v3943
      %v4008 = vmul.f32 %v3624, %v3944
      %v4009 = vmul.f32 %v3625, %v3945
      %v4010 = vmul.f32 %v3626, %v3946
      %v4011 = vmul.f32 %v3627, %v3947
      %v4012 = vmul.f32 %v3628, %v3948
      %v4013 = vmul.f32 %v3629, %v3949
      %v4014 = vmul.f32 %v3630, %v3950
      %v4015 = vmul.f32 %v3631, %v3951
      %4016 = vst [vmem:[%s199] sm:$0xff] %v3952
      %4017 = vst [vmem:[%s199 + $0x8] sm:$0xff] %v3953
      %4018 = vst [vmem:[%s199 + $0x10] sm:$0xff] %v3954
      %4019 = vst [vmem:[%s199 + $0x18] sm:$0xff] %v3955
      %4020 = vst [vmem:[%s199 + $0x20] sm:$0xff] %v3956
      %4021 = vst [vmem:[%s199 + $0x28] sm:$0xff] %v3957
      %4022 = vst [vmem:[%s199 + $0x30] sm:$0xff] %v3958
      %4023 = vst [vmem:[%s199 + $0x38] sm:$0xff] %v3959
      %4024 = vst [vmem:[%s199 + $0x40] sm:$0xff] %v3960
      %4025 = vst [vmem:[%s199 + $0x48] sm:$0xff] %v3961
      %4026 = vst [vmem:[%s199 + $0x50] sm:$0xff] %v3962
      %4027 = vst [vmem:[%s199 + $0x58] sm:$0xff] %v3963
      %4028 = vst [vmem:[%s199 + $0x60] sm:$0xff] %v3964
      %4029 = vst [vmem:[%s199 + $0x68] sm:$0xff] %v3965
      %4030 = vst [vmem:[%s199 + $0x70] sm:$0xff] %v3966
      %4031 = vst [vmem:[%s199 + $0x78] sm:$0xff] %v3967
      %4032 = vst [vmem:[%s199 + $0x80] sm:$0xff] %v3968
      %4033 = vst [vmem:[%s199 + $0x88] sm:$0xff] %v3969
      %4034 = vst [vmem:[%s199 + $0x90] sm:$0xff] %v3970
      %4035 = vst [vmem:[%s199 + $0x98] sm:$0xff] %v3971
      %4036 = vst [vmem:[%s199 + $0xa0] sm:$0xff] %v3972
      %4037 = vst [vmem:[%s199 + $0xa8] sm:$0xff] %v3973
      %4038 = vst [vmem:[%s199 + $0xb0] sm:$0xff] %v3974
      %4039 = vst [vmem:[%s199 + $0xb8] sm:$0xff] %v3975
      %4040 = vst [vmem:[%s199 + $0xc0] sm:$0xff] %v3976
      %4041 = vst [vmem:[%s199 + $0xc8] sm:$0xff] %v3977
      %4042 = vst [vmem:[%s199 + $0xd0] sm:$0xff] %v3978
      %4043 = vst [vmem:[%s199 + $0xd8] sm:$0xff] %v3979
      %4044 = vst [vmem:[%s199 + $0xe0] sm:$0xff] %v3980
      %4045 = vst [vmem:[%s199 + $0xe8] sm:$0xff] %v3981
      %4046 = vst [vmem:[%s199 + $0xf0] sm:$0xff] %v3982
      %4047 = vst [vmem:[%s199 + $0xf8] sm:$0xff] %v3983
      %4048 = vst [vmem:[%s199 + $0x100] sm:$0xff] %v3984
      %4049 = vst [vmem:[%s199 + $0x108] sm:$0xff] %v3985
      %4050 = vst [vmem:[%s199 + $0x110] sm:$0xff] %v3986
      %4051 = vst [vmem:[%s199 + $0x118] sm:$0xff] %v3987
      %4052 = vst [vmem:[%s199 + $0x120] sm:$0xff] %v3988
      %4053 = vst [vmem:[%s199 + $0x128] sm:$0xff] %v3989
      %4054 = vst [vmem:[%s199 + $0x130] sm:$0xff] %v3990
      %4055 = vst [vmem:[%s199 + $0x138] sm:$0xff] %v3991
      %4056 = vst [vmem:[%s199 + $0x140] sm:$0xff] %v3992
      %4057 = vst [vmem:[%s199 + $0x148] sm:$0xff] %v3993
      %4058 = vst [vmem:[%s199 + $0x150] sm:$0xff] %v3994
      %4059 = vst [vmem:[%s199 + $0x158] sm:$0xff] %v3995
      %4060 = vst [vmem:[%s199 + $0x160] sm:$0xff] %v3996
      %4061 = vst [vmem:[%s199 + $0x168] sm:$0xff] %v3997
      %4062 = vst [vmem:[%s199 + $0x170] sm:$0xff] %v3998
      %4063 = vst [vmem:[%s199 + $0x178] sm:$0xff] %v3999
      %4064 = vst [vmem:[%s199 + $0x180] sm:$0xff] %v4000
      %4065 = vst [vmem:[%s199 + $0x188] sm:$0xff] %v4001
      %4066 = vst [vmem:[%s199 + $0x190] sm:$0xff] %v4002
      %4067 = vst [vmem:[%s199 + $0x198] sm:$0xff] %v4003
      %4068 = vst [vmem:[%s199 + $0x1a0] sm:$0xff] %v4004
      %4069 = vst [vmem:[%s199 + $0x1a8] sm:$0xff] %v4005
      %4070 = vst [vmem:[%s199 + $0x1b0] sm:$0xff] %v4006
      %4071 = vst [vmem:[%s199 + $0x1b8] sm:$0xff] %v4007
      %4072 = vst [vmem:[%s199 + $0x1c0] sm:$0xff] %v4008
      %4073 = vst [vmem:[%s199 + $0x1c8] sm:$0xff] %v4009
      %4074 = vst [vmem:[%s199 + $0x1d0] sm:$0xff] %v4010
      %4075 = vst [vmem:[%s199 + $0x1d8] sm:$0xff] %v4011
      %4076 = vst [vmem:[%s199 + $0x1e0] sm:$0xff] %v4012
      %4077 = vst [vmem:[%s199 + $0x1e8] sm:$0xff] %v4013
      %4078 = vst [vmem:[%s199 + $0x1f0] sm:$0xff] %v4014
      %4079 = vst [vmem:[%s199 + $0x1f8] sm:$0xff] %v4015
      %s4080 = smul.u32 64, %s15
      %p4081 = scmp.lt.s32.totalorder %s4080, 127
      %s4082 = scalar_select %p4081, %s4080, 127
      %s4083 = smul.addr %s4082, 8
      %s4084 = scalar_lea.vmem %s4, %s4083
      // Predicated region
      $region37: #{cnn_forward.4} parent=35 // pred_check
        %p4085 = pneg %p122
      $region38: #{cnn_forward.4} parent=35 // pred_check_branch
        %4087 = sbr.rel (%p4085) target = $region40
      $region39: #{cnn_forward.4} parent=35 // pred_region
        %s4088 = smul.u32 64, %s15
      $region40: #{cnn_forward.4} parent=35 // pred_fallthru
        _
    $region36: #{cnn_forward.4} parent=5 // pred_fallthru
      _
    %p4089 = scmp.le.s32.totalorder 2, %s10
    // Predicated region
    $region41: #{cnn_forward.4} parent=5 // pred_check
      %p4090 = pneg %p4089
    $region42: #{cnn_forward.4} parent=5 // pred_check_branch
      %4092 = sbr.rel (%p4090) target = $region44
    $region43: #{cnn_forward.4} parent=5 // pred_region
      %s4093 = ssub.s32 %s10, 2
      // Predicated region
      $region45: #{cnn_forward.4} parent=43 // pred_check
        %p4094 = pneg %p128
      $region46: #{cnn_forward.4} parent=43 // pred_check_branch
        %4096 = sbr.rel (%p4094) target = $region48
      $region47: #{cnn_forward.4} parent=43 // pred_region
        %s4097 = smul.u32 64, %s16
        %p4098 = scmp.lt.s32.totalorder %s4097, 127
        %s4099 = scalar_select %p4098, %s4097, 127
        %s4100 = smul.addr %s4099, 8
        %s4101 = scalar_lea.vmem %s4, %s4100
      $region48: #{cnn_forward.4} parent=43 // pred_fallthru
        _
    $region44: #{cnn_forward.4} parent=5 // pred_fallthru
      _
  $region6: #{cnn_forward.4} parent=0 // loop_footer
    %s14 = sadd.s32 1, %s10
  $region7: #{cnn_forward.4} parent=0 // loop_footer_branch
    %9 = sbr.rel target = $region3
  $region8: #{cnn_forward.4} parent=0 // loop_exit
    _

// kernel: cnn_forward.5
$region0: #{cnn_forward.5}
  #allocation0 [shape = 'u32[]', space=smem, size = 0x4, offset = 0x4, fixed_abs, tag = 'smem constant byte address 0x4 - core index']
  #allocation1 [shape = 'u32[72,128]{1,0:T(1,128)}', space=vmem, size = 0x9000, scoped, tag = 'internal scratch']
  #allocation2 [shape = 'f32[512,128]{1,0:T(8,128)}', space=vmem, size = 0x40000, scoped, tag = 'scratch operand']
  #allocation3 [shape = 'f32[256,128]{1,0:T(8,128)}', space=vmem, size = 0x20000, scoped, tag = 'scratch operand']
  %s0 = inlined_call_operand.vmem [shape: bf16[1024,288], index: 0, kind: input, shape index: {}]
  %s1 = inlined_call_operand.vmem [shape: bf16[288,128], index: 1, kind: input, shape index: {}]
  %s2 = inlined_call_operand.vmem [shape: f32[1,128], index: 2, kind: input, shape index: {}]
  %s3 = inlined_call_operand.vmem [shape: f32[1,128], index: 3, kind: input, shape index: {}]
  %s4 = inlined_call_operand.vmem [shape: f32[256,128], index: 4, kind: output, shape index: {}]
  %s5 = sld [smem:[#allocation0]]
  $region49: #{cnn_forward.5} parent=0
    _
  %s7 = ssub.s32 1, %s5
  %s8 = scalar_select 0, %s7, %s5
  loop: start=0, step=1, limit=4
  $region2: #{cnn_forward.5} parent=0 // loop_pre_header
    _
  $region3: #{cnn_forward.5} parent=0 // loop_header
    %s10 = sphi 0, %s14
    %p11 = scmp.ge.s32.totalorder %s10, 4
    %s20 = sphi 0, %s22
    %s23 = sphi 0, %s20
    %s24 = sphi 0, %s23
    %s40 = sphi 0, %s24
    %s44 = sphi 0, %s44
    %s46 = sphi 0, %s44
    %s47 = sphi 0, %s46
    %s61 = sphi 0, %s47
    %s65 = sphi 0, %s65
    %s67 = sphi 0, %s65
    %s68 = sphi 0, %s67
    %s82 = sphi 0, %s68
    %s86 = sphi 0, %s86
    %s88 = sphi 0, %s86
    %s89 = sphi 0, %s88
    %s103 = sphi 0, %s89
    %s109 = sphi 0, %s111
    %s112 = sphi 0, %s109
    %s113 = sphi 0, %s112
    %s129 = sphi 0, %s113
  $region4: #{cnn_forward.5} parent=0 // loop_header_branch
    %13 = sbr.rel (%p11) target = $region8
  $region5: #{cnn_forward.5} parent=0 // loop_body
    %s15 = ssub.s32 %s10, 1
    %s16 = ssub.s32 %s10, 2
    %s17 = sadd.s32 %s10, 1
    %s18 = ssub.s32 %s10, %s17
    %p19 = scmp.eq.s32.totalorder %s18, 0
    %s21 = sadd.s32 %s20, 1
    %s22 = scalar_select %p19, %s20, %s21
    %p25 = pneg %p19
    %p26 = scmp.eq.s32.totalorder %s10, 1
    %p27 = por %p25, %p26
    %p28 = scmp.ne.s32.totalorder %s20, %s23
    %p29 = scmp.eq.s32.totalorder %s10, 0
    %p30 = por %p28, %p29
    %p31 = scmp.ne.s32.totalorder %s20, %s23
    %p32 = scmp.eq.s32.totalorder %s15, 1
    %p33 = por %p31, %p32
    %p34 = scmp.ne.s32.totalorder %s23, %s24
    %p35 = scmp.eq.s32.totalorder %s15, 0
    %p36 = por %p34, %p35
    %p37 = scmp.ne.s32.totalorder %s23, %s24
    %p38 = scmp.eq.s32.totalorder %s16, 1
    %p39 = por %p37, %p38
    %p41 = scmp.ne.s32.totalorder %s24, %s40
    %p42 = scmp.eq.s32.totalorder %s16, 0
    %p43 = por %p41, %p42
    %s45 = sadd.s32 %s44, 1
    %p48 = scmp.eq.s32.totalorder %s10, 1
    %p49 = scmp.ne.s32.totalorder %s44, %s46
    %p50 = scmp.eq.s32.totalorder %s10, 0
    %p51 = por %p49, %p50
    %p52 = scmp.ne.s32.totalorder %s44, %s46
    %p53 = scmp.eq.s32.totalorder %s15, 1
    %p54 = por %p52, %p53
    %p55 = scmp.ne.s32.totalorder %s46, %s47
    %p56 = scmp.eq.s32.totalorder %s15, 0
    %p57 = por %p55, %p56
    %p58 = scmp.ne.s32.totalorder %s46, %s47
    %p59 = scmp.eq.s32.totalorder %s16, 1
    %p60 = por %p58, %p59
    %p62 = scmp.ne.s32.totalorder %s47, %s61
    %p63 = scmp.eq.s32.totalorder %s16, 0
    %p64 = por %p62, %p63
    %s66 = sadd.s32 %s65, 1
    %p69 = scmp.eq.s32.totalorder %s10, 1
    %p70 = scmp.ne.s32.totalorder %s65, %s67
    %p71 = scmp.eq.s32.totalorder %s10, 0
    %p72 = por %p70, %p71
    %p73 = scmp.ne.s32.totalorder %s65, %s67
    %p74 = scmp.eq.s32.totalorder %s15, 1
    %p75 = por %p73, %p74
    %p76 = scmp.ne.s32.totalorder %s67, %s68
    %p77 = scmp.eq.s32.totalorder %s15, 0
    %p78 = por %p76, %p77
    %p79 = scmp.ne.s32.totalorder %s67, %s68
    %p80 = scmp.eq.s32.totalorder %s16, 1
    %p81 = por %p79, %p80
    %p83 = scmp.ne.s32.totalorder %s68, %s82
    %p84 = scmp.eq.s32.totalorder %s16, 0
    %p85 = por %p83, %p84
    %s87 = sadd.s32 %s86, 1
    %p90 = scmp.eq.s32.totalorder %s10, 1
    %p91 = scmp.ne.s32.totalorder %s86, %s88
    %p92 = scmp.eq.s32.totalorder %s10, 0
    %p93 = por %p91, %p92
    %p94 = scmp.ne.s32.totalorder %s86, %s88
    %p95 = scmp.eq.s32.totalorder %s15, 1
    %p96 = por %p94, %p95
    %p97 = scmp.ne.s32.totalorder %s88, %s89
    %p98 = scmp.eq.s32.totalorder %s15, 0
    %p99 = por %p97, %p98
    %p100 = scmp.ne.s32.totalorder %s88, %s89
    %p101 = scmp.eq.s32.totalorder %s16, 1
    %p102 = por %p100, %p101
    %p104 = scmp.ne.s32.totalorder %s89, %s103
    %p105 = scmp.eq.s32.totalorder %s16, 0
    %p106 = por %p104, %p105
    %s107 = ssub.s32 %s10, %s17
    %p108 = scmp.eq.s32.totalorder %s107, 0
    %s110 = sadd.s32 %s109, 1
    %s111 = scalar_select %p108, %s109, %s110
    %p114 = pneg %p108
    %p115 = scmp.eq.s32.totalorder %s10, 1
    %p116 = por %p114, %p115
    %p117 = scmp.ne.s32.totalorder %s109, %s112
    %p118 = scmp.eq.s32.totalorder %s10, 0
    %p119 = por %p117, %p118
    %p120 = scmp.ne.s32.totalorder %s109, %s112
    %p121 = scmp.eq.s32.totalorder %s15, 1
    %p122 = por %p120, %p121
    %p123 = scmp.ne.s32.totalorder %s112, %s113
    %p124 = scmp.eq.s32.totalorder %s15, 0
    %p125 = por %p123, %p124
    %p126 = scmp.ne.s32.totalorder %s112, %s113
    %p127 = scmp.eq.s32.totalorder %s16, 1
    %p128 = por %p126, %p127
    %p130 = scmp.ne.s32.totalorder %s113, %s129
    %p131 = scmp.eq.s32.totalorder %s16, 0
    %p132 = por %p130, %p131
    %p133 = scmp.le.s32.totalorder 1, %s10
    %p134 = scmp.lt.s32.totalorder %s10, 3
    %p135 = pnand %p133, %p134
    %p136 = pneg %p135
    // Predicated region
    $region9: #{cnn_forward.5} parent=5 // pred_check
      _
    $region10: #{cnn_forward.5} parent=5 // pred_check_branch
      %138 = sbr.rel (%p135) target = $region12
    $region11: #{cnn_forward.5} parent=5 // pred_region
      %s139 = ssub.s32 %s10, 1
      // Predicated region
      $region13: #{cnn_forward.5} parent=11 // pred_check
        %p140 = pneg %p57
      $region14: #{cnn_forward.5} parent=11 // pred_check_branch
        %142 = sbr.rel (%p140) target = $region16
      $region15: #{cnn_forward.5} parent=11 // pred_region
        _
      $region16: #{cnn_forward.5} parent=11 // pred_fallthru
        _
      // Predicated region
      $region17: #{cnn_forward.5} parent=11 // pred_check
        %p143 = pneg %p78
      $region18: #{cnn_forward.5} parent=11 // pred_check_branch
        %145 = sbr.rel (%p143) target = $region20
      $region19: #{cnn_forward.5} parent=11 // pred_region
        _
      $region20: #{cnn_forward.5} parent=11 // pred_fallthru
        _
      // Predicated region
      $region21: #{cnn_forward.5} parent=11 // pred_check
        %p146 = pneg %p99
      $region22: #{cnn_forward.5} parent=11 // pred_check_branch
        %148 = sbr.rel (%p146) target = $region24
      $region23: #{cnn_forward.5} parent=11 // pred_region
        _
      $region24: #{cnn_forward.5} parent=11 // pred_fallthru
        _
    $region12: #{cnn_forward.5} parent=5 // pred_fallthru
      _
    %p149 = scmp.lt.s32.totalorder %s10, 2
    // Predicated region
    $region25: #{cnn_forward.5} parent=5 // pred_check
      %p150 = pneg %p149
    $region26: #{cnn_forward.5} parent=5 // pred_check_branch
      %152 = sbr.rel (%p150) target = $region28
    $region27: #{cnn_forward.5} parent=5 // pred_region
      // Predicated region
      $region29: #{cnn_forward.5} parent=27 // pred_check
        %p153 = pneg %p30
      $region30: #{cnn_forward.5} parent=27 // pred_check_branch
        %155 = sbr.rel (%p153) target = $region32
      $region31: #{cnn_forward.5} parent=27 // pred_region
        %s156 = smul.u32 64, %s10
        %p157 = scmp.lt.s32.totalorder %s156, 127
        %s158 = scalar_select %p157, %s156, 127
        %s159 = smul.addr %s158, 3
        %s160 = smul.addr %s159, 4
        %s161 = scalar_lea.vmem %s0, %s160
        %s162 = smul.u32 64, %s10
      $region32: #{cnn_forward.5} parent=27 // pred_fallthru
        _
    $region28: #{cnn_forward.5} parent=5 // pred_fallthru
      _
    %p163 = scmp.le.s32.totalorder 1, %s10
    %p164 = scmp.lt.s32.totalorder %s10, 3
    %p165 = pnand %p163, %p164
    %p166 = pneg %p165
    // Predicated region
    $region33: #{cnn_forward.5} parent=5 // pred_check
      _
    $region34: #{cnn_forward.5} parent=5 // pred_check_branch
      %168 = sbr.rel (%p165) target = $region36
    $region35: #{cnn_forward.5} parent=5 // pred_region
      %s169 = ssub.s32 %s10, 1
      %s170 = smul.u32 64, %s15
      %p171 = scmp.lt.s32.totalorder %s170, 127
      %s172 = scalar_select %p171, %s170, 127
      %s173 = smul.addr %s172, 3
      %s174 = smul.addr %s173, 4
      %s175 = scalar_lea.vmem %s0, %s174
      %p176 = pneg %p36
      %p177 = pneg %p33
      %p178 = pneg %p57
      %p179 = pneg %p54
      %p180 = pneg %p78
      %p181 = pneg %p75
      %p182 = pneg %p99
      %p183 = pneg %p96
      %p184 = pneg %p125
      %p185 = pneg %p122
      %s186 = smul.u32 16, %s15
      %p187 = scmp.lt.s32.totalorder %s186, 31
      %s188 = scalar_select %p187, %s186, 31
      %s189 = smul.addr %s188, 8
      %s190 = scalar_lea.vmem %s4, %s189
      %s191 = smul.u32 64, %s15
      %p192 = scmp.lt.s32.totalorder %s191, 127
      %s193 = scalar_select %p192, %s191, 127
      %s194 = smul.addr %s193, 3
      %s195 = smul.addr %s194, 4
      %s196 = scalar_lea.vmem %s0, %s195
      %s197 = smul.u32 64, %s15
      %s198 = smul.u32 16, %s15
      %p199 = scmp.lt.s32.totalorder %s198, 31
      %s200 = scalar_select %p199, %s198, 31
      %s201 = smul.addr %s200, 8
      %s202 = scalar_lea.vmem %s4, %s201
      %s203 = smul.u32 16, %s15
      %v205 = vld [vmem:[%s196] sm:$0xff]
      %v206 = vld [vmem:[%s196 + $0x8] sm:$0xf]
      %v207 = vld [vmem:[%s196 + $0xc] sm:$0xff]
      %v208 = vld [vmem:[%s196 + $0x14] sm:$0xf]
      %v209 = vld [vmem:[%s196 + $0x18] sm:$0xff]
      %v210 = vld [vmem:[%s196 + $0x20] sm:$0xf]
      %v211 = vld [vmem:[%s196 + $0x24] sm:$0xff]
      %v212 = vld [vmem:[%s196 + $0x2c] sm:$0xf]
      %v213 = vld [vmem:[%s196 + $0x30] sm:$0xff]
      %v214 = vld [vmem:[%s196 + $0x38] sm:$0xf]
      %v215 = vld [vmem:[%s196 + $0x3c] sm:$0xff]
      %v216 = vld [vmem:[%s196 + $0x44] sm:$0xf]
      %v217 = vld [vmem:[%s196 + $0x48] sm:$0xff]
      %v218 = vld [vmem:[%s196 + $0x50] sm:$0xf]
      %v219 = vld [vmem:[%s196 + $0x54] sm:$0xff]
      %v220 = vld [vmem:[%s196 + $0x5c] sm:$0xf]
      %v221 = vld [vmem:[%s196 + $0x60] sm:$0xff]
      %v222 = vld [vmem:[%s196 + $0x68] sm:$0xf]
      %v223 = vld [vmem:[%s196 + $0x6c] sm:$0xff]
      %v224 = vld [vmem:[%s196 + $0x74] sm:$0xf]
      %v225 = vld [vmem:[%s196 + $0x78] sm:$0xff]
      %v226 = vld [vmem:[%s196 + $0x80] sm:$0xf]
      %v227 = vld [vmem:[%s196 + $0x84] sm:$0xff]
      %v228 = vld [vmem:[%s196 + $0x8c] sm:$0xf]
      %v229 = vld [vmem:[%s196 + $0x90] sm:$0xff]
      %v230 = vld [vmem:[%s196 + $0x98] sm:$0xf]
      %v231 = vld [vmem:[%s196 + $0x9c] sm:$0xff]
      %v232 = vld [vmem:[%s196 + $0xa4] sm:$0xf]
      %v233 = vld [vmem:[%s196 + $0xa8] sm:$0xff]
      %v234 = vld [vmem:[%s196 + $0xb0] sm:$0xf]
      %v235 = vld [vmem:[%s196 + $0xb4] sm:$0xff]
      %v236 = vld [vmem:[%s196 + $0xbc] sm:$0xf]
      %v237 = vld [vmem:[%s196 + $0xc0] sm:$0xff]
      %v238 = vld [vmem:[%s196 + $0xc8] sm:$0xf]
      %v239 = vld [vmem:[%s196 + $0xcc] sm:$0xff]
      %v240 = vld [vmem:[%s196 + $0xd4] sm:$0xf]
      %v241 = vld [vmem:[%s196 + $0xd8] sm:$0xff]
      %v242 = vld [vmem:[%s196 + $0xe0] sm:$0xf]
      %v243 = vld [vmem:[%s196 + $0xe4] sm:$0xff]
      %v244 = vld [vmem:[%s196 + $0xec] sm:$0xf]
      %v245 = vld [vmem:[%s196 + $0xf0] sm:$0xff]
      %v246 = vld [vmem:[%s196 + $0xf8] sm:$0xf]
      %v247 = vld [vmem:[%s196 + $0xfc] sm:$0xff]
      %v248 = vld [vmem:[%s196 + $0x104] sm:$0xf]
      %v249 = vld [vmem:[%s196 + $0x108] sm:$0xff]
      %v250 = vld [vmem:[%s196 + $0x110] sm:$0xf]
      %v251 = vld [vmem:[%s196 + $0x114] sm:$0xff]
      %v252 = vld [vmem:[%s196 + $0x11c] sm:$0xf]
      %v253 = vld [vmem:[%s196 + $0x120] sm:$0xff]
      %v254 = vld [vmem:[%s196 + $0x128] sm:$0xf]
      %v255 = vld [vmem:[%s196 + $0x12c] sm:$0xff]
      %v256 = vld [vmem:[%s196 + $0x134] sm:$0xf]
      %v257 = vld [vmem:[%s196 + $0x138] sm:$0xff]
      %v258 = vld [vmem:[%s196 + $0x140] sm:$0xf]
      %v259 = vld [vmem:[%s196 + $0x144] sm:$0xff]
      %v260 = vld [vmem:[%s196 + $0x14c] sm:$0xf]
      %v261 = vld [vmem:[%s196 + $0x150] sm:$0xff]
      %v262 = vld [vmem:[%s196 + $0x158] sm:$0xf]
      %v263 = vld [vmem:[%s196 + $0x15c] sm:$0xff]
      %v264 = vld [vmem:[%s196 + $0x164] sm:$0xf]
      %v265 = vld [vmem:[%s196 + $0x168] sm:$0xff]
      %v266 = vld [vmem:[%s196 + $0x170] sm:$0xf]
      %v267 = vld [vmem:[%s196 + $0x174] sm:$0xff]
      %v268 = vld [vmem:[%s196 + $0x17c] sm:$0xf]
      %v269 = vld [vmem:[%s196 + $0x180] sm:$0xff]
      %v270 = vld [vmem:[%s196 + $0x188] sm:$0xf]
      %v271 = vld [vmem:[%s196 + $0x18c] sm:$0xff]
      %v272 = vld [vmem:[%s196 + $0x194] sm:$0xf]
      %v273 = vld [vmem:[%s196 + $0x198] sm:$0xff]
      %v274 = vld [vmem:[%s196 + $0x1a0] sm:$0xf]
      %v275 = vld [vmem:[%s196 + $0x1a4] sm:$0xff]
      %v276 = vld [vmem:[%s196 + $0x1ac] sm:$0xf]
      %v277 = vld [vmem:[%s196 + $0x1b0] sm:$0xff]
      %v278 = vld [vmem:[%s196 + $0x1b8] sm:$0xf]
      %v279 = vld [vmem:[%s196 + $0x1bc] sm:$0xff]
      %v280 = vld [vmem:[%s196 + $0x1c4] sm:$0xf]
      %v281 = vld [vmem:[%s196 + $0x1c8] sm:$0xff]
      %v282 = vld [vmem:[%s196 + $0x1d0] sm:$0xf]
      %v283 = vld [vmem:[%s196 + $0x1d4] sm:$0xff]
      %v284 = vld [vmem:[%s196 + $0x1dc] sm:$0xf]
      %v285 = vld [vmem:[%s196 + $0x1e0] sm:$0xff]
      %v286 = vld [vmem:[%s196 + $0x1e8] sm:$0xf]
      %v287 = vld [vmem:[%s196 + $0x1ec] sm:$0xff]
      %v288 = vld [vmem:[%s196 + $0x1f4] sm:$0xf]
      %v289 = vld [vmem:[%s196 + $0x1f8] sm:$0xff]
      %v290 = vld [vmem:[%s196 + $0x200] sm:$0xf]
      %v291 = vld [vmem:[%s196 + $0x204] sm:$0xff]
      %v292 = vld [vmem:[%s196 + $0x20c] sm:$0xf]
      %v293 = vld [vmem:[%s196 + $0x210] sm:$0xff]
      %v294 = vld [vmem:[%s196 + $0x218] sm:$0xf]
      %v295 = vld [vmem:[%s196 + $0x21c] sm:$0xff]
      %v296 = vld [vmem:[%s196 + $0x224] sm:$0xf]
      %v297 = vld [vmem:[%s196 + $0x228] sm:$0xff]
      %v298 = vld [vmem:[%s196 + $0x230] sm:$0xf]
      %v299 = vld [vmem:[%s196 + $0x234] sm:$0xff]
      %v300 = vld [vmem:[%s196 + $0x23c] sm:$0xf]
      %v301 = vld [vmem:[%s196 + $0x240] sm:$0xff]
      %v302 = vld [vmem:[%s196 + $0x248] sm:$0xf]
      %v303 = vld [vmem:[%s196 + $0x24c] sm:$0xff]
      %v304 = vld [vmem:[%s196 + $0x254] sm:$0xf]
      %v305 = vld [vmem:[%s196 + $0x258] sm:$0xff]
      %v306 = vld [vmem:[%s196 + $0x260] sm:$0xf]
      %v307 = vld [vmem:[%s196 + $0x264] sm:$0xff]
      %v308 = vld [vmem:[%s196 + $0x26c] sm:$0xf]
      %v309 = vld [vmem:[%s196 + $0x270] sm:$0xff]
      %v310 = vld [vmem:[%s196 + $0x278] sm:$0xf]
      %v311 = vld [vmem:[%s196 + $0x27c] sm:$0xff]
      %v312 = vld [vmem:[%s196 + $0x284] sm:$0xf]
      %v313 = vld [vmem:[%s196 + $0x288] sm:$0xff]
      %v314 = vld [vmem:[%s196 + $0x290] sm:$0xf]
      %v315 = vld [vmem:[%s196 + $0x294] sm:$0xff]
      %v316 = vld [vmem:[%s196 + $0x29c] sm:$0xf]
      %v317 = vld [vmem:[%s196 + $0x2a0] sm:$0xff]
      %v318 = vld [vmem:[%s196 + $0x2a8] sm:$0xf]
      %v319 = vld [vmem:[%s196 + $0x2ac] sm:$0xff]
      %v320 = vld [vmem:[%s196 + $0x2b4] sm:$0xf]
      %v321 = vld [vmem:[%s196 + $0x2b8] sm:$0xff]
      %v322 = vld [vmem:[%s196 + $0x2c0] sm:$0xf]
      %v323 = vld [vmem:[%s196 + $0x2c4] sm:$0xff]
      %v324 = vld [vmem:[%s196 + $0x2cc] sm:$0xf]
      %v325 = vld [vmem:[%s196 + $0x2d0] sm:$0xff]
      %v326 = vld [vmem:[%s196 + $0x2d8] sm:$0xf]
      %v327 = vld [vmem:[%s196 + $0x2dc] sm:$0xff]
      %v328 = vld [vmem:[%s196 + $0x2e4] sm:$0xf]
      %v329 = vld [vmem:[%s196 + $0x2e8] sm:$0xff]
      %v330 = vld [vmem:[%s196 + $0x2f0] sm:$0xf]
      %v331 = vld [vmem:[%s196 + $0x2f4] sm:$0xff]
      %v332 = vld [vmem:[%s196 + $0x2fc] sm:$0xf]
      %v333 = vld [vmem:[%s1] sm:$0xf]
      %v334 = vld [vmem:[%s1 + $0x4] sm:$0xf]
      %v335 = vld [vmem:[%s1 + $0x8] sm:$0xf]
      %v336 = vld [vmem:[%s1 + $0xc] sm:$0xf]
      %v337 = vld [vmem:[%s1 + $0x10] sm:$0xf]
      %v338 = vld [vmem:[%s1 + $0x14] sm:$0xf]
      %v339 = vld [vmem:[%s1 + $0x18] sm:$0xf]
      %v340 = vld [vmem:[%s1 + $0x1c] sm:$0xf]
      %v341 = vld [vmem:[%s1 + $0x20] sm:$0xf]
      %v342 = vld [vmem:[%s1 + $0x24] sm:$0xf]
      %v343 = vld [vmem:[%s1 + $0x28] sm:$0xf]
      %v344 = vld [vmem:[%s1 + $0x2c] sm:$0xf]
      %v345 = vld [vmem:[%s1 + $0x30] sm:$0xf]
      %v346 = vld [vmem:[%s1 + $0x34] sm:$0xf]
      %v347 = vld [vmem:[%s1 + $0x38] sm:$0xf]
      %v348 = vld [vmem:[%s1 + $0x3c] sm:$0xf]
      %v349 = vld [vmem:[%s1 + $0x40] sm:$0xf]
      %v350 = vld [vmem:[%s1 + $0x44] sm:$0xf]
      %v351 = vld [vmem:[%s1 + $0x48] sm:$0xf]
      %v352 = vld [vmem:[%s1 + $0x4c] sm:$0xf]
      %v353 = vld [vmem:[%s1 + $0x50] sm:$0xf]
      %v354 = vld [vmem:[%s1 + $0x54] sm:$0xf]
      %v355 = vld [vmem:[%s1 + $0x58] sm:$0xf]
      %v356 = vld [vmem:[%s1 + $0x5c] sm:$0xf]
      %v357 = vld [vmem:[%s1 + $0x60] sm:$0xf]
      %v358 = vld [vmem:[%s1 + $0x64] sm:$0xf]
      %v359 = vld [vmem:[%s1 + $0x68] sm:$0xf]
      %v360 = vld [vmem:[%s1 + $0x6c] sm:$0xf]
      %v361 = vld [vmem:[%s1 + $0x70] sm:$0xf]
      %v362 = vld [vmem:[%s1 + $0x74] sm:$0xf]
      %v363 = vld [vmem:[%s1 + $0x78] sm:$0xf]
      %v364 = vld [vmem:[%s1 + $0x7c] sm:$0xf]
      %v365 = vld [vmem:[%s1 + $0x80] sm:$0xf]
      %v366 = vld [vmem:[%s1 + $0x84] sm:$0xf]
      %v367 = vld [vmem:[%s1 + $0x88] sm:$0xf]
      %v368 = vld [vmem:[%s1 + $0x8c] sm:$0xf]
      %v497 = vunpack.c.l.b16 %v205
      %v498 = vunpack.c.h.b16 %v205
      %v499 = vunpack.c.l.b16 %v206
      %v500 = vunpack.c.l.b16 %v207
      %v501 = vunpack.c.h.b16 %v207
      %v502 = vunpack.c.l.b16 %v208
      %v503 = vunpack.c.l.b16 %v209
      %v504 = vunpack.c.h.b16 %v209
      %v505 = vunpack.c.l.b16 %v210
      %v506 = vunpack.c.l.b16 %v211
      %v507 = vunpack.c.h.b16 %v211
      %v508 = vunpack.c.l.b16 %v212
      %v509 = vunpack.c.l.b16 %v213
      %v510 = vunpack.c.h.b16 %v213
      %v511 = vunpack.c.l.b16 %v214
      %v512 = vunpack.c.l.b16 %v215
      %v513 = vunpack.c.h.b16 %v215
      %v514 = vunpack.c.l.b16 %v216
      %v515 = vunpack.c.l.b16 %v217
      %v516 = vunpack.c.h.b16 %v217
      %v517 = vunpack.c.l.b16 %v218
      %v518 = vunpack.c.l.b16 %v219
      %v519 = vunpack.c.h.b16 %v219
      %v520 = vunpack.c.l.b16 %v220
      %v521 = vunpack.c.l.b16 %v221
      %v522 = vunpack.c.h.b16 %v221
      %v523 = vunpack.c.l.b16 %v222
      %v524 = vunpack.c.l.b16 %v223
      %v525 = vunpack.c.h.b16 %v223
      %v526 = vunpack.c.l.b16 %v224
      %v527 = vunpack.c.l.b16 %v225
      %v528 = vunpack.c.h.b16 %v225
      %v529 = vunpack.c.l.b16 %v226
      %v530 = vunpack.c.l.b16 %v227
      %v531 = vunpack.c.h.b16 %v227
      %v532 = vunpack.c.l.b16 %v228
      %v533 = vunpack.c.l.b16 %v229
      %v534 = vunpack.c.h.b16 %v229
      %v535 = vunpack.c.l.b16 %v230
      %v536 = vunpack.c.l.b16 %v231
      %v537 = vunpack.c.h.b16 %v231
      %v538 = vunpack.c.l.b16 %v232
      %v539 = vunpack.c.l.b16 %v233
      %v540 = vunpack.c.h.b16 %v233
      %v541 = vunpack.c.l.b16 %v234
      %v542 = vunpack.c.l.b16 %v235
      %v543 = vunpack.c.h.b16 %v235
      %v544 = vunpack.c.l.b16 %v236
      %v545 = vunpack.c.l.b16 %v237
      %v546 = vunpack.c.h.b16 %v237
      %v547 = vunpack.c.l.b16 %v238
      %v548 = vunpack.c.l.b16 %v239
      %v549 = vunpack.c.h.b16 %v239
      %v550 = vunpack.c.l.b16 %v240
      %v551 = vunpack.c.l.b16 %v241
      %v552 = vunpack.c.h.b16 %v241
      %v553 = vunpack.c.l.b16 %v242
      %v554 = vunpack.c.l.b16 %v243
      %v555 = vunpack.c.h.b16 %v243
      %v556 = vunpack.c.l.b16 %v244
      %v557 = vunpack.c.l.b16 %v245
      %v558 = vunpack.c.h.b16 %v245
      %v559 = vunpack.c.l.b16 %v246
      %v560 = vunpack.c.l.b16 %v247
      %v561 = vunpack.c.h.b16 %v247
      %v562 = vunpack.c.l.b16 %v248
      %v563 = vunpack.c.l.b16 %v249
      %v564 = vunpack.c.h.b16 %v249
      %v565 = vunpack.c.l.b16 %v250
      %v566 = vunpack.c.l.b16 %v251
      %v567 = vunpack.c.h.b16 %v251
      %v568 = vunpack.c.l.b16 %v252
      %v569 = vunpack.c.l.b16 %v253
      %v570 = vunpack.c.h.b16 %v253
      %v571 = vunpack.c.l.b16 %v254
      %v572 = vunpack.c.l.b16 %v255
      %v573 = vunpack.c.h.b16 %v255
      %v574 = vunpack.c.l.b16 %v256
      %v575 = vunpack.c.l.b16 %v257
      %v576 = vunpack.c.h.b16 %v257
      %v577 = vunpack.c.l.b16 %v258
      %v578 = vunpack.c.l.b16 %v259
      %v579 = vunpack.c.h.b16 %v259
      %v580 = vunpack.c.l.b16 %v260
      %v581 = vunpack.c.l.b16 %v261
      %v582 = vunpack.c.h.b16 %v261
      %v583 = vunpack.c.l.b16 %v262
      %v584 = vunpack.c.l.b16 %v263
      %v585 = vunpack.c.h.b16 %v263
      %v586 = vunpack.c.l.b16 %v264
      %v587 = vunpack.c.l.b16 %v265
      %v588 = vunpack.c.h.b16 %v265
      %v589 = vunpack.c.l.b16 %v266
      %v590 = vunpack.c.l.b16 %v267
      %v591 = vunpack.c.h.b16 %v267
      %v592 = vunpack.c.l.b16 %v268
      %v593 = vunpack.c.l.b16 %v269
      %v594 = vunpack.c.h.b16 %v269
      %v595 = vunpack.c.l.b16 %v270
      %v596 = vunpack.c.l.b16 %v271
      %v597 = vunpack.c.h.b16 %v271
      %v598 = vunpack.c.l.b16 %v272
      %v599 = vunpack.c.l.b16 %v273
      %v600 = vunpack.c.h.b16 %v273
      %v601 = vunpack.c.l.b16 %v274
      %v602 = vunpack.c.l.b16 %v275
      %v603 = vunpack.c.h.b16 %v275
      %v604 = vunpack.c.l.b16 %v276
      %v605 = vunpack.c.l.b16 %v277
      %v606 = vunpack.c.h.b16 %v277
      %v607 = vunpack.c.l.b16 %v278
      %v608 = vunpack.c.l.b16 %v279
      %v609 = vunpack.c.h.b16 %v279
      %v610 = vunpack.c.l.b16 %v280
      %v611 = vunpack.c.l.b16 %v281
      %v612 = vunpack.c.h.b16 %v281
      %v613 = vunpack.c.l.b16 %v282
      %v614 = vunpack.c.l.b16 %v283
      %v615 = vunpack.c.h.b16 %v283
      %v616 = vunpack.c.l.b16 %v284
      %v617 = vunpack.c.l.b16 %v285
      %v618 = vunpack.c.h.b16 %v285
      %v619 = vunpack.c.l.b16 %v286
      %v620 = vunpack.c.l.b16 %v287
      %v621 = vunpack.c.h.b16 %v287
      %v622 = vunpack.c.l.b16 %v288
      %v623 = vunpack.c.l.b16 %v289
      %v624 = vunpack.c.h.b16 %v289
      %v625 = vunpack.c.l.b16 %v290
      %v626 = vunpack.c.l.b16 %v291
      %v627 = vunpack.c.h.b16 %v291
      %v628 = vunpack.c.l.b16 %v292
      %v629 = vunpack.c.l.b16 %v293
      %v630 = vunpack.c.h.b16 %v293
      %v631 = vunpack.c.l.b16 %v294
      %v632 = vunpack.c.l.b16 %v295
      %v633 = vunpack.c.h.b16 %v295
      %v634 = vunpack.c.l.b16 %v296
      %v635 = vunpack.c.l.b16 %v297
      %v636 = vunpack.c.h.b16 %v297
      %v637 = vunpack.c.l.b16 %v298
      %v638 = vunpack.c.l.b16 %v299
      %v639 = vunpack.c.h.b16 %v299
      %v640 = vunpack.c.l.b16 %v300
      %v641 = vunpack.c.l.b16 %v301
      %v642 = vunpack.c.h.b16 %v301
      %v643 = vunpack.c.l.b16 %v302
      %v644 = vunpack.c.l.b16 %v303
      %v645 = vunpack.c.h.b16 %v303
      %v646 = vunpack.c.l.b16 %v304
      %v647 = vunpack.c.l.b16 %v305
      %v648 = vunpack.c.h.b16 %v305
      %v649 = vunpack.c.l.b16 %v306
      %v650 = vunpack.c.l.b16 %v307
      %v651 = vunpack.c.h.b16 %v307
      %v652 = vunpack.c.l.b16 %v308
      %v653 = vunpack.c.l.b16 %v309
      %v654 = vunpack.c.h.b16 %v309
      %v655 = vunpack.c.l.b16 %v310
      %v656 = vunpack.c.l.b16 %v311
      %v657 = vunpack.c.h.b16 %v311
      %v658 = vunpack.c.l.b16 %v312
      %v659 = vunpack.c.l.b16 %v313
      %v660 = vunpack.c.h.b16 %v313
      %v661 = vunpack.c.l.b16 %v314
      %v662 = vunpack.c.l.b16 %v315
      %v663 = vunpack.c.h.b16 %v315
      %v664 = vunpack.c.l.b16 %v316
      %v665 = vunpack.c.l.b16 %v317
      %v666 = vunpack.c.h.b16 %v317
      %v667 = vunpack.c.l.b16 %v318
      %v668 = vunpack.c.l.b16 %v319
      %v669 = vunpack.c.h.b16 %v319
      %v670 = vunpack.c.l.b16 %v320
      %v671 = vunpack.c.l.b16 %v321
      %v672 = vunpack.c.h.b16 %v321
      %v673 = vunpack.c.l.b16 %v322
      %v674 = vunpack.c.l.b16 %v323
      %v675 = vunpack.c.h.b16 %v323
      %v676 = vunpack.c.l.b16 %v324
      %v677 = vunpack.c.l.b16 %v325
      %v678 = vunpack.c.h.b16 %v325
      %v679 = vunpack.c.l.b16 %v326
      %v680 = vunpack.c.l.b16 %v327
      %v681 = vunpack.c.h.b16 %v327
      %v682 = vunpack.c.l.b16 %v328
      %v683 = vunpack.c.l.b16 %v329
      %v684 = vunpack.c.h.b16 %v329
      %v685 = vunpack.c.l.b16 %v330
      %v686 = vunpack.c.l.b16 %v331
      %v687 = vunpack.c.h.b16 %v331
      %v688 = vunpack.c.l.b16 %v332
      %v689 = vpack.c.b16 %v500, %v497
      %v690 = vpack.c.b16 %v501, %v498
      %v691 = vpack.c.b16 %v502, %v499
      %v692 = vpack.c.b16 %v506, %v503
      %v693 = vpack.c.b16 %v507, %v504
      %v694 = vpack.c.b16 %v508, %v505
      %v695 = vpack.c.b16 %v512, %v509
      %v696 = vpack.c.b16 %v513, %v510
      %v697 = vpack.c.b16 %v514, %v511
      %v698 = vpack.c.b16 %v518, %v515
      %v699 = vpack.c.b16 %v519, %v516
      %v700 = vpack.c.b16 %v520, %v517
      %v701 = vpack.c.b16 %v524, %v521
      %v702 = vpack.c.b16 %v525, %v522
      %v703 = vpack.c.b16 %v526, %v523
      %v704 = vpack.c.b16 %v530, %v527
      %v705 = vpack.c.b16 %v531, %v528
      %v706 = vpack.c.b16 %v532, %v529
      %v707 = vpack.c.b16 %v536, %v533
      %v708 = vpack.c.b16 %v537, %v534
      %v709 = vpack.c.b16 %v538, %v535
      %v710 = vpack.c.b16 %v542, %v539
      %v711 = vpack.c.b16 %v543, %v540
      %v712 = vpack.c.b16 %v544, %v541
      %v713 = vpack.c.b16 %v548, %v545
      %v714 = vpack.c.b16 %v549, %v546
      %v715 = vpack.c.b16 %v550, %v547
      %v716 = vpack.c.b16 %v554, %v551
      %v717 = vpack.c.b16 %v555, %v552
      %v718 = vpack.c.b16 %v556, %v553
      %v719 = vpack.c.b16 %v560, %v557
      %v720 = vpack.c.b16 %v561, %v558
      %v721 = vpack.c.b16 %v562, %v559
      %v722 = vpack.c.b16 %v566, %v563
      %v723 = vpack.c.b16 %v567, %v564
      %v724 = vpack.c.b16 %v568, %v565
      %v725 = vpack.c.b16 %v572, %v569
      %v726 = vpack.c.b16 %v573, %v570
      %v727 = vpack.c.b16 %v574, %v571
      %v728 = vpack.c.b16 %v578, %v575
      %v729 = vpack.c.b16 %v579, %v576
      %v730 = vpack.c.b16 %v580, %v577
      %v731 = vpack.c.b16 %v584, %v581
      %v732 = vpack.c.b16 %v585, %v582
      %v733 = vpack.c.b16 %v586, %v583
      %v734 = vpack.c.b16 %v590, %v587
      %v735 = vpack.c.b16 %v591, %v588
      %v736 = vpack.c.b16 %v592, %v589
      %v737 = vpack.c.b16 %v596, %v593
      %v738 = vpack.c.b16 %v597, %v594
      %v739 = vpack.c.b16 %v598, %v595
      %v740 = vpack.c.b16 %v602, %v599
      %v741 = vpack.c.b16 %v603, %v600
      %v742 = vpack.c.b16 %v604, %v601
      %v743 = vpack.c.b16 %v608, %v605
      %v744 = vpack.c.b16 %v609, %v606
      %v745 = vpack.c.b16 %v610, %v607
      %v746 = vpack.c.b16 %v614, %v611
      %v747 = vpack.c.b16 %v615, %v612
      %v748 = vpack.c.b16 %v616, %v613
      %v749 = vpack.c.b16 %v620, %v617
      %v750 = vpack.c.b16 %v621, %v618
      %v751 = vpack.c.b16 %v622, %v619
      %v752 = vpack.c.b16 %v626, %v623
      %v753 = vpack.c.b16 %v627, %v624
      %v754 = vpack.c.b16 %v628, %v625
      %v755 = vpack.c.b16 %v632, %v629
      %v756 = vpack.c.b16 %v633, %v630
      %v757 = vpack.c.b16 %v634, %v631
      %v758 = vpack.c.b16 %v638, %v635
      %v759 = vpack.c.b16 %v639, %v636
      %v760 = vpack.c.b16 %v640, %v637
      %v761 = vpack.c.b16 %v644, %v641
      %v762 = vpack.c.b16 %v645, %v642
      %v763 = vpack.c.b16 %v646, %v643
      %v764 = vpack.c.b16 %v650, %v647
      %v765 = vpack.c.b16 %v651, %v648
      %v766 = vpack.c.b16 %v652, %v649
      %v767 = vpack.c.b16 %v656, %v653
      %v768 = vpack.c.b16 %v657, %v654
      %v769 = vpack.c.b16 %v658, %v655
      %v770 = vpack.c.b16 %v662, %v659
      %v771 = vpack.c.b16 %v663, %v660
      %v772 = vpack.c.b16 %v664, %v661
      %v773 = vpack.c.b16 %v668, %v665
      %v774 = vpack.c.b16 %v669, %v666
      %v775 = vpack.c.b16 %v670, %v667
      %v776 = vpack.c.b16 %v674, %v671
      %v777 = vpack.c.b16 %v675, %v672
      %v778 = vpack.c.b16 %v676, %v673
      %v779 = vpack.c.b16 %v680, %v677
      %v780 = vpack.c.b16 %v681, %v678
      %v781 = vpack.c.b16 %v682, %v679
      %v782 = vpack.c.b16 %v686, %v683
      %v783 = vpack.c.b16 %v687, %v684
      %v784 = vpack.c.b16 %v688, %v685
      %v885 = vunpack.c.l.b16 %v333
      %v886 = vunpack.c.l.b16 %v334
      %v887 = vunpack.c.l.b16 %v335
      %v888 = vunpack.c.l.b16 %v336
      %v889 = vunpack.c.l.b16 %v337
      %v890 = vunpack.c.l.b16 %v338
      %v891 = vunpack.c.l.b16 %v339
      %v892 = vunpack.c.l.b16 %v340
      %v893 = vunpack.c.l.b16 %v341
      %v894 = vunpack.c.l.b16 %v342
      %v895 = vunpack.c.l.b16 %v343
      %v896 = vunpack.c.l.b16 %v344
      %v897 = vunpack.c.l.b16 %v345
      %v898 = vunpack.c.l.b16 %v346
      %v899 = vunpack.c.l.b16 %v347
      %v900 = vunpack.c.l.b16 %v348
      %v901 = vunpack.c.l.b16 %v349
      %v902 = vunpack.c.l.b16 %v350
      %v903 = vunpack.c.l.b16 %v351
      %v904 = vunpack.c.l.b16 %v352
      %v905 = vunpack.c.l.b16 %v353
      %v906 = vunpack.c.l.b16 %v354
      %v907 = vunpack.c.l.b16 %v355
      %v908 = vunpack.c.l.b16 %v356
      %v909 = vunpack.c.l.b16 %v357
      %v910 = vunpack.c.l.b16 %v358
      %v911 = vunpack.c.l.b16 %v359
      %v912 = vunpack.c.l.b16 %v360
      %v913 = vunpack.c.l.b16 %v361
      %v914 = vunpack.c.l.b16 %v362
      %v915 = vunpack.c.l.b16 %v363
      %v916 = vunpack.c.l.b16 %v364
      %v917 = vunpack.c.l.b16 %v365
      %v918 = vunpack.c.l.b16 %v366
      %v919 = vunpack.c.l.b16 %v367
      %v920 = vunpack.c.l.b16 %v368
      %v921 = vpack.c.b16 %v886, %v885
      %v922 = vpack.c.b16 %v888, %v887
      %v923 = vpack.c.b16 %v890, %v889
      %v924 = vpack.c.b16 %v892, %v891
      %v925 = vpack.c.b16 %v894, %v893
      %v926 = vpack.c.b16 %v896, %v895
      %v927 = vpack.c.b16 %v898, %v897
      %v928 = vpack.c.b16 %v900, %v899
      %v929 = vpack.c.b16 %v902, %v901
      %v930 = vpack.c.b16 %v904, %v903
      %v931 = vpack.c.b16 %v906, %v905
      %v932 = vpack.c.b16 %v908, %v907
      %v933 = vpack.c.b16 %v910, %v909
      %v934 = vpack.c.b16 %v912, %v911
      %v935 = vpack.c.b16 %v914, %v913
      %v936 = vpack.c.b16 %v916, %v915
      %v937 = vpack.c.b16 %v918, %v917
      %v938 = vpack.c.b16 %v920, %v919
      %vm957 = vcmask 261120
      %v959 = vsel %vm957, %v691, 0
      %v962 = vsel %vm957, %v694, 0
      %v965 = vsel %vm957, %v697, 0
      %v968 = vsel %vm957, %v700, 0
      %v971 = vsel %vm957, %v703, 0
      %v974 = vsel %vm957, %v706, 0
      %v977 = vsel %vm957, %v709, 0
      %v980 = vsel %vm957, %v712, 0
      %v983 = vsel %vm957, %v715, 0
      %v986 = vsel %vm957, %v718, 0
      %v989 = vsel %vm957, %v721, 0
      %v992 = vsel %vm957, %v724, 0
      %v995 = vsel %vm957, %v727, 0
      %v998 = vsel %vm957, %v730, 0
      %v1001 = vsel %vm957, %v733, 0
      %v1004 = vsel %vm957, %v736, 0
      %v1007 = vsel %vm957, %v739, 0
      %v1010 = vsel %vm957, %v742, 0
      %v1013 = vsel %vm957, %v745, 0
      %v1016 = vsel %vm957, %v748, 0
      %v1019 = vsel %vm957, %v751, 0
      %v1022 = vsel %vm957, %v754, 0
      %v1025 = vsel %vm957, %v757, 0
      %v1028 = vsel %vm957, %v760, 0
      %v1031 = vsel %vm957, %v763, 0
      %v1034 = vsel %vm957, %v766, 0
      %v1037 = vsel %vm957, %v769, 0
      %v1040 = vsel %vm957, %v772, 0
      %v1043 = vsel %vm957, %v775, 0
      %v1046 = vsel %vm957, %v778, 0
      %v1049 = vsel %vm957, %v781, 0
      %v1052 = vsel %vm957, %v784, 0
      %1054 = vmatpush.bf16.msra.mxu0 %v928
      %1055 = vmatpush.bf16.msra.mxu0 %v927
      %1056 = vmatpush.bf16.msra.mxu0 %v926
      %1057 = vmatpush.bf16.msra.mxu0 %v925
      %1058 = vmatpush.bf16.msra.mxu0 %v924
      %1059 = vmatpush.bf16.msra.mxu0 %v923
      %1060 = vmatpush.bf16.msra.mxu0 %v922
      %1061 = vmatpush.bf16.msra.mxu0 %v921
      %1062 = vmatmul.bf16.gmra.mxu0 %v689
      %v1063 = vpop.f32.mrf.mxu0
      %v1064 = vadd.f32 0.0, %v1063
      %v1065 = vpop.f32.mrf.mxu0
      %v1066 = vadd.f32 0.0, %v1065
      %1067 = vmatmul.bf16.gmra.mxu0 %v692
      %v1068 = vpop.f32.mrf.mxu0
      %v1069 = vadd.f32 0.0, %v1068
      %v1070 = vpop.f32.mrf.mxu0
      %v1071 = vadd.f32 0.0, %v1070
      %1072 = vmatmul.bf16.gmra.mxu0 %v695
      %v1073 = vpop.f32.mrf.mxu0
      %v1074 = vadd.f32 0.0, %v1073
      %v1075 = vpop.f32.mrf.mxu0
      %v1076 = vadd.f32 0.0, %v1075
      %1077 = vmatmul.bf16.gmra.mxu0 %v698
      %v1078 = vpop.f32.mrf.mxu0
      %v1079 = vadd.f32 0.0, %v1078
      %v1080 = vpop.f32.mrf.mxu0
      %v1081 = vadd.f32 0.0, %v1080
      %1082 = vmatmul.bf16.gmra.mxu0 %v701
      %v1083 = vpop.f32.mrf.mxu0
      %v1084 = vadd.f32 0.0, %v1083
      %v1085 = vpop.f32.mrf.mxu0
      %v1086 = vadd.f32 0.0, %v1085
      %1087 = vmatmul.bf16.gmra.mxu0 %v704
      %v1088 = vpop.f32.mrf.mxu0
      %v1089 = vadd.f32 0.0, %v1088
      %v1090 = vpop.f32.mrf.mxu0
      %v1091 = vadd.f32 0.0, %v1090
      %1092 = vmatmul.bf16.gmra.mxu0 %v707
      %v1093 = vpop.f32.mrf.mxu0
      %v1094 = vadd.f32 0.0, %v1093
      %v1095 = vpop.f32.mrf.mxu0
      %v1096 = vadd.f32 0.0, %v1095
      %1097 = vmatmul.bf16.gmra.mxu0 %v710
      %v1098 = vpop.f32.mrf.mxu0
      %v1099 = vadd.f32 0.0, %v1098
      %v1100 = vpop.f32.mrf.mxu0
      %v1101 = vadd.f32 0.0, %v1100
      %1102 = vmatmul.bf16.gmra.mxu0 %v713
      %v1103 = vpop.f32.mrf.mxu0
      %v1104 = vadd.f32 0.0, %v1103
      %v1105 = vpop.f32.mrf.mxu0
      %v1106 = vadd.f32 0.0, %v1105
      %1107 = vmatmul.bf16.gmra.mxu0 %v716
      %v1108 = vpop.f32.mrf.mxu0
      %v1109 = vadd.f32 0.0, %v1108
      %v1110 = vpop.f32.mrf.mxu0
      %v1111 = vadd.f32 0.0, %v1110
      %1112 = vmatmul.bf16.gmra.mxu0 %v719
      %v1113 = vpop.f32.mrf.mxu0
      %v1114 = vadd.f32 0.0, %v1113
      %v1115 = vpop.f32.mrf.mxu0
      %v1116 = vadd.f32 0.0, %v1115
      %1117 = vmatmul.bf16.gmra.mxu0 %v722
      %v1118 = vpop.f32.mrf.mxu0
      %v1119 = vadd.f32 0.0, %v1118
      %v1120 = vpop.f32.mrf.mxu0
      %v1121 = vadd.f32 0.0, %v1120
      %1122 = vmatmul.bf16.gmra.mxu0 %v725
      %v1123 = vpop.f32.mrf.mxu0
      %v1124 = vadd.f32 0.0, %v1123
      %v1125 = vpop.f32.mrf.mxu0
      %v1126 = vadd.f32 0.0, %v1125
      %1127 = vmatmul.bf16.gmra.mxu0 %v728
      %v1128 = vpop.f32.mrf.mxu0
      %v1129 = vadd.f32 0.0, %v1128
      %v1130 = vpop.f32.mrf.mxu0
      %v1131 = vadd.f32 0.0, %v1130
      %1132 = vmatmul.bf16.gmra.mxu0 %v731
      %v1133 = vpop.f32.mrf.mxu0
      %v1134 = vadd.f32 0.0, %v1133
      %v1135 = vpop.f32.mrf.mxu0
      %v1136 = vadd.f32 0.0, %v1135
      %1137 = vmatmul.bf16.gmra.mxu0 %v734
      %v1138 = vpop.f32.mrf.mxu0
      %v1139 = vadd.f32 0.0, %v1138
      %v1140 = vpop.f32.mrf.mxu0
      %v1141 = vadd.f32 0.0, %v1140
      %1142 = vmatmul.bf16.gmra.mxu0 %v737
      %v1143 = vpop.f32.mrf.mxu0
      %v1144 = vadd.f32 0.0, %v1143
      %v1145 = vpop.f32.mrf.mxu0
      %v1146 = vadd.f32 0.0, %v1145
      %1147 = vmatmul.bf16.gmra.mxu0 %v740
      %v1148 = vpop.f32.mrf.mxu0
      %v1149 = vadd.f32 0.0, %v1148
      %v1150 = vpop.f32.mrf.mxu0
      %v1151 = vadd.f32 0.0, %v1150
      %1152 = vmatmul.bf16.gmra.mxu0 %v743
      %v1153 = vpop.f32.mrf.mxu0
      %v1154 = vadd.f32 0.0, %v1153
      %v1155 = vpop.f32.mrf.mxu0
      %v1156 = vadd.f32 0.0, %v1155
      %1157 = vmatmul.bf16.gmra.mxu0 %v746
      %v1158 = vpop.f32.mrf.mxu0
      %v1159 = vadd.f32 0.0, %v1158
      %v1160 = vpop.f32.mrf.mxu0
      %v1161 = vadd.f32 0.0, %v1160
      %1162 = vmatmul.bf16.gmra.mxu0 %v749
      %v1163 = vpop.f32.mrf.mxu0
      %v1164 = vadd.f32 0.0, %v1163
      %v1165 = vpop.f32.mrf.mxu0
      %v1166 = vadd.f32 0.0, %v1165
      %1167 = vmatmul.bf16.gmra.mxu0 %v752
      %v1168 = vpop.f32.mrf.mxu0
      %v1169 = vadd.f32 0.0, %v1168
      %v1170 = vpop.f32.mrf.mxu0
      %v1171 = vadd.f32 0.0, %v1170
      %1172 = vmatmul.bf16.gmra.mxu0 %v755
      %v1173 = vpop.f32.mrf.mxu0
      %v1174 = vadd.f32 0.0, %v1173
      %v1175 = vpop.f32.mrf.mxu0
      %v1176 = vadd.f32 0.0, %v1175
      %1177 = vmatmul.bf16.gmra.mxu0 %v758
      %v1178 = vpop.f32.mrf.mxu0
      %v1179 = vadd.f32 0.0, %v1178
      %v1180 = vpop.f32.mrf.mxu0
      %v1181 = vadd.f32 0.0, %v1180
      %1182 = vmatmul.bf16.gmra.mxu0 %v761
      %v1183 = vpop.f32.mrf.mxu0
      %v1184 = vadd.f32 0.0, %v1183
      %v1185 = vpop.f32.mrf.mxu0
      %v1186 = vadd.f32 0.0, %v1185
      %1187 = vmatmul.bf16.gmra.mxu0 %v764
      %v1188 = vpop.f32.mrf.mxu0
      %v1189 = vadd.f32 0.0, %v1188
      %v1190 = vpop.f32.mrf.mxu0
      %v1191 = vadd.f32 0.0, %v1190
      %1192 = vmatmul.bf16.gmra.mxu0 %v767
      %v1193 = vpop.f32.mrf.mxu0
      %v1194 = vadd.f32 0.0, %v1193
      %v1195 = vpop.f32.mrf.mxu0
      %v1196 = vadd.f32 0.0, %v1195
      %1197 = vmatmul.bf16.gmra.mxu0 %v770
      %v1198 = vpop.f32.mrf.mxu0
      %v1199 = vadd.f32 0.0, %v1198
      %v1200 = vpop.f32.mrf.mxu0
      %v1201 = vadd.f32 0.0, %v1200
      %1202 = vmatmul.bf16.gmra.mxu0 %v773
      %v1203 = vpop.f32.mrf.mxu0
      %v1204 = vadd.f32 0.0, %v1203
      %v1205 = vpop.f32.mrf.mxu0
      %v1206 = vadd.f32 0.0, %v1205
      %1207 = vmatmul.bf16.gmra.mxu0 %v776
      %v1208 = vpop.f32.mrf.mxu0
      %v1209 = vadd.f32 0.0, %v1208
      %v1210 = vpop.f32.mrf.mxu0
      %v1211 = vadd.f32 0.0, %v1210
      %1212 = vmatmul.bf16.gmra.mxu0 %v779
      %v1213 = vpop.f32.mrf.mxu0
      %v1214 = vadd.f32 0.0, %v1213
      %v1215 = vpop.f32.mrf.mxu0
      %v1216 = vadd.f32 0.0, %v1215
      %1217 = vmatmul.bf16.gmra.mxu0 %v782
      %v1218 = vpop.f32.mrf.mxu0
      %v1219 = vadd.f32 0.0, %v1218
      %v1220 = vpop.f32.mrf.mxu0
      %v1221 = vadd.f32 0.0, %v1220
      %1222 = vdwg.mxu0
      %1223 = vmatpush.bf16.msra.mxu0 %v936
      %1224 = vmatpush.bf16.msra.mxu0 %v935
      %1225 = vmatpush.bf16.msra.mxu0 %v934
      %1226 = vmatpush.bf16.msra.mxu0 %v933
      %1227 = vmatpush.bf16.msra.mxu0 %v932
      %1228 = vmatpush.bf16.msra.mxu0 %v931
      %1229 = vmatpush.bf16.msra.mxu0 %v930
      %1230 = vmatpush.bf16.msra.mxu0 %v929
      %1231 = vmatmul.bf16.gmra.mxu0 %v690
      %v1232 = vpop.f32.mrf.mxu0
      %v1233 = vadd.f32 %v1064, %v1232
      %v1234 = vpop.f32.mrf.mxu0
      %v1235 = vadd.f32 %v1066, %v1234
      %1236 = vmatmul.bf16.gmra.mxu0 %v693
      %v1237 = vpop.f32.mrf.mxu0
      %v1238 = vadd.f32 %v1069, %v1237
      %v1239 = vpop.f32.mrf.mxu0
      %v1240 = vadd.f32 %v1071, %v1239
      %1241 = vmatmul.bf16.gmra.mxu0 %v696
      %v1242 = vpop.f32.mrf.mxu0
      %v1243 = vadd.f32 %v1074, %v1242
      %v1244 = vpop.f32.mrf.mxu0
      %v1245 = vadd.f32 %v1076, %v1244
      %1246 = vmatmul.bf16.gmra.mxu0 %v699
      %v1247 = vpop.f32.mrf.mxu0
      %v1248 = vadd.f32 %v1079, %v1247
      %v1249 = vpop.f32.mrf.mxu0
      %v1250 = vadd.f32 %v1081, %v1249
      %1251 = vmatmul.bf16.gmra.mxu0 %v702
      %v1252 = vpop.f32.mrf.mxu0
      %v1253 = vadd.f32 %v1084, %v1252
      %v1254 = vpop.f32.mrf.mxu0
      %v1255 = vadd.f32 %v1086, %v1254
      %1256 = vmatmul.bf16.gmra.mxu0 %v705
      %v1257 = vpop.f32.mrf.mxu0
      %v1258 = vadd.f32 %v1089, %v1257
      %v1259 = vpop.f32.mrf.mxu0
      %v1260 = vadd.f32 %v1091, %v1259
      %1261 = vmatmul.bf16.gmra.mxu0 %v708
      %v1262 = vpop.f32.mrf.mxu0
      %v1263 = vadd.f32 %v1094, %v1262
      %v1264 = vpop.f32.mrf.mxu0
      %v1265 = vadd.f32 %v1096, %v1264
      %1266 = vmatmul.bf16.gmra.mxu0 %v711
      %v1267 = vpop.f32.mrf.mxu0
      %v1268 = vadd.f32 %v1099, %v1267
      %v1269 = vpop.f32.mrf.mxu0
      %v1270 = vadd.f32 %v1101, %v1269
      %1271 = vmatmul.bf16.gmra.mxu0 %v714
      %v1272 = vpop.f32.mrf.mxu0
      %v1273 = vadd.f32 %v1104, %v1272
      %v1274 = vpop.f32.mrf.mxu0
      %v1275 = vadd.f32 %v1106, %v1274
      %1276 = vmatmul.bf16.gmra.mxu0 %v717
      %v1277 = vpop.f32.mrf.mxu0
      %v1278 = vadd.f32 %v1109, %v1277
      %v1279 = vpop.f32.mrf.mxu0
      %v1280 = vadd.f32 %v1111, %v1279
      %1281 = vmatmul.bf16.gmra.mxu0 %v720
      %v1282 = vpop.f32.mrf.mxu0
      %v1283 = vadd.f32 %v1114, %v1282
      %v1284 = vpop.f32.mrf.mxu0
      %v1285 = vadd.f32 %v1116, %v1284
      %1286 = vmatmul.bf16.gmra.mxu0 %v723
      %v1287 = vpop.f32.mrf.mxu0
      %v1288 = vadd.f32 %v1119, %v1287
      %v1289 = vpop.f32.mrf.mxu0
      %v1290 = vadd.f32 %v1121, %v1289
      %1291 = vmatmul.bf16.gmra.mxu0 %v726
      %v1292 = vpop.f32.mrf.mxu0
      %v1293 = vadd.f32 %v1124, %v1292
      %v1294 = vpop.f32.mrf.mxu0
      %v1295 = vadd.f32 %v1126, %v1294
      %1296 = vmatmul.bf16.gmra.mxu0 %v729
      %v1297 = vpop.f32.mrf.mxu0
      %v1298 = vadd.f32 %v1129, %v1297
      %v1299 = vpop.f32.mrf.mxu0
      %v1300 = vadd.f32 %v1131, %v1299
      %1301 = vmatmul.bf16.gmra.mxu0 %v732
      %v1302 = vpop.f32.mrf.mxu0
      %v1303 = vadd.f32 %v1134, %v1302
      %v1304 = vpop.f32.mrf.mxu0
      %v1305 = vadd.f32 %v1136, %v1304
      %1306 = vmatmul.bf16.gmra.mxu0 %v735
      %v1307 = vpop.f32.mrf.mxu0
      %v1308 = vadd.f32 %v1139, %v1307
      %v1309 = vpop.f32.mrf.mxu0
      %v1310 = vadd.f32 %v1141, %v1309
      %1311 = vmatmul.bf16.gmra.mxu0 %v738
      %v1312 = vpop.f32.mrf.mxu0
      %v1313 = vadd.f32 %v1144, %v1312
      %v1314 = vpop.f32.mrf.mxu0
      %v1315 = vadd.f32 %v1146, %v1314
      %1316 = vmatmul.bf16.gmra.mxu0 %v741
      %v1317 = vpop.f32.mrf.mxu0
      %v1318 = vadd.f32 %v1149, %v1317
      %v1319 = vpop.f32.mrf.mxu0
      %v1320 = vadd.f32 %v1151, %v1319
      %1321 = vmatmul.bf16.gmra.mxu0 %v744
      %v1322 = vpop.f32.mrf.mxu0
      %v1323 = vadd.f32 %v1154, %v1322
      %v1324 = vpop.f32.mrf.mxu0
      %v1325 = vadd.f32 %v1156, %v1324
      %1326 = vmatmul.bf16.gmra.mxu0 %v747
      %v1327 = vpop.f32.mrf.mxu0
      %v1328 = vadd.f32 %v1159, %v1327
      %v1329 = vpop.f32.mrf.mxu0
      %v1330 = vadd.f32 %v1161, %v1329
      %1331 = vmatmul.bf16.gmra.mxu0 %v750
      %v1332 = vpop.f32.mrf.mxu0
      %v1333 = vadd.f32 %v1164, %v1332
      %v1334 = vpop.f32.mrf.mxu0
      %v1335 = vadd.f32 %v1166, %v1334
      %1336 = vmatmul.bf16.gmra.mxu0 %v753
      %v1337 = vpop.f32.mrf.mxu0
      %v1338 = vadd.f32 %v1169, %v1337
      %v1339 = vpop.f32.mrf.mxu0
      %v1340 = vadd.f32 %v1171, %v1339
      %1341 = vmatmul.bf16.gmra.mxu0 %v756
      %v1342 = vpop.f32.mrf.mxu0
      %v1343 = vadd.f32 %v1174, %v1342
      %v1344 = vpop.f32.mrf.mxu0
      %v1345 = vadd.f32 %v1176, %v1344
      %1346 = vmatmul.bf16.gmra.mxu0 %v759
      %v1347 = vpop.f32.mrf.mxu0
      %v1348 = vadd.f32 %v1179, %v1347
      %v1349 = vpop.f32.mrf.mxu0
      %v1350 = vadd.f32 %v1181, %v1349
      %1351 = vmatmul.bf16.gmra.mxu0 %v762
      %v1352 = vpop.f32.mrf.mxu0
      %v1353 = vadd.f32 %v1184, %v1352
      %v1354 = vpop.f32.mrf.mxu0
      %v1355 = vadd.f32 %v1186, %v1354
      %1356 = vmatmul.bf16.gmra.mxu0 %v765
      %v1357 = vpop.f32.mrf.mxu0
      %v1358 = vadd.f32 %v1189, %v1357
      %v1359 = vpop.f32.mrf.mxu0
      %v1360 = vadd.f32 %v1191, %v1359
      %1361 = vmatmul.bf16.gmra.mxu0 %v768
      %v1362 = vpop.f32.mrf.mxu0
      %v1363 = vadd.f32 %v1194, %v1362
      %v1364 = vpop.f32.mrf.mxu0
      %v1365 = vadd.f32 %v1196, %v1364
      %1366 = vmatmul.bf16.gmra.mxu0 %v771
      %v1367 = vpop.f32.mrf.mxu0
      %v1368 = vadd.f32 %v1199, %v1367
      %v1369 = vpop.f32.mrf.mxu0
      %v1370 = vadd.f32 %v1201, %v1369
      %1371 = vmatmul.bf16.gmra.mxu0 %v774
      %v1372 = vpop.f32.mrf.mxu0
      %v1373 = vadd.f32 %v1204, %v1372
      %v1374 = vpop.f32.mrf.mxu0
      %v1375 = vadd.f32 %v1206, %v1374
      %1376 = vmatmul.bf16.gmra.mxu0 %v777
      %v1377 = vpop.f32.mrf.mxu0
      %v1378 = vadd.f32 %v1209, %v1377
      %v1379 = vpop.f32.mrf.mxu0
      %v1380 = vadd.f32 %v1211, %v1379
      %1381 = vmatmul.bf16.gmra.mxu0 %v780
      %v1382 = vpop.f32.mrf.mxu0
      %v1383 = vadd.f32 %v1214, %v1382
      %v1384 = vpop.f32.mrf.mxu0
      %v1385 = vadd.f32 %v1216, %v1384
      %1386 = vmatmul.bf16.gmra.mxu0 %v783
      %v1387 = vpop.f32.mrf.mxu0
      %v1388 = vadd.f32 %v1219, %v1387
      %v1389 = vpop.f32.mrf.mxu0
      %v1390 = vadd.f32 %v1221, %v1389
      %1391 = vdwg.mxu0
      %1392 = vmatpush.bf16.msra.mxu0 0
      %1393 = vmatpush.bf16.msra.mxu0 0
      %1394 = vmatpush.bf16.msra.mxu0 0
      %1395 = vmatpush.bf16.msra.mxu0 0
      %1396 = vmatpush.bf16.msra.mxu0 0
      %1397 = vmatpush.bf16.msra.mxu0 0
      %1398 = vmatpush.bf16.msra.mxu0 %v938
      %1399 = vmatpush.bf16.msra.mxu0 %v937
      %1400 = vmatmul.bf16.gmra.mxu0 %v959
      %v1401 = vpop.f32.mrf.mxu0
      %v1402 = vadd.f32 %v1233, %v1401
      %v1403 = vpop.f32.mrf.mxu0
      %v1404 = vadd.f32 %v1235, %v1403
      %1405 = vmatmul.bf16.gmra.mxu0 %v962
      %v1406 = vpop.f32.mrf.mxu0
      %v1407 = vadd.f32 %v1238, %v1406
      %v1408 = vpop.f32.mrf.mxu0
      %v1409 = vadd.f32 %v1240, %v1408
      %1410 = vmatmul.bf16.gmra.mxu0 %v965
      %v1411 = vpop.f32.mrf.mxu0
      %v1412 = vadd.f32 %v1243, %v1411
      %v1413 = vpop.f32.mrf.mxu0
      %v1414 = vadd.f32 %v1245, %v1413
      %1415 = vmatmul.bf16.gmra.mxu0 %v968
      %v1416 = vpop.f32.mrf.mxu0
      %v1417 = vadd.f32 %v1248, %v1416
      %v1418 = vpop.f32.mrf.mxu0
      %v1419 = vadd.f32 %v1250, %v1418
      %1420 = vmatmul.bf16.gmra.mxu0 %v971
      %v1421 = vpop.f32.mrf.mxu0
      %v1422 = vadd.f32 %v1253, %v1421
      %v1423 = vpop.f32.mrf.mxu0
      %v1424 = vadd.f32 %v1255, %v1423
      %1425 = vmatmul.bf16.gmra.mxu0 %v974
      %v1426 = vpop.f32.mrf.mxu0
      %v1427 = vadd.f32 %v1258, %v1426
      %v1428 = vpop.f32.mrf.mxu0
      %v1429 = vadd.f32 %v1260, %v1428
      %1430 = vmatmul.bf16.gmra.mxu0 %v977
      %v1431 = vpop.f32.mrf.mxu0
      %v1432 = vadd.f32 %v1263, %v1431
      %v1433 = vpop.f32.mrf.mxu0
      %v1434 = vadd.f32 %v1265, %v1433
      %1435 = vmatmul.bf16.gmra.mxu0 %v980
      %v1436 = vpop.f32.mrf.mxu0
      %v1437 = vadd.f32 %v1268, %v1436
      %v1438 = vpop.f32.mrf.mxu0
      %v1439 = vadd.f32 %v1270, %v1438
      %1440 = vmatmul.bf16.gmra.mxu0 %v983
      %v1441 = vpop.f32.mrf.mxu0
      %v1442 = vadd.f32 %v1273, %v1441
      %v1443 = vpop.f32.mrf.mxu0
      %v1444 = vadd.f32 %v1275, %v1443
      %1445 = vmatmul.bf16.gmra.mxu0 %v986
      %v1446 = vpop.f32.mrf.mxu0
      %v1447 = vadd.f32 %v1278, %v1446
      %v1448 = vpop.f32.mrf.mxu0
      %v1449 = vadd.f32 %v1280, %v1448
      %1450 = vmatmul.bf16.gmra.mxu0 %v989
      %v1451 = vpop.f32.mrf.mxu0
      %v1452 = vadd.f32 %v1283, %v1451
      %v1453 = vpop.f32.mrf.mxu0
      %v1454 = vadd.f32 %v1285, %v1453
      %1455 = vmatmul.bf16.gmra.mxu0 %v992
      %v1456 = vpop.f32.mrf.mxu0
      %v1457 = vadd.f32 %v1288, %v1456
      %v1458 = vpop.f32.mrf.mxu0
      %v1459 = vadd.f32 %v1290, %v1458
      %1460 = vmatmul.bf16.gmra.mxu0 %v995
      %v1461 = vpop.f32.mrf.mxu0
      %v1462 = vadd.f32 %v1293, %v1461
      %v1463 = vpop.f32.mrf.mxu0
      %v1464 = vadd.f32 %v1295, %v1463
      %1465 = vmatmul.bf16.gmra.mxu0 %v998
      %v1466 = vpop.f32.mrf.mxu0
      %v1467 = vadd.f32 %v1298, %v1466
      %v1468 = vpop.f32.mrf.mxu0
      %v1469 = vadd.f32 %v1300, %v1468
      %1470 = vmatmul.bf16.gmra.mxu0 %v1001
      %v1471 = vpop.f32.mrf.mxu0
      %v1472 = vadd.f32 %v1303, %v1471
      %v1473 = vpop.f32.mrf.mxu0
      %v1474 = vadd.f32 %v1305, %v1473
      %1475 = vmatmul.bf16.gmra.mxu0 %v1004
      %v1476 = vpop.f32.mrf.mxu0
      %v1477 = vadd.f32 %v1308, %v1476
      %v1478 = vpop.f32.mrf.mxu0
      %v1479 = vadd.f32 %v1310, %v1478
      %1480 = vmatmul.bf16.gmra.mxu0 %v1007
      %v1481 = vpop.f32.mrf.mxu0
      %v1482 = vadd.f32 %v1313, %v1481
      %v1483 = vpop.f32.mrf.mxu0
      %v1484 = vadd.f32 %v1315, %v1483
      %1485 = vmatmul.bf16.gmra.mxu0 %v1010
      %v1486 = vpop.f32.mrf.mxu0
      %v1487 = vadd.f32 %v1318, %v1486
      %v1488 = vpop.f32.mrf.mxu0
      %v1489 = vadd.f32 %v1320, %v1488
      %1490 = vmatmul.bf16.gmra.mxu0 %v1013
      %v1491 = vpop.f32.mrf.mxu0
      %v1492 = vadd.f32 %v1323, %v1491
      %v1493 = vpop.f32.mrf.mxu0
      %v1494 = vadd.f32 %v1325, %v1493
      %1495 = vmatmul.bf16.gmra.mxu0 %v1016
      %v1496 = vpop.f32.mrf.mxu0
      %v1497 = vadd.f32 %v1328, %v1496
      %v1498 = vpop.f32.mrf.mxu0
      %v1499 = vadd.f32 %v1330, %v1498
      %1500 = vmatmul.bf16.gmra.mxu0 %v1019
      %v1501 = vpop.f32.mrf.mxu0
      %v1502 = vadd.f32 %v1333, %v1501
      %v1503 = vpop.f32.mrf.mxu0
      %v1504 = vadd.f32 %v1335, %v1503
      %1505 = vmatmul.bf16.gmra.mxu0 %v1022
      %v1506 = vpop.f32.mrf.mxu0
      %v1507 = vadd.f32 %v1338, %v1506
      %v1508 = vpop.f32.mrf.mxu0
      %v1509 = vadd.f32 %v1340, %v1508
      %1510 = vmatmul.bf16.gmra.mxu0 %v1025
      %v1511 = vpop.f32.mrf.mxu0
      %v1512 = vadd.f32 %v1343, %v1511
      %v1513 = vpop.f32.mrf.mxu0
      %v1514 = vadd.f32 %v1345, %v1513
      %1515 = vmatmul.bf16.gmra.mxu0 %v1028
      %v1516 = vpop.f32.mrf.mxu0
      %v1517 = vadd.f32 %v1348, %v1516
      %v1518 = vpop.f32.mrf.mxu0
      %v1519 = vadd.f32 %v1350, %v1518
      %1520 = vmatmul.bf16.gmra.mxu0 %v1031
      %v1521 = vpop.f32.mrf.mxu0
      %v1522 = vadd.f32 %v1353, %v1521
      %v1523 = vpop.f32.mrf.mxu0
      %v1524 = vadd.f32 %v1355, %v1523
      %1525 = vmatmul.bf16.gmra.mxu0 %v1034
      %v1526 = vpop.f32.mrf.mxu0
      %v1527 = vadd.f32 %v1358, %v1526
      %v1528 = vpop.f32.mrf.mxu0
      %v1529 = vadd.f32 %v1360, %v1528
      %1530 = vmatmul.bf16.gmra.mxu0 %v1037
      %v1531 = vpop.f32.mrf.mxu0
      %v1532 = vadd.f32 %v1363, %v1531
      %v1533 = vpop.f32.mrf.mxu0
      %v1534 = vadd.f32 %v1365, %v1533
      %1535 = vmatmul.bf16.gmra.mxu0 %v1040
      %v1536 = vpop.f32.mrf.mxu0
      %v1537 = vadd.f32 %v1368, %v1536
      %v1538 = vpop.f32.mrf.mxu0
      %v1539 = vadd.f32 %v1370, %v1538
      %1540 = vmatmul.bf16.gmra.mxu0 %v1043
      %v1541 = vpop.f32.mrf.mxu0
      %v1542 = vadd.f32 %v1373, %v1541
      %v1543 = vpop.f32.mrf.mxu0
      %v1544 = vadd.f32 %v1375, %v1543
      %1545 = vmatmul.bf16.gmra.mxu0 %v1046
      %v1546 = vpop.f32.mrf.mxu0
      %v1547 = vadd.f32 %v1378, %v1546
      %v1548 = vpop.f32.mrf.mxu0
      %v1549 = vadd.f32 %v1380, %v1548
      %1550 = vmatmul.bf16.gmra.mxu0 %v1049
      %v1551 = vpop.f32.mrf.mxu0
      %v1552 = vadd.f32 %v1383, %v1551
      %v1553 = vpop.f32.mrf.mxu0
      %v1554 = vadd.f32 %v1385, %v1553
      %1555 = vmatmul.bf16.gmra.mxu0 %v1052
      %v1556 = vpop.f32.mrf.mxu0
      %v1557 = vadd.f32 %v1388, %v1556
      %v1558 = vpop.f32.mrf.mxu0
      %v1559 = vadd.f32 %v1390, %v1558
      %1560 = vdwg.mxu0
      %1561 = vst [vmem:[#allocation2] sm:$0xff] %v1402
      %1562 = vst [vmem:[#allocation2 + $0x8] sm:$0xff] %v1404
      %1563 = vst [vmem:[#allocation2 + $0x10] sm:$0xff] %v1407
      %1564 = vst [vmem:[#allocation2 + $0x18] sm:$0xff] %v1409
      %1565 = vst [vmem:[#allocation2 + $0x20] sm:$0xff] %v1412
      %1566 = vst [vmem:[#allocation2 + $0x28] sm:$0xff] %v1414
      %1567 = vst [vmem:[#allocation2 + $0x30] sm:$0xff] %v1417
      %1568 = vst [vmem:[#allocation2 + $0x38] sm:$0xff] %v1419
      %1569 = vst [vmem:[#allocation2 + $0x40] sm:$0xff] %v1422
      %1570 = vst [vmem:[#allocation2 + $0x48] sm:$0xff] %v1424
      %1571 = vst [vmem:[#allocation2 + $0x50] sm:$0xff] %v1427
      %1572 = vst [vmem:[#allocation2 + $0x58] sm:$0xff] %v1429
      %1573 = vst [vmem:[#allocation2 + $0x60] sm:$0xff] %v1432
      %1574 = vst [vmem:[#allocation2 + $0x68] sm:$0xff] %v1434
      %1575 = vst [vmem:[#allocation2 + $0x70] sm:$0xff] %v1437
      %1576 = vst [vmem:[#allocation2 + $0x78] sm:$0xff] %v1439
      %1577 = vst [vmem:[#allocation2 + $0x80] sm:$0xff] %v1442
      %1578 = vst [vmem:[#allocation2 + $0x88] sm:$0xff] %v1444
      %1579 = vst [vmem:[#allocation2 + $0x90] sm:$0xff] %v1447
      %1580 = vst [vmem:[#allocation2 + $0x98] sm:$0xff] %v1449
      %1581 = vst [vmem:[#allocation2 + $0xa0] sm:$0xff] %v1452
      %1582 = vst [vmem:[#allocation2 + $0xa8] sm:$0xff] %v1454
      %1583 = vst [vmem:[#allocation2 + $0xb0] sm:$0xff] %v1457
      %1584 = vst [vmem:[#allocation2 + $0xb8] sm:$0xff] %v1459
      %1585 = vst [vmem:[#allocation2 + $0xc0] sm:$0xff] %v1462
      %1586 = vst [vmem:[#allocation2 + $0xc8] sm:$0xff] %v1464
      %1587 = vst [vmem:[#allocation2 + $0xd0] sm:$0xff] %v1467
      %1588 = vst [vmem:[#allocation2 + $0xd8] sm:$0xff] %v1469
      %1589 = vst [vmem:[#allocation2 + $0xe0] sm:$0xff] %v1472
      %1590 = vst [vmem:[#allocation2 + $0xe8] sm:$0xff] %v1474
      %1591 = vst [vmem:[#allocation2 + $0xf0] sm:$0xff] %v1477
      %1592 = vst [vmem:[#allocation2 + $0xf8] sm:$0xff] %v1479
      %1593 = vst [vmem:[#allocation2 + $0x100] sm:$0xff] %v1482
      %1594 = vst [vmem:[#allocation2 + $0x108] sm:$0xff] %v1484
      %1595 = vst [vmem:[#allocation2 + $0x110] sm:$0xff] %v1487
      %1596 = vst [vmem:[#allocation2 + $0x118] sm:$0xff] %v1489
      %1597 = vst [vmem:[#allocation2 + $0x120] sm:$0xff] %v1492
      %1598 = vst [vmem:[#allocation2 + $0x128] sm:$0xff] %v1494
      %1599 = vst [vmem:[#allocation2 + $0x130] sm:$0xff] %v1497
      %1600 = vst [vmem:[#allocation2 + $0x138] sm:$0xff] %v1499
      %1601 = vst [vmem:[#allocation2 + $0x140] sm:$0xff] %v1502
      %1602 = vst [vmem:[#allocation2 + $0x148] sm:$0xff] %v1504
      %1603 = vst [vmem:[#allocation2 + $0x150] sm:$0xff] %v1507
      %1604 = vst [vmem:[#allocation2 + $0x158] sm:$0xff] %v1509
      %1605 = vst [vmem:[#allocation2 + $0x160] sm:$0xff] %v1512
      %1606 = vst [vmem:[#allocation2 + $0x168] sm:$0xff] %v1514
      %1607 = vst [vmem:[#allocation2 + $0x170] sm:$0xff] %v1517
      %1608 = vst [vmem:[#allocation2 + $0x178] sm:$0xff] %v1519
      %1609 = vst [vmem:[#allocation2 + $0x180] sm:$0xff] %v1522
      %1610 = vst [vmem:[#allocation2 + $0x188] sm:$0xff] %v1524
      %1611 = vst [vmem:[#allocation2 + $0x190] sm:$0xff] %v1527
      %1612 = vst [vmem:[#allocation2 + $0x198] sm:$0xff] %v1529
      %1613 = vst [vmem:[#allocation2 + $0x1a0] sm:$0xff] %v1532
      %1614 = vst [vmem:[#allocation2 + $0x1a8] sm:$0xff] %v1534
      %1615 = vst [vmem:[#allocation2 + $0x1b0] sm:$0xff] %v1537
      %1616 = vst [vmem:[#allocation2 + $0x1b8] sm:$0xff] %v1539
      %1617 = vst [vmem:[#allocation2 + $0x1c0] sm:$0xff] %v1542
      %1618 = vst [vmem:[#allocation2 + $0x1c8] sm:$0xff] %v1544
      %1619 = vst [vmem:[#allocation2 + $0x1d0] sm:$0xff] %v1547
      %1620 = vst [vmem:[#allocation2 + $0x1d8] sm:$0xff] %v1549
      %1621 = vst [vmem:[#allocation2 + $0x1e0] sm:$0xff] %v1552
      %1622 = vst [vmem:[#allocation2 + $0x1e8] sm:$0xff] %v1554
      %1623 = vst [vmem:[#allocation2 + $0x1f0] sm:$0xff] %v1557
      %1624 = vst [vmem:[#allocation2 + $0x1f8] sm:$0xff] %v1559
      %v1625 = vld [vmem:[#allocation2] ss:$2 sm:$0xff]
      %s1626 = scalar_lea.vmem [#allocation2], 16
      %v1627 = vld [vmem:[%s1626] ss:$2 sm:$0xff]
      %s1628 = scalar_lea.vmem [#allocation2], 32
      %v1629 = vld [vmem:[%s1628] ss:$2 sm:$0xff]
      %s1630 = scalar_lea.vmem [#allocation2], 48
      %v1631 = vld [vmem:[%s1630] ss:$2 sm:$0xff]
      %s1632 = scalar_lea.vmem [#allocation2], 64
      %v1633 = vld [vmem:[%s1632] ss:$2 sm:$0xff]
      %s1634 = scalar_lea.vmem [#allocation2], 80
      %v1635 = vld [vmem:[%s1634] ss:$2 sm:$0xff]
      %s1636 = scalar_lea.vmem [#allocation2], 96
      %v1637 = vld [vmem:[%s1636] ss:$2 sm:$0xff]
      %s1638 = scalar_lea.vmem [#allocation2], 112
      %v1639 = vld [vmem:[%s1638] ss:$2 sm:$0xff]
      %s1640 = scalar_lea.vmem [#allocation2], 128
      %v1641 = vld [vmem:[%s1640] ss:$2 sm:$0xff]
      %s1642 = scalar_lea.vmem [#allocation2], 144
      %v1643 = vld [vmem:[%s1642] ss:$2 sm:$0xff]
      %s1644 = scalar_lea.vmem [#allocation2], 160
      %v1645 = vld [vmem:[%s1644] ss:$2 sm:$0xff]
      %s1646 = scalar_lea.vmem [#allocation2], 176
      %v1647 = vld [vmem:[%s1646] ss:$2 sm:$0xff]
      %s1648 = scalar_lea.vmem [#allocation2], 192
      %v1649 = vld [vmem:[%s1648] ss:$2 sm:$0xff]
      %s1650 = scalar_lea.vmem [#allocation2], 208
      %v1651 = vld [vmem:[%s1650] ss:$2 sm:$0xff]
      %s1652 = scalar_lea.vmem [#allocation2], 224
      %v1653 = vld [vmem:[%s1652] ss:$2 sm:$0xff]
      %s1654 = scalar_lea.vmem [#allocation2], 240
      %v1655 = vld [vmem:[%s1654] ss:$2 sm:$0xff]
      %s1656 = scalar_lea.vmem [#allocation2], 256
      %v1657 = vld [vmem:[%s1656] ss:$2 sm:$0xff]
      %s1658 = scalar_lea.vmem [#allocation2], 272
      %v1659 = vld [vmem:[%s1658] ss:$2 sm:$0xff]
      %s1660 = scalar_lea.vmem [#allocation2], 288
      %v1661 = vld [vmem:[%s1660] ss:$2 sm:$0xff]
      %s1662 = scalar_lea.vmem [#allocation2], 304
      %v1663 = vld [vmem:[%s1662] ss:$2 sm:$0xff]
      %s1664 = scalar_lea.vmem [#allocation2], 320
      %v1665 = vld [vmem:[%s1664] ss:$2 sm:$0xff]
      %s1666 = scalar_lea.vmem [#allocation2], 336
      %v1667 = vld [vmem:[%s1666] ss:$2 sm:$0xff]
      %s1668 = scalar_lea.vmem [#allocation2], 352
      %v1669 = vld [vmem:[%s1668] ss:$2 sm:$0xff]
      %s1670 = scalar_lea.vmem [#allocation2], 368
      %v1671 = vld [vmem:[%s1670] ss:$2 sm:$0xff]
      %s1672 = scalar_lea.vmem [#allocation2], 384
      %v1673 = vld [vmem:[%s1672] ss:$2 sm:$0xff]
      %s1674 = scalar_lea.vmem [#allocation2], 400
      %v1675 = vld [vmem:[%s1674] ss:$2 sm:$0xff]
      %s1676 = scalar_lea.vmem [#allocation2], 416
      %v1677 = vld [vmem:[%s1676] ss:$2 sm:$0xff]
      %s1678 = scalar_lea.vmem [#allocation2], 432
      %v1679 = vld [vmem:[%s1678] ss:$2 sm:$0xff]
      %s1680 = scalar_lea.vmem [#allocation2], 448
      %v1681 = vld [vmem:[%s1680] ss:$2 sm:$0xff]
      %s1682 = scalar_lea.vmem [#allocation2], 464
      %v1683 = vld [vmem:[%s1682] ss:$2 sm:$0xff]
      %s1684 = scalar_lea.vmem [#allocation2], 480
      %v1685 = vld [vmem:[%s1684] ss:$2 sm:$0xff]
      %s1686 = scalar_lea.vmem [#allocation2], 496
      %v1687 = vld [vmem:[%s1686] ss:$2 sm:$0xff]
      %s1688 = scalar_lea.vmem [#allocation2], 1
      %v1689 = vld [vmem:[%s1688] ss:$2 sm:$0xff]
      %s1690 = scalar_lea.vmem [#allocation2], 17
      %v1691 = vld [vmem:[%s1690] ss:$2 sm:$0xff]
      %s1692 = scalar_lea.vmem [#allocation2], 33
      %v1693 = vld [vmem:[%s1692] ss:$2 sm:$0xff]
      %s1694 = scalar_lea.vmem [#allocation2], 49
      %v1695 = vld [vmem:[%s1694] ss:$2 sm:$0xff]
      %s1696 = scalar_lea.vmem [#allocation2], 65
      %v1697 = vld [vmem:[%s1696] ss:$2 sm:$0xff]
      %s1698 = scalar_lea.vmem [#allocation2], 81
      %v1699 = vld [vmem:[%s1698] ss:$2 sm:$0xff]
      %s1700 = scalar_lea.vmem [#allocation2], 97
      %v1701 = vld [vmem:[%s1700] ss:$2 sm:$0xff]
      %s1702 = scalar_lea.vmem [#allocation2], 113
      %v1703 = vld [vmem:[%s1702] ss:$2 sm:$0xff]
      %s1704 = scalar_lea.vmem [#allocation2], 129
      %v1705 = vld [vmem:[%s1704] ss:$2 sm:$0xff]
      %s1706 = scalar_lea.vmem [#allocation2], 145
      %v1707 = vld [vmem:[%s1706] ss:$2 sm:$0xff]
      %s1708 = scalar_lea.vmem [#allocation2], 161
      %v1709 = vld [vmem:[%s1708] ss:$2 sm:$0xff]
      %s1710 = scalar_lea.vmem [#allocation2], 177
      %v1711 = vld [vmem:[%s1710] ss:$2 sm:$0xff]
      %s1712 = scalar_lea.vmem [#allocation2], 193
      %v1713 = vld [vmem:[%s1712] ss:$2 sm:$0xff]
      %s1714 = scalar_lea.vmem [#allocation2], 209
      %v1715 = vld [vmem:[%s1714] ss:$2 sm:$0xff]
      %s1716 = scalar_lea.vmem [#allocation2], 225
      %v1717 = vld [vmem:[%s1716] ss:$2 sm:$0xff]
      %s1718 = scalar_lea.vmem [#allocation2], 241
      %v1719 = vld [vmem:[%s1718] ss:$2 sm:$0xff]
      %s1720 = scalar_lea.vmem [#allocation2], 257
      %v1721 = vld [vmem:[%s1720] ss:$2 sm:$0xff]
      %s1722 = scalar_lea.vmem [#allocation2], 273
      %v1723 = vld [vmem:[%s1722] ss:$2 sm:$0xff]
      %s1724 = scalar_lea.vmem [#allocation2], 289
      %v1725 = vld [vmem:[%s1724] ss:$2 sm:$0xff]
      %s1726 = scalar_lea.vmem [#allocation2], 305
      %v1727 = vld [vmem:[%s1726] ss:$2 sm:$0xff]
      %s1728 = scalar_lea.vmem [#allocation2], 321
      %v1729 = vld [vmem:[%s1728] ss:$2 sm:$0xff]
      %s1730 = scalar_lea.vmem [#allocation2], 337
      %v1731 = vld [vmem:[%s1730] ss:$2 sm:$0xff]
      %s1732 = scalar_lea.vmem [#allocation2], 353
      %v1733 = vld [vmem:[%s1732] ss:$2 sm:$0xff]
      %s1734 = scalar_lea.vmem [#allocation2], 369
      %v1735 = vld [vmem:[%s1734] ss:$2 sm:$0xff]
      %s1736 = scalar_lea.vmem [#allocation2], 385
      %v1737 = vld [vmem:[%s1736] ss:$2 sm:$0xff]
      %s1738 = scalar_lea.vmem [#allocation2], 401
      %v1739 = vld [vmem:[%s1738] ss:$2 sm:$0xff]
      %s1740 = scalar_lea.vmem [#allocation2], 417
      %v1741 = vld [vmem:[%s1740] ss:$2 sm:$0xff]
      %s1742 = scalar_lea.vmem [#allocation2], 433
      %v1743 = vld [vmem:[%s1742] ss:$2 sm:$0xff]
      %s1744 = scalar_lea.vmem [#allocation2], 449
      %v1745 = vld [vmem:[%s1744] ss:$2 sm:$0xff]
      %s1746 = scalar_lea.vmem [#allocation2], 465
      %v1747 = vld [vmem:[%s1746] ss:$2 sm:$0xff]
      %s1748 = scalar_lea.vmem [#allocation2], 481
      %v1749 = vld [vmem:[%s1748] ss:$2 sm:$0xff]
      %s1750 = scalar_lea.vmem [#allocation2], 497
      %v1751 = vld [vmem:[%s1750] ss:$2 sm:$0xff]
      %v1752 = vmax.f32 %v1625, %v1689
      %v1753 = vmax.f32 %v1627, %v1691
      %v1754 = vmax.f32 %v1629, %v1693
      %v1755 = vmax.f32 %v1631, %v1695
      %v1756 = vmax.f32 %v1633, %v1697
      %v1757 = vmax.f32 %v1635, %v1699
      %v1758 = vmax.f32 %v1637, %v1701
      %v1759 = vmax.f32 %v1639, %v1703
      %v1760 = vmax.f32 %v1641, %v1705
      %v1761 = vmax.f32 %v1643, %v1707
      %v1762 = vmax.f32 %v1645, %v1709
      %v1763 = vmax.f32 %v1647, %v1711
      %v1764 = vmax.f32 %v1649, %v1713
      %v1765 = vmax.f32 %v1651, %v1715
      %v1766 = vmax.f32 %v1653, %v1717
      %v1767 = vmax.f32 %v1655, %v1719
      %v1768 = vmax.f32 %v1657, %v1721
      %v1769 = vmax.f32 %v1659, %v1723
      %v1770 = vmax.f32 %v1661, %v1725
      %v1771 = vmax.f32 %v1663, %v1727
      %v1772 = vmax.f32 %v1665, %v1729
      %v1773 = vmax.f32 %v1667, %v1731
      %v1774 = vmax.f32 %v1669, %v1733
      %v1775 = vmax.f32 %v1671, %v1735
      %v1776 = vmax.f32 %v1673, %v1737
      %v1777 = vmax.f32 %v1675, %v1739
      %v1778 = vmax.f32 %v1677, %v1741
      %v1779 = vmax.f32 %v1679, %v1743
      %v1780 = vmax.f32 %v1681, %v1745
      %v1781 = vmax.f32 %v1683, %v1747
      %v1782 = vmax.f32 %v1685, %v1749
      %v1783 = vmax.f32 %v1687, %v1751
      %1784 = vst [vmem:[#allocation3] sm:$0xff] %v1752
      %1785 = vst [vmem:[#allocation3 + $0x8] sm:$0xff] %v1753
      %1786 = vst [vmem:[#allocation3 + $0x10] sm:$0xff] %v1754
      %1787 = vst [vmem:[#allocation3 + $0x18] sm:$0xff] %v1755
      %1788 = vst [vmem:[#allocation3 + $0x20] sm:$0xff] %v1756
      %1789 = vst [vmem:[#allocation3 + $0x28] sm:$0xff] %v1757
      %1790 = vst [vmem:[#allocation3 + $0x30] sm:$0xff] %v1758
      %1791 = vst [vmem:[#allocation3 + $0x38] sm:$0xff] %v1759
      %1792 = vst [vmem:[#allocation3 + $0x40] sm:$0xff] %v1760
      %1793 = vst [vmem:[#allocation3 + $0x48] sm:$0xff] %v1761
      %1794 = vst [vmem:[#allocation3 + $0x50] sm:$0xff] %v1762
      %1795 = vst [vmem:[#allocation3 + $0x58] sm:$0xff] %v1763
      %1796 = vst [vmem:[#allocation3 + $0x60] sm:$0xff] %v1764
      %1797 = vst [vmem:[#allocation3 + $0x68] sm:$0xff] %v1765
      %1798 = vst [vmem:[#allocation3 + $0x70] sm:$0xff] %v1766
      %1799 = vst [vmem:[#allocation3 + $0x78] sm:$0xff] %v1767
      %1800 = vst [vmem:[#allocation3 + $0x80] sm:$0xff] %v1768
      %1801 = vst [vmem:[#allocation3 + $0x88] sm:$0xff] %v1769
      %1802 = vst [vmem:[#allocation3 + $0x90] sm:$0xff] %v1770
      %1803 = vst [vmem:[#allocation3 + $0x98] sm:$0xff] %v1771
      %1804 = vst [vmem:[#allocation3 + $0xa0] sm:$0xff] %v1772
      %1805 = vst [vmem:[#allocation3 + $0xa8] sm:$0xff] %v1773
      %1806 = vst [vmem:[#allocation3 + $0xb0] sm:$0xff] %v1774
      %1807 = vst [vmem:[#allocation3 + $0xb8] sm:$0xff] %v1775
      %1808 = vst [vmem:[#allocation3 + $0xc0] sm:$0xff] %v1776
      %1809 = vst [vmem:[#allocation3 + $0xc8] sm:$0xff] %v1777
      %1810 = vst [vmem:[#allocation3 + $0xd0] sm:$0xff] %v1778
      %1811 = vst [vmem:[#allocation3 + $0xd8] sm:$0xff] %v1779
      %1812 = vst [vmem:[#allocation3 + $0xe0] sm:$0xff] %v1780
      %1813 = vst [vmem:[#allocation3 + $0xe8] sm:$0xff] %v1781
      %1814 = vst [vmem:[#allocation3 + $0xf0] sm:$0xff] %v1782
      %1815 = vst [vmem:[#allocation3 + $0xf8] sm:$0xff] %v1783
      %v1816 = vld [vmem:[#allocation3] ss:$2 sm:$0xff]
      %s1817 = scalar_lea.vmem [#allocation3], 16
      %v1818 = vld [vmem:[%s1817] ss:$2 sm:$0xff]
      %s1819 = scalar_lea.vmem [#allocation3], 32
      %v1820 = vld [vmem:[%s1819] ss:$2 sm:$0xff]
      %s1821 = scalar_lea.vmem [#allocation3], 48
      %v1822 = vld [vmem:[%s1821] ss:$2 sm:$0xff]
      %s1823 = scalar_lea.vmem [#allocation3], 64
      %v1824 = vld [vmem:[%s1823] ss:$2 sm:$0xff]
      %s1825 = scalar_lea.vmem [#allocation3], 80
      %v1826 = vld [vmem:[%s1825] ss:$2 sm:$0xff]
      %s1827 = scalar_lea.vmem [#allocation3], 96
      %v1828 = vld [vmem:[%s1827] ss:$2 sm:$0xff]
      %s1829 = scalar_lea.vmem [#allocation3], 112
      %v1830 = vld [vmem:[%s1829] ss:$2 sm:$0xff]
      %s1831 = scalar_lea.vmem [#allocation3], 128
      %v1832 = vld [vmem:[%s1831] ss:$2 sm:$0xff]
      %s1833 = scalar_lea.vmem [#allocation3], 144
      %v1834 = vld [vmem:[%s1833] ss:$2 sm:$0xff]
      %s1835 = scalar_lea.vmem [#allocation3], 160
      %v1836 = vld [vmem:[%s1835] ss:$2 sm:$0xff]
      %s1837 = scalar_lea.vmem [#allocation3], 176
      %v1838 = vld [vmem:[%s1837] ss:$2 sm:$0xff]
      %s1839 = scalar_lea.vmem [#allocation3], 192
      %v1840 = vld [vmem:[%s1839] ss:$2 sm:$0xff]
      %s1841 = scalar_lea.vmem [#allocation3], 208
      %v1842 = vld [vmem:[%s1841] ss:$2 sm:$0xff]
      %s1843 = scalar_lea.vmem [#allocation3], 224
      %v1844 = vld [vmem:[%s1843] ss:$2 sm:$0xff]
      %s1845 = scalar_lea.vmem [#allocation3], 240
      %v1846 = vld [vmem:[%s1845] ss:$2 sm:$0xff]
      %s1847 = scalar_lea.vmem [#allocation3], 1
      %v1848 = vld [vmem:[%s1847] ss:$2 sm:$0xff]
      %s1849 = scalar_lea.vmem [#allocation3], 17
      %v1850 = vld [vmem:[%s1849] ss:$2 sm:$0xff]
      %s1851 = scalar_lea.vmem [#allocation3], 33
      %v1852 = vld [vmem:[%s1851] ss:$2 sm:$0xff]
      %s1853 = scalar_lea.vmem [#allocation3], 49
      %v1854 = vld [vmem:[%s1853] ss:$2 sm:$0xff]
      %s1855 = scalar_lea.vmem [#allocation3], 65
      %v1856 = vld [vmem:[%s1855] ss:$2 sm:$0xff]
      %s1857 = scalar_lea.vmem [#allocation3], 81
      %v1858 = vld [vmem:[%s1857] ss:$2 sm:$0xff]
      %s1859 = scalar_lea.vmem [#allocation3], 97
      %v1860 = vld [vmem:[%s1859] ss:$2 sm:$0xff]
      %s1861 = scalar_lea.vmem [#allocation3], 113
      %v1862 = vld [vmem:[%s1861] ss:$2 sm:$0xff]
      %s1863 = scalar_lea.vmem [#allocation3], 129
      %v1864 = vld [vmem:[%s1863] ss:$2 sm:$0xff]
      %s1865 = scalar_lea.vmem [#allocation3], 145
      %v1866 = vld [vmem:[%s1865] ss:$2 sm:$0xff]
      %s1867 = scalar_lea.vmem [#allocation3], 161
      %v1868 = vld [vmem:[%s1867] ss:$2 sm:$0xff]
      %s1869 = scalar_lea.vmem [#allocation3], 177
      %v1870 = vld [vmem:[%s1869] ss:$2 sm:$0xff]
      %s1871 = scalar_lea.vmem [#allocation3], 193
      %v1872 = vld [vmem:[%s1871] ss:$2 sm:$0xff]
      %s1873 = scalar_lea.vmem [#allocation3], 209
      %v1874 = vld [vmem:[%s1873] ss:$2 sm:$0xff]
      %s1875 = scalar_lea.vmem [#allocation3], 225
      %v1876 = vld [vmem:[%s1875] ss:$2 sm:$0xff]
      %s1877 = scalar_lea.vmem [#allocation3], 241
      %v1878 = vld [vmem:[%s1877] ss:$2 sm:$0xff]
      %v1879 = vmax.f32 %v1816, %v1848
      %v1880 = vmax.f32 %v1818, %v1850
      %v1881 = vmax.f32 %v1820, %v1852
      %v1882 = vmax.f32 %v1822, %v1854
      %v1883 = vmax.f32 %v1824, %v1856
      %v1884 = vmax.f32 %v1826, %v1858
      %v1885 = vmax.f32 %v1828, %v1860
      %v1886 = vmax.f32 %v1830, %v1862
      %v1887 = vmax.f32 %v1832, %v1864
      %v1888 = vmax.f32 %v1834, %v1866
      %v1889 = vmax.f32 %v1836, %v1868
      %v1890 = vmax.f32 %v1838, %v1870
      %v1891 = vmax.f32 %v1840, %v1872
      %v1892 = vmax.f32 %v1842, %v1874
      %v1893 = vmax.f32 %v1844, %v1876
      %v1894 = vmax.f32 %v1846, %v1878
      %v1895 = vld [vmem:[%s2] sm:$0x1]
      %v1897 = vperm.slane %v1895, 0
      %v1899 = vmul.f32 %v1879, %v1897
      %v1900 = vmul.f32 %v1880, %v1897
      %v1901 = vmul.f32 %v1881, %v1897
      %v1902 = vmul.f32 %v1882, %v1897
      %v1903 = vmul.f32 %v1883, %v1897
      %v1904 = vmul.f32 %v1884, %v1897
      %v1905 = vmul.f32 %v1885, %v1897
      %v1906 = vmul.f32 %v1886, %v1897
      %v1907 = vmul.f32 %v1887, %v1897
      %v1908 = vmul.f32 %v1888, %v1897
      %v1909 = vmul.f32 %v1889, %v1897
      %v1910 = vmul.f32 %v1890, %v1897
      %v1911 = vmul.f32 %v1891, %v1897
      %v1912 = vmul.f32 %v1892, %v1897
      %v1913 = vmul.f32 %v1893, %v1897
      %v1914 = vmul.f32 %v1894, %v1897
      %v1915 = vld [vmem:[%s3] sm:$0x1]
      %v1917 = vperm.slane %v1915, 0
      %v1919 = vadd.f32 %v1899, %v1917
      %v1920 = vadd.f32 %v1900, %v1917
      %v1921 = vadd.f32 %v1901, %v1917
      %v1922 = vadd.f32 %v1902, %v1917
      %v1923 = vadd.f32 %v1903, %v1917
      %v1924 = vadd.f32 %v1904, %v1917
      %v1925 = vadd.f32 %v1905, %v1917
      %v1926 = vadd.f32 %v1906, %v1917
      %v1927 = vadd.f32 %v1907, %v1917
      %v1928 = vadd.f32 %v1908, %v1917
      %v1929 = vadd.f32 %v1909, %v1917
      %v1930 = vadd.f32 %v1910, %v1917
      %v1931 = vadd.f32 %v1911, %v1917
      %v1932 = vadd.f32 %v1912, %v1917
      %v1933 = vadd.f32 %v1913, %v1917
      %v1934 = vadd.f32 %v1914, %v1917
      %v1935 = vsub.f32 0.0, %v1919
      %v1936 = vsub.f32 0.0, %v1920
      %v1937 = vsub.f32 0.0, %v1921
      %v1938 = vsub.f32 0.0, %v1922
      %v1939 = vsub.f32 0.0, %v1923
      %v1940 = vsub.f32 0.0, %v1924
      %v1941 = vsub.f32 0.0, %v1925
      %v1942 = vsub.f32 0.0, %v1926
      %v1943 = vsub.f32 0.0, %v1927
      %v1944 = vsub.f32 0.0, %v1928
      %v1945 = vsub.f32 0.0, %v1929
      %v1946 = vsub.f32 0.0, %v1930
      %v1947 = vsub.f32 0.0, %v1931
      %v1948 = vsub.f32 0.0, %v1932
      %v1949 = vsub.f32 0.0, %v1933
      %v1950 = vsub.f32 0.0, %v1934
      %v1951 = vmul.f32 %v1935, 1.442695
      %v1952 = vpow.pop %v1951
      %v1953 = vmul.f32 %v1936, 1.442695
      %v1954 = vpow.pop %v1953
      %v1955 = vmul.f32 %v1937, 1.442695
      %v1956 = vpow.pop %v1955
      %v1957 = vmul.f32 %v1938, 1.442695
      %v1958 = vpow.pop %v1957
      %v1959 = vmul.f32 %v1939, 1.442695
      %v1960 = vpow.pop %v1959
      %v1961 = vmul.f32 %v1940, 1.442695
      %v1962 = vpow.pop %v1961
      %v1963 = vmul.f32 %v1941, 1.442695
      %v1964 = vpow.pop %v1963
      %v1965 = vmul.f32 %v1942, 1.442695
      %v1966 = vpow.pop %v1965
      %v1967 = vmul.f32 %v1943, 1.442695
      %v1968 = vpow.pop %v1967
      %v1969 = vmul.f32 %v1944, 1.442695
      %v1970 = vpow.pop %v1969
      %v1971 = vmul.f32 %v1945, 1.442695
      %v1972 = vpow.pop %v1971
      %v1973 = vmul.f32 %v1946, 1.442695
      %v1974 = vpow.pop %v1973
      %v1975 = vmul.f32 %v1947, 1.442695
      %v1976 = vpow.pop %v1975
      %v1977 = vmul.f32 %v1948, 1.442695
      %v1978 = vpow.pop %v1977
      %v1979 = vmul.f32 %v1949, 1.442695
      %v1980 = vpow.pop %v1979
      %v1981 = vmul.f32 %v1950, 1.442695
      %v1982 = vpow.pop %v1981
      %v1983 = vadd.f32 %v1952, 1.0
      %v1984 = vadd.f32 %v1954, 1.0
      %v1985 = vadd.f32 %v1956, 1.0
      %v1986 = vadd.f32 %v1958, 1.0
      %v1987 = vadd.f32 %v1960, 1.0
      %v1988 = vadd.f32 %v1962, 1.0
      %v1989 = vadd.f32 %v1964, 1.0
      %v1990 = vadd.f32 %v1966, 1.0
      %v1991 = vadd.f32 %v1968, 1.0
      %v1992 = vadd.f32 %v1970, 1.0
      %v1993 = vadd.f32 %v1972, 1.0
      %v1994 = vadd.f32 %v1974, 1.0
      %v1995 = vadd.f32 %v1976, 1.0
      %v1996 = vadd.f32 %v1978, 1.0
      %v1997 = vadd.f32 %v1980, 1.0
      %v1998 = vadd.f32 %v1982, 1.0
      %v1999 = vrcp.pop %v1983
      %v2000 = vrcp.pop %v1984
      %v2001 = vrcp.pop %v1985
      %v2002 = vrcp.pop %v1986
      %v2003 = vrcp.pop %v1987
      %v2004 = vrcp.pop %v1988
      %v2005 = vrcp.pop %v1989
      %v2006 = vrcp.pop %v1990
      %v2007 = vrcp.pop %v1991
      %v2008 = vrcp.pop %v1992
      %v2009 = vrcp.pop %v1993
      %v2010 = vrcp.pop %v1994
      %v2011 = vrcp.pop %v1995
      %v2012 = vrcp.pop %v1996
      %v2013 = vrcp.pop %v1997
      %v2014 = vrcp.pop %v1998
      %v2015 = vmul.f32 %v1919, %v1999
      %v2016 = vmul.f32 %v1920, %v2000
      %v2017 = vmul.f32 %v1921, %v2001
      %v2018 = vmul.f32 %v1922, %v2002
      %v2019 = vmul.f32 %v1923, %v2003
      %v2020 = vmul.f32 %v1924, %v2004
      %v2021 = vmul.f32 %v1925, %v2005
      %v2022 = vmul.f32 %v1926, %v2006
      %v2023 = vmul.f32 %v1927, %v2007
      %v2024 = vmul.f32 %v1928, %v2008
      %v2025 = vmul.f32 %v1929, %v2009
      %v2026 = vmul.f32 %v1930, %v2010
      %v2027 = vmul.f32 %v1931, %v2011
      %v2028 = vmul.f32 %v1932, %v2012
      %v2029 = vmul.f32 %v1933, %v2013
      %v2030 = vmul.f32 %v1934, %v2014
      %2031 = vst [vmem:[%s202] sm:$0xff] %v2015
      %2032 = vst [vmem:[%s202 + $0x8] sm:$0xff] %v2016
      %2033 = vst [vmem:[%s202 + $0x10] sm:$0xff] %v2017
      %2034 = vst [vmem:[%s202 + $0x18] sm:$0xff] %v2018
      %2035 = vst [vmem:[%s202 + $0x20] sm:$0xff] %v2019
      %2036 = vst [vmem:[%s202 + $0x28] sm:$0xff] %v2020
      %2037 = vst [vmem:[%s202 + $0x30] sm:$0xff] %v2021
      %2038 = vst [vmem:[%s202 + $0x38] sm:$0xff] %v2022
      %2039 = vst [vmem:[%s202 + $0x40] sm:$0xff] %v2023
      %2040 = vst [vmem:[%s202 + $0x48] sm:$0xff] %v2024
      %2041 = vst [vmem:[%s202 + $0x50] sm:$0xff] %v2025
      %2042 = vst [vmem:[%s202 + $0x58] sm:$0xff] %v2026
      %2043 = vst [vmem:[%s202 + $0x60] sm:$0xff] %v2027
      %2044 = vst [vmem:[%s202 + $0x68] sm:$0xff] %v2028
      %2045 = vst [vmem:[%s202 + $0x70] sm:$0xff] %v2029
      %2046 = vst [vmem:[%s202 + $0x78] sm:$0xff] %v2030
      %s2047 = smul.u32 16, %s15
      %p2048 = scmp.lt.s32.totalorder %s2047, 31
      %s2049 = scalar_select %p2048, %s2047, 31
      %s2050 = smul.addr %s2049, 8
      %s2051 = scalar_lea.vmem %s4, %s2050
      // Predicated region
      $region37: #{cnn_forward.5} parent=35 // pred_check
        %p2052 = pneg %p122
      $region38: #{cnn_forward.5} parent=35 // pred_check_branch
        %2054 = sbr.rel (%p2052) target = $region40
      $region39: #{cnn_forward.5} parent=35 // pred_region
        %s2055 = smul.u32 16, %s15
      $region40: #{cnn_forward.5} parent=35 // pred_fallthru
        _
    $region36: #{cnn_forward.5} parent=5 // pred_fallthru
      _
    %p2056 = scmp.le.s32.totalorder 2, %s10
    // Predicated region
    $region41: #{cnn_forward.5} parent=5 // pred_check
      %p2057 = pneg %p2056
    $region42: #{cnn_forward.5} parent=5 // pred_check_branch
      %2059 = sbr.rel (%p2057) target = $region44
    $region43: #{cnn_forward.5} parent=5 // pred_region
      %s2060 = ssub.s32 %s10, 2
      // Predicated region
      $region45: #{cnn_forward.5} parent=43 // pred_check
        %p2061 = pneg %p128
      $region46: #{cnn_forward.5} parent=43 // pred_check_branch
        %2063 = sbr.rel (%p2061) target = $region48
      $region47: #{cnn_forward.5} parent=43 // pred_region
        %s2064 = smul.u32 16, %s16
        %p2065 = scmp.lt.s32.totalorder %s2064, 31
        %s2066 = scalar_select %p2065, %s2064, 31
        %s2067 = smul.addr %s2066, 8
        %s2068 = scalar_lea.vmem %s4, %s2067
      $region48: #{cnn_forward.5} parent=43 // pred_fallthru
        _
    $region44: #{cnn_forward.5} parent=5 // pred_fallthru
      _
  $region6: #{cnn_forward.5} parent=0 // loop_footer
    %s14 = sadd.s32 1, %s10
  $region7: #{cnn_forward.5} parent=0 // loop_footer_branch
    %9 = sbr.rel target = $region3
  $region8: #{cnn_forward.5} parent=0 // loop_exit
    _

// kernel: cnn_forward.6
$region0: #{cnn_forward.6}
  #allocation0 [shape = 'u32[]', space=smem, size = 0x4, offset = 0x4, fixed_abs, tag = 'smem constant byte address 0x4 - core index']
  #allocation1 [shape = 'u32[72,128]{1,0:T(1,128)}', space=vmem, size = 0x9000, scoped, tag = 'internal scratch']
  #allocation2 [shape = 'f32[128,128]{1,0:T(8,128)}', space=vmem, size = 0x10000, scoped, tag = 'scratch operand']
  #allocation3 [shape = 'f32[64,128]{1,0:T(8,128)}', space=vmem, size = 0x8000, scoped, tag = 'scratch operand']
  %s0 = inlined_call_operand.vmem [shape: bf16[256,576], index: 0, kind: input, shape index: {}]
  %s1 = inlined_call_operand.vmem [shape: bf16[576,128], index: 1, kind: input, shape index: {}]
  %s2 = inlined_call_operand.vmem [shape: f32[1,128], index: 2, kind: input, shape index: {}]
  %s3 = inlined_call_operand.vmem [shape: f32[1,128], index: 3, kind: input, shape index: {}]
  %s4 = inlined_call_operand.vmem [shape: f32[64,128], index: 4, kind: output, shape index: {}]
  %s5 = sld [smem:[#allocation0]]
  $region49: #{cnn_forward.6} parent=0
    _
  %s7 = ssub.s32 1, %s5
  %s8 = scalar_select 0, %s7, %s5
  loop: start=0, step=1, limit=4
  $region2: #{cnn_forward.6} parent=0 // loop_pre_header
    _
  $region3: #{cnn_forward.6} parent=0 // loop_header
    %s10 = sphi 0, %s14
    %p11 = scmp.ge.s32.totalorder %s10, 4
    %s20 = sphi 0, %s22
    %s23 = sphi 0, %s20
    %s24 = sphi 0, %s23
    %s40 = sphi 0, %s24
    %s44 = sphi 0, %s44
    %s46 = sphi 0, %s44
    %s47 = sphi 0, %s46
    %s61 = sphi 0, %s47
    %s65 = sphi 0, %s65
    %s67 = sphi 0, %s65
    %s68 = sphi 0, %s67
    %s82 = sphi 0, %s68
    %s86 = sphi 0, %s86
    %s88 = sphi 0, %s86
    %s89 = sphi 0, %s88
    %s103 = sphi 0, %s89
    %s109 = sphi 0, %s111
    %s112 = sphi 0, %s109
    %s113 = sphi 0, %s112
    %s129 = sphi 0, %s113
  $region4: #{cnn_forward.6} parent=0 // loop_header_branch
    %13 = sbr.rel (%p11) target = $region8
  $region5: #{cnn_forward.6} parent=0 // loop_body
    %s15 = ssub.s32 %s10, 1
    %s16 = ssub.s32 %s10, 2
    %s17 = sadd.s32 %s10, 1
    %s18 = ssub.s32 %s10, %s17
    %p19 = scmp.eq.s32.totalorder %s18, 0
    %s21 = sadd.s32 %s20, 1
    %s22 = scalar_select %p19, %s20, %s21
    %p25 = pneg %p19
    %p26 = scmp.eq.s32.totalorder %s10, 1
    %p27 = por %p25, %p26
    %p28 = scmp.ne.s32.totalorder %s20, %s23
    %p29 = scmp.eq.s32.totalorder %s10, 0
    %p30 = por %p28, %p29
    %p31 = scmp.ne.s32.totalorder %s20, %s23
    %p32 = scmp.eq.s32.totalorder %s15, 1
    %p33 = por %p31, %p32
    %p34 = scmp.ne.s32.totalorder %s23, %s24
    %p35 = scmp.eq.s32.totalorder %s15, 0
    %p36 = por %p34, %p35
    %p37 = scmp.ne.s32.totalorder %s23, %s24
    %p38 = scmp.eq.s32.totalorder %s16, 1
    %p39 = por %p37, %p38
    %p41 = scmp.ne.s32.totalorder %s24, %s40
    %p42 = scmp.eq.s32.totalorder %s16, 0
    %p43 = por %p41, %p42
    %s45 = sadd.s32 %s44, 1
    %p48 = scmp.eq.s32.totalorder %s10, 1
    %p49 = scmp.ne.s32.totalorder %s44, %s46
    %p50 = scmp.eq.s32.totalorder %s10, 0
    %p51 = por %p49, %p50
    %p52 = scmp.ne.s32.totalorder %s44, %s46
    %p53 = scmp.eq.s32.totalorder %s15, 1
    %p54 = por %p52, %p53
    %p55 = scmp.ne.s32.totalorder %s46, %s47
    %p56 = scmp.eq.s32.totalorder %s15, 0
    %p57 = por %p55, %p56
    %p58 = scmp.ne.s32.totalorder %s46, %s47
    %p59 = scmp.eq.s32.totalorder %s16, 1
    %p60 = por %p58, %p59
    %p62 = scmp.ne.s32.totalorder %s47, %s61
    %p63 = scmp.eq.s32.totalorder %s16, 0
    %p64 = por %p62, %p63
    %s66 = sadd.s32 %s65, 1
    %p69 = scmp.eq.s32.totalorder %s10, 1
    %p70 = scmp.ne.s32.totalorder %s65, %s67
    %p71 = scmp.eq.s32.totalorder %s10, 0
    %p72 = por %p70, %p71
    %p73 = scmp.ne.s32.totalorder %s65, %s67
    %p74 = scmp.eq.s32.totalorder %s15, 1
    %p75 = por %p73, %p74
    %p76 = scmp.ne.s32.totalorder %s67, %s68
    %p77 = scmp.eq.s32.totalorder %s15, 0
    %p78 = por %p76, %p77
    %p79 = scmp.ne.s32.totalorder %s67, %s68
    %p80 = scmp.eq.s32.totalorder %s16, 1
    %p81 = por %p79, %p80
    %p83 = scmp.ne.s32.totalorder %s68, %s82
    %p84 = scmp.eq.s32.totalorder %s16, 0
    %p85 = por %p83, %p84
    %s87 = sadd.s32 %s86, 1
    %p90 = scmp.eq.s32.totalorder %s10, 1
    %p91 = scmp.ne.s32.totalorder %s86, %s88
    %p92 = scmp.eq.s32.totalorder %s10, 0
    %p93 = por %p91, %p92
    %p94 = scmp.ne.s32.totalorder %s86, %s88
    %p95 = scmp.eq.s32.totalorder %s15, 1
    %p96 = por %p94, %p95
    %p97 = scmp.ne.s32.totalorder %s88, %s89
    %p98 = scmp.eq.s32.totalorder %s15, 0
    %p99 = por %p97, %p98
    %p100 = scmp.ne.s32.totalorder %s88, %s89
    %p101 = scmp.eq.s32.totalorder %s16, 1
    %p102 = por %p100, %p101
    %p104 = scmp.ne.s32.totalorder %s89, %s103
    %p105 = scmp.eq.s32.totalorder %s16, 0
    %p106 = por %p104, %p105
    %s107 = ssub.s32 %s10, %s17
    %p108 = scmp.eq.s32.totalorder %s107, 0
    %s110 = sadd.s32 %s109, 1
    %s111 = scalar_select %p108, %s109, %s110
    %p114 = pneg %p108
    %p115 = scmp.eq.s32.totalorder %s10, 1
    %p116 = por %p114, %p115
    %p117 = scmp.ne.s32.totalorder %s109, %s112
    %p118 = scmp.eq.s32.totalorder %s10, 0
    %p119 = por %p117, %p118
    %p120 = scmp.ne.s32.totalorder %s109, %s112
    %p121 = scmp.eq.s32.totalorder %s15, 1
    %p122 = por %p120, %p121
    %p123 = scmp.ne.s32.totalorder %s112, %s113
    %p124 = scmp.eq.s32.totalorder %s15, 0
    %p125 = por %p123, %p124
    %p126 = scmp.ne.s32.totalorder %s112, %s113
    %p127 = scmp.eq.s32.totalorder %s16, 1
    %p128 = por %p126, %p127
    %p130 = scmp.ne.s32.totalorder %s113, %s129
    %p131 = scmp.eq.s32.totalorder %s16, 0
    %p132 = por %p130, %p131
    %p133 = scmp.le.s32.totalorder 1, %s10
    %p134 = scmp.lt.s32.totalorder %s10, 3
    %p135 = pnand %p133, %p134
    %p136 = pneg %p135
    // Predicated region
    $region9: #{cnn_forward.6} parent=5 // pred_check
      _
    $region10: #{cnn_forward.6} parent=5 // pred_check_branch
      %138 = sbr.rel (%p135) target = $region12
    $region11: #{cnn_forward.6} parent=5 // pred_region
      %s139 = ssub.s32 %s10, 1
      // Predicated region
      $region13: #{cnn_forward.6} parent=11 // pred_check
        %p140 = pneg %p57
      $region14: #{cnn_forward.6} parent=11 // pred_check_branch
        %142 = sbr.rel (%p140) target = $region16
      $region15: #{cnn_forward.6} parent=11 // pred_region
        _
      $region16: #{cnn_forward.6} parent=11 // pred_fallthru
        _
      // Predicated region
      $region17: #{cnn_forward.6} parent=11 // pred_check
        %p143 = pneg %p78
      $region18: #{cnn_forward.6} parent=11 // pred_check_branch
        %145 = sbr.rel (%p143) target = $region20
      $region19: #{cnn_forward.6} parent=11 // pred_region
        _
      $region20: #{cnn_forward.6} parent=11 // pred_fallthru
        _
      // Predicated region
      $region21: #{cnn_forward.6} parent=11 // pred_check
        %p146 = pneg %p99
      $region22: #{cnn_forward.6} parent=11 // pred_check_branch
        %148 = sbr.rel (%p146) target = $region24
      $region23: #{cnn_forward.6} parent=11 // pred_region
        _
      $region24: #{cnn_forward.6} parent=11 // pred_fallthru
        _
    $region12: #{cnn_forward.6} parent=5 // pred_fallthru
      _
    %p149 = scmp.lt.s32.totalorder %s10, 2
    // Predicated region
    $region25: #{cnn_forward.6} parent=5 // pred_check
      %p150 = pneg %p149
    $region26: #{cnn_forward.6} parent=5 // pred_check_branch
      %152 = sbr.rel (%p150) target = $region28
    $region27: #{cnn_forward.6} parent=5 // pred_region
      // Predicated region
      $region29: #{cnn_forward.6} parent=27 // pred_check
        %p153 = pneg %p30
      $region30: #{cnn_forward.6} parent=27 // pred_check_branch
        %155 = sbr.rel (%p153) target = $region32
      $region31: #{cnn_forward.6} parent=27 // pred_region
        %s156 = smul.u32 16, %s10
        %p157 = scmp.lt.s32.totalorder %s156, 31
        %s158 = scalar_select %p157, %s156, 31
        %s159 = smul.addr %s158, 5
        %s160 = smul.addr %s159, 4
        %s161 = scalar_lea.vmem %s0, %s160
        %s162 = smul.u32 16, %s10
      $region32: #{cnn_forward.6} parent=27 // pred_fallthru
        _
    $region28: #{cnn_forward.6} parent=5 // pred_fallthru
      _
    %p163 = scmp.le.s32.totalorder 1, %s10
    %p164 = scmp.lt.s32.totalorder %s10, 3
    %p165 = pnand %p163, %p164
    %p166 = pneg %p165
    // Predicated region
    $region33: #{cnn_forward.6} parent=5 // pred_check
      _
    $region34: #{cnn_forward.6} parent=5 // pred_check_branch
      %168 = sbr.rel (%p165) target = $region36
    $region35: #{cnn_forward.6} parent=5 // pred_region
      %s169 = ssub.s32 %s10, 1
      %s170 = smul.u32 16, %s15
      %p171 = scmp.lt.s32.totalorder %s170, 31
      %s172 = scalar_select %p171, %s170, 31
      %s173 = smul.addr %s172, 5
      %s174 = smul.addr %s173, 4
      %s175 = scalar_lea.vmem %s0, %s174
      %p176 = pneg %p36
      %p177 = pneg %p33
      %p178 = pneg %p57
      %p179 = pneg %p54
      %p180 = pneg %p78
      %p181 = pneg %p75
      %p182 = pneg %p99
      %p183 = pneg %p96
      %p184 = pneg %p125
      %p185 = pneg %p122
      %s186 = smul.u32 4, %s15
      %p187 = scmp.lt.s32.totalorder %s186, 7
      %s188 = scalar_select %p187, %s186, 7
      %s189 = smul.addr %s188, 8
      %s190 = scalar_lea.vmem %s4, %s189
      %s191 = smul.u32 16, %s15
      %p192 = scmp.lt.s32.totalorder %s191, 31
      %s193 = scalar_select %p192, %s191, 31
      %s194 = smul.addr %s193, 5
      %s195 = smul.addr %s194, 4
      %s196 = scalar_lea.vmem %s0, %s195
      %s197 = smul.u32 16, %s15
      %s198 = smul.u32 4, %s15
      %p199 = scmp.lt.s32.totalorder %s198, 7
      %s200 = scalar_select %p199, %s198, 7
      %s201 = smul.addr %s200, 8
      %s202 = scalar_lea.vmem %s4, %s201
      %s203 = smul.u32 4, %s15
      %v205 = vld [vmem:[%s196] sm:$0xff]
      %v206 = vld [vmem:[%s196 + $0x8] sm:$0xff]
      %v207 = vld [vmem:[%s196 + $0x10] sm:$0xf]
      %v208 = vld [vmem:[%s196 + $0x14] sm:$0xff]
      %v209 = vld [vmem:[%s196 + $0x1c] sm:$0xff]
      %v210 = vld [vmem:[%s196 + $0x24] sm:$0xf]
      %v211 = vld [vmem:[%s196 + $0x28] sm:$0xff]
      %v212 = vld [vmem:[%s196 + $0x30] sm:$0xff]
      %v213 = vld [vmem:[%s196 + $0x38] sm:$0xf]
      %v214 = vld [vmem:[%s196 + $0x3c] sm:$0xff]
      %v215 = vld [vmem:[%s196 + $0x44] sm:$0xff]
      %v216 = vld [vmem:[%s196 + $0x4c] sm:$0xf]
      %v217 = vld [vmem:[%s196 + $0x50] sm:$0xff]
      %v218 = vld [vmem:[%s196 + $0x58] sm:$0xff]
      %v219 = vld [vmem:[%s196 + $0x60] sm:$0xf]
      %v220 = vld [vmem:[%s196 + $0x64] sm:$0xff]
      %v221 = vld [vmem:[%s196 + $0x6c] sm:$0xff]
      %v222 = vld [vmem:[%s196 + $0x74] sm:$0xf]
      %v223 = vld [vmem:[%s196 + $0x78] sm:$0xff]
      %v224 = vld [vmem:[%s196 + $0x80] sm:$0xff]
      %v225 = vld [vmem:[%s196 + $0x88] sm:$0xf]
      %v226 = vld [vmem:[%s196 + $0x8c] sm:$0xff]
      %v227 = vld [vmem:[%s196 + $0x94] sm:$0xff]
      %v228 = vld [vmem:[%s196 + $0x9c] sm:$0xf]
      %v229 = vld [vmem:[%s196 + $0xa0] sm:$0xff]
      %v230 = vld [vmem:[%s196 + $0xa8] sm:$0xff]
      %v231 = vld [vmem:[%s196 + $0xb0] sm:$0xf]
      %v232 = vld [vmem:[%s196 + $0xb4] sm:$0xff]
      %v233 = vld [vmem:[%s196 + $0xbc] sm:$0xff]
      %v234 = vld [vmem:[%s196 + $0xc4] sm:$0xf]
      %v235 = vld [vmem:[%s196 + $0xc8] sm:$0xff]
      %v236 = vld [vmem:[%s196 + $0xd0] sm:$0xff]
      %v237 = vld [vmem:[%s196 + $0xd8] sm:$0xf]
      %v238 = vld [vmem:[%s196 + $0xdc] sm:$0xff]
      %v239 = vld [vmem:[%s196 + $0xe4] sm:$0xff]
      %v240 = vld [vmem:[%s196 + $0xec] sm:$0xf]
      %v241 = vld [vmem:[%s196 + $0xf0] sm:$0xff]
      %v242 = vld [vmem:[%s196 + $0xf8] sm:$0xff]
      %v243 = vld [vmem:[%s196 + $0x100] sm:$0xf]
      %v244 = vld [vmem:[%s196 + $0x104] sm:$0xff]
      %v245 = vld [vmem:[%s196 + $0x10c] sm:$0xff]
      %v246 = vld [vmem:[%s196 + $0x114] sm:$0xf]
      %v247 = vld [vmem:[%s196 + $0x118] sm:$0xff]
      %v248 = vld [vmem:[%s196 + $0x120] sm:$0xff]
      %v249 = vld [vmem:[%s196 + $0x128] sm:$0xf]
      %v250 = vld [vmem:[%s196 + $0x12c] sm:$0xff]
      %v251 = vld [vmem:[%s196 + $0x134] sm:$0xff]
      %v252 = vld [vmem:[%s196 + $0x13c] sm:$0xf]
      %v253 = vld [vmem:[%s1] sm:$0xf]
      %v254 = vld [vmem:[%s1 + $0x4] sm:$0xf]
      %v255 = vld [vmem:[%s1 + $0x8] sm:$0xf]
      %v256 = vld [vmem:[%s1 + $0xc] sm:$0xf]
      %v257 = vld [vmem:[%s1 + $0x10] sm:$0xf]
      %v258 = vld [vmem:[%s1 + $0x14] sm:$0xf]
      %v259 = vld [vmem:[%s1 + $0x18] sm:$0xf]
      %v260 = vld [vmem:[%s1 + $0x1c] sm:$0xf]
      %v261 = vld [vmem:[%s1 + $0x20] sm:$0xf]
      %v262 = vld [vmem:[%s1 + $0x24] sm:$0xf]
      %v263 = vld [vmem:[%s1 + $0x28] sm:$0xf]
      %v264 = vld [vmem:[%s1 + $0x2c] sm:$0xf]
      %v265 = vld [vmem:[%s1 + $0x30] sm:$0xf]
      %v266 = vld [vmem:[%s1 + $0x34] sm:$0xf]
      %v267 = vld [vmem:[%s1 + $0x38] sm:$0xf]
      %v268 = vld [vmem:[%s1 + $0x3c] sm:$0xf]
      %v269 = vld [vmem:[%s1 + $0x40] sm:$0xf]
      %v270 = vld [vmem:[%s1 + $0x44] sm:$0xf]
      %v271 = vld [vmem:[%s1 + $0x48] sm:$0xf]
      %v272 = vld [vmem:[%s1 + $0x4c] sm:$0xf]
      %v273 = vld [vmem:[%s1 + $0x50] sm:$0xf]
      %v274 = vld [vmem:[%s1 + $0x54] sm:$0xf]
      %v275 = vld [vmem:[%s1 + $0x58] sm:$0xf]
      %v276 = vld [vmem:[%s1 + $0x5c] sm:$0xf]
      %v277 = vld [vmem:[%s1 + $0x60] sm:$0xf]
      %v278 = vld [vmem:[%s1 + $0x64] sm:$0xf]
      %v279 = vld [vmem:[%s1 + $0x68] sm:$0xf]
      %v280 = vld [vmem:[%s1 + $0x6c] sm:$0xf]
      %v281 = vld [vmem:[%s1 + $0x70] sm:$0xf]
      %v282 = vld [vmem:[%s1 + $0x74] sm:$0xf]
      %v283 = vld [vmem:[%s1 + $0x78] sm:$0xf]
      %v284 = vld [vmem:[%s1 + $0x7c] sm:$0xf]
      %v285 = vld [vmem:[%s1 + $0x80] sm:$0xf]
      %v286 = vld [vmem:[%s1 + $0x84] sm:$0xf]
      %v287 = vld [vmem:[%s1 + $0x88] sm:$0xf]
      %v288 = vld [vmem:[%s1 + $0x8c] sm:$0xf]
      %v289 = vld [vmem:[%s1 + $0x90] sm:$0xf]
      %v290 = vld [vmem:[%s1 + $0x94] sm:$0xf]
      %v291 = vld [vmem:[%s1 + $0x98] sm:$0xf]
      %v292 = vld [vmem:[%s1 + $0x9c] sm:$0xf]
      %v293 = vld [vmem:[%s1 + $0xa0] sm:$0xf]
      %v294 = vld [vmem:[%s1 + $0xa4] sm:$0xf]
      %v295 = vld [vmem:[%s1 + $0xa8] sm:$0xf]
      %v296 = vld [vmem:[%s1 + $0xac] sm:$0xf]
      %v297 = vld [vmem:[%s1 + $0xb0] sm:$0xf]
      %v298 = vld [vmem:[%s1 + $0xb4] sm:$0xf]
      %v299 = vld [vmem:[%s1 + $0xb8] sm:$0xf]
      %v300 = vld [vmem:[%s1 + $0xbc] sm:$0xf]
      %v301 = vld [vmem:[%s1 + $0xc0] sm:$0xf]
      %v302 = vld [vmem:[%s1 + $0xc4] sm:$0xf]
      %v303 = vld [vmem:[%s1 + $0xc8] sm:$0xf]
      %v304 = vld [vmem:[%s1 + $0xcc] sm:$0xf]
      %v305 = vld [vmem:[%s1 + $0xd0] sm:$0xf]
      %v306 = vld [vmem:[%s1 + $0xd4] sm:$0xf]
      %v307 = vld [vmem:[%s1 + $0xd8] sm:$0xf]
      %v308 = vld [vmem:[%s1 + $0xdc] sm:$0xf]
      %v309 = vld [vmem:[%s1 + $0xe0] sm:$0xf]
      %v310 = vld [vmem:[%s1 + $0xe4] sm:$0xf]
      %v311 = vld [vmem:[%s1 + $0xe8] sm:$0xf]
      %v312 = vld [vmem:[%s1 + $0xec] sm:$0xf]
      %v313 = vld [vmem:[%s1 + $0xf0] sm:$0xf]
      %v314 = vld [vmem:[%s1 + $0xf4] sm:$0xf]
      %v315 = vld [vmem:[%s1 + $0xf8] sm:$0xf]
      %v316 = vld [vmem:[%s1 + $0xfc] sm:$0xf]
      %v317 = vld [vmem:[%s1 + $0x100] sm:$0xf]
      %v318 = vld [vmem:[%s1 + $0x104] sm:$0xf]
      %v319 = vld [vmem:[%s1 + $0x108] sm:$0xf]
      %v320 = vld [vmem:[%s1 + $0x10c] sm:$0xf]
      %v321 = vld [vmem:[%s1 + $0x110] sm:$0xf]
      %v322 = vld [vmem:[%s1 + $0x114] sm:$0xf]
      %v323 = vld [vmem:[%s1 + $0x118] sm:$0xf]
      %v324 = vld [vmem:[%s1 + $0x11c] sm:$0xf]
      %v373 = vunpack.c.l.b16 %v205
      %v374 = vunpack.c.h.b16 %v205
      %v375 = vunpack.c.l.b16 %v206
      %v376 = vunpack.c.h.b16 %v206
      %v377 = vunpack.c.l.b16 %v207
      %v378 = vunpack.c.l.b16 %v208
      %v379 = vunpack.c.h.b16 %v208
      %v380 = vunpack.c.l.b16 %v209
      %v381 = vunpack.c.h.b16 %v209
      %v382 = vunpack.c.l.b16 %v210
      %v383 = vunpack.c.l.b16 %v211
      %v384 = vunpack.c.h.b16 %v211
      %v385 = vunpack.c.l.b16 %v212
      %v386 = vunpack.c.h.b16 %v212
      %v387 = vunpack.c.l.b16 %v213
      %v388 = vunpack.c.l.b16 %v214
      %v389 = vunpack.c.h.b16 %v214
      %v390 = vunpack.c.l.b16 %v215
      %v391 = vunpack.c.h.b16 %v215
      %v392 = vunpack.c.l.b16 %v216
      %v393 = vunpack.c.l.b16 %v217
      %v394 = vunpack.c.h.b16 %v217
      %v395 = vunpack.c.l.b16 %v218
      %v396 = vunpack.c.h.b16 %v218
      %v397 = vunpack.c.l.b16 %v219
      %v398 = vunpack.c.l.b16 %v220
      %v399 = vunpack.c.h.b16 %v220
      %v400 = vunpack.c.l.b16 %v221
      %v401 = vunpack.c.h.b16 %v221
      %v402 = vunpack.c.l.b16 %v222
      %v403 = vunpack.c.l.b16 %v223
      %v404 = vunpack.c.h.b16 %v223
      %v405 = vunpack.c.l.b16 %v224
      %v406 = vunpack.c.h.b16 %v224
      %v407 = vunpack.c.l.b16 %v225
      %v408 = vunpack.c.l.b16 %v226
      %v409 = vunpack.c.h.b16 %v226
      %v410 = vunpack.c.l.b16 %v227
      %v411 = vunpack.c.h.b16 %v227
      %v412 = vunpack.c.l.b16 %v228
      %v413 = vunpack.c.l.b16 %v229
      %v414 = vunpack.c.h.b16 %v229
      %v415 = vunpack.c.l.b16 %v230
      %v416 = vunpack.c.h.b16 %v230
      %v417 = vunpack.c.l.b16 %v231
      %v418 = vunpack.c.l.b16 %v232
      %v419 = vunpack.c.h.b16 %v232
      %v420 = vunpack.c.l.b16 %v233
      %v421 = vunpack.c.h.b16 %v233
      %v422 = vunpack.c.l.b16 %v234
      %v423 = vunpack.c.l.b16 %v235
      %v424 = vunpack.c.h.b16 %v235
      %v425 = vunpack.c.l.b16 %v236
      %v426 = vunpack.c.h.b16 %v236
      %v427 = vunpack.c.l.b16 %v237
      %v428 = vunpack.c.l.b16 %v238
      %v429 = vunpack.c.h.b16 %v238
      %v430 = vunpack.c.l.b16 %v239
      %v431 = vunpack.c.h.b16 %v239
      %v432 = vunpack.c.l.b16 %v240
      %v433 = vunpack.c.l.b16 %v241
      %v434 = vunpack.c.h.b16 %v241
      %v435 = vunpack.c.l.b16 %v242
      %v436 = vunpack.c.h.b16 %v242
      %v437 = vunpack.c.l.b16 %v243
      %v438 = vunpack.c.l.b16 %v244
      %v439 = vunpack.c.h.b16 %v244
      %v440 = vunpack.c.l.b16 %v245
      %v441 = vunpack.c.h.b16 %v245
      %v442 = vunpack.c.l.b16 %v246
      %v443 = vunpack.c.l.b16 %v247
      %v444 = vunpack.c.h.b16 %v247
      %v445 = vunpack.c.l.b16 %v248
      %v446 = vunpack.c.h.b16 %v248
      %v447 = vunpack.c.l.b16 %v249
      %v448 = vunpack.c.l.b16 %v250
      %v449 = vunpack.c.h.b16 %v250
      %v450 = vunpack.c.l.b16 %v251
      %v451 = vunpack.c.h.b16 %v251
      %v452 = vunpack.c.l.b16 %v252
      %v453 = vpack.c.b16 %v378, %v373
      %v454 = vpack.c.b16 %v379, %v374
      %v455 = vpack.c.b16 %v380, %v375
      %v456 = vpack.c.b16 %v381, %v376
      %v457 = vpack.c.b16 %v382, %v377
      %v458 = vpack.c.b16 %v388, %v383
      %v459 = vpack.c.b16 %v389, %v384
      %v460 = vpack.c.b16 %v390, %v385
      %v461 = vpack.c.b16 %v391, %v386
      %v462 = vpack.c.b16 %v392, %v387
      %v463 = vpack.c.b16 %v398, %v393
      %v464 = vpack.c.b16 %v399, %v394
      %v465 = vpack.c.b16 %v400, %v395
      %v466 = vpack.c.b16 %v401, %v396
      %v467 = vpack.c.b16 %v402, %v397
      %v468 = vpack.c.b16 %v408, %v403
      %v469 = vpack.c.b16 %v409, %v404
      %v470 = vpack.c.b16 %v410, %v405
      %v471 = vpack.c.b16 %v411, %v406
      %v472 = vpack.c.b16 %v412, %v407
      %v473 = vpack.c.b16 %v418, %v413
      %v474 = vpack.c.b16 %v419, %v414
      %v475 = vpack.c.b16 %v420, %v415
      %v476 = vpack.c.b16 %v421, %v416
      %v477 = vpack.c.b16 %v422, %v417
      %v478 = vpack.c.b16 %v428, %v423
      %v479 = vpack.c.b16 %v429, %v424
      %v480 = vpack.c.b16 %v430, %v425
      %v481 = vpack.c.b16 %v431, %v426
      %v482 = vpack.c.b16 %v432, %v427
      %v483 = vpack.c.b16 %v438, %v433
      %v484 = vpack.c.b16 %v439, %v434
      %v485 = vpack.c.b16 %v440, %v435
      %v486 = vpack.c.b16 %v441, %v436
      %v487 = vpack.c.b16 %v442, %v437
      %v488 = vpack.c.b16 %v448, %v443
      %v489 = vpack.c.b16 %v449, %v444
      %v490 = vpack.c.b16 %v450, %v445
      %v491 = vpack.c.b16 %v451, %v446
      %v492 = vpack.c.b16 %v452, %v447
      %v597 = vunpack.c.l.b16 %v253
      %v598 = vunpack.c.l.b16 %v254
      %v599 = vunpack.c.l.b16 %v255
      %v600 = vunpack.c.l.b16 %v256
      %v601 = vunpack.c.l.b16 %v257
      %v602 = vunpack.c.l.b16 %v258
      %v603 = vunpack.c.l.b16 %v259
      %v604 = vunpack.c.l.b16 %v260
      %v605 = vunpack.c.l.b16 %v261
      %v606 = vunpack.c.l.b16 %v262
      %v607 = vunpack.c.l.b16 %v263
      %v608 = vunpack.c.l.b16 %v264
      %v609 = vunpack.c.l.b16 %v265
      %v610 = vunpack.c.l.b16 %v266
      %v611 = vunpack.c.l.b16 %v267
      %v612 = vunpack.c.l.b16 %v268
      %v613 = vunpack.c.l.b16 %v269
      %v614 = vunpack.c.l.b16 %v270
      %v615 = vunpack.c.l.b16 %v271
      %v616 = vunpack.c.l.b16 %v272
      %v617 = vunpack.c.l.b16 %v273
      %v618 = vunpack.c.l.b16 %v274
      %v619 = vunpack.c.l.b16 %v275
      %v620 = vunpack.c.l.b16 %v276
      %v621 = vunpack.c.l.b16 %v277
      %v622 = vunpack.c.l.b16 %v278
      %v623 = vunpack.c.l.b16 %v279
      %v624 = vunpack.c.l.b16 %v280
      %v625 = vunpack.c.l.b16 %v281
      %v626 = vunpack.c.l.b16 %v282
      %v627 = vunpack.c.l.b16 %v283
      %v628 = vunpack.c.l.b16 %v284
      %v629 = vunpack.c.l.b16 %v285
      %v630 = vunpack.c.l.b16 %v286
      %v631 = vunpack.c.l.b16 %v287
      %v632 = vunpack.c.l.b16 %v288
      %v633 = vunpack.c.l.b16 %v289
      %v634 = vunpack.c.l.b16 %v290
      %v635 = vunpack.c.l.b16 %v291
      %v636 = vunpack.c.l.b16 %v292
      %v637 = vunpack.c.l.b16 %v293
      %v638 = vunpack.c.l.b16 %v294
      %v639 = vunpack.c.l.b16 %v295
      %v640 = vunpack.c.l.b16 %v296
      %v641 = vunpack.c.l.b16 %v297
      %v642 = vunpack.c.l.b16 %v298
      %v643 = vunpack.c.l.b16 %v299
      %v644 = vunpack.c.l.b16 %v300
      %v645 = vunpack.c.l.b16 %v301
      %v646 = vunpack.c.l.b16 %v302
      %v647 = vunpack.c.l.b16 %v303
      %v648 = vunpack.c.l.b16 %v304
      %v649 = vunpack.c.l.b16 %v305
      %v650 = vunpack.c.l.b16 %v306
      %v651 = vunpack.c.l.b16 %v307
      %v652 = vunpack.c.l.b16 %v308
      %v653 = vunpack.c.l.b16 %v309
      %v654 = vunpack.c.l.b16 %v310
      %v655 = vunpack.c.l.b16 %v311
      %v656 = vunpack.c.l.b16 %v312
      %v657 = vunpack.c.l.b16 %v313
      %v658 = vunpack.c.l.b16 %v314
      %v659 = vunpack.c.l.b16 %v315
      %v660 = vunpack.c.l.b16 %v316
      %v661 = vunpack.c.l.b16 %v317
      %v662 = vunpack.c.l.b16 %v318
      %v663 = vunpack.c.l.b16 %v319
      %v664 = vunpack.c.l.b16 %v320
      %v665 = vunpack.c.l.b16 %v321
      %v666 = vunpack.c.l.b16 %v322
      %v667 = vunpack.c.l.b16 %v323
      %v668 = vunpack.c.l.b16 %v324
      %v669 = vpack.c.b16 %v598, %v597
      %v670 = vpack.c.b16 %v600, %v599
      %v671 = vpack.c.b16 %v602, %v601
      %v672 = vpack.c.b16 %v604, %v603
      %v673 = vpack.c.b16 %v606, %v605
      %v674 = vpack.c.b16 %v608, %v607
      %v675 = vpack.c.b16 %v610, %v609
      %v676 = vpack.c.b16 %v612, %v611
      %v677 = vpack.c.b16 %v614, %v613
      %v678 = vpack.c.b16 %v616, %v615
      %v679 = vpack.c.b16 %v618, %v617
      %v680 = vpack.c.b16 %v620, %v619
      %v681 = vpack.c.b16 %v622, %v621
      %v682 = vpack.c.b16 %v624, %v623
      %v683 = vpack.c.b16 %v626, %v625
      %v684 = vpack.c.b16 %v628, %v627
      %v685 = vpack.c.b16 %v630, %v629
      %v686 = vpack.c.b16 %v632, %v631
      %v687 = vpack.c.b16 %v634, %v633
      %v688 = vpack.c.b16 %v636, %v635
      %v689 = vpack.c.b16 %v638, %v637
      %v690 = vpack.c.b16 %v640, %v639
      %v691 = vpack.c.b16 %v642, %v641
      %v692 = vpack.c.b16 %v644, %v643
      %v693 = vpack.c.b16 %v646, %v645
      %v694 = vpack.c.b16 %v648, %v647
      %v695 = vpack.c.b16 %v650, %v649
      %v696 = vpack.c.b16 %v652, %v651
      %v697 = vpack.c.b16 %v654, %v653
      %v698 = vpack.c.b16 %v656, %v655
      %v699 = vpack.c.b16 %v658, %v657
      %v700 = vpack.c.b16 %v660, %v659
      %v701 = vpack.c.b16 %v662, %v661
      %v702 = vpack.c.b16 %v664, %v663
      %v703 = vpack.c.b16 %v666, %v665
      %v704 = vpack.c.b16 %v668, %v667
      %vm741 = vcmask 523264
      %v743 = vsel %vm741, %v457, 0
      %v746 = vsel %vm741, %v462, 0
      %v749 = vsel %vm741, %v467, 0
      %v752 = vsel %vm741, %v472, 0
      %v755 = vsel %vm741, %v477, 0
      %v758 = vsel %vm741, %v482, 0
      %v761 = vsel %vm741, %v487, 0
      %v764 = vsel %vm741, %v492, 0
      %766 = vmatpush.bf16.msra.mxu0 %v676
      %767 = vmatpush.bf16.msra.mxu0 %v675
      %768 = vmatpush.bf16.msra.mxu0 %v674
      %769 = vmatpush.bf16.msra.mxu0 %v673
      %770 = vmatpush.bf16.msra.mxu0 %v672
      %771 = vmatpush.bf16.msra.mxu0 %v671
      %772 = vmatpush.bf16.msra.mxu0 %v670
      %773 = vmatpush.bf16.msra.mxu0 %v669
      %774 = vmatmul.bf16.gmra.mxu0 %v453
      %v775 = vpop.f32.mrf.mxu0
      %v776 = vadd.f32 0.0, %v775
      %v777 = vpop.f32.mrf.mxu0
      %v778 = vadd.f32 0.0, %v777
      %779 = vmatmul.bf16.gmra.mxu0 %v458
      %v780 = vpop.f32.mrf.mxu0
      %v781 = vadd.f32 0.0, %v780
      %v782 = vpop.f32.mrf.mxu0
      %v783 = vadd.f32 0.0, %v782
      %784 = vmatmul.bf16.gmra.mxu0 %v463
      %v785 = vpop.f32.mrf.mxu0
      %v786 = vadd.f32 0.0, %v785
      %v787 = vpop.f32.mrf.mxu0
      %v788 = vadd.f32 0.0, %v787
      %789 = vmatmul.bf16.gmra.mxu0 %v468
      %v790 = vpop.f32.mrf.mxu0
      %v791 = vadd.f32 0.0, %v790
      %v792 = vpop.f32.mrf.mxu0
      %v793 = vadd.f32 0.0, %v792
      %794 = vmatmul.bf16.gmra.mxu0 %v473
      %v795 = vpop.f32.mrf.mxu0
      %v796 = vadd.f32 0.0, %v795
      %v797 = vpop.f32.mrf.mxu0
      %v798 = vadd.f32 0.0, %v797
      %799 = vmatmul.bf16.gmra.mxu0 %v478
      %v800 = vpop.f32.mrf.mxu0
      %v801 = vadd.f32 0.0, %v800
      %v802 = vpop.f32.mrf.mxu0
      %v803 = vadd.f32 0.0, %v802
      %804 = vmatmul.bf16.gmra.mxu0 %v483
      %v805 = vpop.f32.mrf.mxu0
      %v806 = vadd.f32 0.0, %v805
      %v807 = vpop.f32.mrf.mxu0
      %v808 = vadd.f32 0.0, %v807
      %809 = vmatmul.bf16.gmra.mxu0 %v488
      %v810 = vpop.f32.mrf.mxu0
      %v811 = vadd.f32 0.0, %v810
      %v812 = vpop.f32.mrf.mxu0
      %v813 = vadd.f32 0.0, %v812
      %814 = vdwg.mxu0
      %815 = vmatpush.bf16.msra.mxu0 %v684
      %816 = vmatpush.bf16.msra.mxu0 %v683
      %817 = vmatpush.bf16.msra.mxu0 %v682
      %818 = vmatpush.bf16.msra.mxu0 %v681
      %819 = vmatpush.bf16.msra.mxu0 %v680
      %820 = vmatpush.bf16.msra.mxu0 %v679
      %821 = vmatpush.bf16.msra.mxu0 %v678
      %822 = vmatpush.bf16.msra.mxu0 %v677
      %823 = vmatmul.bf16.gmra.mxu0 %v454
      %v824 = vpop.f32.mrf.mxu0
      %v825 = vadd.f32 %v776, %v824
      %v826 = vpop.f32.mrf.mxu0
      %v827 = vadd.f32 %v778, %v826
      %828 = vmatmul.bf16.gmra.mxu0 %v459
      %v829 = vpop.f32.mrf.mxu0
      %v830 = vadd.f32 %v781, %v829
      %v831 = vpop.f32.mrf.mxu0
      %v832 = vadd.f32 %v783, %v831
      %833 = vmatmul.bf16.gmra.mxu0 %v464
      %v834 = vpop.f32.mrf.mxu0
      %v835 = vadd.f32 %v786, %v834
      %v836 = vpop.f32.mrf.mxu0
      %v837 = vadd.f32 %v788, %v836
      %838 = vmatmul.bf16.gmra.mxu0 %v469
      %v839 = vpop.f32.mrf.mxu0
      %v840 = vadd.f32 %v791, %v839
      %v841 = vpop.f32.mrf.mxu0
      %v842 = vadd.f32 %v793, %v841
      %843 = vmatmul.bf16.gmra.mxu0 %v474
      %v844 = vpop.f32.mrf.mxu0
      %v845 = vadd.f32 %v796, %v844
      %v846 = vpop.f32.mrf.mxu0
      %v847 = vadd.f32 %v798, %v846
      %848 = vmatmul.bf16.gmra.mxu0 %v479
      %v849 = vpop.f32.mrf.mxu0
      %v850 = vadd.f32 %v801, %v849
      %v851 = vpop.f32.mrf.mxu0
      %v852 = vadd.f32 %v803, %v851
      %853 = vmatmul.bf16.gmra.mxu0 %v484
      %v854 = vpop.f32.mrf.mxu0
      %v855 = vadd.f32 %v806, %v854
      %v856 = vpop.f32.mrf.mxu0
      %v857 = vadd.f32 %v808, %v856
      %858 = vmatmul.bf16.gmra.mxu0 %v489
      %v859 = vpop.f32.mrf.mxu0
      %v860 = vadd.f32 %v811, %v859
      %v861 = vpop.f32.mrf.mxu0
      %v862 = vadd.f32 %v813, %v861
      %863 = vdwg.mxu0
      %864 = vmatpush.bf16.msra.mxu0 %v692
      %865 = vmatpush.bf16.msra.mxu0 %v691
      %866 = vmatpush.bf16.msra.mxu0 %v690
      %867 = vmatpush.bf16.msra.mxu0 %v689
      %868 = vmatpush.bf16.msra.mxu0 %v688
      %869 = vmatpush.bf16.msra.mxu0 %v687
      %870 = vmatpush.bf16.msra.mxu0 %v686
      %871 = vmatpush.bf16.msra.mxu0 %v685
      %872 = vmatmul.bf16.gmra.mxu0 %v455
      %v873 = vpop.f32.mrf.mxu0
      %v874 = vadd.f32 %v825, %v873
      %v875 = vpop.f32.mrf.mxu0
      %v876 = vadd.f32 %v827, %v875
      %877 = vmatmul.bf16.gmra.mxu0 %v460
      %v878 = vpop.f32.mrf.mxu0
      %v879 = vadd.f32 %v830, %v878
      %v880 = vpop.f32.mrf.mxu0
      %v881 = vadd.f32 %v832, %v880
      %882 = vmatmul.bf16.gmra.mxu0 %v465
      %v883 = vpop.f32.mrf.mxu0
      %v884 = vadd.f32 %v835, %v883
      %v885 = vpop.f32.mrf.mxu0
      %v886 = vadd.f32 %v837, %v885
      %887 = vmatmul.bf16.gmra.mxu0 %v470
      %v888 = vpop.f32.mrf.mxu0
      %v889 = vadd.f32 %v840, %v888
      %v890 = vpop.f32.mrf.mxu0
      %v891 = vadd.f32 %v842, %v890
      %892 = vmatmul.bf16.gmra.mxu0 %v475
      %v893 = vpop.f32.mrf.mxu0
      %v894 = vadd.f32 %v845, %v893
      %v895 = vpop.f32.mrf.mxu0
      %v896 = vadd.f32 %v847, %v895
      %897 = vmatmul.bf16.gmra.mxu0 %v480
      %v898 = vpop.f32.mrf.mxu0
      %v899 = vadd.f32 %v850, %v898
      %v900 = vpop.f32.mrf.mxu0
      %v901 = vadd.f32 %v852, %v900
      %902 = vmatmul.bf16.gmra.mxu0 %v485
      %v903 = vpop.f32.mrf.mxu0
      %v904 = vadd.f32 %v855, %v903
      %v905 = vpop.f32.mrf.mxu0
      %v906 = vadd.f32 %v857, %v905
      %907 = vmatmul.bf16.gmra.mxu0 %v490
      %v908 = vpop.f32.mrf.mxu0
      %v909 = vadd.f32 %v860, %v908
      %v910 = vpop.f32.mrf.mxu0
      %v911 = vadd.f32 %v862, %v910
      %912 = vdwg.mxu0
      %913 = vmatpush.bf16.msra.mxu0 %v700
      %914 = vmatpush.bf16.msra.mxu0 %v699
      %915 = vmatpush.bf16.msra.mxu0 %v698
      %916 = vmatpush.bf16.msra.mxu0 %v697
      %917 = vmatpush.bf16.msra.mxu0 %v696
      %918 = vmatpush.bf16.msra.mxu0 %v695
      %919 = vmatpush.bf16.msra.mxu0 %v694
      %920 = vmatpush.bf16.msra.mxu0 %v693
      %921 = vmatmul.bf16.gmra.mxu0 %v456
      %v922 = vpop.f32.mrf.mxu0
      %v923 = vadd.f32 %v874, %v922
      %v924 = vpop.f32.mrf.mxu0
      %v925 = vadd.f32 %v876, %v924
      %926 = vmatmul.bf16.gmra.mxu0 %v461
      %v927 = vpop.f32.mrf.mxu0
      %v928 = vadd.f32 %v879, %v927
      %v929 = vpop.f32.mrf.mxu0
      %v930 = vadd.f32 %v881, %v929
      %931 = vmatmul.bf16.gmra.mxu0 %v466
      %v932 = vpop.f32.mrf.mxu0
      %v933 = vadd.f32 %v884, %v932
      %v934 = vpop.f32.mrf.mxu0
      %v935 = vadd.f32 %v886, %v934
      %936 = vmatmul.bf16.gmra.mxu0 %v471
      %v937 = vpop.f32.mrf.mxu0
      %v938 = vadd.f32 %v889, %v937
      %v939 = vpop.f32.mrf.mxu0
      %v940 = vadd.f32 %v891, %v939
      %941 = vmatmul.bf16.gmra.mxu0 %v476
      %v942 = vpop.f32.mrf.mxu0
      %v943 = vadd.f32 %v894, %v942
      %v944 = vpop.f32.mrf.mxu0
      %v945 = vadd.f32 %v896, %v944
      %946 = vmatmul.bf16.gmra.mxu0 %v481
      %v947 = vpop.f32.mrf.mxu0
      %v948 = vadd.f32 %v899, %v947
      %v949 = vpop.f32.mrf.mxu0
      %v950 = vadd.f32 %v901, %v949
      %951 = vmatmul.bf16.gmra.mxu0 %v486
      %v952 = vpop.f32.mrf.mxu0
      %v953 = vadd.f32 %v904, %v952
      %v954 = vpop.f32.mrf.mxu0
      %v955 = vadd.f32 %v906, %v954
      %956 = vmatmul.bf16.gmra.mxu0 %v491
      %v957 = vpop.f32.mrf.mxu0
      %v958 = vadd.f32 %v909, %v957
      %v959 = vpop.f32.mrf.mxu0
      %v960 = vadd.f32 %v911, %v959
      %961 = vdwg.mxu0
      %962 = vmatpush.bf16.msra.mxu0 0
      %963 = vmatpush.bf16.msra.mxu0 0
      %964 = vmatpush.bf16.msra.mxu0 0
      %965 = vmatpush.bf16.msra.mxu0 0
      %966 = vmatpush.bf16.msra.mxu0 %v704
      %967 = vmatpush.bf16.msra.mxu0 %v703
      %968 = vmatpush.bf16.msra.mxu0 %v702
      %969 = vmatpush.bf16.msra.mxu0 %v701
      %970 = vmatmul.bf16.gmra.mxu0 %v743
      %v971 = vpop.f32.mrf.mxu0
      %v972 = vadd.f32 %v923, %v971
      %v973 = vpop.f32.mrf.mxu0
      %v974 = vadd.f32 %v925, %v973
      %975 = vmatmul.bf16.gmra.mxu0 %v746
      %v976 = vpop.f32.mrf.mxu0
      %v977 = vadd.f32 %v928, %v976
      %v978 = vpop.f32.mrf.mxu0
      %v979 = vadd.f32 %v930, %v978
      %980 = vmatmul.bf16.gmra.mxu0 %v749
      %v981 = vpop.f32.mrf.mxu0
      %v982 = vadd.f32 %v933, %v981
      %v983 = vpop.f32.mrf.mxu0
      %v984 = vadd.f32 %v935, %v983
      %985 = vmatmul.bf16.gmra.mxu0 %v752
      %v986 = vpop.f32.mrf.mxu0
      %v987 = vadd.f32 %v938, %v986
      %v988 = vpop.f32.mrf.mxu0
      %v989 = vadd.f32 %v940, %v988
      %990 = vmatmul.bf16.gmra.mxu0 %v755
      %v991 = vpop.f32.mrf.mxu0
      %v992 = vadd.f32 %v943, %v991
      %v993 = vpop.f32.mrf.mxu0
      %v994 = vadd.f32 %v945, %v993
      %995 = vmatmul.bf16.gmra.mxu0 %v758
      %v996 = vpop.f32.mrf.mxu0
      %v997 = vadd.f32 %v948, %v996
      %v998 = vpop.f32.mrf.mxu0
      %v999 = vadd.f32 %v950, %v998
      %1000 = vmatmul.bf16.gmra.mxu0 %v761
      %v1001 = vpop.f32.mrf.mxu0
      %v1002 = vadd.f32 %v953, %v1001
      %v1003 = vpop.f32.mrf.mxu0
      %v1004 = vadd.f32 %v955, %v1003
      %1005 = vmatmul.bf16.gmra.mxu0 %v764
      %v1006 = vpop.f32.mrf.mxu0
      %v1007 = vadd.f32 %v958, %v1006
      %v1008 = vpop.f32.mrf.mxu0
      %v1009 = vadd.f32 %v960, %v1008
      %1010 = vdwg.mxu0
      %1011 = vst [vmem:[#allocation2] sm:$0xff] %v972
      %1012 = vst [vmem:[#allocation2 + $0x8] sm:$0xff] %v974
      %1013 = vst [vmem:[#allocation2 + $0x10] sm:$0xff] %v977
      %1014 = vst [vmem:[#allocation2 + $0x18] sm:$0xff] %v979
      %1015 = vst [vmem:[#allocation2 + $0x20] sm:$0xff] %v982
      %1016 = vst [vmem:[#allocation2 + $0x28] sm:$0xff] %v984
      %1017 = vst [vmem:[#allocation2 + $0x30] sm:$0xff] %v987
      %1018 = vst [vmem:[#allocation2 + $0x38] sm:$0xff] %v989
      %1019 = vst [vmem:[#allocation2 + $0x40] sm:$0xff] %v992
      %1020 = vst [vmem:[#allocation2 + $0x48] sm:$0xff] %v994
      %1021 = vst [vmem:[#allocation2 + $0x50] sm:$0xff] %v997
      %1022 = vst [vmem:[#allocation2 + $0x58] sm:$0xff] %v999
      %1023 = vst [vmem:[#allocation2 + $0x60] sm:$0xff] %v1002
      %1024 = vst [vmem:[#allocation2 + $0x68] sm:$0xff] %v1004
      %1025 = vst [vmem:[#allocation2 + $0x70] sm:$0xff] %v1007
      %1026 = vst [vmem:[#allocation2 + $0x78] sm:$0xff] %v1009
      %v1027 = vld [vmem:[#allocation2] ss:$2 sm:$0xff]
      %s1028 = scalar_lea.vmem [#allocation2], 16
      %v1029 = vld [vmem:[%s1028] ss:$2 sm:$0xff]
      %s1030 = scalar_lea.vmem [#allocation2], 32
      %v1031 = vld [vmem:[%s1030] ss:$2 sm:$0xff]
      %s1032 = scalar_lea.vmem [#allocation2], 48
      %v1033 = vld [vmem:[%s1032] ss:$2 sm:$0xff]
      %s1034 = scalar_lea.vmem [#allocation2], 64
      %v1035 = vld [vmem:[%s1034] ss:$2 sm:$0xff]
      %s1036 = scalar_lea.vmem [#allocation2], 80
      %v1037 = vld [vmem:[%s1036] ss:$2 sm:$0xff]
      %s1038 = scalar_lea.vmem [#allocation2], 96
      %v1039 = vld [vmem:[%s1038] ss:$2 sm:$0xff]
      %s1040 = scalar_lea.vmem [#allocation2], 112
      %v1041 = vld [vmem:[%s1040] ss:$2 sm:$0xff]
      %s1042 = scalar_lea.vmem [#allocation2], 1
      %v1043 = vld [vmem:[%s1042] ss:$2 sm:$0xff]
      %s1044 = scalar_lea.vmem [#allocation2], 17
      %v1045 = vld [vmem:[%s1044] ss:$2 sm:$0xff]
      %s1046 = scalar_lea.vmem [#allocation2], 33
      %v1047 = vld [vmem:[%s1046] ss:$2 sm:$0xff]
      %s1048 = scalar_lea.vmem [#allocation2], 49
      %v1049 = vld [vmem:[%s1048] ss:$2 sm:$0xff]
      %s1050 = scalar_lea.vmem [#allocation2], 65
      %v1051 = vld [vmem:[%s1050] ss:$2 sm:$0xff]
      %s1052 = scalar_lea.vmem [#allocation2], 81
      %v1053 = vld [vmem:[%s1052] ss:$2 sm:$0xff]
      %s1054 = scalar_lea.vmem [#allocation2], 97
      %v1055 = vld [vmem:[%s1054] ss:$2 sm:$0xff]
      %s1056 = scalar_lea.vmem [#allocation2], 113
      %v1057 = vld [vmem:[%s1056] ss:$2 sm:$0xff]
      %v1058 = vmax.f32 %v1027, %v1043
      %v1059 = vmax.f32 %v1029, %v1045
      %v1060 = vmax.f32 %v1031, %v1047
      %v1061 = vmax.f32 %v1033, %v1049
      %v1062 = vmax.f32 %v1035, %v1051
      %v1063 = vmax.f32 %v1037, %v1053
      %v1064 = vmax.f32 %v1039, %v1055
      %v1065 = vmax.f32 %v1041, %v1057
      %1066 = vst [vmem:[#allocation3] sm:$0xff] %v1058
      %1067 = vst [vmem:[#allocation3 + $0x8] sm:$0xff] %v1059
      %1068 = vst [vmem:[#allocation3 + $0x10] sm:$0xff] %v1060
      %1069 = vst [vmem:[#allocation3 + $0x18] sm:$0xff] %v1061
      %1070 = vst [vmem:[#allocation3 + $0x20] sm:$0xff] %v1062
      %1071 = vst [vmem:[#allocation3 + $0x28] sm:$0xff] %v1063
      %1072 = vst [vmem:[#allocation3 + $0x30] sm:$0xff] %v1064
      %1073 = vst [vmem:[#allocation3 + $0x38] sm:$0xff] %v1065
      %v1074 = vld [vmem:[#allocation3] ss:$2 sm:$0xff]
      %s1075 = scalar_lea.vmem [#allocation3], 16
      %v1076 = vld [vmem:[%s1075] ss:$2 sm:$0xff]
      %s1077 = scalar_lea.vmem [#allocation3], 32
      %v1078 = vld [vmem:[%s1077] ss:$2 sm:$0xff]
      %s1079 = scalar_lea.vmem [#allocation3], 48
      %v1080 = vld [vmem:[%s1079] ss:$2 sm:$0xff]
      %s1081 = scalar_lea.vmem [#allocation3], 1
      %v1082 = vld [vmem:[%s1081] ss:$2 sm:$0xff]
      %s1083 = scalar_lea.vmem [#allocation3], 17
      %v1084 = vld [vmem:[%s1083] ss:$2 sm:$0xff]
      %s1085 = scalar_lea.vmem [#allocation3], 33
      %v1086 = vld [vmem:[%s1085] ss:$2 sm:$0xff]
      %s1087 = scalar_lea.vmem [#allocation3], 49
      %v1088 = vld [vmem:[%s1087] ss:$2 sm:$0xff]
      %v1089 = vmax.f32 %v1074, %v1082
      %v1090 = vmax.f32 %v1076, %v1084
      %v1091 = vmax.f32 %v1078, %v1086
      %v1092 = vmax.f32 %v1080, %v1088
      %v1093 = vld [vmem:[%s2] sm:$0x1]
      %v1095 = vperm.slane %v1093, 0
      %v1097 = vmul.f32 %v1089, %v1095
      %v1098 = vmul.f32 %v1090, %v1095
      %v1099 = vmul.f32 %v1091, %v1095
      %v1100 = vmul.f32 %v1092, %v1095
      %v1101 = vld [vmem:[%s3] sm:$0x1]
      %v1103 = vperm.slane %v1101, 0
      %v1105 = vadd.f32 %v1097, %v1103
      %v1106 = vadd.f32 %v1098, %v1103
      %v1107 = vadd.f32 %v1099, %v1103
      %v1108 = vadd.f32 %v1100, %v1103
      %v1109 = vsub.f32 0.0, %v1105
      %v1110 = vsub.f32 0.0, %v1106
      %v1111 = vsub.f32 0.0, %v1107
      %v1112 = vsub.f32 0.0, %v1108
      %v1113 = vmul.f32 %v1109, 1.442695
      %v1114 = vpow.pop %v1113
      %v1115 = vmul.f32 %v1110, 1.442695
      %v1116 = vpow.pop %v1115
      %v1117 = vmul.f32 %v1111, 1.442695
      %v1118 = vpow.pop %v1117
      %v1119 = vmul.f32 %v1112, 1.442695
      %v1120 = vpow.pop %v1119
      %v1121 = vadd.f32 %v1114, 1.0
      %v1122 = vadd.f32 %v1116, 1.0
      %v1123 = vadd.f32 %v1118, 1.0
      %v1124 = vadd.f32 %v1120, 1.0
      %v1125 = vrcp.pop %v1121
      %v1126 = vrcp.pop %v1122
      %v1127 = vrcp.pop %v1123
      %v1128 = vrcp.pop %v1124
      %v1129 = vmul.f32 %v1105, %v1125
      %v1130 = vmul.f32 %v1106, %v1126
      %v1131 = vmul.f32 %v1107, %v1127
      %v1132 = vmul.f32 %v1108, %v1128
      %1133 = vst [vmem:[%s202] sm:$0xff] %v1129
      %1134 = vst [vmem:[%s202 + $0x8] sm:$0xff] %v1130
      %1135 = vst [vmem:[%s202 + $0x10] sm:$0xff] %v1131
      %1136 = vst [vmem:[%s202 + $0x18] sm:$0xff] %v1132
      %s1137 = smul.u32 4, %s15
      %p1138 = scmp.lt.s32.totalorder %s1137, 7
      %s1139 = scalar_select %p1138, %s1137, 7
      %s1140 = smul.addr %s1139, 8
      %s1141 = scalar_lea.vmem %s4, %s1140
      // Predicated region
      $region37: #{cnn_forward.6} parent=35 // pred_check
        %p1142 = pneg %p122
      $region38: #{cnn_forward.6} parent=35 // pred_check_branch
        %1144 = sbr.rel (%p1142) target = $region40
      $region39: #{cnn_forward.6} parent=35 // pred_region
        %s1145 = smul.u32 4, %s15
      $region40: #{cnn_forward.6} parent=35 // pred_fallthru
        _
    $region36: #{cnn_forward.6} parent=5 // pred_fallthru
      _
    %p1146 = scmp.le.s32.totalorder 2, %s10
    // Predicated region
    $region41: #{cnn_forward.6} parent=5 // pred_check
      %p1147 = pneg %p1146
    $region42: #{cnn_forward.6} parent=5 // pred_check_branch
      %1149 = sbr.rel (%p1147) target = $region44
    $region43: #{cnn_forward.6} parent=5 // pred_region
      %s1150 = ssub.s32 %s10, 2
      // Predicated region
      $region45: #{cnn_forward.6} parent=43 // pred_check
        %p1151 = pneg %p128
      $region46: #{cnn_forward.6} parent=43 // pred_check_branch
        %1153 = sbr.rel (%p1151) target = $region48
      $region47: #{cnn_forward.6} parent=43 // pred_region
        %s1154 = smul.u32 4, %s16
        %p1155 = scmp.lt.s32.totalorder %s1154, 7
        %s1156 = scalar_select %p1155, %s1154, 7
        %s1157 = smul.addr %s1156, 8
        %s1158 = scalar_lea.vmem %s4, %s1157
      $region48: #{cnn_forward.6} parent=43 // pred_fallthru
        _
    $region44: #{cnn_forward.6} parent=5 // pred_fallthru
      _
  $region6: #{cnn_forward.6} parent=0 // loop_footer
    %s14 = sadd.s32 1, %s10
  $region7: #{cnn_forward.6} parent=0 // loop_footer_branch
    %9 = sbr.rel target = $region3
  $region8: #{cnn_forward.6} parent=0 // loop_exit
    _

// kernel: cnn_forward.7
$region0: #{cnn_forward.7}
  #allocation0 [shape = 'u32[]', space=smem, size = 0x4, offset = 0x4, fixed_abs, tag = 'smem constant byte address 0x4 - core index']
  #allocation1 [shape = 'u32[72,128]{1,0:T(1,128)}', space=vmem, size = 0x9000, scoped, tag = 'internal scratch']
  %s0 = inlined_call_operand.vmem [shape: bf16[4,2048], index: 0, kind: input, shape index: {}]
  %s1 = inlined_call_operand.vmem [shape: bf16[2048,128], index: 1, kind: input, shape index: {}]
  %s2 = inlined_call_operand.vmem [shape: f32[1,128], index: 2, kind: input, shape index: {}]
  %s3 = inlined_call_operand.hbm [shape: f32[4,128], index: 3, kind: output, shape index: {}]
  %s4 = sld [smem:[#allocation0]]
  $region22: #{cnn_forward.7} parent=0
    _
  %s6 = ssub.s32 1, %s4
  %s7 = scalar_select 0, %s6, %s4
  $region1: #{cnn_forward.7} parent=0
    #allocation2 [shape = 'u8[2048]{0}', space=vmem, size = 0x800, scoped, tag = 'output window, operand 0, single buffered']
    #allocation3 [shape = 's32[1]{0}', space=sflag, size = 0x4, scoped, tag = 'scoped memory for cnn_forward.7']
    %8 = vsyncpa [#allocation3], 0
    // Predicated region
    $region2: #{cnn_forward.7} parent=1 // pred_check
      _
    $region3: #{cnn_forward.7} parent=1 // pred_check_branch
      %10 = sbr.rel (0) target = $region5
    $region4: #{cnn_forward.7} parent=1 // pred_region
      _
    $region5: #{cnn_forward.7} parent=1 // pred_fallthru
      _
    // Predicated region
    $region6: #{cnn_forward.7} parent=1 // pred_check
      _
    $region7: #{cnn_forward.7} parent=1 // pred_check_branch
      %12 = sbr.rel (0) target = $region9
    $region8: #{cnn_forward.7} parent=1 // pred_region
      _
    $region9: #{cnn_forward.7} parent=1 // pred_fallthru
      _
    // Predicated region
    $region10: #{cnn_forward.7} parent=1 // pred_check
      _
    $region11: #{cnn_forward.7} parent=1 // pred_check_branch
      %14 = sbr.rel (0) target = $region13
    $region12: #{cnn_forward.7} parent=1 // pred_region
      _
    $region13: #{cnn_forward.7} parent=1 // pred_fallthru
      _
    %v15 = vld [vmem:[%s0] sm:$0xff]
    %v16 = vld [vmem:[%s0 + $0x8] sm:$0xff]
    %v17 = vld [vmem:[%s0 + $0x10] sm:$0xff]
    %v18 = vld [vmem:[%s0 + $0x18] sm:$0xff]
    %v19 = vld [vmem:[%s1] sm:$0xf]
    %v20 = vld [vmem:[%s1 + $0x4] sm:$0xf]
    %v21 = vld [vmem:[%s1 + $0x8] sm:$0xf]
    %v22 = vld [vmem:[%s1 + $0xc] sm:$0xf]
    %v23 = vld [vmem:[%s1 + $0x10] sm:$0xf]
    %v24 = vld [vmem:[%s1 + $0x14] sm:$0xf]
    %v25 = vld [vmem:[%s1 + $0x18] sm:$0xf]
    %v26 = vld [vmem:[%s1 + $0x1c] sm:$0xf]
    %v27 = vld [vmem:[%s1 + $0x20] sm:$0xf]
    %v28 = vld [vmem:[%s1 + $0x24] sm:$0xf]
    %v29 = vld [vmem:[%s1 + $0x28] sm:$0xf]
    %v30 = vld [vmem:[%s1 + $0x2c] sm:$0xf]
    %v31 = vld [vmem:[%s1 + $0x30] sm:$0xf]
    %v32 = vld [vmem:[%s1 + $0x34] sm:$0xf]
    %v33 = vld [vmem:[%s1 + $0x38] sm:$0xf]
    %v34 = vld [vmem:[%s1 + $0x3c] sm:$0xf]
    %v35 = vld [vmem:[%s1 + $0x40] sm:$0xf]
    %v36 = vld [vmem:[%s1 + $0x44] sm:$0xf]
    %v37 = vld [vmem:[%s1 + $0x48] sm:$0xf]
    %v38 = vld [vmem:[%s1 + $0x4c] sm:$0xf]
    %v39 = vld [vmem:[%s1 + $0x50] sm:$0xf]
    %v40 = vld [vmem:[%s1 + $0x54] sm:$0xf]
    %v41 = vld [vmem:[%s1 + $0x58] sm:$0xf]
    %v42 = vld [vmem:[%s1 + $0x5c] sm:$0xf]
    %v43 = vld [vmem:[%s1 + $0x60] sm:$0xf]
    %v44 = vld [vmem:[%s1 + $0x64] sm:$0xf]
    %v45 = vld [vmem:[%s1 + $0x68] sm:$0xf]
    %v46 = vld [vmem:[%s1 + $0x6c] sm:$0xf]
    %v47 = vld [vmem:[%s1 + $0x70] sm:$0xf]
    %v48 = vld [vmem:[%s1 + $0x74] sm:$0xf]
    %v49 = vld [vmem:[%s1 + $0x78] sm:$0xf]
    %v50 = vld [vmem:[%s1 + $0x7c] sm:$0xf]
    %v51 = vld [vmem:[%s1 + $0x80] sm:$0xf]
    %v52 = vld [vmem:[%s1 + $0x84] sm:$0xf]
    %v53 = vld [vmem:[%s1 + $0x88] sm:$0xf]
    %v54 = vld [vmem:[%s1 + $0x8c] sm:$0xf]
    %v55 = vld [vmem:[%s1 + $0x90] sm:$0xf]
    %v56 = vld [vmem:[%s1 + $0x94] sm:$0xf]
    %v57 = vld [vmem:[%s1 + $0x98] sm:$0xf]
    %v58 = vld [vmem:[%s1 + $0x9c] sm:$0xf]
    %v59 = vld [vmem:[%s1 + $0xa0] sm:$0xf]
    %v60 = vld [vmem:[%s1 + $0xa4] sm:$0xf]
    %v61 = vld [vmem:[%s1 + $0xa8] sm:$0xf]
    %v62 = vld [vmem:[%s1 + $0xac] sm:$0xf]
    %v63 = vld [vmem:[%s1 + $0xb0] sm:$0xf]
    %v64 = vld [vmem:[%s1 + $0xb4] sm:$0xf]
    %v65 = vld [vmem:[%s1 + $0xb8] sm:$0xf]
    %v66 = vld [vmem:[%s1 + $0xbc] sm:$0xf]
    %v67 = vld [vmem:[%s1 + $0xc0] sm:$0xf]
    %v68 = vld [vmem:[%s1 + $0xc4] sm:$0xf]
    %v69 = vld [vmem:[%s1 + $0xc8] sm:$0xf]
    %v70 = vld [vmem:[%s1 + $0xcc] sm:$0xf]
    %v71 = vld [vmem:[%s1 + $0xd0] sm:$0xf]
    %v72 = vld [vmem:[%s1 + $0xd4] sm:$0xf]
    %v73 = vld [vmem:[%s1 + $0xd8] sm:$0xf]
    %v74 = vld [vmem:[%s1 + $0xdc] sm:$0xf]
    %v75 = vld [vmem:[%s1 + $0xe0] sm:$0xf]
    %v76 = vld [vmem:[%s1 + $0xe4] sm:$0xf]
    %v77 = vld [vmem:[%s1 + $0xe8] sm:$0xf]
    %v78 = vld [vmem:[%s1 + $0xec] sm:$0xf]
    %v79 = vld [vmem:[%s1 + $0xf0] sm:$0xf]
    %v80 = vld [vmem:[%s1 + $0xf4] sm:$0xf]
    %v81 = vld [vmem:[%s1 + $0xf8] sm:$0xf]
    %v82 = vld [vmem:[%s1 + $0xfc] sm:$0xf]
    %v83 = vld [vmem:[%s1 + $0x100] sm:$0xf]
    %v84 = vld [vmem:[%s1 + $0x104] sm:$0xf]
    %v85 = vld [vmem:[%s1 + $0x108] sm:$0xf]
    %v86 = vld [vmem:[%s1 + $0x10c] sm:$0xf]
    %v87 = vld [vmem:[%s1 + $0x110] sm:$0xf]
    %v88 = vld [vmem:[%s1 + $0x114] sm:$0xf]
    %v89 = vld [vmem:[%s1 + $0x118] sm:$0xf]
    %v90 = vld [vmem:[%s1 + $0x11c] sm:$0xf]
    %v91 = vld [vmem:[%s1 + $0x120] sm:$0xf]
    %v92 = vld [vmem:[%s1 + $0x124] sm:$0xf]
    %v93 = vld [vmem:[%s1 + $0x128] sm:$0xf]
    %v94 = vld [vmem:[%s1 + $0x12c] sm:$0xf]
    %v95 = vld [vmem:[%s1 + $0x130] sm:$0xf]
    %v96 = vld [vmem:[%s1 + $0x134] sm:$0xf]
    %v97 = vld [vmem:[%s1 + $0x138] sm:$0xf]
    %v98 = vld [vmem:[%s1 + $0x13c] sm:$0xf]
    %v99 = vld [vmem:[%s1 + $0x140] sm:$0xf]
    %v100 = vld [vmem:[%s1 + $0x144] sm:$0xf]
    %v101 = vld [vmem:[%s1 + $0x148] sm:$0xf]
    %v102 = vld [vmem:[%s1 + $0x14c] sm:$0xf]
    %v103 = vld [vmem:[%s1 + $0x150] sm:$0xf]
    %v104 = vld [vmem:[%s1 + $0x154] sm:$0xf]
    %v105 = vld [vmem:[%s1 + $0x158] sm:$0xf]
    %v106 = vld [vmem:[%s1 + $0x15c] sm:$0xf]
    %v107 = vld [vmem:[%s1 + $0x160] sm:$0xf]
    %v108 = vld [vmem:[%s1 + $0x164] sm:$0xf]
    %v109 = vld [vmem:[%s1 + $0x168] sm:$0xf]
    %v110 = vld [vmem:[%s1 + $0x16c] sm:$0xf]
    %v111 = vld [vmem:[%s1 + $0x170] sm:$0xf]
    %v112 = vld [vmem:[%s1 + $0x174] sm:$0xf]
    %v113 = vld [vmem:[%s1 + $0x178] sm:$0xf]
    %v114 = vld [vmem:[%s1 + $0x17c] sm:$0xf]
    %v115 = vld [vmem:[%s1 + $0x180] sm:$0xf]
    %v116 = vld [vmem:[%s1 + $0x184] sm:$0xf]
    %v117 = vld [vmem:[%s1 + $0x188] sm:$0xf]
    %v118 = vld [vmem:[%s1 + $0x18c] sm:$0xf]
    %v119 = vld [vmem:[%s1 + $0x190] sm:$0xf]
    %v120 = vld [vmem:[%s1 + $0x194] sm:$0xf]
    %v121 = vld [vmem:[%s1 + $0x198] sm:$0xf]
    %v122 = vld [vmem:[%s1 + $0x19c] sm:$0xf]
    %v123 = vld [vmem:[%s1 + $0x1a0] sm:$0xf]
    %v124 = vld [vmem:[%s1 + $0x1a4] sm:$0xf]
    %v125 = vld [vmem:[%s1 + $0x1a8] sm:$0xf]
    %v126 = vld [vmem:[%s1 + $0x1ac] sm:$0xf]
    %v127 = vld [vmem:[%s1 + $0x1b0] sm:$0xf]
    %v128 = vld [vmem:[%s1 + $0x1b4] sm:$0xf]
    %v129 = vld [vmem:[%s1 + $0x1b8] sm:$0xf]
    %v130 = vld [vmem:[%s1 + $0x1bc] sm:$0xf]
    %v131 = vld [vmem:[%s1 + $0x1c0] sm:$0xf]
    %v132 = vld [vmem:[%s1 + $0x1c4] sm:$0xf]
    %v133 = vld [vmem:[%s1 + $0x1c8] sm:$0xf]
    %v134 = vld [vmem:[%s1 + $0x1cc] sm:$0xf]
    %v135 = vld [vmem:[%s1 + $0x1d0] sm:$0xf]
    %v136 = vld [vmem:[%s1 + $0x1d4] sm:$0xf]
    %v137 = vld [vmem:[%s1 + $0x1d8] sm:$0xf]
    %v138 = vld [vmem:[%s1 + $0x1dc] sm:$0xf]
    %v139 = vld [vmem:[%s1 + $0x1e0] sm:$0xf]
    %v140 = vld [vmem:[%s1 + $0x1e4] sm:$0xf]
    %v141 = vld [vmem:[%s1 + $0x1e8] sm:$0xf]
    %v142 = vld [vmem:[%s1 + $0x1ec] sm:$0xf]
    %v143 = vld [vmem:[%s1 + $0x1f0] sm:$0xf]
    %v144 = vld [vmem:[%s1 + $0x1f4] sm:$0xf]
    %v145 = vld [vmem:[%s1 + $0x1f8] sm:$0xf]
    %v146 = vld [vmem:[%s1 + $0x1fc] sm:$0xf]
    %v147 = vld [vmem:[%s1 + $0x200] sm:$0xf]
    %v148 = vld [vmem:[%s1 + $0x204] sm:$0xf]
    %v149 = vld [vmem:[%s1 + $0x208] sm:$0xf]
    %v150 = vld [vmem:[%s1 + $0x20c] sm:$0xf]
    %v151 = vld [vmem:[%s1 + $0x210] sm:$0xf]
    %v152 = vld [vmem:[%s1 + $0x214] sm:$0xf]
    %v153 = vld [vmem:[%s1 + $0x218] sm:$0xf]
    %v154 = vld [vmem:[%s1 + $0x21c] sm:$0xf]
    %v155 = vld [vmem:[%s1 + $0x220] sm:$0xf]
    %v156 = vld [vmem:[%s1 + $0x224] sm:$0xf]
    %v157 = vld [vmem:[%s1 + $0x228] sm:$0xf]
    %v158 = vld [vmem:[%s1 + $0x22c] sm:$0xf]
    %v159 = vld [vmem:[%s1 + $0x230] sm:$0xf]
    %v160 = vld [vmem:[%s1 + $0x234] sm:$0xf]
    %v161 = vld [vmem:[%s1 + $0x238] sm:$0xf]
    %v162 = vld [vmem:[%s1 + $0x23c] sm:$0xf]
    %v163 = vld [vmem:[%s1 + $0x240] sm:$0xf]
    %v164 = vld [vmem:[%s1 + $0x244] sm:$0xf]
    %v165 = vld [vmem:[%s1 + $0x248] sm:$0xf]
    %v166 = vld [vmem:[%s1 + $0x24c] sm:$0xf]
    %v167 = vld [vmem:[%s1 + $0x250] sm:$0xf]
    %v168 = vld [vmem:[%s1 + $0x254] sm:$0xf]
    %v169 = vld [vmem:[%s1 + $0x258] sm:$0xf]
    %v170 = vld [vmem:[%s1 + $0x25c] sm:$0xf]
    %v171 = vld [vmem:[%s1 + $0x260] sm:$0xf]
    %v172 = vld [vmem:[%s1 + $0x264] sm:$0xf]
    %v173 = vld [vmem:[%s1 + $0x268] sm:$0xf]
    %v174 = vld [vmem:[%s1 + $0x26c] sm:$0xf]
    %v175 = vld [vmem:[%s1 + $0x270] sm:$0xf]
    %v176 = vld [vmem:[%s1 + $0x274] sm:$0xf]
    %v177 = vld [vmem:[%s1 + $0x278] sm:$0xf]
    %v178 = vld [vmem:[%s1 + $0x27c] sm:$0xf]
    %v179 = vld [vmem:[%s1 + $0x280] sm:$0xf]
    %v180 = vld [vmem:[%s1 + $0x284] sm:$0xf]
    %v181 = vld [vmem:[%s1 + $0x288] sm:$0xf]
    %v182 = vld [vmem:[%s1 + $0x28c] sm:$0xf]
    %v183 = vld [vmem:[%s1 + $0x290] sm:$0xf]
    %v184 = vld [vmem:[%s1 + $0x294] sm:$0xf]
    %v185 = vld [vmem:[%s1 + $0x298] sm:$0xf]
    %v186 = vld [vmem:[%s1 + $0x29c] sm:$0xf]
    %v187 = vld [vmem:[%s1 + $0x2a0] sm:$0xf]
    %v188 = vld [vmem:[%s1 + $0x2a4] sm:$0xf]
    %v189 = vld [vmem:[%s1 + $0x2a8] sm:$0xf]
    %v190 = vld [vmem:[%s1 + $0x2ac] sm:$0xf]
    %v191 = vld [vmem:[%s1 + $0x2b0] sm:$0xf]
    %v192 = vld [vmem:[%s1 + $0x2b4] sm:$0xf]
    %v193 = vld [vmem:[%s1 + $0x2b8] sm:$0xf]
    %v194 = vld [vmem:[%s1 + $0x2bc] sm:$0xf]
    %v195 = vld [vmem:[%s1 + $0x2c0] sm:$0xf]
    %v196 = vld [vmem:[%s1 + $0x2c4] sm:$0xf]
    %v197 = vld [vmem:[%s1 + $0x2c8] sm:$0xf]
    %v198 = vld [vmem:[%s1 + $0x2cc] sm:$0xf]
    %v199 = vld [vmem:[%s1 + $0x2d0] sm:$0xf]
    %v200 = vld [vmem:[%s1 + $0x2d4] sm:$0xf]
    %v201 = vld [vmem:[%s1 + $0x2d8] sm:$0xf]
    %v202 = vld [vmem:[%s1 + $0x2dc] sm:$0xf]
    %v203 = vld [vmem:[%s1 + $0x2e0] sm:$0xf]
    %v204 = vld [vmem:[%s1 + $0x2e4] sm:$0xf]
    %v205 = vld [vmem:[%s1 + $0x2e8] sm:$0xf]
    %v206 = vld [vmem:[%s1 + $0x2ec] sm:$0xf]
    %v207 = vld [vmem:[%s1 + $0x2f0] sm:$0xf]
    %v208 = vld [vmem:[%s1 + $0x2f4] sm:$0xf]
    %v209 = vld [vmem:[%s1 + $0x2f8] sm:$0xf]
    %v210 = vld [vmem:[%s1 + $0x2fc] sm:$0xf]
    %v211 = vld [vmem:[%s1 + $0x300] sm:$0xf]
    %v212 = vld [vmem:[%s1 + $0x304] sm:$0xf]
    %v213 = vld [vmem:[%s1 + $0x308] sm:$0xf]
    %v214 = vld [vmem:[%s1 + $0x30c] sm:$0xf]
    %v215 = vld [vmem:[%s1 + $0x310] sm:$0xf]
    %v216 = vld [vmem:[%s1 + $0x314] sm:$0xf]
    %v217 = vld [vmem:[%s1 + $0x318] sm:$0xf]
    %v218 = vld [vmem:[%s1 + $0x31c] sm:$0xf]
    %v219 = vld [vmem:[%s1 + $0x320] sm:$0xf]
    %v220 = vld [vmem:[%s1 + $0x324] sm:$0xf]
    %v221 = vld [vmem:[%s1 + $0x328] sm:$0xf]
    %v222 = vld [vmem:[%s1 + $0x32c] sm:$0xf]
    %v223 = vld [vmem:[%s1 + $0x330] sm:$0xf]
    %v224 = vld [vmem:[%s1 + $0x334] sm:$0xf]
    %v225 = vld [vmem:[%s1 + $0x338] sm:$0xf]
    %v226 = vld [vmem:[%s1 + $0x33c] sm:$0xf]
    %v227 = vld [vmem:[%s1 + $0x340] sm:$0xf]
    %v228 = vld [vmem:[%s1 + $0x344] sm:$0xf]
    %v229 = vld [vmem:[%s1 + $0x348] sm:$0xf]
    %v230 = vld [vmem:[%s1 + $0x34c] sm:$0xf]
    %v231 = vld [vmem:[%s1 + $0x350] sm:$0xf]
    %v232 = vld [vmem:[%s1 + $0x354] sm:$0xf]
    %v233 = vld [vmem:[%s1 + $0x358] sm:$0xf]
    %v234 = vld [vmem:[%s1 + $0x35c] sm:$0xf]
    %v235 = vld [vmem:[%s1 + $0x360] sm:$0xf]
    %v236 = vld [vmem:[%s1 + $0x364] sm:$0xf]
    %v237 = vld [vmem:[%s1 + $0x368] sm:$0xf]
    %v238 = vld [vmem:[%s1 + $0x36c] sm:$0xf]
    %v239 = vld [vmem:[%s1 + $0x370] sm:$0xf]
    %v240 = vld [vmem:[%s1 + $0x374] sm:$0xf]
    %v241 = vld [vmem:[%s1 + $0x378] sm:$0xf]
    %v242 = vld [vmem:[%s1 + $0x37c] sm:$0xf]
    %v243 = vld [vmem:[%s1 + $0x380] sm:$0xf]
    %v244 = vld [vmem:[%s1 + $0x384] sm:$0xf]
    %v245 = vld [vmem:[%s1 + $0x388] sm:$0xf]
    %v246 = vld [vmem:[%s1 + $0x38c] sm:$0xf]
    %v247 = vld [vmem:[%s1 + $0x390] sm:$0xf]
    %v248 = vld [vmem:[%s1 + $0x394] sm:$0xf]
    %v249 = vld [vmem:[%s1 + $0x398] sm:$0xf]
    %v250 = vld [vmem:[%s1 + $0x39c] sm:$0xf]
    %v251 = vld [vmem:[%s1 + $0x3a0] sm:$0xf]
    %v252 = vld [vmem:[%s1 + $0x3a4] sm:$0xf]
    %v253 = vld [vmem:[%s1 + $0x3a8] sm:$0xf]
    %v254 = vld [vmem:[%s1 + $0x3ac] sm:$0xf]
    %v255 = vld [vmem:[%s1 + $0x3b0] sm:$0xf]
    %v256 = vld [vmem:[%s1 + $0x3b4] sm:$0xf]
    %v257 = vld [vmem:[%s1 + $0x3b8] sm:$0xf]
    %v258 = vld [vmem:[%s1 + $0x3bc] sm:$0xf]
    %v259 = vld [vmem:[%s1 + $0x3c0] sm:$0xf]
    %v260 = vld [vmem:[%s1 + $0x3c4] sm:$0xf]
    %v261 = vld [vmem:[%s1 + $0x3c8] sm:$0xf]
    %v262 = vld [vmem:[%s1 + $0x3cc] sm:$0xf]
    %v263 = vld [vmem:[%s1 + $0x3d0] sm:$0xf]
    %v264 = vld [vmem:[%s1 + $0x3d4] sm:$0xf]
    %v265 = vld [vmem:[%s1 + $0x3d8] sm:$0xf]
    %v266 = vld [vmem:[%s1 + $0x3dc] sm:$0xf]
    %v267 = vld [vmem:[%s1 + $0x3e0] sm:$0xf]
    %v268 = vld [vmem:[%s1 + $0x3e4] sm:$0xf]
    %v269 = vld [vmem:[%s1 + $0x3e8] sm:$0xf]
    %v270 = vld [vmem:[%s1 + $0x3ec] sm:$0xf]
    %v271 = vld [vmem:[%s1 + $0x3f0] sm:$0xf]
    %v272 = vld [vmem:[%s1 + $0x3f4] sm:$0xf]
    %v273 = vld [vmem:[%s1 + $0x3f8] sm:$0xf]
    %v274 = vld [vmem:[%s1 + $0x3fc] sm:$0xf]
    %v275 = vld [vmem:[%s2] sm:$0x1]
    %v277 = vperm.slane %v275, 0
    %280 = vst [vmem:[#allocation1] ss:$4 sm:$0xff] %v15
    %s282 = scalar_lea.vmem [#allocation1], 32
    %283 = vst [vmem:[%s282] ss:$4 sm:$0xff] %v16
    %v284 = vld.sshfl [vmem:[#allocation1] sm:$0xff pattern:$0x73625140]
    %v285 = vld.sshfl [vmem:[#allocation1 + $0x8] sm:$0xff pattern:$0x73625140]
    %v286 = vld.sshfl [vmem:[#allocation1 + $0x10] sm:$0xff pattern:$0x73625140]
    %v287 = vld.sshfl [vmem:[#allocation1 + $0x18] sm:$0xff pattern:$0x73625140]
    %v288 = vld.sshfl [vmem:[#allocation1 + $0x20] sm:$0xff pattern:$0x73625140]
    %v289 = vld.sshfl [vmem:[#allocation1 + $0x28] sm:$0xff pattern:$0x73625140]
    %v290 = vld.sshfl [vmem:[#allocation1 + $0x30] sm:$0xff pattern:$0x73625140]
    %v291 = vld.sshfl [vmem:[#allocation1 + $0x38] sm:$0xff pattern:$0x73625140]
    %293 = vst [vmem:[#allocation1] ss:$4 sm:$0xff] %v17
    %295 = vst [vmem:[%s282] ss:$4 sm:$0xff] %v18
    %v296 = vld.sshfl [vmem:[#allocation1] sm:$0xff pattern:$0x73625140]
    %v297 = vld.sshfl [vmem:[#allocation1 + $0x8] sm:$0xff pattern:$0x73625140]
    %v298 = vld.sshfl [vmem:[#allocation1 + $0x10] sm:$0xff pattern:$0x73625140]
    %v299 = vld.sshfl [vmem:[#allocation1 + $0x18] sm:$0xff pattern:$0x73625140]
    %v300 = vld.sshfl [vmem:[#allocation1 + $0x20] sm:$0xff pattern:$0x73625140]
    %v301 = vld.sshfl [vmem:[#allocation1 + $0x28] sm:$0xff pattern:$0x73625140]
    %v302 = vld.sshfl [vmem:[#allocation1 + $0x30] sm:$0xff pattern:$0x73625140]
    %v303 = vld.sshfl [vmem:[#allocation1 + $0x38] sm:$0xff pattern:$0x73625140]
    %v576 = vunpack.c.l.b16 %v19
    %v577 = vunpack.c.l.b16 %v20
    %v578 = vunpack.c.l.b16 %v21
    %v579 = vunpack.c.l.b16 %v22
    %v580 = vunpack.c.l.b16 %v23
    %v581 = vunpack.c.l.b16 %v24
    %v582 = vunpack.c.l.b16 %v25
    %v583 = vunpack.c.l.b16 %v26
    %v584 = vunpack.c.l.b16 %v27
    %v585 = vunpack.c.l.b16 %v28
    %v586 = vunpack.c.l.b16 %v29
    %v587 = vunpack.c.l.b16 %v30
    %v588 = vunpack.c.l.b16 %v31
    %v589 = vunpack.c.l.b16 %v32
    %v590 = vunpack.c.l.b16 %v33
    %v591 = vunpack.c.l.b16 %v34
    %v592 = vunpack.c.l.b16 %v35
    %v593 = vunpack.c.l.b16 %v36
    %v594 = vunpack.c.l.b16 %v37
    %v595 = vunpack.c.l.b16 %v38
    %v596 = vunpack.c.l.b16 %v39
    %v597 = vunpack.c.l.b16 %v40
    %v598 = vunpack.c.l.b16 %v41
    %v599 = vunpack.c.l.b16 %v42
    %v600 = vunpack.c.l.b16 %v43
    %v601 = vunpack.c.l.b16 %v44
    %v602 = vunpack.c.l.b16 %v45
    %v603 = vunpack.c.l.b16 %v46
    %v604 = vunpack.c.l.b16 %v47
    %v605 = vunpack.c.l.b16 %v48
    %v606 = vunpack.c.l.b16 %v49
    %v607 = vunpack.c.l.b16 %v50
    %v608 = vunpack.c.l.b16 %v51
    %v609 = vunpack.c.l.b16 %v52
    %v610 = vunpack.c.l.b16 %v53
    %v611 = vunpack.c.l.b16 %v54
    %v612 = vunpack.c.l.b16 %v55
    %v613 = vunpack.c.l.b16 %v56
    %v614 = vunpack.c.l.b16 %v57
    %v615 = vunpack.c.l.b16 %v58
    %v616 = vunpack.c.l.b16 %v59
    %v617 = vunpack.c.l.b16 %v60
    %v618 = vunpack.c.l.b16 %v61
    %v619 = vunpack.c.l.b16 %v62
    %v620 = vunpack.c.l.b16 %v63
    %v621 = vunpack.c.l.b16 %v64
    %v622 = vunpack.c.l.b16 %v65
    %v623 = vunpack.c.l.b16 %v66
    %v624 = vunpack.c.l.b16 %v67
    %v625 = vunpack.c.l.b16 %v68
    %v626 = vunpack.c.l.b16 %v69
    %v627 = vunpack.c.l.b16 %v70
    %v628 = vunpack.c.l.b16 %v71
    %v629 = vunpack.c.l.b16 %v72
    %v630 = vunpack.c.l.b16 %v73
    %v631 = vunpack.c.l.b16 %v74
    %v632 = vunpack.c.l.b16 %v75
    %v633 = vunpack.c.l.b16 %v76
    %v634 = vunpack.c.l.b16 %v77
    %v635 = vunpack.c.l.b16 %v78
    %v636 = vunpack.c.l.b16 %v79
    %v637 = vunpack.c.l.b16 %v80
    %v638 = vunpack.c.l.b16 %v81
    %v639 = vunpack.c.l.b16 %v82
    %v640 = vunpack.c.l.b16 %v83
    %v641 = vunpack.c.l.b16 %v84
    %v642 = vunpack.c.l.b16 %v85
    %v643 = vunpack.c.l.b16 %v86
    %v644 = vunpack.c.l.b16 %v87
    %v645 = vunpack.c.l.b16 %v88
    %v646 = vunpack.c.l.b16 %v89
    %v647 = vunpack.c.l.b16 %v90
    %v648 = vunpack.c.l.b16 %v91
    %v649 = vunpack.c.l.b16 %v92
    %v650 = vunpack.c.l.b16 %v93
    %v651 = vunpack.c.l.b16 %v94
    %v652 = vunpack.c.l.b16 %v95
    %v653 = vunpack.c.l.b16 %v96
    %v654 = vunpack.c.l.b16 %v97
    %v655 = vunpack.c.l.b16 %v98
    %v656 = vunpack.c.l.b16 %v99
    %v657 = vunpack.c.l.b16 %v100
    %v658 = vunpack.c.l.b16 %v101
    %v659 = vunpack.c.l.b16 %v102
    %v660 = vunpack.c.l.b16 %v103
    %v661 = vunpack.c.l.b16 %v104
    %v662 = vunpack.c.l.b16 %v105
    %v663 = vunpack.c.l.b16 %v106
    %v664 = vunpack.c.l.b16 %v107
    %v665 = vunpack.c.l.b16 %v108
    %v666 = vunpack.c.l.b16 %v109
    %v667 = vunpack.c.l.b16 %v110
    %v668 = vunpack.c.l.b16 %v111
    %v669 = vunpack.c.l.b16 %v112
    %v670 = vunpack.c.l.b16 %v113
    %v671 = vunpack.c.l.b16 %v114
    %v672 = vunpack.c.l.b16 %v115
    %v673 = vunpack.c.l.b16 %v116
    %v674 = vunpack.c.l.b16 %v117
    %v675 = vunpack.c.l.b16 %v118
    %v676 = vunpack.c.l.b16 %v119
    %v677 = vunpack.c.l.b16 %v120
    %v678 = vunpack.c.l.b16 %v121
    %v679 = vunpack.c.l.b16 %v122
    %v680 = vunpack.c.l.b16 %v123
    %v681 = vunpack.c.l.b16 %v124
    %v682 = vunpack.c.l.b16 %v125
    %v683 = vunpack.c.l.b16 %v126
    %v684 = vunpack.c.l.b16 %v127
    %v685 = vunpack.c.l.b16 %v128
    %v686 = vunpack.c.l.b16 %v129
    %v687 = vunpack.c.l.b16 %v130
    %v688 = vunpack.c.l.b16 %v131
    %v689 = vunpack.c.l.b16 %v132
    %v690 = vunpack.c.l.b16 %v133
    %v691 = vunpack.c.l.b16 %v134
    %v692 = vunpack.c.l.b16 %v135
    %v693 = vunpack.c.l.b16 %v136
    %v694 = vunpack.c.l.b16 %v137
    %v695 = vunpack.c.l.b16 %v138
    %v696 = vunpack.c.l.b16 %v139
    %v697 = vunpack.c.l.b16 %v140
    %v698 = vunpack.c.l.b16 %v141
    %v699 = vunpack.c.l.b16 %v142
    %v700 = vunpack.c.l.b16 %v143
    %v701 = vunpack.c.l.b16 %v144
    %v702 = vunpack.c.l.b16 %v145
    %v703 = vunpack.c.l.b16 %v146
    %v704 = vunpack.c.l.b16 %v147
    %v705 = vunpack.c.l.b16 %v148
    %v706 = vunpack.c.l.b16 %v149
    %v707 = vunpack.c.l.b16 %v150
    %v708 = vunpack.c.l.b16 %v151
    %v709 = vunpack.c.l.b16 %v152
    %v710 = vunpack.c.l.b16 %v153
    %v711 = vunpack.c.l.b16 %v154
    %v712 = vunpack.c.l.b16 %v155
    %v713 = vunpack.c.l.b16 %v156
    %v714 = vunpack.c.l.b16 %v157
    %v715 = vunpack.c.l.b16 %v158
    %v716 = vunpack.c.l.b16 %v159
    %v717 = vunpack.c.l.b16 %v160
    %v718 = vunpack.c.l.b16 %v161
    %v719 = vunpack.c.l.b16 %v162
    %v720 = vunpack.c.l.b16 %v163
    %v721 = vunpack.c.l.b16 %v164
    %v722 = vunpack.c.l.b16 %v165
    %v723 = vunpack.c.l.b16 %v166
    %v724 = vunpack.c.l.b16 %v167
    %v725 = vunpack.c.l.b16 %v168
    %v726 = vunpack.c.l.b16 %v169
    %v727 = vunpack.c.l.b16 %v170
    %v728 = vunpack.c.l.b16 %v171
    %v729 = vunpack.c.l.b16 %v172
    %v730 = vunpack.c.l.b16 %v173
    %v731 = vunpack.c.l.b16 %v174
    %v732 = vunpack.c.l.b16 %v175
    %v733 = vunpack.c.l.b16 %v176
    %v734 = vunpack.c.l.b16 %v177
    %v735 = vunpack.c.l.b16 %v178
    %v736 = vunpack.c.l.b16 %v179
    %v737 = vunpack.c.l.b16 %v180
    %v738 = vunpack.c.l.b16 %v181
    %v739 = vunpack.c.l.b16 %v182
    %v740 = vunpack.c.l.b16 %v183
    %v741 = vunpack.c.l.b16 %v184
    %v742 = vunpack.c.l.b16 %v185
    %v743 = vunpack.c.l.b16 %v186
    %v744 = vunpack.c.l.b16 %v187
    %v745 = vunpack.c.l.b16 %v188
    %v746 = vunpack.c.l.b16 %v189
    %v747 = vunpack.c.l.b16 %v190
    %v748 = vunpack.c.l.b16 %v191
    %v749 = vunpack.c.l.b16 %v192
    %v750 = vunpack.c.l.b16 %v193
    %v751 = vunpack.c.l.b16 %v194
    %v752 = vunpack.c.l.b16 %v195
    %v753 = vunpack.c.l.b16 %v196
    %v754 = vunpack.c.l.b16 %v197
    %v755 = vunpack.c.l.b16 %v198
    %v756 = vunpack.c.l.b16 %v199
    %v757 = vunpack.c.l.b16 %v200
    %v758 = vunpack.c.l.b16 %v201
    %v759 = vunpack.c.l.b16 %v202
    %v760 = vunpack.c.l.b16 %v203
    %v761 = vunpack.c.l.b16 %v204
    %v762 = vunpack.c.l.b16 %v205
    %v763 = vunpack.c.l.b16 %v206
    %v764 = vunpack.c.l.b16 %v207
    %v765 = vunpack.c.l.b16 %v208
    %v766 = vunpack.c.l.b16 %v209
    %v767 = vunpack.c.l.b16 %v210
    %v768 = vunpack.c.l.b16 %v211
    %v769 = vunpack.c.l.b16 %v212
    %v770 = vunpack.c.l.b16 %v213
    %v771 = vunpack.c.l.b16 %v214
    %v772 = vunpack.c.l.b16 %v215
    %v773 = vunpack.c.l.b16 %v216
    %v774 = vunpack.c.l.b16 %v217
    %v775 = vunpack.c.l.b16 %v218
    %v776 = vunpack.c.l.b16 %v219
    %v777 = vunpack.c.l.b16 %v220
    %v778 = vunpack.c.l.b16 %v221
    %v779 = vunpack.c.l.b16 %v222
    %v780 = vunpack.c.l.b16 %v223
    %v781 = vunpack.c.l.b16 %v224
    %v782 = vunpack.c.l.b16 %v225
    %v783 = vunpack.c.l.b16 %v226
    %v784 = vunpack.c.l.b16 %v227
    %v785 = vunpack.c.l.b16 %v228
    %v786 = vunpack.c.l.b16 %v229
    %v787 = vunpack.c.l.b16 %v230
    %v788 = vunpack.c.l.b16 %v231
    %v789 = vunpack.c.l.b16 %v232
    %v790 = vunpack.c.l.b16 %v233
    %v791 = vunpack.c.l.b16 %v234
    %v792 = vunpack.c.l.b16 %v235
    %v793 = vunpack.c.l.b16 %v236
    %v794 = vunpack.c.l.b16 %v237
    %v795 = vunpack.c.l.b16 %v238
    %v796 = vunpack.c.l.b16 %v239
    %v797 = vunpack.c.l.b16 %v240
    %v798 = vunpack.c.l.b16 %v241
    %v799 = vunpack.c.l.b16 %v242
    %v800 = vunpack.c.l.b16 %v243
    %v801 = vunpack.c.l.b16 %v244
    %v802 = vunpack.c.l.b16 %v245
    %v803 = vunpack.c.l.b16 %v246
    %v804 = vunpack.c.l.b16 %v247
    %v805 = vunpack.c.l.b16 %v248
    %v806 = vunpack.c.l.b16 %v249
    %v807 = vunpack.c.l.b16 %v250
    %v808 = vunpack.c.l.b16 %v251
    %v809 = vunpack.c.l.b16 %v252
    %v810 = vunpack.c.l.b16 %v253
    %v811 = vunpack.c.l.b16 %v254
    %v812 = vunpack.c.l.b16 %v255
    %v813 = vunpack.c.l.b16 %v256
    %v814 = vunpack.c.l.b16 %v257
    %v815 = vunpack.c.l.b16 %v258
    %v816 = vunpack.c.l.b16 %v259
    %v817 = vunpack.c.l.b16 %v260
    %v818 = vunpack.c.l.b16 %v261
    %v819 = vunpack.c.l.b16 %v262
    %v820 = vunpack.c.l.b16 %v263
    %v821 = vunpack.c.l.b16 %v264
    %v822 = vunpack.c.l.b16 %v265
    %v823 = vunpack.c.l.b16 %v266
    %v824 = vunpack.c.l.b16 %v267
    %v825 = vunpack.c.l.b16 %v268
    %v826 = vunpack.c.l.b16 %v269
    %v827 = vunpack.c.l.b16 %v270
    %v828 = vunpack.c.l.b16 %v271
    %v829 = vunpack.c.l.b16 %v272
    %v830 = vunpack.c.l.b16 %v273
    %v831 = vunpack.c.l.b16 %v274
    %v832 = vpack.c.b16 %v577, %v576
    %v833 = vpack.c.b16 %v579, %v578
    %v834 = vpack.c.b16 %v581, %v580
    %v835 = vpack.c.b16 %v583, %v582
    %v836 = vpack.c.b16 %v585, %v584
    %v837 = vpack.c.b16 %v587, %v586
    %v838 = vpack.c.b16 %v589, %v588
    %v839 = vpack.c.b16 %v591, %v590
    %v840 = vpack.c.b16 %v593, %v592
    %v841 = vpack.c.b16 %v595, %v594
    %v842 = vpack.c.b16 %v597, %v596
    %v843 = vpack.c.b16 %v599, %v598
    %v844 = vpack.c.b16 %v601, %v600
    %v845 = vpack.c.b16 %v603, %v602
    %v846 = vpack.c.b16 %v605, %v604
    %v847 = vpack.c.b16 %v607, %v606
    %v848 = vpack.c.b16 %v609, %v608
    %v849 = vpack.c.b16 %v611, %v610
    %v850 = vpack.c.b16 %v613, %v612
    %v851 = vpack.c.b16 %v615, %v614
    %v852 = vpack.c.b16 %v617, %v616
    %v853 = vpack.c.b16 %v619, %v618
    %v854 = vpack.c.b16 %v621, %v620
    %v855 = vpack.c.b16 %v623, %v622
    %v856 = vpack.c.b16 %v625, %v624
    %v857 = vpack.c.b16 %v627, %v626
    %v858 = vpack.c.b16 %v629, %v628
    %v859 = vpack.c.b16 %v631, %v630
    %v860 = vpack.c.b16 %v633, %v632
    %v861 = vpack.c.b16 %v635, %v634
    %v862 = vpack.c.b16 %v637, %v636
    %v863 = vpack.c.b16 %v639, %v638
    %v864 = vpack.c.b16 %v641, %v640
    %v865 = vpack.c.b16 %v643, %v642
    %v866 = vpack.c.b16 %v645, %v644
    %v867 = vpack.c.b16 %v647, %v646
    %v868 = vpack.c.b16 %v649, %v648
    %v869 = vpack.c.b16 %v651, %v650
    %v870 = vpack.c.b16 %v653, %v652
    %v871 = vpack.c.b16 %v655, %v654
    %v872 = vpack.c.b16 %v657, %v656
    %v873 = vpack.c.b16 %v659, %v658
    %v874 = vpack.c.b16 %v661, %v660
    %v875 = vpack.c.b16 %v663, %v662
    %v876 = vpack.c.b16 %v665, %v664
    %v877 = vpack.c.b16 %v667, %v666
    %v878 = vpack.c.b16 %v669, %v668
    %v879 = vpack.c.b16 %v671, %v670
    %v880 = vpack.c.b16 %v673, %v672
    %v881 = vpack.c.b16 %v675, %v674
    %v882 = vpack.c.b16 %v677, %v676
    %v883 = vpack.c.b16 %v679, %v678
    %v884 = vpack.c.b16 %v681, %v680
    %v885 = vpack.c.b16 %v683, %v682
    %v886 = vpack.c.b16 %v685, %v684
    %v887 = vpack.c.b16 %v687, %v686
    %v888 = vpack.c.b16 %v689, %v688
    %v889 = vpack.c.b16 %v691, %v690
    %v890 = vpack.c.b16 %v693, %v692
    %v891 = vpack.c.b16 %v695, %v694
    %v892 = vpack.c.b16 %v697, %v696
    %v893 = vpack.c.b16 %v699, %v698
    %v894 = vpack.c.b16 %v701, %v700
    %v895 = vpack.c.b16 %v703, %v702
    %v896 = vpack.c.b16 %v705, %v704
    %v897 = vpack.c.b16 %v707, %v706
    %v898 = vpack.c.b16 %v709, %v708
    %v899 = vpack.c.b16 %v711, %v710
    %v900 = vpack.c.b16 %v713, %v712
    %v901 = vpack.c.b16 %v715, %v714
    %v902 = vpack.c.b16 %v717, %v716
    %v903 = vpack.c.b16 %v719, %v718
    %v904 = vpack.c.b16 %v721, %v720
    %v905 = vpack.c.b16 %v723, %v722
    %v906 = vpack.c.b16 %v725, %v724
    %v907 = vpack.c.b16 %v727, %v726
    %v908 = vpack.c.b16 %v729, %v728
    %v909 = vpack.c.b16 %v731, %v730
    %v910 = vpack.c.b16 %v733, %v732
    %v911 = vpack.c.b16 %v735, %v734
    %v912 = vpack.c.b16 %v737, %v736
    %v913 = vpack.c.b16 %v739, %v738
    %v914 = vpack.c.b16 %v741, %v740
    %v915 = vpack.c.b16 %v743, %v742
    %v916 = vpack.c.b16 %v745, %v744
    %v917 = vpack.c.b16 %v747, %v746
    %v918 = vpack.c.b16 %v749, %v748
    %v919 = vpack.c.b16 %v751, %v750
    %v920 = vpack.c.b16 %v753, %v752
    %v921 = vpack.c.b16 %v755, %v754
    %v922 = vpack.c.b16 %v757, %v756
    %v923 = vpack.c.b16 %v759, %v758
    %v924 = vpack.c.b16 %v761, %v760
    %v925 = vpack.c.b16 %v763, %v762
    %v926 = vpack.c.b16 %v765, %v764
    %v927 = vpack.c.b16 %v767, %v766
    %v928 = vpack.c.b16 %v769, %v768
    %v929 = vpack.c.b16 %v771, %v770
    %v930 = vpack.c.b16 %v773, %v772
    %v931 = vpack.c.b16 %v775, %v774
    %v932 = vpack.c.b16 %v777, %v776
    %v933 = vpack.c.b16 %v779, %v778
    %v934 = vpack.c.b16 %v781, %v780
    %v935 = vpack.c.b16 %v783, %v782
    %v936 = vpack.c.b16 %v785, %v784
    %v937 = vpack.c.b16 %v787, %v786
    %v938 = vpack.c.b16 %v789, %v788
    %v939 = vpack.c.b16 %v791, %v790
    %v940 = vpack.c.b16 %v793, %v792
    %v941 = vpack.c.b16 %v795, %v794
    %v942 = vpack.c.b16 %v797, %v796
    %v943 = vpack.c.b16 %v799, %v798
    %v944 = vpack.c.b16 %v801, %v800
    %v945 = vpack.c.b16 %v803, %v802
    %v946 = vpack.c.b16 %v805, %v804
    %v947 = vpack.c.b16 %v807, %v806
    %v948 = vpack.c.b16 %v809, %v808
    %v949 = vpack.c.b16 %v811, %v810
    %v950 = vpack.c.b16 %v813, %v812
    %v951 = vpack.c.b16 %v815, %v814
    %v952 = vpack.c.b16 %v817, %v816
    %v953 = vpack.c.b16 %v819, %v818
    %v954 = vpack.c.b16 %v821, %v820
    %v955 = vpack.c.b16 %v823, %v822
    %v956 = vpack.c.b16 %v825, %v824
    %v957 = vpack.c.b16 %v827, %v826
    %v958 = vpack.c.b16 %v829, %v828
    %v959 = vpack.c.b16 %v831, %v830
    %1088 = vmatpush.bf16.msra.mxu0 %v839
    %1089 = vmatpush.bf16.msra.mxu0 %v838
    %1090 = vmatpush.bf16.msra.mxu0 %v837
    %1091 = vmatpush.bf16.msra.mxu0 %v836
    %1092 = vmatpush.bf16.msra.mxu0 %v835
    %1093 = vmatpush.bf16.msra.mxu0 %v834
    %1094 = vmatpush.bf16.msra.mxu0 %v833
    %1095 = vmatpush.bf16.msra.mxu0 %v832
    %1096 = vmatmul.bf16.gmra.mxu0 %v284
    %v1097 = vpop.f32.mrf.mxu0
    %v1098 = vadd.f32 %v277, %v1097
    %v1099 = vpop.f32.mrf.mxu0
    %1100 = vdwg.mxu0
    %1101 = vmatpush.bf16.msra.mxu0 %v847
    %1102 = vmatpush.bf16.msra.mxu0 %v846
    %1103 = vmatpush.bf16.msra.mxu0 %v845
    %1104 = vmatpush.bf16.msra.mxu0 %v844
    %1105 = vmatpush.bf16.msra.mxu0 %v843
    %1106 = vmatpush.bf16.msra.mxu0 %v842
    %1107 = vmatpush.bf16.msra.mxu0 %v841
    %1108 = vmatpush.bf16.msra.mxu0 %v840
    %1109 = vmatmul.bf16.gmra.mxu0 %v285
    %v1110 = vpop.f32.mrf.mxu0
    %v1111 = vadd.f32 %v1098, %v1110
    %v1112 = vpop.f32.mrf.mxu0
    %1113 = vdwg.mxu0
    %1114 = vmatpush.bf16.msra.mxu0 %v855
    %1115 = vmatpush.bf16.msra.mxu0 %v854
    %1116 = vmatpush.bf16.msra.mxu0 %v853
    %1117 = vmatpush.bf16.msra.mxu0 %v852
    %1118 = vmatpush.bf16.msra.mxu0 %v851
    %1119 = vmatpush.bf16.msra.mxu0 %v850
    %1120 = vmatpush.bf16.msra.mxu0 %v849
    %1121 = vmatpush.bf16.msra.mxu0 %v848
    %1122 = vmatmul.bf16.gmra.mxu0 %v286
    %v1123 = vpop.f32.mrf.mxu0
    %v1124 = vadd.f32 %v1111, %v1123
    %v1125 = vpop.f32.mrf.mxu0
    %1126 = vdwg.mxu0
    %1127 = vmatpush.bf16.msra.mxu0 %v863
    %1128 = vmatpush.bf16.msra.mxu0 %v862
    %1129 = vmatpush.bf16.msra.mxu0 %v861
    %1130 = vmatpush.bf16.msra.mxu0 %v860
    %1131 = vmatpush.bf16.msra.mxu0 %v859
    %1132 = vmatpush.bf16.msra.mxu0 %v858
    %1133 = vmatpush.bf16.msra.mxu0 %v857
    %1134 = vmatpush.bf16.msra.mxu0 %v856
    %1135 = vmatmul.bf16.gmra.mxu0 %v287
    %v1136 = vpop.f32.mrf.mxu0
    %v1137 = vadd.f32 %v1124, %v1136
    %v1138 = vpop.f32.mrf.mxu0
    %1139 = vdwg.mxu0
    %1140 = vmatpush.bf16.msra.mxu0 %v871
    %1141 = vmatpush.bf16.msra.mxu0 %v870
    %1142 = vmatpush.bf16.msra.mxu0 %v869
    %1143 = vmatpush.bf16.msra.mxu0 %v868
    %1144 = vmatpush.bf16.msra.mxu0 %v867
    %1145 = vmatpush.bf16.msra.mxu0 %v866
    %1146 = vmatpush.bf16.msra.mxu0 %v865
    %1147 = vmatpush.bf16.msra.mxu0 %v864
    %1148 = vmatmul.bf16.gmra.mxu0 %v288
    %v1149 = vpop.f32.mrf.mxu0
    %v1150 = vadd.f32 %v1137, %v1149
    %v1151 = vpop.f32.mrf.mxu0
    %1152 = vdwg.mxu0
    %1153 = vmatpush.bf16.msra.mxu0 %v879
    %1154 = vmatpush.bf16.msra.mxu0 %v878
    %1155 = vmatpush.bf16.msra.mxu0 %v877
    %1156 = vmatpush.bf16.msra.mxu0 %v876
    %1157 = vmatpush.bf16.msra.mxu0 %v875
    %1158 = vmatpush.bf16.msra.mxu0 %v874
    %1159 = vmatpush.bf16.msra.mxu0 %v873
    %1160 = vmatpush.bf16.msra.mxu0 %v872
    %1161 = vmatmul.bf16.gmra.mxu0 %v289
    %v1162 = vpop.f32.mrf.mxu0
    %v1163 = vadd.f32 %v1150, %v1162
    %v1164 = vpop.f32.mrf.mxu0
    %1165 = vdwg.mxu0
    %1166 = vmatpush.bf16.msra.mxu0 %v887
    %1167 = vmatpush.bf16.msra.mxu0 %v886
    %1168 = vmatpush.bf16.msra.mxu0 %v885
    %1169 = vmatpush.bf16.msra.mxu0 %v884
    %1170 = vmatpush.bf16.msra.mxu0 %v883
    %1171 = vmatpush.bf16.msra.mxu0 %v882
    %1172 = vmatpush.bf16.msra.mxu0 %v881
    %1173 = vmatpush.bf16.msra.mxu0 %v880
    %1174 = vmatmul.bf16.gmra.mxu0 %v290
    %v1175 = vpop.f32.mrf.mxu0
    %v1176 = vadd.f32 %v1163, %v1175
    %v1177 = vpop.f32.mrf.mxu0
    %1178 = vdwg.mxu0
    %1179 = vmatpush.bf16.msra.mxu0 %v895
    %1180 = vmatpush.bf16.msra.mxu0 %v894
    %1181 = vmatpush.bf16.msra.mxu0 %v893
    %1182 = vmatpush.bf16.msra.mxu0 %v892
    %1183 = vmatpush.bf16.msra.mxu0 %v891
    %1184 = vmatpush.bf16.msra.mxu0 %v890
    %1185 = vmatpush.bf16.msra.mxu0 %v889
    %1186 = vmatpush.bf16.msra.mxu0 %v888
    %1187 = vmatmul.bf16.gmra.mxu0 %v291
    %v1188 = vpop.f32.mrf.mxu0
    %v1189 = vadd.f32 %v1176, %v1188
    %v1190 = vpop.f32.mrf.mxu0
    %1191 = vdwg.mxu0
    %1192 = vmatpush.bf16.msra.mxu0 %v903
    %1193 = vmatpush.bf16.msra.mxu0 %v902
    %1194 = vmatpush.bf16.msra.mxu0 %v901
    %1195 = vmatpush.bf16.msra.mxu0 %v900
    %1196 = vmatpush.bf16.msra.mxu0 %v899
    %1197 = vmatpush.bf16.msra.mxu0 %v898
    %1198 = vmatpush.bf16.msra.mxu0 %v897
    %1199 = vmatpush.bf16.msra.mxu0 %v896
    %1200 = vmatmul.bf16.gmra.mxu0 %v296
    %v1201 = vpop.f32.mrf.mxu0
    %v1202 = vadd.f32 %v1189, %v1201
    %v1203 = vpop.f32.mrf.mxu0
    %1204 = vdwg.mxu0
    %1205 = vmatpush.bf16.msra.mxu0 %v911
    %1206 = vmatpush.bf16.msra.mxu0 %v910
    %1207 = vmatpush.bf16.msra.mxu0 %v909
    %1208 = vmatpush.bf16.msra.mxu0 %v908
    %1209 = vmatpush.bf16.msra.mxu0 %v907
    %1210 = vmatpush.bf16.msra.mxu0 %v906
    %1211 = vmatpush.bf16.msra.mxu0 %v905
    %1212 = vmatpush.bf16.msra.mxu0 %v904
    %1213 = vmatmul.bf16.gmra.mxu0 %v297
    %v1214 = vpop.f32.mrf.mxu0
    %v1215 = vadd.f32 %v1202, %v1214
    %v1216 = vpop.f32.mrf.mxu0
    %1217 = vdwg.mxu0
    %1218 = vmatpush.bf16.msra.mxu0 %v919
    %1219 = vmatpush.bf16.msra.mxu0 %v918
    %1220 = vmatpush.bf16.msra.mxu0 %v917
    %1221 = vmatpush.bf16.msra.mxu0 %v916
    %1222 = vmatpush.bf16.msra.mxu0 %v915
    %1223 = vmatpush.bf16.msra.mxu0 %v914
    %1224 = vmatpush.bf16.msra.mxu0 %v913
    %1225 = vmatpush.bf16.msra.mxu0 %v912
    %1226 = vmatmul.bf16.gmra.mxu0 %v298
    %v1227 = vpop.f32.mrf.mxu0
    %v1228 = vadd.f32 %v1215, %v1227
    %v1229 = vpop.f32.mrf.mxu0
    %1230 = vdwg.mxu0
    %1231 = vmatpush.bf16.msra.mxu0 %v927
    %1232 = vmatpush.bf16.msra.mxu0 %v926
    %1233 = vmatpush.bf16.msra.mxu0 %v925
    %1234 = vmatpush.bf16.msra.mxu0 %v924
    %1235 = vmatpush.bf16.msra.mxu0 %v923
    %1236 = vmatpush.bf16.msra.mxu0 %v922
    %1237 = vmatpush.bf16.msra.mxu0 %v921
    %1238 = vmatpush.bf16.msra.mxu0 %v920
    %1239 = vmatmul.bf16.gmra.mxu0 %v299
    %v1240 = vpop.f32.mrf.mxu0
    %v1241 = vadd.f32 %v1228, %v1240
    %v1242 = vpop.f32.mrf.mxu0
    %1243 = vdwg.mxu0
    %1244 = vmatpush.bf16.msra.mxu0 %v935
    %1245 = vmatpush.bf16.msra.mxu0 %v934
    %1246 = vmatpush.bf16.msra.mxu0 %v933
    %1247 = vmatpush.bf16.msra.mxu0 %v932
    %1248 = vmatpush.bf16.msra.mxu0 %v931
    %1249 = vmatpush.bf16.msra.mxu0 %v930
    %1250 = vmatpush.bf16.msra.mxu0 %v929
    %1251 = vmatpush.bf16.msra.mxu0 %v928
    %1252 = vmatmul.bf16.gmra.mxu0 %v300
    %v1253 = vpop.f32.mrf.mxu0
    %v1254 = vadd.f32 %v1241, %v1253
    %v1255 = vpop.f32.mrf.mxu0
    %1256 = vdwg.mxu0
    %1257 = vmatpush.bf16.msra.mxu0 %v943
    %1258 = vmatpush.bf16.msra.mxu0 %v942
    %1259 = vmatpush.bf16.msra.mxu0 %v941
    %1260 = vmatpush.bf16.msra.mxu0 %v940
    %1261 = vmatpush.bf16.msra.mxu0 %v939
    %1262 = vmatpush.bf16.msra.mxu0 %v938
    %1263 = vmatpush.bf16.msra.mxu0 %v937
    %1264 = vmatpush.bf16.msra.mxu0 %v936
    %1265 = vmatmul.bf16.gmra.mxu0 %v301
    %v1266 = vpop.f32.mrf.mxu0
    %v1267 = vadd.f32 %v1254, %v1266
    %v1268 = vpop.f32.mrf.mxu0
    %1269 = vdwg.mxu0
    %1270 = vmatpush.bf16.msra.mxu0 %v951
    %1271 = vmatpush.bf16.msra.mxu0 %v950
    %1272 = vmatpush.bf16.msra.mxu0 %v949
    %1273 = vmatpush.bf16.msra.mxu0 %v948
    %1274 = vmatpush.bf16.msra.mxu0 %v947
    %1275 = vmatpush.bf16.msra.mxu0 %v946
    %1276 = vmatpush.bf16.msra.mxu0 %v945
    %1277 = vmatpush.bf16.msra.mxu0 %v944
    %1278 = vmatmul.bf16.gmra.mxu0 %v302
    %v1279 = vpop.f32.mrf.mxu0
    %v1280 = vadd.f32 %v1267, %v1279
    %v1281 = vpop.f32.mrf.mxu0
    %1282 = vdwg.mxu0
    %1283 = vmatpush.bf16.msra.mxu0 %v959
    %1284 = vmatpush.bf16.msra.mxu0 %v958
    %1285 = vmatpush.bf16.msra.mxu0 %v957
    %1286 = vmatpush.bf16.msra.mxu0 %v956
    %1287 = vmatpush.bf16.msra.mxu0 %v955
    %1288 = vmatpush.bf16.msra.mxu0 %v954
    %1289 = vmatpush.bf16.msra.mxu0 %v953
    %1290 = vmatpush.bf16.msra.mxu0 %v952
    %1291 = vmatmul.bf16.gmra.mxu0 %v303
    %v1292 = vpop.f32.mrf.mxu0
    %v1293 = vadd.f32 %v1280, %v1292
    %v1294 = vpop.f32.mrf.mxu0
    %1295 = vdwg.mxu0
    %1296 = vst [vmem:[#allocation2] sm:$0xf] %v1293
    // Predicated region
    $region14: #{cnn_forward.7} parent=1 // pred_check
      _
    $region15: #{cnn_forward.7} parent=1 // pred_check_branch
      %1298 = sbr.rel (0) target = $region17
    $region16: #{cnn_forward.7} parent=1 // pred_region
      %1300 = vsyncadd [#allocation3], 0
      %s1302 = sshll.u32 [#allocation2], 4
      %s1303 = int_to_ptr.vmem [resolvable:$true] %s1302
      %s1304 = sshll.u32 %s3, 4
      %s1305 = int_to_ptr.hbm [resolvable:$true] %s1304
      %1307 = dma.vmem_to_hbm [thread:$0]  %s1303, 64, %s1305, [#allocation3]
    $region17: #{cnn_forward.7} parent=1 // pred_fallthru
      _
    // Predicated region
    $region18: #{cnn_forward.7} parent=1 // pred_check
      _
    $region19: #{cnn_forward.7} parent=1 // pred_check_branch
      %1309 = sbr.rel (0) target = $region21
    $region20: #{cnn_forward.7} parent=1 // pred_region
      %1311 = dma.done [#allocation3], 64
    $region21: #{cnn_forward.7} parent=1 // pred_fallthru
      _
    %1312 = vsyncpa [#allocation3], 1

</llo_original>
